<compile_context>
chip_gen: v7x
topology: tpu7x:2x2x1
jax: 0.10.0
libtpu: 0.0.40
codegen_flags: <defaults>
</compile_context>

<pallas_src>
import jax
import jax.numpy as jnp
from jax.experimental import pallas as pl
from jax.experimental.pallas import tpu as pltpu

N, C, H, W = 2, 64, 16, 16          # channels fixed to 64 by the module
HP = H + 2                          # one halo row above and below
M = N * H * W                       # 512 output pixels
EPS = 1e-5


def _conv3x3(p_ref, w_ref, not_w0, not_wl):
    """3x3 'same' conv. p_ref: bf16 H-halo-padded activation (N, HP, W, C);
    w_ref: (3, 3, Cin, Cout) bf16.

    For each kh the three kw taps are computed on the *unshifted* row block
    (one aligned load); the +/-1-pixel shift is applied to the f32 MXU output
    with a sublane roll + boundary mask, keeping every scratch access aligned
    and every roll/select in f32."""
    acc = None
    for kh in range(3):
        lhs = p_ref[:, kh:kh + H].reshape(M, C)            # aligned bf16 load
        # centre tap (kw = 1): no shift
        t = jnp.dot(lhs, w_ref[kh, 1], preferred_element_type=jnp.float32)
        acc = t if acc is None else acc + t
        # left tap (kw = 0): y[m] += t[m-1], zero where w == 0
        t = jnp.dot(lhs, w_ref[kh, 0], preferred_element_type=jnp.float32)
        acc = acc + jnp.where(not_w0, pltpu.roll(t, shift=1, axis=0), 0.0)
        # right tap (kw = 2): y[m] += t[m+1], zero where w == W-1
        # (roll by M-1 == shift by -1; kept non-negative for the rotate)
        t = jnp.dot(lhs, w_ref[kh, 2], preferred_element_type=jnp.float32)
        acc = acc + jnp.where(not_wl, pltpu.roll(t, shift=M - 1, axis=0), 0.0)
    return acc                                              # (M, C) f32


def _bn(y, gamma_ref, beta_ref):
    """Training-mode BatchNorm2d folded to one scale/shift (centered,
    biased variance)."""
    inv_m = 1.0 / M
    mean = jnp.sum(y, axis=0, keepdims=True) * inv_m                 # (1, C)
    yc = y - mean
    var = jnp.sum(yc * yc, axis=0, keepdims=True) * inv_m            # (1, C)
    scale = gamma_ref[...] * jax.lax.rsqrt(var + EPS)
    return yc * scale + beta_ref[...]


def resblock_kernel(x_ref, w1_ref, w2_ref, g1_ref, b1_ref, g2_ref, b2_ref,
                    alpha_ref, out_ref, p_scr):
    alpha = alpha_ref[0, 0]

    # w-boundary masks, built once and shared by both convs.
    w_idx = jax.lax.broadcasted_iota(jnp.int32, (N, H, W, C), 2).reshape(M, C)
    not_w0 = w_idx != 0
    not_wl = w_idx != W - 1

    # Scratch is uninitialized: zero exactly the two halo rows that are never
    # written; both convs reuse this zero border.
    zrow = jnp.zeros((N, 1, W, C), jnp.bfloat16)
    p_scr[:, 0:1] = zrow
    p_scr[:, HP - 1:HP] = zrow

    # ---- conv1 -> bn1 -> PReLU ---------------------------------------------
    p_scr[:, 1:H + 1] = x_ref[...].astype(jnp.bfloat16)     # aligned store
    y1 = _conv3x3(p_scr, w1_ref, not_w0, not_wl)
    y1 = _bn(y1, g1_ref, b1_ref)
    act = jnp.where(y1 >= 0.0, y1, alpha * y1)              # PReLU, scalar a

    # ---- conv2 -> bn2 -------------------------------------------------------
    p_scr[:, 1:H + 1] = act.reshape(N, H, W, C).astype(jnp.bfloat16)
    y2 = _conv3x3(p_scr, w2_ref, not_w0, not_wl)
    y2 = _bn(y2, g2_ref, b2_ref)

    # ---- residual add, single full-block store ------------------------------
    out_ref[...] = (y2 + x_ref[...].reshape(M, C)).reshape(N, H, W, C)


@jax.jit
def residual_block(x_nchw, w1, w2, g1, b1, g2, b2, alpha):
    """x_nchw: (N, 64, H, W) f32.  w1, w2 in PyTorch layout (Cout, Cin, 3, 3).

    NOTE: in a full SR network the NCHW<->NHWC transposes and the weight pack
    would be hoisted out of the hot path (activations kept NHWC between
    blocks, weights packed once at init); kept here for a self-contained demo.
    """
    x = jnp.transpose(x_nchw, (0, 2, 3, 1)).astype(jnp.float32)      # NHWC

    def pack(w):
        # (Cout, Cin, kh, kw) -> (kh, kw, Cin, Cout), bf16 MXU rhs per tap
        return jnp.transpose(w, (2, 3, 1, 0)).astype(jnp.bfloat16)

    w1p, w2p = pack(w1), pack(w2)
    g1r = g1.reshape(1, C).astype(jnp.float32)
    b1r = b1.reshape(1, C).astype(jnp.float32)
    g2r = g2.reshape(1, C).astype(jnp.float32)
    b2r = b2.reshape(1, C).astype(jnp.float32)
    alpha2d = jnp.asarray(alpha, jnp.float32).reshape(1, 1)

    out_nhwc = pl.pallas_call(
        resblock_kernel,
        out_shape=jax.ShapeDtypeStruct((N, H, W, C), jnp.float32),
        grid=(1,),
        in_specs=[
            pl.BlockSpec((N, H, W, C), lambda i: (0, 0, 0, 0)),     # x (NHWC)
            pl.BlockSpec((3, 3, C, C), lambda i: (0, 0, 0, 0)),     # conv1 w
            pl.BlockSpec((3, 3, C, C), lambda i: (0, 0, 0, 0)),     # conv2 w
            pl.BlockSpec((1, C), lambda i: (0, 0)),                 # bn1 gamma
            pl.BlockSpec((1, C), lambda i: (0, 0)),                 # bn1 beta
            pl.BlockSpec((1, C), lambda i: (0, 0)),                 # bn2 gamma
            pl.BlockSpec((1, C), lambda i: (0, 0)),                 # bn2 beta
            pl.BlockSpec((1, 1), lambda i: (0, 0),
                         memory_space=pltpu.MemorySpace.SMEM),      # PReLU a
        ],
        out_specs=pl.BlockSpec((N, H, W, C), lambda i: (0, 0, 0, 0)),
        scratch_shapes=[
            pltpu.VMEM((N, HP, W, C), jnp.bfloat16),    # halo-padded staging
        ],
        compiler_params=pltpu.CompilerParams(
            dimension_semantics=("arbitrary",)),
    )(x, w1p, w2p, g1r, b1r, g2r, b2r, alpha2d)

    return jnp.transpose(out_nhwc, (0, 3, 1, 2))                     # NCHW


def _reference(x, w1, w2, g1, b1, g2, b2, alpha):
    """Pure-JAX (XLA) reference with identical training-mode semantics."""
    def conv(z, w):
        return jax.lax.conv_general_dilated(
            z, w, window_strides=(1, 1), padding="SAME",
            dimension_numbers=("NCHW", "OIHW", "NCHW"))

    def bn(y, g, b):
        mu = jnp.mean(y, axis=(0, 2, 3), keepdims=True)
        var = jnp.mean((y - mu) ** 2, axis=(0, 2, 3), keepdims=True)
        return (y - mu) * jax.lax.rsqrt(var + EPS) * g.reshape(1, C, 1, 1) \
               + b.reshape(1, C, 1, 1)

    r = bn(conv(x, w1), g1, b1)
    r = jnp.where(r >= 0.0, r, alpha * r)
    r = bn(conv(r, w2), g2, b2)
    return r + x


if __name__ == "__main__":
    key = jax.random.PRNGKey(0)
    kx, k1, k2 = jax.random.split(key, 3)

    # deterministic synthetic parameters (shapes fixed by the module __init__)
    x = jax.random.normal(kx, (N, C, H, W), jnp.float32)
    std = (2.0 / (C * 9)) ** 0.5                                     # kaiming-like
    w1 = jax.random.normal(k1, (C, C, 3, 3), jnp.float32) * std
    w2 = jax.random.normal(k2, (C, C, 3, 3), jnp.float32) * std
    g1 = jnp.ones((C,), jnp.float32); b1 = jnp.zeros((C,), jnp.float32)
    g2 = jnp.ones((C,), jnp.float32); b2 = jnp.zeros((C,), jnp.float32)
    alpha = jnp.float32(0.2)                                         # PReLU init

    out = residual_block(x, w1, w2, g1, b1, g2, b2, alpha)
    jax.block_until_ready(out)
    assert out.shape == (N, C, H, W) and out.dtype == jnp.float32

    ref = _reference(x, w1, w2, g1, b1, g2, b2, alpha)
    err = float(jnp.max(jnp.abs(out - ref)))
    assert err < 1e-1, f"max abs error vs reference too large: {err}"

    print("KERNEL_OK")
</pallas_src>

<mosaic_0001>
module attributes {stable_mosaic.version = 11 : i64} {
  func.func @resblock_kernel(%arg0: i32, %arg1: memref<2x16x16x64xf32, #tpu.memory_space<vmem>>, %arg2: memref<3x3x64x64xbf16, #tpu.memory_space<vmem>>, %arg3: memref<3x3x64x64xbf16, #tpu.memory_space<vmem>>, %arg4: memref<1x64xf32, #tpu.memory_space<vmem>>, %arg5: memref<1x64xf32, #tpu.memory_space<vmem>>, %arg6: memref<1x64xf32, #tpu.memory_space<vmem>>, %arg7: memref<1x64xf32, #tpu.memory_space<vmem>>, %arg8: memref<1x1xf32, #tpu.memory_space<smem>>, %arg9: memref<2x16x16x64xf32, #tpu.memory_space<vmem>>, %arg10: memref<2x18x16x64xbf16, #tpu.memory_space<vmem>>) attributes {dimension_semantics = [#tpu.dimension_semantics<arbitrary>], iteration_bounds = array<i64: 1>, scalar_prefetch = 0 : i64, scratch_operands = 1 : i64, tpu.core_type = #tpu.core_type<tc>, window_params = [{pipeline_mode = #tpu.pipeline_mode<synchronous>, transform_indices = @transform_0, window_bounds = array<i64: 2, 16, 16, 64>}, {pipeline_mode = #tpu.pipeline_mode<synchronous>, transform_indices = @transform_1, window_bounds = array<i64: 3, 3, 64, 64>}, {pipeline_mode = #tpu.pipeline_mode<synchronous>, transform_indices = @transform_2, window_bounds = array<i64: 3, 3, 64, 64>}, {pipeline_mode = #tpu.pipeline_mode<synchronous>, transform_indices = @transform_3, window_bounds = array<i64: 1, 64>}, {pipeline_mode = #tpu.pipeline_mode<synchronous>, transform_indices = @transform_4, window_bounds = array<i64: 1, 64>}, {pipeline_mode = #tpu.pipeline_mode<synchronous>, transform_indices = @transform_5, window_bounds = array<i64: 1, 64>}, {pipeline_mode = #tpu.pipeline_mode<synchronous>, transform_indices = @transform_6, window_bounds = array<i64: 1, 64>}, {transform_indices = @transform_7, window_bounds = array<i64: 1, 1>}, {pipeline_mode = #tpu.pipeline_mode<synchronous>, transform_indices = @transform_8, window_bounds = array<i64: 2, 16, 16, 64>}]} {
    %c0 = arith.constant 0 : index
    %c0_0 = arith.constant 0 : index
    %0 = memref.load %arg8[%c0, %c0_0] : memref<1x1xf32, #tpu.memory_space<smem>>
    %1 = tpu.iota {dimensions = array<i32: 2>} : vector<2x16x16x64xi32>
    %2 = vector.shape_cast %1 : vector<2x16x16x64xi32> to vector<512x64xi32>
    %c0_i32 = arith.constant 0 : i32
    %3 = vector.broadcast %c0_i32 : i32 to vector<512x64xi32>
    %4 = arith.cmpi ne, %2, %3 : vector<512x64xi32>
    %c15_i32 = arith.constant 15 : i32
    %5 = vector.broadcast %c15_i32 : i32 to vector<512x64xi32>
    %6 = arith.cmpi ne, %2, %5 : vector<512x64xi32>
    %cst = arith.constant 0.000000e+00 : bf16
    %7 = vector.broadcast %cst : bf16 to vector<2x1x16x64xbf16>
    %c0_1 = arith.constant 0 : index
    %c0_2 = arith.constant 0 : index
    %c0_3 = arith.constant 0 : index
    %c0_4 = arith.constant 0 : index
    %8 = vector.load %arg10[%c0_1, %c0_2, %c0_3, %c0_4] : memref<2x18x16x64xbf16, #tpu.memory_space<vmem>>, vector<2x1x16x64xbf16>
    tpu.vector_store %arg10[%c0_1, %c0_2, %c0_3, %c0_4], %7 {strides = array<i32>} : memref<2x18x16x64xbf16, #tpu.memory_space<vmem>>, vector<2x1x16x64xbf16>,
    %c0_5 = arith.constant 0 : index
    %c17 = arith.constant 17 : index
    %c0_6 = arith.constant 0 : index
    %c0_7 = arith.constant 0 : index
    %9 = vector.load %arg10[%c0_5, %c17, %c0_6, %c0_7] : memref<2x18x16x64xbf16, #tpu.memory_space<vmem>>, vector<2x1x16x64xbf16>
    tpu.vector_store %arg10[%c0_5, %c17, %c0_6, %c0_7], %7 {strides = array<i32>} : memref<2x18x16x64xbf16, #tpu.memory_space<vmem>>, vector<2x1x16x64xbf16>,
    %c0_8 = arith.constant 0 : index
    %c0_9 = arith.constant 0 : index
    %c0_10 = arith.constant 0 : index
    %c0_11 = arith.constant 0 : index
    %10 = vector.load %arg1[%c0_8, %c0_9, %c0_10, %c0_11] : memref<2x16x16x64xf32, #tpu.memory_space<vmem>>, vector<2x16x16x64xf32>
    %11 = arith.truncf %10 : vector<2x16x16x64xf32> to vector<2x16x16x64xbf16>
    %c0_12 = arith.constant 0 : index
    %c1 = arith.constant 1 : index
    %c0_13 = arith.constant 0 : index
    %c0_14 = arith.constant 0 : index
    %12 = vector.load %arg10[%c0_12, %c1, %c0_13, %c0_14] : memref<2x18x16x64xbf16, #tpu.memory_space<vmem>>, vector<2x16x16x64xbf16>
    tpu.vector_store %arg10[%c0_12, %c1, %c0_13, %c0_14], %11 {strides = array<i32>} : memref<2x18x16x64xbf16, #tpu.memory_space<vmem>>, vector<2x16x16x64xbf16>,
    %c0_15 = arith.constant 0 : index
    %c0_16 = arith.constant 0 : index
    %c0_17 = arith.constant 0 : index
    %c0_18 = arith.constant 0 : index
    %13 = vector.load %arg10[%c0_15, %c0_16, %c0_17, %c0_18] : memref<2x18x16x64xbf16, #tpu.memory_space<vmem>>, vector<2x16x16x64xbf16>
    %14 = vector.shape_cast %13 : vector<2x16x16x64xbf16> to vector<512x64xbf16>
    %c0_19 = arith.constant 0 : index
    %c1_20 = arith.constant 1 : index
    %c0_21 = arith.constant 0 : index
    %c0_22 = arith.constant 0 : index
    %15 = vector.load %arg2[%c0_19, %c1_20, %c0_21, %c0_22] : memref<3x3x64x64xbf16, #tpu.memory_space<vmem>>, vector<1x1x64x64xbf16>
    %16 = vector.shape_cast %15 : vector<1x1x64x64xbf16> to vector<64x64xbf16>
    %cst_23 = arith.constant dense<0.000000e+00> : vector<512x64xf32>
    %17 = tpu.matmul %14, %16, %cst_23 {dimension_numbers = #tpu.dot_dimension_numbers<[1], [0], [0], [1], [0, 0, 1, 1], [], []>} : vector<512x64xbf16>, vector<64x64xbf16>, vector<512x64xf32> -> vector<512x64xf32>
    %c0_24 = arith.constant 0 : index
    %c0_25 = arith.constant 0 : index
    %c0_26 = arith.constant 0 : index
    %c0_27 = arith.constant 0 : index
    %18 = vector.load %arg2[%c0_24, %c0_25, %c0_26, %c0_27] : memref<3x3x64x64xbf16, #tpu.memory_space<vmem>>, vector<1x1x64x64xbf16>
    %19 = vector.shape_cast %18 : vector<1x1x64x64xbf16> to vector<64x64xbf16>
    %cst_28 = arith.constant dense<0.000000e+00> : vector<512x64xf32>
    %20 = tpu.matmul %14, %19, %cst_28 {dimension_numbers = #tpu.dot_dimension_numbers<[1], [0], [0], [1], [0, 0, 1, 1], [], []>} : vector<512x64xbf16>, vector<64x64xbf16>, vector<512x64xf32> -> vector<512x64xf32>
    %c1_i32 = arith.constant 1 : i32
    %21 = tpu.dynamic_rotate %20 by %c1_i32 dim 0 : vector<512x64xf32>, i32 -> vector<512x64xf32>
    %cst_29 = arith.constant 0.000000e+00 : f32
    %22 = vector.broadcast %cst_29 : f32 to vector<512x64xf32>
    %23 = arith.select %4, %21, %22 : vector<512x64xi1>, vector<512x64xf32>
    %24 = arith.addf %17, %23 : vector<512x64xf32>
    %c0_30 = arith.constant 0 : index
    %c2 = arith.constant 2 : index
    %c0_31 = arith.constant 0 : index
    %c0_32 = arith.constant 0 : index
    %25 = vector.load %arg2[%c0_30, %c2, %c0_31, %c0_32] : memref<3x3x64x64xbf16, #tpu.memory_space<vmem>>, vector<1x1x64x64xbf16>
    %26 = vector.shape_cast %25 : vector<1x1x64x64xbf16> to vector<64x64xbf16>
    %cst_33 = arith.constant dense<0.000000e+00> : vector<512x64xf32>
    %27 = tpu.matmul %14, %26, %cst_33 {dimension_numbers = #tpu.dot_dimension_numbers<[1], [0], [0], [1], [0, 0, 1, 1], [], []>} : vector<512x64xbf16>, vector<64x64xbf16>, vector<512x64xf32> -> vector<512x64xf32>
    %c511_i32 = arith.constant 511 : i32
    %28 = tpu.dynamic_rotate %27 by %c511_i32 dim 0 : vector<512x64xf32>, i32 -> vector<512x64xf32>
    %cst_34 = arith.constant 0.000000e+00 : f32
    %29 = vector.broadcast %cst_34 : f32 to vector<512x64xf32>
    %30 = arith.select %6, %28, %29 : vector<512x64xi1>, vector<512x64xf32>
    %31 = arith.addf %24, %30 : vector<512x64xf32>
    %c0_35 = arith.constant 0 : index
    %c1_36 = arith.constant 1 : index
    %c0_37 = arith.constant 0 : index
    %c0_38 = arith.constant 0 : index
    %32 = vector.load %arg10[%c0_35, %c1_36, %c0_37, %c0_38] : memref<2x18x16x64xbf16, #tpu.memory_space<vmem>>, vector<2x16x16x64xbf16>
    %33 = vector.shape_cast %32 : vector<2x16x16x64xbf16> to vector<512x64xbf16>
    %c1_39 = arith.constant 1 : index
    %c1_40 = arith.constant 1 : index
    %c0_41 = arith.constant 0 : index
    %c0_42 = arith.constant 0 : index
    %34 = vector.load %arg2[%c1_39, %c1_40, %c0_41, %c0_42] : memref<3x3x64x64xbf16, #tpu.memory_space<vmem>>, vector<1x1x64x64xbf16>
    %35 = vector.shape_cast %34 : vector<1x1x64x64xbf16> to vector<64x64xbf16>
    %cst_43 = arith.constant dense<0.000000e+00> : vector<512x64xf32>
    %36 = tpu.matmul %33, %35, %cst_43 {dimension_numbers = #tpu.dot_dimension_numbers<[1], [0], [0], [1], [0, 0, 1, 1], [], []>} : vector<512x64xbf16>, vector<64x64xbf16>, vector<512x64xf32> -> vector<512x64xf32>
    %37 = arith.addf %31, %36 : vector<512x64xf32>
    %c1_44 = arith.constant 1 : index
    %c0_45 = arith.constant 0 : index
    %c0_46 = arith.constant 0 : index
    %c0_47 = arith.constant 0 : index
    %38 = vector.load %arg2[%c1_44, %c0_45, %c0_46, %c0_47] : memref<3x3x64x64xbf16, #tpu.memory_space<vmem>>, vector<1x1x64x64xbf16>
    %39 = vector.shape_cast %38 : vector<1x1x64x64xbf16> to vector<64x64xbf16>
    %cst_48 = arith.constant dense<0.000000e+00> : vector<512x64xf32>
    %40 = tpu.matmul %33, %39, %cst_48 {dimension_numbers = #tpu.dot_dimension_numbers<[1], [0], [0], [1], [0, 0, 1, 1], [], []>} : vector<512x64xbf16>, vector<64x64xbf16>, vector<512x64xf32> -> vector<512x64xf32>
    %c1_i32_49 = arith.constant 1 : i32
    %41 = tpu.dynamic_rotate %40 by %c1_i32_49 dim 0 : vector<512x64xf32>, i32 -> vector<512x64xf32>
    %cst_50 = arith.constant 0.000000e+00 : f32
    %42 = vector.broadcast %cst_50 : f32 to vector<512x64xf32>
    %43 = arith.select %4, %41, %42 : vector<512x64xi1>, vector<512x64xf32>
    %44 = arith.addf %37, %43 : vector<512x64xf32>
    %c1_51 = arith.constant 1 : index
    %c2_52 = arith.constant 2 : index
    %c0_53 = arith.constant 0 : index
    %c0_54 = arith.constant 0 : index
    %45 = vector.load %arg2[%c1_51, %c2_52, %c0_53, %c0_54] : memref<3x3x64x64xbf16, #tpu.memory_space<vmem>>, vector<1x1x64x64xbf16>
    %46 = vector.shape_cast %45 : vector<1x1x64x64xbf16> to vector<64x64xbf16>
    %cst_55 = arith.constant dense<0.000000e+00> : vector<512x64xf32>
    %47 = tpu.matmul %33, %46, %cst_55 {dimension_numbers = #tpu.dot_dimension_numbers<[1], [0], [0], [1], [0, 0, 1, 1], [], []>} : vector<512x64xbf16>, vector<64x64xbf16>, vector<512x64xf32> -> vector<512x64xf32>
    %c511_i32_56 = arith.constant 511 : i32
    %48 = tpu.dynamic_rotate %47 by %c511_i32_56 dim 0 : vector<512x64xf32>, i32 -> vector<512x64xf32>
    %cst_57 = arith.constant 0.000000e+00 : f32
    %49 = vector.broadcast %cst_57 : f32 to vector<512x64xf32>
    %50 = arith.select %6, %48, %49 : vector<512x64xi1>, vector<512x64xf32>
    %51 = arith.addf %44, %50 : vector<512x64xf32>
    %c0_58 = arith.constant 0 : index
    %c2_59 = arith.constant 2 : index
    %c0_60 = arith.constant 0 : index
    %c0_61 = arith.constant 0 : index
    %52 = vector.load %arg10[%c0_58, %c2_59, %c0_60, %c0_61] : memref<2x18x16x64xbf16, #tpu.memory_space<vmem>>, vector<2x16x16x64xbf16>
    %53 = vector.shape_cast %52 : vector<2x16x16x64xbf16> to vector<512x64xbf16>
    %c2_62 = arith.constant 2 : index
    %c1_63 = arith.constant 1 : index
    %c0_64 = arith.constant 0 : index
    %c0_65 = arith.constant 0 : index
    %54 = vector.load %arg2[%c2_62, %c1_63, %c0_64, %c0_65] : memref<3x3x64x64xbf16, #tpu.memory_space<vmem>>, vector<1x1x64x64xbf16>
    %55 = vector.shape_cast %54 : vector<1x1x64x64xbf16> to vector<64x64xbf16>
    %cst_66 = arith.constant dense<0.000000e+00> : vector<512x64xf32>
    %56 = tpu.matmul %53, %55, %cst_66 {dimension_numbers = #tpu.dot_dimension_numbers<[1], [0], [0], [1], [0, 0, 1, 1], [], []>} : vector<512x64xbf16>, vector<64x64xbf16>, vector<512x64xf32> -> vector<512x64xf32>
    %57 = arith.addf %51, %56 : vector<512x64xf32>
    %c2_67 = arith.constant 2 : index
    %c0_68 = arith.constant 0 : index
    %c0_69 = arith.constant 0 : index
    %c0_70 = arith.constant 0 : index
    %58 = vector.load %arg2[%c2_67, %c0_68, %c0_69, %c0_70] : memref<3x3x64x64xbf16, #tpu.memory_space<vmem>>, vector<1x1x64x64xbf16>
    %59 = vector.shape_cast %58 : vector<1x1x64x64xbf16> to vector<64x64xbf16>
    %cst_71 = arith.constant dense<0.000000e+00> : vector<512x64xf32>
    %60 = tpu.matmul %53, %59, %cst_71 {dimension_numbers = #tpu.dot_dimension_numbers<[1], [0], [0], [1], [0, 0, 1, 1], [], []>} : vector<512x64xbf16>, vector<64x64xbf16>, vector<512x64xf32> -> vector<512x64xf32>
    %c1_i32_72 = arith.constant 1 : i32
    %61 = tpu.dynamic_rotate %60 by %c1_i32_72 dim 0 : vector<512x64xf32>, i32 -> vector<512x64xf32>
    %cst_73 = arith.constant 0.000000e+00 : f32
    %62 = vector.broadcast %cst_73 : f32 to vector<512x64xf32>
    %63 = arith.select %4, %61, %62 : vector<512x64xi1>, vector<512x64xf32>
    %64 = arith.addf %57, %63 : vector<512x64xf32>
    %c2_74 = arith.constant 2 : index
    %c2_75 = arith.constant 2 : index
    %c0_76 = arith.constant 0 : index
    %c0_77 = arith.constant 0 : index
    %65 = vector.load %arg2[%c2_74, %c2_75, %c0_76, %c0_77] : memref<3x3x64x64xbf16, #tpu.memory_space<vmem>>, vector<1x1x64x64xbf16>
    %66 = vector.shape_cast %65 : vector<1x1x64x64xbf16> to vector<64x64xbf16>
    %cst_78 = arith.constant dense<0.000000e+00> : vector<512x64xf32>
    %67 = tpu.matmul %53, %66, %cst_78 {dimension_numbers = #tpu.dot_dimension_numbers<[1], [0], [0], [1], [0, 0, 1, 1], [], []>} : vector<512x64xbf16>, vector<64x64xbf16>, vector<512x64xf32> -> vector<512x64xf32>
    %c511_i32_79 = arith.constant 511 : i32
    %68 = tpu.dynamic_rotate %67 by %c511_i32_79 dim 0 : vector<512x64xf32>, i32 -> vector<512x64xf32>
    %cst_80 = arith.constant 0.000000e+00 : f32
    %69 = vector.broadcast %cst_80 : f32 to vector<512x64xf32>
    %70 = arith.select %6, %68, %69 : vector<512x64xi1>, vector<512x64xf32>
    %71 = arith.addf %64, %70 : vector<512x64xf32>
    %cst_81 = arith.constant dense<0.000000e+00> : vector<64xf32>
    %72 = vector.multi_reduction <add>, %71, %cst_81 [0] : vector<512x64xf32> to vector<64xf32>
    %73 = vector.shape_cast %72 : vector<64xf32> to vector<1x64xf32>
    %cst_82 = arith.constant 0.001953125 : f32
    %74 = vector.broadcast %cst_82 : f32 to vector<1x64xf32>
    %75 = arith.mulf %73, %74 : vector<1x64xf32>
    %76 = vector.broadcast %75 : vector<1x64xf32> to vector<512x64xf32>
    %77 = arith.subf %71, %76 : vector<512x64xf32>
    %78 = arith.mulf %77, %77 : vector<512x64xf32>
    %cst_83 = arith.constant dense<0.000000e+00> : vector<64xf32>
    %79 = vector.multi_reduction <add>, %78, %cst_83 [0] : vector<512x64xf32> to vector<64xf32>
    %80 = vector.shape_cast %79 : vector<64xf32> to vector<1x64xf32>
    %cst_84 = arith.constant 0.001953125 : f32
    %81 = vector.broadcast %cst_84 : f32 to vector<1x64xf32>
    %82 = arith.mulf %80, %81 : vector<1x64xf32>
    %c0_85 = arith.constant 0 : index
    %c0_86 = arith.constant 0 : index
    %83 = vector.load %arg4[%c0_85, %c0_86] : memref<1x64xf32, #tpu.memory_space<vmem>>, vector<1x64xf32>
    %cst_87 = arith.constant 9.99999974E-6 : f32
    %84 = vector.broadcast %cst_87 : f32 to vector<1x64xf32>
    %85 = arith.addf %82, %84 : vector<1x64xf32>
    %86 = math.rsqrt %85 : vector<1x64xf32>
    %87 = arith.mulf %83, %86 : vector<1x64xf32>
    %88 = vector.broadcast %87 : vector<1x64xf32> to vector<512x64xf32>
    %89 = arith.mulf %77, %88 : vector<512x64xf32>
    %c0_88 = arith.constant 0 : index
    %c0_89 = arith.constant 0 : index
    %90 = vector.load %arg5[%c0_88, %c0_89] : memref<1x64xf32, #tpu.memory_space<vmem>>, vector<1x64xf32>
    %91 = vector.broadcast %90 : vector<1x64xf32> to vector<512x64xf32>
    %92 = arith.addf %89, %91 : vector<512x64xf32>
    %cst_90 = arith.constant 0.000000e+00 : f32
    %93 = vector.broadcast %cst_90 : f32 to vector<512x64xf32>
    %94 = arith.cmpf oge, %92, %93 : vector<512x64xf32>
    %95 = vector.broadcast %0 : f32 to vector<512x64xf32>
    %96 = arith.mulf %95, %92 : vector<512x64xf32>
    %97 = arith.select %94, %92, %96 : vector<512x64xi1>, vector<512x64xf32>
    %98 = vector.shape_cast %97 : vector<512x64xf32> to vector<2x16x16x64xf32>
    %99 = arith.truncf %98 : vector<2x16x16x64xf32> to vector<2x16x16x64xbf16>
    %c0_91 = arith.constant 0 : index
    %c1_92 = arith.constant 1 : index
    %c0_93 = arith.constant 0 : index
    %c0_94 = arith.constant 0 : index
    %100 = vector.load %arg10[%c0_91, %c1_92, %c0_93, %c0_94] : memref<2x18x16x64xbf16, #tpu.memory_space<vmem>>, vector<2x16x16x64xbf16>
    tpu.vector_store %arg10[%c0_91, %c1_92, %c0_93, %c0_94], %99 {strides = array<i32>} : memref<2x18x16x64xbf16, #tpu.memory_space<vmem>>, vector<2x16x16x64xbf16>,
    %c0_95 = arith.constant 0 : index
    %c0_96 = arith.constant 0 : index
    %c0_97 = arith.constant 0 : index
    %c0_98 = arith.constant 0 : index
    %101 = vector.load %arg10[%c0_95, %c0_96, %c0_97, %c0_98] : memref<2x18x16x64xbf16, #tpu.memory_space<vmem>>, vector<2x16x16x64xbf16>
    %102 = vector.shape_cast %101 : vector<2x16x16x64xbf16> to vector<512x64xbf16>
    %c0_99 = arith.constant 0 : index
    %c1_100 = arith.constant 1 : index
    %c0_101 = arith.constant 0 : index
    %c0_102 = arith.constant 0 : index
    %103 = vector.load %arg3[%c0_99, %c1_100, %c0_101, %c0_102] : memref<3x3x64x64xbf16, #tpu.memory_space<vmem>>, vector<1x1x64x64xbf16>
    %104 = vector.shape_cast %103 : vector<1x1x64x64xbf16> to vector<64x64xbf16>
    %cst_103 = arith.constant dense<0.000000e+00> : vector<512x64xf32>
    %105 = tpu.matmul %102, %104, %cst_103 {dimension_numbers = #tpu.dot_dimension_numbers<[1], [0], [0], [1], [0, 0, 1, 1], [], []>} : vector<512x64xbf16>, vector<64x64xbf16>, vector<512x64xf32> -> vector<512x64xf32>
    %c0_104 = arith.constant 0 : index
    %c0_105 = arith.constant 0 : index
    %c0_106 = arith.constant 0 : index
    %c0_107 = arith.constant 0 : index
    %106 = vector.load %arg3[%c0_104, %c0_105, %c0_106, %c0_107] : memref<3x3x64x64xbf16, #tpu.memory_space<vmem>>, vector<1x1x64x64xbf16>
    %107 = vector.shape_cast %106 : vector<1x1x64x64xbf16> to vector<64x64xbf16>
    %cst_108 = arith.constant dense<0.000000e+00> : vector<512x64xf32>
    %108 = tpu.matmul %102, %107, %cst_108 {dimension_numbers = #tpu.dot_dimension_numbers<[1], [0], [0], [1], [0, 0, 1, 1], [], []>} : vector<512x64xbf16>, vector<64x64xbf16>, vector<512x64xf32> -> vector<512x64xf32>
    %c1_i32_109 = arith.constant 1 : i32
    %109 = tpu.dynamic_rotate %108 by %c1_i32_109 dim 0 : vector<512x64xf32>, i32 -> vector<512x64xf32>
    %cst_110 = arith.constant 0.000000e+00 : f32
    %110 = vector.broadcast %cst_110 : f32 to vector<512x64xf32>
    %111 = arith.select %4, %109, %110 : vector<512x64xi1>, vector<512x64xf32>
    %112 = arith.addf %105, %111 : vector<512x64xf32>
    %c0_111 = arith.constant 0 : index
    %c2_112 = arith.constant 2 : index
    %c0_113 = arith.constant 0 : index
    %c0_114 = arith.constant 0 : index
    %113 = vector.load %arg3[%c0_111, %c2_112, %c0_113, %c0_114] : memref<3x3x64x64xbf16, #tpu.memory_space<vmem>>, vector<1x1x64x64xbf16>
    %114 = vector.shape_cast %113 : vector<1x1x64x64xbf16> to vector<64x64xbf16>
    %cst_115 = arith.constant dense<0.000000e+00> : vector<512x64xf32>
    %115 = tpu.matmul %102, %114, %cst_115 {dimension_numbers = #tpu.dot_dimension_numbers<[1], [0], [0], [1], [0, 0, 1, 1], [], []>} : vector<512x64xbf16>, vector<64x64xbf16>, vector<512x64xf32> -> vector<512x64xf32>
    %c511_i32_116 = arith.constant 511 : i32
    %116 = tpu.dynamic_rotate %115 by %c511_i32_116 dim 0 : vector<512x64xf32>, i32 -> vector<512x64xf32>
    %cst_117 = arith.constant 0.000000e+00 : f32
    %117 = vector.broadcast %cst_117 : f32 to vector<512x64xf32>
    %118 = arith.select %6, %116, %117 : vector<512x64xi1>, vector<512x64xf32>
    %119 = arith.addf %112, %118 : vector<512x64xf32>
    %c0_118 = arith.constant 0 : index
    %c1_119 = arith.constant 1 : index
    %c0_120 = arith.constant 0 : index
    %c0_121 = arith.constant 0 : index
    %120 = vector.load %arg10[%c0_118, %c1_119, %c0_120, %c0_121] : memref<2x18x16x64xbf16, #tpu.memory_space<vmem>>, vector<2x16x16x64xbf16>
    %121 = vector.shape_cast %120 : vector<2x16x16x64xbf16> to vector<512x64xbf16>
    %c1_122 = arith.constant 1 : index
    %c1_123 = arith.constant 1 : index
    %c0_124 = arith.constant 0 : index
    %c0_125 = arith.constant 0 : index
    %122 = vector.load %arg3[%c1_122, %c1_123, %c0_124, %c0_125] : memref<3x3x64x64xbf16, #tpu.memory_space<vmem>>, vector<1x1x64x64xbf16>
    %123 = vector.shape_cast %122 : vector<1x1x64x64xbf16> to vector<64x64xbf16>
    %cst_126 = arith.constant dense<0.000000e+00> : vector<512x64xf32>
    %124 = tpu.matmul %121, %123, %cst_126 {dimension_numbers = #tpu.dot_dimension_numbers<[1], [0], [0], [1], [0, 0, 1, 1], [], []>} : vector<512x64xbf16>, vector<64x64xbf16>, vector<512x64xf32> -> vector<512x64xf32>
    %125 = arith.addf %119, %124 : vector<512x64xf32>
    %c1_127 = arith.constant 1 : index
    %c0_128 = arith.constant 0 : index
    %c0_129 = arith.constant 0 : index
    %c0_130 = arith.constant 0 : index
    %126 = vector.load %arg3[%c1_127, %c0_128, %c0_129, %c0_130] : memref<3x3x64x64xbf16, #tpu.memory_space<vmem>>, vector<1x1x64x64xbf16>
    %127 = vector.shape_cast %126 : vector<1x1x64x64xbf16> to vector<64x64xbf16>
    %cst_131 = arith.constant dense<0.000000e+00> : vector<512x64xf32>
    %128 = tpu.matmul %121, %127, %cst_131 {dimension_numbers = #tpu.dot_dimension_numbers<[1], [0], [0], [1], [0, 0, 1, 1], [], []>} : vector<512x64xbf16>, vector<64x64xbf16>, vector<512x64xf32> -> vector<512x64xf32>
    %c1_i32_132 = arith.constant 1 : i32
    %129 = tpu.dynamic_rotate %128 by %c1_i32_132 dim 0 : vector<512x64xf32>, i32 -> vector<512x64xf32>
    %cst_133 = arith.constant 0.000000e+00 : f32
    %130 = vector.broadcast %cst_133 : f32 to vector<512x64xf32>
    %131 = arith.select %4, %129, %130 : vector<512x64xi1>, vector<512x64xf32>
    %132 = arith.addf %125, %131 : vector<512x64xf32>
    %c1_134 = arith.constant 1 : index
    %c2_135 = arith.constant 2 : index
    %c0_136 = arith.constant 0 : index
    %c0_137 = arith.constant 0 : index
    %133 = vector.load %arg3[%c1_134, %c2_135, %c0_136, %c0_137] : memref<3x3x64x64xbf16, #tpu.memory_space<vmem>>, vector<1x1x64x64xbf16>
    %134 = vector.shape_cast %133 : vector<1x1x64x64xbf16> to vector<64x64xbf16>
    %cst_138 = arith.constant dense<0.000000e+00> : vector<512x64xf32>
    %135 = tpu.matmul %121, %134, %cst_138 {dimension_numbers = #tpu.dot_dimension_numbers<[1], [0], [0], [1], [0, 0, 1, 1], [], []>} : vector<512x64xbf16>, vector<64x64xbf16>, vector<512x64xf32> -> vector<512x64xf32>
    %c511_i32_139 = arith.constant 511 : i32
    %136 = tpu.dynamic_rotate %135 by %c511_i32_139 dim 0 : vector<512x64xf32>, i32 -> vector<512x64xf32>
    %cst_140 = arith.constant 0.000000e+00 : f32
    %137 = vector.broadcast %cst_140 : f32 to vector<512x64xf32>
    %138 = arith.select %6, %136, %137 : vector<512x64xi1>, vector<512x64xf32>
    %139 = arith.addf %132, %138 : vector<512x64xf32>
    %c0_141 = arith.constant 0 : index
    %c2_142 = arith.constant 2 : index
    %c0_143 = arith.constant 0 : index
    %c0_144 = arith.constant 0 : index
    %140 = vector.load %arg10[%c0_141, %c2_142, %c0_143, %c0_144] : memref<2x18x16x64xbf16, #tpu.memory_space<vmem>>, vector<2x16x16x64xbf16>
    %141 = vector.shape_cast %140 : vector<2x16x16x64xbf16> to vector<512x64xbf16>
    %c2_145 = arith.constant 2 : index
    %c1_146 = arith.constant 1 : index
    %c0_147 = arith.constant 0 : index
    %c0_148 = arith.constant 0 : index
    %142 = vector.load %arg3[%c2_145, %c1_146, %c0_147, %c0_148] : memref<3x3x64x64xbf16, #tpu.memory_space<vmem>>, vector<1x1x64x64xbf16>
    %143 = vector.shape_cast %142 : vector<1x1x64x64xbf16> to vector<64x64xbf16>
    %cst_149 = arith.constant dense<0.000000e+00> : vector<512x64xf32>
    %144 = tpu.matmul %141, %143, %cst_149 {dimension_numbers = #tpu.dot_dimension_numbers<[1], [0], [0], [1], [0, 0, 1, 1], [], []>} : vector<512x64xbf16>, vector<64x64xbf16>, vector<512x64xf32> -> vector<512x64xf32>
    %145 = arith.addf %139, %144 : vector<512x64xf32>
    %c2_150 = arith.constant 2 : index
    %c0_151 = arith.constant 0 : index
    %c0_152 = arith.constant 0 : index
    %c0_153 = arith.constant 0 : index
    %146 = vector.load %arg3[%c2_150, %c0_151, %c0_152, %c0_153] : memref<3x3x64x64xbf16, #tpu.memory_space<vmem>>, vector<1x1x64x64xbf16>
    %147 = vector.shape_cast %146 : vector<1x1x64x64xbf16> to vector<64x64xbf16>
    %cst_154 = arith.constant dense<0.000000e+00> : vector<512x64xf32>
    %148 = tpu.matmul %141, %147, %cst_154 {dimension_numbers = #tpu.dot_dimension_numbers<[1], [0], [0], [1], [0, 0, 1, 1], [], []>} : vector<512x64xbf16>, vector<64x64xbf16>, vector<512x64xf32> -> vector<512x64xf32>
    %c1_i32_155 = arith.constant 1 : i32
    %149 = tpu.dynamic_rotate %148 by %c1_i32_155 dim 0 : vector<512x64xf32>, i32 -> vector<512x64xf32>
    %cst_156 = arith.constant 0.000000e+00 : f32
    %150 = vector.broadcast %cst_156 : f32 to vector<512x64xf32>
    %151 = arith.select %4, %149, %150 : vector<512x64xi1>, vector<512x64xf32>
    %152 = arith.addf %145, %151 : vector<512x64xf32>
    %c2_157 = arith.constant 2 : index
    %c2_158 = arith.constant 2 : index
    %c0_159 = arith.constant 0 : index
    %c0_160 = arith.constant 0 : index
    %153 = vector.load %arg3[%c2_157, %c2_158, %c0_159, %c0_160] : memref<3x3x64x64xbf16, #tpu.memory_space<vmem>>, vector<1x1x64x64xbf16>
    %154 = vector.shape_cast %153 : vector<1x1x64x64xbf16> to vector<64x64xbf16>
    %cst_161 = arith.constant dense<0.000000e+00> : vector<512x64xf32>
    %155 = tpu.matmul %141, %154, %cst_161 {dimension_numbers = #tpu.dot_dimension_numbers<[1], [0], [0], [1], [0, 0, 1, 1], [], []>} : vector<512x64xbf16>, vector<64x64xbf16>, vector<512x64xf32> -> vector<512x64xf32>
    %c511_i32_162 = arith.constant 511 : i32
    %156 = tpu.dynamic_rotate %155 by %c511_i32_162 dim 0 : vector<512x64xf32>, i32 -> vector<512x64xf32>
    %cst_163 = arith.constant 0.000000e+00 : f32
    %157 = vector.broadcast %cst_163 : f32 to vector<512x64xf32>
    %158 = arith.select %6, %156, %157 : vector<512x64xi1>, vector<512x64xf32>
    %159 = arith.addf %152, %158 : vector<512x64xf32>
    %cst_164 = arith.constant dense<0.000000e+00> : vector<64xf32>
    %160 = vector.multi_reduction <add>, %159, %cst_164 [0] : vector<512x64xf32> to vector<64xf32>
    %161 = vector.shape_cast %160 : vector<64xf32> to vector<1x64xf32>
    %cst_165 = arith.constant 0.001953125 : f32
    %162 = vector.broadcast %cst_165 : f32 to vector<1x64xf32>
    %163 = arith.mulf %161, %162 : vector<1x64xf32>
    %164 = vector.broadcast %163 : vector<1x64xf32> to vector<512x64xf32>
    %165 = arith.subf %159, %164 : vector<512x64xf32>
    %166 = arith.mulf %165, %165 : vector<512x64xf32>
    %cst_166 = arith.constant dense<0.000000e+00> : vector<64xf32>
    %167 = vector.multi_reduction <add>, %166, %cst_166 [0] : vector<512x64xf32> to vector<64xf32>
    %168 = vector.shape_cast %167 : vector<64xf32> to vector<1x64xf32>
    %cst_167 = arith.constant 0.001953125 : f32
    %169 = vector.broadcast %cst_167 : f32 to vector<1x64xf32>
    %170 = arith.mulf %168, %169 : vector<1x64xf32>
    %c0_168 = arith.constant 0 : index
    %c0_169 = arith.constant 0 : index
    %171 = vector.load %arg6[%c0_168, %c0_169] : memref<1x64xf32, #tpu.memory_space<vmem>>, vector<1x64xf32>
    %cst_170 = arith.constant 9.99999974E-6 : f32
    %172 = vector.broadcast %cst_170 : f32 to vector<1x64xf32>
    %173 = arith.addf %170, %172 : vector<1x64xf32>
    %174 = math.rsqrt %173 : vector<1x64xf32>
    %175 = arith.mulf %171, %174 : vector<1x64xf32>
    %176 = vector.broadcast %175 : vector<1x64xf32> to vector<512x64xf32>
    %177 = arith.mulf %165, %176 : vector<512x64xf32>
    %c0_171 = arith.constant 0 : index
    %c0_172 = arith.constant 0 : index
    %178 = vector.load %arg7[%c0_171, %c0_172] : memref<1x64xf32, #tpu.memory_space<vmem>>, vector<1x64xf32>
    %179 = vector.broadcast %178 : vector<1x64xf32> to vector<512x64xf32>
    %180 = arith.addf %177, %179 : vector<512x64xf32>
    %c0_173 = arith.constant 0 : index
    %c0_174 = arith.constant 0 : index
    %c0_175 = arith.constant 0 : index
    %c0_176 = arith.constant 0 : index
    %181 = vector.load %arg1[%c0_173, %c0_174, %c0_175, %c0_176] : memref<2x16x16x64xf32, #tpu.memory_space<vmem>>, vector<2x16x16x64xf32>
    %182 = vector.shape_cast %181 : vector<2x16x16x64xf32> to vector<512x64xf32>
    %183 = arith.addf %180, %182 : vector<512x64xf32>
    %184 = vector.shape_cast %183 : vector<512x64xf32> to vector<2x16x16x64xf32>
    %c0_177 = arith.constant 0 : index
    %c0_178 = arith.constant 0 : index
    %c0_179 = arith.constant 0 : index
    %c0_180 = arith.constant 0 : index
    %185 = vector.load %arg9[%c0_177, %c0_178, %c0_179, %c0_180] : memref<2x16x16x64xf32, #tpu.memory_space<vmem>>, vector<2x16x16x64xf32>
    tpu.vector_store %arg9[%c0_177, %c0_178, %c0_179, %c0_180], %184 {strides = array<i32>} : memref<2x16x16x64xf32, #tpu.memory_space<vmem>>, vector<2x16x16x64xf32>,
    return
  }
  func.func @transform_0(%arg0: i32) -> (i32, i32, i32, i32) {
    %c0_i32 = arith.constant 0 : i32
    %c0_i32_0 = arith.constant 0 : i32
    %c0_i32_1 = arith.constant 0 : i32
    %c0_i32_2 = arith.constant 0 : i32
    %c0_i32_3 = arith.constant 0 : i32
    return %c0_i32, %c0_i32_0, %c0_i32_1, %c0_i32_2 : i32, i32, i32, i32
  }
  func.func @transform_1(%arg0: i32) -> (i32, i32, i32, i32) {
    %c0_i32 = arith.constant 0 : i32
    %c0_i32_0 = arith.constant 0 : i32
    %c0_i32_1 = arith.constant 0 : i32
    %c0_i32_2 = arith.constant 0 : i32
    %c0_i32_3 = arith.constant 0 : i32
    return %c0_i32, %c0_i32_0, %c0_i32_1, %c0_i32_2 : i32, i32, i32, i32
  }
  func.func @transform_2(%arg0: i32) -> (i32, i32, i32, i32) {
    %c0_i32 = arith.constant 0 : i32
    %c0_i32_0 = arith.constant 0 : i32
    %c0_i32_1 = arith.constant 0 : i32
    %c0_i32_2 = arith.constant 0 : i32
    %c0_i32_3 = arith.constant 0 : i32
    return %c0_i32, %c0_i32_0, %c0_i32_1, %c0_i32_2 : i32, i32, i32, i32
  }
  func.func @transform_3(%arg0: i32) -> (i32, i32) {
    %c0_i32 = arith.constant 0 : i32
    %c0_i32_0 = arith.constant 0 : i32
    %c0_i32_1 = arith.constant 0 : i32
    return %c0_i32, %c0_i32_0 : i32, i32
  }
  func.func @transform_4(%arg0: i32) -> (i32, i32) {
    %c0_i32 = arith.constant 0 : i32
    %c0_i32_0 = arith.constant 0 : i32
    %c0_i32_1 = arith.constant 0 : i32
    return %c0_i32, %c0_i32_0 : i32, i32
  }
  func.func @transform_5(%arg0: i32) -> (i32, i32) {
    %c0_i32 = arith.constant 0 : i32
    %c0_i32_0 = arith.constant 0 : i32
    %c0_i32_1 = arith.constant 0 : i32
    return %c0_i32, %c0_i32_0 : i32, i32
  }
  func.func @transform_6(%arg0: i32) -> (i32, i32) {
    %c0_i32 = arith.constant 0 : i32
    %c0_i32_0 = arith.constant 0 : i32
    %c0_i32_1 = arith.constant 0 : i32
    return %c0_i32, %c0_i32_0 : i32, i32
  }
  func.func @transform_7(%arg0: i32) -> (i32, i32) {
    %c0_i32 = arith.constant 0 : i32
    %c0_i32_0 = arith.constant 0 : i32
    %c0_i32_1 = arith.constant 0 : i32
    return %c0_i32, %c0_i32_0 : i32, i32
  }
  func.func @transform_8(%arg0: i32) -> (i32, i32, i32, i32) {
    %c0_i32 = arith.constant 0 : i32
    %c0_i32_0 = arith.constant 0 : i32
    %c0_i32_1 = arith.constant 0 : i32
    %c0_i32_2 = arith.constant 0 : i32
    %c0_i32_3 = arith.constant 0 : i32
    return %c0_i32, %c0_i32_0, %c0_i32_1, %c0_i32_2 : i32, i32, i32, i32
  }
}

</mosaic_0001>

<llo_original>
// kernel: residual_block.1
$region0: #{residual_block.1}
  #allocation0 [shape = 'u32[]', space=smem, size = 0x4, offset = 0x4, fixed_abs, tag = 'smem constant byte address 0x4 - core index']
  #allocation1 [shape = 'u32[144,128]{1,0:T(1,128)}', space=vmem, size = 0x12000, scoped, tag = 'internal scratch']
  #allocation2 [shape = 'bf16[2,18,16,64]{3,2,1,0:T(16,128)(2,1)}', space=vmem, size = 0x24000, scoped, tag = 'scratch operand']
  #allocation3 [shape = 'f32[1,1]{1,0:T(1,128)S(6)}', space=smem, size = 0x200, scoped, tag = 'scoped memory for residual_block.1']
  %s0 = inlined_call_operand.vmem [shape: f32[2,16,16,64], index: 0, kind: input, shape index: {}]
  %s1 = inlined_call_operand.vmem [shape: bf16[3,3,64,64], index: 1, kind: input, shape index: {}]
  %s2 = inlined_call_operand.vmem [shape: bf16[3,3,64,64], index: 2, kind: input, shape index: {}]
  %s3 = inlined_call_operand.vmem [shape: f32[1,64], index: 3, kind: input, shape index: {}]
  %s4 = inlined_call_operand.vmem [shape: f32[1,64], index: 4, kind: input, shape index: {}]
  %s5 = inlined_call_operand.vmem [shape: f32[1,64], index: 5, kind: input, shape index: {}]
  %s6 = inlined_call_operand.vmem [shape: f32[1,64], index: 6, kind: input, shape index: {}]
  %s7 = inlined_call_operand.<no memory space> [shape: f32[1,1], index: 7, kind: input, shape index: {}]
  %s8 = inlined_call_operand.hbm [shape: f32[2,16,16,64], index: 8, kind: output, shape index: {}]
  %s9 = sld [smem:[#allocation0]]
  $region42: #{residual_block.1} parent=0
    _
  %s11 = ssub.s32 1, %s9
  %s12 = scalar_select 0, %s11, %s9
  %13 = sst [smem:[#allocation3]] %s7
  $region1: #{residual_block.1} parent=0
    #allocation4 [shape = 'u8[262144]{0}', space=vmem, size = 0x40000, scoped, tag = 'output window, operand 0, single buffered']
    #allocation5 [shape = 's32[1]{0}', space=sflag, size = 0x4, scoped, tag = 'scoped memory for residual_block.1']
    %14 = vsyncpa [#allocation5], 0
    // Predicated region
    $region2: #{residual_block.1} parent=1 // pred_check
      _
    $region3: #{residual_block.1} parent=1 // pred_check_branch
      %16 = sbr.rel (0) target = $region5
    $region4: #{residual_block.1} parent=1 // pred_region
      _
    $region5: #{residual_block.1} parent=1 // pred_fallthru
      _
    // Predicated region
    $region6: #{residual_block.1} parent=1 // pred_check
      _
    $region7: #{residual_block.1} parent=1 // pred_check_branch
      %18 = sbr.rel (0) target = $region9
    $region8: #{residual_block.1} parent=1 // pred_region
      _
    $region9: #{residual_block.1} parent=1 // pred_fallthru
      _
    // Predicated region
    $region10: #{residual_block.1} parent=1 // pred_check
      _
    $region11: #{residual_block.1} parent=1 // pred_check_branch
      %20 = sbr.rel (0) target = $region13
    $region12: #{residual_block.1} parent=1 // pred_region
      _
    $region13: #{residual_block.1} parent=1 // pred_fallthru
      _
    // Predicated region
    $region14: #{residual_block.1} parent=1 // pred_check
      _
    $region15: #{residual_block.1} parent=1 // pred_check_branch
      %22 = sbr.rel (0) target = $region17
    $region16: #{residual_block.1} parent=1 // pred_region
      _
    $region17: #{residual_block.1} parent=1 // pred_fallthru
      _
    // Predicated region
    $region18: #{residual_block.1} parent=1 // pred_check
      _
    $region19: #{residual_block.1} parent=1 // pred_check_branch
      %24 = sbr.rel (0) target = $region21
    $region20: #{residual_block.1} parent=1 // pred_region
      _
    $region21: #{residual_block.1} parent=1 // pred_fallthru
      _
    // Predicated region
    $region22: #{residual_block.1} parent=1 // pred_check
      _
    $region23: #{residual_block.1} parent=1 // pred_check_branch
      %26 = sbr.rel (0) target = $region25
    $region24: #{residual_block.1} parent=1 // pred_region
      _
    $region25: #{residual_block.1} parent=1 // pred_fallthru
      _
    // Predicated region
    $region26: #{residual_block.1} parent=1 // pred_check
      _
    $region27: #{residual_block.1} parent=1 // pred_check_branch
      %28 = sbr.rel (0) target = $region29
    $region28: #{residual_block.1} parent=1 // pred_region
      _
    $region29: #{residual_block.1} parent=1 // pred_fallthru
      _
    // Predicated region
    $region30: #{residual_block.1} parent=1 // pred_check
      _
    $region31: #{residual_block.1} parent=1 // pred_check_branch
      %30 = sbr.rel (0) target = $region33
    $region32: #{residual_block.1} parent=1 // pred_region
      _
    $region33: #{residual_block.1} parent=1 // pred_fallthru
      _
    %s32 = sld [smem:[#allocation3]]
    %v33 = vlaneseq
    %v34 = vshrl.u32 %v33, 7
    %v35 = vadd.s32 %v34, 8
    %vm36 = vcmp.ne.s32.totalorder %v34, 0
    %vm37 = vcmp.ne.s32.totalorder %v35, 0
    %vm38 = vcmp.ne.s32.totalorder %v34, 15
    %vm39 = vcmp.ne.s32.totalorder %v35, 15
    %vm40 = vcmask 523264
    %41 = vst.msk [vmem:[#allocation2] sm:$0xff] %vm40, 0
    %42 = vst.msk [vmem:[#allocation2 + $0x90] sm:$0xff] %vm40, 0
    %s43 = scalar_lea.vmem [#allocation2], 136
    %44 = vst.msk [vmem:[%s43] sm:$0xff] %vm40, 0
    %45 = vst.msk [vmem:[%s43 + $0x90] sm:$0xff] %vm40, 0
    %v46 = vld [vmem:[%s0] sm:$0xff]
    %v47 = vld [vmem:[%s0 + $0x8] sm:$0xff]
    %v48 = vld [vmem:[%s0 + $0x10] sm:$0xff]
    %v49 = vld [vmem:[%s0 + $0x18] sm:$0xff]
    %v50 = vld [vmem:[%s0 + $0x20] sm:$0xff]
    %v51 = vld [vmem:[%s0 + $0x28] sm:$0xff]
    %v52 = vld [vmem:[%s0 + $0x30] sm:$0xff]
    %v53 = vld [vmem:[%s0 + $0x38] sm:$0xff]
    %v54 = vld [vmem:[%s0 + $0x40] sm:$0xff]
    %v55 = vld [vmem:[%s0 + $0x48] sm:$0xff]
    %v56 = vld [vmem:[%s0 + $0x50] sm:$0xff]
    %v57 = vld [vmem:[%s0 + $0x58] sm:$0xff]
    %v58 = vld [vmem:[%s0 + $0x60] sm:$0xff]
    %v59 = vld [vmem:[%s0 + $0x68] sm:$0xff]
    %v60 = vld [vmem:[%s0 + $0x70] sm:$0xff]
    %v61 = vld [vmem:[%s0 + $0x78] sm:$0xff]
    %v62 = vld [vmem:[%s0 + $0x80] sm:$0xff]
    %v63 = vld [vmem:[%s0 + $0x88] sm:$0xff]
    %v64 = vld [vmem:[%s0 + $0x90] sm:$0xff]
    %v65 = vld [vmem:[%s0 + $0x98] sm:$0xff]
    %v66 = vld [vmem:[%s0 + $0xa0] sm:$0xff]
    %v67 = vld [vmem:[%s0 + $0xa8] sm:$0xff]
    %v68 = vld [vmem:[%s0 + $0xb0] sm:$0xff]
    %v69 = vld [vmem:[%s0 + $0xb8] sm:$0xff]
    %v70 = vld [vmem:[%s0 + $0xc0] sm:$0xff]
    %v71 = vld [vmem:[%s0 + $0xc8] sm:$0xff]
    %v72 = vld [vmem:[%s0 + $0xd0] sm:$0xff]
    %v73 = vld [vmem:[%s0 + $0xd8] sm:$0xff]
    %v74 = vld [vmem:[%s0 + $0xe0] sm:$0xff]
    %v75 = vld [vmem:[%s0 + $0xe8] sm:$0xff]
    %v76 = vld [vmem:[%s0 + $0xf0] sm:$0xff]
    %v77 = vld [vmem:[%s0 + $0xf8] sm:$0xff]
    %v78 = vld [vmem:[%s0 + $0x100] sm:$0xff]
    %v79 = vld [vmem:[%s0 + $0x108] sm:$0xff]
    %v80 = vld [vmem:[%s0 + $0x110] sm:$0xff]
    %v81 = vld [vmem:[%s0 + $0x118] sm:$0xff]
    %v82 = vld [vmem:[%s0 + $0x120] sm:$0xff]
    %v83 = vld [vmem:[%s0 + $0x128] sm:$0xff]
    %v84 = vld [vmem:[%s0 + $0x130] sm:$0xff]
    %v85 = vld [vmem:[%s0 + $0x138] sm:$0xff]
    %v86 = vld [vmem:[%s0 + $0x140] sm:$0xff]
    %v87 = vld [vmem:[%s0 + $0x148] sm:$0xff]
    %v88 = vld [vmem:[%s0 + $0x150] sm:$0xff]
    %v89 = vld [vmem:[%s0 + $0x158] sm:$0xff]
    %v90 = vld [vmem:[%s0 + $0x160] sm:$0xff]
    %v91 = vld [vmem:[%s0 + $0x168] sm:$0xff]
    %v92 = vld [vmem:[%s0 + $0x170] sm:$0xff]
    %v93 = vld [vmem:[%s0 + $0x178] sm:$0xff]
    %v94 = vld [vmem:[%s0 + $0x180] sm:$0xff]
    %v95 = vld [vmem:[%s0 + $0x188] sm:$0xff]
    %v96 = vld [vmem:[%s0 + $0x190] sm:$0xff]
    %v97 = vld [vmem:[%s0 + $0x198] sm:$0xff]
    %v98 = vld [vmem:[%s0 + $0x1a0] sm:$0xff]
    %v99 = vld [vmem:[%s0 + $0x1a8] sm:$0xff]
    %v100 = vld [vmem:[%s0 + $0x1b0] sm:$0xff]
    %v101 = vld [vmem:[%s0 + $0x1b8] sm:$0xff]
    %v102 = vld [vmem:[%s0 + $0x1c0] sm:$0xff]
    %v103 = vld [vmem:[%s0 + $0x1c8] sm:$0xff]
    %v104 = vld [vmem:[%s0 + $0x1d0] sm:$0xff]
    %v105 = vld [vmem:[%s0 + $0x1d8] sm:$0xff]
    %v106 = vld [vmem:[%s0 + $0x1e0] sm:$0xff]
    %v107 = vld [vmem:[%s0 + $0x1e8] sm:$0xff]
    %v108 = vld [vmem:[%s0 + $0x1f0] sm:$0xff]
    %v109 = vld [vmem:[%s0 + $0x1f8] sm:$0xff]
    %v110 = vpack.c.bf16 %v47, %v46
    %v111 = vpack.c.bf16 %v49, %v48
    %v112 = vpack.c.bf16 %v51, %v50
    %v113 = vpack.c.bf16 %v53, %v52
    %v114 = vpack.c.bf16 %v55, %v54
    %v115 = vpack.c.bf16 %v57, %v56
    %v116 = vpack.c.bf16 %v59, %v58
    %v117 = vpack.c.bf16 %v61, %v60
    %v118 = vpack.c.bf16 %v63, %v62
    %v119 = vpack.c.bf16 %v65, %v64
    %v120 = vpack.c.bf16 %v67, %v66
    %v121 = vpack.c.bf16 %v69, %v68
    %v122 = vpack.c.bf16 %v71, %v70
    %v123 = vpack.c.bf16 %v73, %v72
    %v124 = vpack.c.bf16 %v75, %v74
    %v125 = vpack.c.bf16 %v77, %v76
    %v126 = vpack.c.bf16 %v79, %v78
    %v127 = vpack.c.bf16 %v81, %v80
    %v128 = vpack.c.bf16 %v83, %v82
    %v129 = vpack.c.bf16 %v85, %v84
    %v130 = vpack.c.bf16 %v87, %v86
    %v131 = vpack.c.bf16 %v89, %v88
    %v132 = vpack.c.bf16 %v91, %v90
    %v133 = vpack.c.bf16 %v93, %v92
    %v134 = vpack.c.bf16 %v95, %v94
    %v135 = vpack.c.bf16 %v97, %v96
    %v136 = vpack.c.bf16 %v99, %v98
    %v137 = vpack.c.bf16 %v101, %v100
    %v138 = vpack.c.bf16 %v103, %v102
    %v139 = vpack.c.bf16 %v105, %v104
    %v140 = vpack.c.bf16 %v107, %v106
    %v141 = vpack.c.bf16 %v109, %v108
    %s142 = scalar_lea.vmem [#allocation2], 8
    %143 = vst.msk [vmem:[%s142] sm:$0xff] %vm40, %v110
    %144 = vst.msk [vmem:[%s142 + $0x8] sm:$0xff] %vm40, %v111
    %145 = vst.msk [vmem:[%s142 + $0x10] sm:$0xff] %vm40, %v112
    %146 = vst.msk [vmem:[%s142 + $0x18] sm:$0xff] %vm40, %v113
    %147 = vst.msk [vmem:[%s142 + $0x20] sm:$0xff] %vm40, %v114
    %148 = vst.msk [vmem:[%s142 + $0x28] sm:$0xff] %vm40, %v115
    %149 = vst.msk [vmem:[%s142 + $0x30] sm:$0xff] %vm40, %v116
    %150 = vst.msk [vmem:[%s142 + $0x38] sm:$0xff] %vm40, %v117
    %151 = vst.msk [vmem:[%s142 + $0x40] sm:$0xff] %vm40, %v118
    %152 = vst.msk [vmem:[%s142 + $0x48] sm:$0xff] %vm40, %v119
    %153 = vst.msk [vmem:[%s142 + $0x50] sm:$0xff] %vm40, %v120
    %154 = vst.msk [vmem:[%s142 + $0x58] sm:$0xff] %vm40, %v121
    %155 = vst.msk [vmem:[%s142 + $0x60] sm:$0xff] %vm40, %v122
    %156 = vst.msk [vmem:[%s142 + $0x68] sm:$0xff] %vm40, %v123
    %157 = vst.msk [vmem:[%s142 + $0x70] sm:$0xff] %vm40, %v124
    %158 = vst.msk [vmem:[%s142 + $0x78] sm:$0xff] %vm40, %v125
    %159 = vst.msk [vmem:[%s142 + $0x90] sm:$0xff] %vm40, %v126
    %160 = vst.msk [vmem:[%s142 + $0x98] sm:$0xff] %vm40, %v127
    %161 = vst.msk [vmem:[%s142 + $0xa0] sm:$0xff] %vm40, %v128
    %162 = vst.msk [vmem:[%s142 + $0xa8] sm:$0xff] %vm40, %v129
    %163 = vst.msk [vmem:[%s142 + $0xb0] sm:$0xff] %vm40, %v130
    %164 = vst.msk [vmem:[%s142 + $0xb8] sm:$0xff] %vm40, %v131
    %165 = vst.msk [vmem:[%s142 + $0xc0] sm:$0xff] %vm40, %v132
    %166 = vst.msk [vmem:[%s142 + $0xc8] sm:$0xff] %vm40, %v133
    %167 = vst.msk [vmem:[%s142 + $0xd0] sm:$0xff] %vm40, %v134
    %168 = vst.msk [vmem:[%s142 + $0xd8] sm:$0xff] %vm40, %v135
    %169 = vst.msk [vmem:[%s142 + $0xe0] sm:$0xff] %vm40, %v136
    %170 = vst.msk [vmem:[%s142 + $0xe8] sm:$0xff] %vm40, %v137
    %171 = vst.msk [vmem:[%s142 + $0xf0] sm:$0xff] %vm40, %v138
    %172 = vst.msk [vmem:[%s142 + $0xf8] sm:$0xff] %vm40, %v139
    %173 = vst.msk [vmem:[%s142 + $0x100] sm:$0xff] %vm40, %v140
    %174 = vst.msk [vmem:[%s142 + $0x108] sm:$0xff] %vm40, %v141
    %v175 = vld [vmem:[#allocation2] sm:$0xff]
    %v176 = vld [vmem:[#allocation2 + $0x8] sm:$0xff]
    %v177 = vld [vmem:[#allocation2 + $0x10] sm:$0xff]
    %v178 = vld [vmem:[#allocation2 + $0x18] sm:$0xff]
    %v179 = vld [vmem:[#allocation2 + $0x20] sm:$0xff]
    %v180 = vld [vmem:[#allocation2 + $0x28] sm:$0xff]
    %v181 = vld [vmem:[#allocation2 + $0x30] sm:$0xff]
    %v182 = vld [vmem:[#allocation2 + $0x38] sm:$0xff]
    %v183 = vld [vmem:[#allocation2 + $0x40] sm:$0xff]
    %v184 = vld [vmem:[#allocation2 + $0x48] sm:$0xff]
    %v185 = vld [vmem:[#allocation2 + $0x50] sm:$0xff]
    %v186 = vld [vmem:[#allocation2 + $0x58] sm:$0xff]
    %v187 = vld [vmem:[#allocation2 + $0x60] sm:$0xff]
    %v188 = vld [vmem:[#allocation2 + $0x68] sm:$0xff]
    %v189 = vld [vmem:[#allocation2 + $0x70] sm:$0xff]
    %v190 = vld [vmem:[#allocation2 + $0x78] sm:$0xff]
    %v191 = vld [vmem:[#allocation2 + $0x90] sm:$0xff]
    %v192 = vld [vmem:[#allocation2 + $0x98] sm:$0xff]
    %v193 = vld [vmem:[#allocation2 + $0xa0] sm:$0xff]
    %v194 = vld [vmem:[#allocation2 + $0xa8] sm:$0xff]
    %v195 = vld [vmem:[#allocation2 + $0xb0] sm:$0xff]
    %v196 = vld [vmem:[#allocation2 + $0xb8] sm:$0xff]
    %v197 = vld [vmem:[#allocation2 + $0xc0] sm:$0xff]
    %v198 = vld [vmem:[#allocation2 + $0xc8] sm:$0xff]
    %v199 = vld [vmem:[#allocation2 + $0xd0] sm:$0xff]
    %v200 = vld [vmem:[#allocation2 + $0xd8] sm:$0xff]
    %v201 = vld [vmem:[#allocation2 + $0xe0] sm:$0xff]
    %v202 = vld [vmem:[#allocation2 + $0xe8] sm:$0xff]
    %v203 = vld [vmem:[#allocation2 + $0xf0] sm:$0xff]
    %v204 = vld [vmem:[#allocation2 + $0xf8] sm:$0xff]
    %v205 = vld [vmem:[#allocation2 + $0x100] sm:$0xff]
    %v206 = vld [vmem:[#allocation2 + $0x108] sm:$0xff]
    %s207 = scalar_lea.vmem %s1, 32
    %v208 = vld [vmem:[%s207] sm:$0xf]
    %v209 = vld [vmem:[%s207 + $0x4] sm:$0xf]
    %v210 = vld [vmem:[%s207 + $0x8] sm:$0xf]
    %v211 = vld [vmem:[%s207 + $0xc] sm:$0xf]
    %v212 = vld [vmem:[%s207 + $0x10] sm:$0xf]
    %v213 = vld [vmem:[%s207 + $0x14] sm:$0xf]
    %v214 = vld [vmem:[%s207 + $0x18] sm:$0xf]
    %v215 = vld [vmem:[%s207 + $0x1c] sm:$0xf]
    %v216 = vld [vmem:[%s1] sm:$0xf]
    %v217 = vld [vmem:[%s1 + $0x4] sm:$0xf]
    %v218 = vld [vmem:[%s1 + $0x8] sm:$0xf]
    %v219 = vld [vmem:[%s1 + $0xc] sm:$0xf]
    %v220 = vld [vmem:[%s1 + $0x10] sm:$0xf]
    %v221 = vld [vmem:[%s1 + $0x14] sm:$0xf]
    %v222 = vld [vmem:[%s1 + $0x18] sm:$0xf]
    %v223 = vld [vmem:[%s1 + $0x1c] sm:$0xf]
    %v232 = vunpack.c.l.b16 %v216
    %v233 = vunpack.c.l.b16 %v217
    %v234 = vunpack.c.l.b16 %v218
    %v235 = vunpack.c.l.b16 %v219
    %v236 = vunpack.c.l.b16 %v220
    %v237 = vunpack.c.l.b16 %v221
    %v238 = vunpack.c.l.b16 %v222
    %v239 = vunpack.c.l.b16 %v223
    %v240 = vpack.c.b16 %v233, %v232
    %v241 = vpack.c.b16 %v235, %v234
    %v242 = vpack.c.b16 %v237, %v236
    %v243 = vpack.c.b16 %v239, %v238
    %v249 = vsel %vm40, %v175, 0
    %v252 = vsel %vm40, %v176, 0
    %v255 = vsel %vm40, %v177, 0
    %v258 = vsel %vm40, %v178, 0
    %v261 = vsel %vm40, %v179, 0
    %v264 = vsel %vm40, %v180, 0
    %v267 = vsel %vm40, %v181, 0
    %v270 = vsel %vm40, %v182, 0
    %v273 = vsel %vm40, %v183, 0
    %v276 = vsel %vm40, %v184, 0
    %v279 = vsel %vm40, %v185, 0
    %v282 = vsel %vm40, %v186, 0
    %v285 = vsel %vm40, %v187, 0
    %v288 = vsel %vm40, %v188, 0
    %v291 = vsel %vm40, %v189, 0
    %v294 = vsel %vm40, %v190, 0
    %v297 = vsel %vm40, %v191, 0
    %v300 = vsel %vm40, %v192, 0
    %v303 = vsel %vm40, %v193, 0
    %v306 = vsel %vm40, %v194, 0
    %v309 = vsel %vm40, %v195, 0
    %v312 = vsel %vm40, %v196, 0
    %v315 = vsel %vm40, %v197, 0
    %v318 = vsel %vm40, %v198, 0
    %v321 = vsel %vm40, %v199, 0
    %v324 = vsel %vm40, %v200, 0
    %v327 = vsel %vm40, %v201, 0
    %v330 = vsel %vm40, %v202, 0
    %v333 = vsel %vm40, %v203, 0
    %v336 = vsel %vm40, %v204, 0
    %v339 = vsel %vm40, %v205, 0
    %v342 = vsel %vm40, %v206, 0
    %344 = vmatprep.subr.bf16.mxu0 0
    %345 = vmatpush1.bf16.msra.mxu0 %v240
    %346 = vmatprep.subr.bf16.mxu0 0
    %347 = vmatpush1.bf16.msra.mxu0 %v241
    %348 = vmatprep.subr.bf16.mxu0 0
    %349 = vmatpush1.bf16.msra.mxu0 %v242
    %350 = vmatprep.subr.bf16.mxu0 0
    %351 = vmatpush1.bf16.msra.mxu0 %v243
    %352 = vmatprep.subr.bf16.mxu0 0
    %353 = vmatpush1.bf16.msra.mxu0 0
    %354 = vmatprep.subr.bf16.mxu0 0
    %355 = vmatpush1.bf16.msra.mxu0 0
    %356 = vmatprep.subr.bf16.mxu0 0
    %357 = vmatpush1.bf16.msra.mxu0 0
    %358 = vmatprep.subr.bf16.mxu0 0
    %359 = vmatpush1.bf16.msra.mxu0 0
    %360 = vmatprep.subr.bf16.mxu0 0
    %361 = vmatpush1.bf16.msra.mxu0 0
    %362 = vmatprep.subr.bf16.mxu0 0
    %363 = vmatpush1.bf16.msra.mxu0 0
    %364 = vmatprep.subr.bf16.mxu0 0
    %365 = vmatpush1.bf16.msra.mxu0 0
    %366 = vmatprep.subr.bf16.mxu0 0
    %367 = vmatpush1.bf16.msra.mxu0 0
    %368 = vmatprep.subr.bf16.mxu0 0
    %369 = vmatpush1.bf16.msra.mxu0 0
    %370 = vmatprep.subr.bf16.mxu0 0
    %371 = vmatpush1.bf16.msra.mxu0 0
    %372 = vmatprep.subr.bf16.mxu0 0
    %373 = vmatpush1.bf16.msra.mxu0 0
    %374 = vmatprep.subr.bf16.mxu0 0
    %375 = vmatpush1.bf16.msra.mxu0 0
    %376 = vmatprep.mubr.bf16.mxu0 0
    %377 = vmatmul.mubr.bf16.gmra.mrb[0].mxu0 %v249
    %v378 = vpop.f32.mrb[0].mxu0
    %v379 = vadd.f32 0.0, %v378
    %v380 = vpop.f32.mrb[0].mxu0
    %v381 = vpop.f32.mrb[0].mxu0
    %v382 = vadd.f32 0.0, %v381
    %v383 = vpop.f32.mrb[0].mxu0
    %384 = vmatprep.mubr.bf16.mxu0 0
    %385 = vmatmul.mubr.bf16.gmra.mrb[0].mxu0 %v252
    %v386 = vpop.f32.mrb[0].mxu0
    %v387 = vadd.f32 0.0, %v386
    %v388 = vpop.f32.mrb[0].mxu0
    %v389 = vpop.f32.mrb[0].mxu0
    %v390 = vadd.f32 0.0, %v389
    %v391 = vpop.f32.mrb[0].mxu0
    %392 = vmatprep.mubr.bf16.mxu0 0
    %393 = vmatmul.mubr.bf16.gmra.mrb[0].mxu0 %v255
    %v394 = vpop.f32.mrb[0].mxu0
    %v395 = vadd.f32 0.0, %v394
    %v396 = vpop.f32.mrb[0].mxu0
    %v397 = vpop.f32.mrb[0].mxu0
    %v398 = vadd.f32 0.0, %v397
    %v399 = vpop.f32.mrb[0].mxu0
    %400 = vmatprep.mubr.bf16.mxu0 0
    %401 = vmatmul.mubr.bf16.gmra.mrb[0].mxu0 %v258
    %v402 = vpop.f32.mrb[0].mxu0
    %v403 = vadd.f32 0.0, %v402
    %v404 = vpop.f32.mrb[0].mxu0
    %v405 = vpop.f32.mrb[0].mxu0
    %v406 = vadd.f32 0.0, %v405
    %v407 = vpop.f32.mrb[0].mxu0
    %408 = vmatprep.mubr.bf16.mxu0 0
    %409 = vmatmul.mubr.bf16.gmra.mrb[0].mxu0 %v261
    %v410 = vpop.f32.mrb[0].mxu0
    %v411 = vadd.f32 0.0, %v410
    %v412 = vpop.f32.mrb[0].mxu0
    %v413 = vpop.f32.mrb[0].mxu0
    %v414 = vadd.f32 0.0, %v413
    %v415 = vpop.f32.mrb[0].mxu0
    %416 = vmatprep.mubr.bf16.mxu0 0
    %417 = vmatmul.mubr.bf16.gmra.mrb[0].mxu0 %v264
    %v418 = vpop.f32.mrb[0].mxu0
    %v419 = vadd.f32 0.0, %v418
    %v420 = vpop.f32.mrb[0].mxu0
    %v421 = vpop.f32.mrb[0].mxu0
    %v422 = vadd.f32 0.0, %v421
    %v423 = vpop.f32.mrb[0].mxu0
    %424 = vmatprep.mubr.bf16.mxu0 0
    %425 = vmatmul.mubr.bf16.gmra.mrb[0].mxu0 %v267
    %v426 = vpop.f32.mrb[0].mxu0
    %v427 = vadd.f32 0.0, %v426
    %v428 = vpop.f32.mrb[0].mxu0
    %v429 = vpop.f32.mrb[0].mxu0
    %v430 = vadd.f32 0.0, %v429
    %v431 = vpop.f32.mrb[0].mxu0
    %432 = vmatprep.mubr.bf16.mxu0 0
    %433 = vmatmul.mubr.bf16.gmra.mrb[0].mxu0 %v270
    %v434 = vpop.f32.mrb[0].mxu0
    %v435 = vadd.f32 0.0, %v434
    %v436 = vpop.f32.mrb[0].mxu0
    %v437 = vpop.f32.mrb[0].mxu0
    %v438 = vadd.f32 0.0, %v437
    %v439 = vpop.f32.mrb[0].mxu0
    %440 = vmatprep.mubr.bf16.mxu0 0
    %441 = vmatmul.mubr.bf16.gmra.mrb[0].mxu0 %v273
    %v442 = vpop.f32.mrb[0].mxu0
    %v443 = vadd.f32 0.0, %v442
    %v444 = vpop.f32.mrb[0].mxu0
    %v445 = vpop.f32.mrb[0].mxu0
    %v446 = vadd.f32 0.0, %v445
    %v447 = vpop.f32.mrb[0].mxu0
    %448 = vmatprep.mubr.bf16.mxu0 0
    %449 = vmatmul.mubr.bf16.gmra.mrb[0].mxu0 %v276
    %v450 = vpop.f32.mrb[0].mxu0
    %v451 = vadd.f32 0.0, %v450
    %v452 = vpop.f32.mrb[0].mxu0
    %v453 = vpop.f32.mrb[0].mxu0
    %v454 = vadd.f32 0.0, %v453
    %v455 = vpop.f32.mrb[0].mxu0
    %456 = vmatprep.mubr.bf16.mxu0 0
    %457 = vmatmul.mubr.bf16.gmra.mrb[0].mxu0 %v279
    %v458 = vpop.f32.mrb[0].mxu0
    %v459 = vadd.f32 0.0, %v458
    %v460 = vpop.f32.mrb[0].mxu0
    %v461 = vpop.f32.mrb[0].mxu0
    %v462 = vadd.f32 0.0, %v461
    %v463 = vpop.f32.mrb[0].mxu0
    %464 = vmatprep.mubr.bf16.mxu0 0
    %465 = vmatmul.mubr.bf16.gmra.mrb[0].mxu0 %v282
    %v466 = vpop.f32.mrb[0].mxu0
    %v467 = vadd.f32 0.0, %v466
    %v468 = vpop.f32.mrb[0].mxu0
    %v469 = vpop.f32.mrb[0].mxu0
    %v470 = vadd.f32 0.0, %v469
    %v471 = vpop.f32.mrb[0].mxu0
    %472 = vmatprep.mubr.bf16.mxu0 0
    %473 = vmatmul.mubr.bf16.gmra.mrb[0].mxu0 %v285
    %v474 = vpop.f32.mrb[0].mxu0
    %v475 = vadd.f32 0.0, %v474
    %v476 = vpop.f32.mrb[0].mxu0
    %v477 = vpop.f32.mrb[0].mxu0
    %v478 = vadd.f32 0.0, %v477
    %v479 = vpop.f32.mrb[0].mxu0
    %480 = vmatprep.mubr.bf16.mxu0 0
    %481 = vmatmul.mubr.bf16.gmra.mrb[0].mxu0 %v288
    %v482 = vpop.f32.mrb[0].mxu0
    %v483 = vadd.f32 0.0, %v482
    %v484 = vpop.f32.mrb[0].mxu0
    %v485 = vpop.f32.mrb[0].mxu0
    %v486 = vadd.f32 0.0, %v485
    %v487 = vpop.f32.mrb[0].mxu0
    %488 = vmatprep.mubr.bf16.mxu0 0
    %489 = vmatmul.mubr.bf16.gmra.mrb[0].mxu0 %v291
    %v490 = vpop.f32.mrb[0].mxu0
    %v491 = vadd.f32 0.0, %v490
    %v492 = vpop.f32.mrb[0].mxu0
    %v493 = vpop.f32.mrb[0].mxu0
    %v494 = vadd.f32 0.0, %v493
    %v495 = vpop.f32.mrb[0].mxu0
    %496 = vmatprep.mubr.bf16.mxu0 0
    %497 = vmatmul.mubr.bf16.gmra.mrb[0].mxu0 %v294
    %v498 = vpop.f32.mrb[0].mxu0
    %v499 = vadd.f32 0.0, %v498
    %v500 = vpop.f32.mrb[0].mxu0
    %v501 = vpop.f32.mrb[0].mxu0
    %v502 = vadd.f32 0.0, %v501
    %v503 = vpop.f32.mrb[0].mxu0
    %504 = vmatprep.mubr.bf16.mxu0 0
    %505 = vmatmul.mubr.bf16.gmra.mrb[0].mxu0 %v297
    %v506 = vpop.f32.mrb[0].mxu0
    %v507 = vadd.f32 0.0, %v506
    %v508 = vpop.f32.mrb[0].mxu0
    %v509 = vpop.f32.mrb[0].mxu0
    %v510 = vadd.f32 0.0, %v509
    %v511 = vpop.f32.mrb[0].mxu0
    %512 = vmatprep.mubr.bf16.mxu0 0
    %513 = vmatmul.mubr.bf16.gmra.mrb[0].mxu0 %v300
    %v514 = vpop.f32.mrb[0].mxu0
    %v515 = vadd.f32 0.0, %v514
    %v516 = vpop.f32.mrb[0].mxu0
    %v517 = vpop.f32.mrb[0].mxu0
    %v518 = vadd.f32 0.0, %v517
    %v519 = vpop.f32.mrb[0].mxu0
    %520 = vmatprep.mubr.bf16.mxu0 0
    %521 = vmatmul.mubr.bf16.gmra.mrb[0].mxu0 %v303
    %v522 = vpop.f32.mrb[0].mxu0
    %v523 = vadd.f32 0.0, %v522
    %v524 = vpop.f32.mrb[0].mxu0
    %v525 = vpop.f32.mrb[0].mxu0
    %v526 = vadd.f32 0.0, %v525
    %v527 = vpop.f32.mrb[0].mxu0
    %528 = vmatprep.mubr.bf16.mxu0 0
    %529 = vmatmul.mubr.bf16.gmra.mrb[0].mxu0 %v306
    %v530 = vpop.f32.mrb[0].mxu0
    %v531 = vadd.f32 0.0, %v530
    %v532 = vpop.f32.mrb[0].mxu0
    %v533 = vpop.f32.mrb[0].mxu0
    %v534 = vadd.f32 0.0, %v533
    %v535 = vpop.f32.mrb[0].mxu0
    %536 = vmatprep.mubr.bf16.mxu0 0
    %537 = vmatmul.mubr.bf16.gmra.mrb[0].mxu0 %v309
    %v538 = vpop.f32.mrb[0].mxu0
    %v539 = vadd.f32 0.0, %v538
    %v540 = vpop.f32.mrb[0].mxu0
    %v541 = vpop.f32.mrb[0].mxu0
    %v542 = vadd.f32 0.0, %v541
    %v543 = vpop.f32.mrb[0].mxu0
    %544 = vmatprep.mubr.bf16.mxu0 0
    %545 = vmatmul.mubr.bf16.gmra.mrb[0].mxu0 %v312
    %v546 = vpop.f32.mrb[0].mxu0
    %v547 = vadd.f32 0.0, %v546
    %v548 = vpop.f32.mrb[0].mxu0
    %v549 = vpop.f32.mrb[0].mxu0
    %v550 = vadd.f32 0.0, %v549
    %v551 = vpop.f32.mrb[0].mxu0
    %552 = vmatprep.mubr.bf16.mxu0 0
    %553 = vmatmul.mubr.bf16.gmra.mrb[0].mxu0 %v315
    %v554 = vpop.f32.mrb[0].mxu0
    %v555 = vadd.f32 0.0, %v554
    %v556 = vpop.f32.mrb[0].mxu0
    %v557 = vpop.f32.mrb[0].mxu0
    %v558 = vadd.f32 0.0, %v557
    %v559 = vpop.f32.mrb[0].mxu0
    %560 = vmatprep.mubr.bf16.mxu0 0
    %561 = vmatmul.mubr.bf16.gmra.mrb[0].mxu0 %v318
    %v562 = vpop.f32.mrb[0].mxu0
    %v563 = vadd.f32 0.0, %v562
    %v564 = vpop.f32.mrb[0].mxu0
    %v565 = vpop.f32.mrb[0].mxu0
    %v566 = vadd.f32 0.0, %v565
    %v567 = vpop.f32.mrb[0].mxu0
    %568 = vmatprep.mubr.bf16.mxu0 0
    %569 = vmatmul.mubr.bf16.gmra.mrb[0].mxu0 %v321
    %v570 = vpop.f32.mrb[0].mxu0
    %v571 = vadd.f32 0.0, %v570
    %v572 = vpop.f32.mrb[0].mxu0
    %v573 = vpop.f32.mrb[0].mxu0
    %v574 = vadd.f32 0.0, %v573
    %v575 = vpop.f32.mrb[0].mxu0
    %576 = vmatprep.mubr.bf16.mxu0 0
    %577 = vmatmul.mubr.bf16.gmra.mrb[0].mxu0 %v324
    %v578 = vpop.f32.mrb[0].mxu0
    %v579 = vadd.f32 0.0, %v578
    %v580 = vpop.f32.mrb[0].mxu0
    %v581 = vpop.f32.mrb[0].mxu0
    %v582 = vadd.f32 0.0, %v581
    %v583 = vpop.f32.mrb[0].mxu0
    %584 = vmatprep.mubr.bf16.mxu0 0
    %585 = vmatmul.mubr.bf16.gmra.mrb[0].mxu0 %v327
    %v586 = vpop.f32.mrb[0].mxu0
    %v587 = vadd.f32 0.0, %v586
    %v588 = vpop.f32.mrb[0].mxu0
    %v589 = vpop.f32.mrb[0].mxu0
    %v590 = vadd.f32 0.0, %v589
    %v591 = vpop.f32.mrb[0].mxu0
    %592 = vmatprep.mubr.bf16.mxu0 0
    %593 = vmatmul.mubr.bf16.gmra.mrb[0].mxu0 %v330
    %v594 = vpop.f32.mrb[0].mxu0
    %v595 = vadd.f32 0.0, %v594
    %v596 = vpop.f32.mrb[0].mxu0
    %v597 = vpop.f32.mrb[0].mxu0
    %v598 = vadd.f32 0.0, %v597
    %v599 = vpop.f32.mrb[0].mxu0
    %600 = vmatprep.mubr.bf16.mxu0 0
    %601 = vmatmul.mubr.bf16.gmra.mrb[0].mxu0 %v333
    %v602 = vpop.f32.mrb[0].mxu0
    %v603 = vadd.f32 0.0, %v602
    %v604 = vpop.f32.mrb[0].mxu0
    %v605 = vpop.f32.mrb[0].mxu0
    %v606 = vadd.f32 0.0, %v605
    %v607 = vpop.f32.mrb[0].mxu0
    %608 = vmatprep.mubr.bf16.mxu0 0
    %609 = vmatmul.mubr.bf16.gmra.mrb[0].mxu0 %v336
    %v610 = vpop.f32.mrb[0].mxu0
    %v611 = vadd.f32 0.0, %v610
    %v612 = vpop.f32.mrb[0].mxu0
    %v613 = vpop.f32.mrb[0].mxu0
    %v614 = vadd.f32 0.0, %v613
    %v615 = vpop.f32.mrb[0].mxu0
    %616 = vmatprep.mubr.bf16.mxu0 0
    %617 = vmatmul.mubr.bf16.gmra.mrb[0].mxu0 %v339
    %v618 = vpop.f32.mrb[0].mxu0
    %v619 = vadd.f32 0.0, %v618
    %v620 = vpop.f32.mrb[0].mxu0
    %v621 = vpop.f32.mrb[0].mxu0
    %v622 = vadd.f32 0.0, %v621
    %v623 = vpop.f32.mrb[0].mxu0
    %624 = vmatprep.mubr.bf16.mxu0 0
    %625 = vmatmul.mubr.bf16.gmra.mrb[0].mxu0 %v342
    %v626 = vpop.f32.mrb[0].mxu0
    %v627 = vadd.f32 0.0, %v626
    %v628 = vpop.f32.mrb[0].mxu0
    %v629 = vpop.f32.mrb[0].mxu0
    %v630 = vadd.f32 0.0, %v629
    %v631 = vpop.f32.mrb[0].mxu0
    %632 = vdwg.mxu0
    %v633 = vrot.slane %v379, 7
    %v634 = vrot.slane %v382, 7
    %v635 = vrot.slane %v387, 7
    %v636 = vrot.slane %v390, 7
    %v637 = vrot.slane %v395, 7
    %v638 = vrot.slane %v398, 7
    %v639 = vrot.slane %v403, 7
    %v640 = vrot.slane %v406, 7
    %v641 = vrot.slane %v411, 7
    %v642 = vrot.slane %v414, 7
    %v643 = vrot.slane %v419, 7
    %v644 = vrot.slane %v422, 7
    %v645 = vrot.slane %v427, 7
    %v646 = vrot.slane %v430, 7
    %v647 = vrot.slane %v435, 7
    %v648 = vrot.slane %v438, 7
    %v649 = vrot.slane %v443, 7
    %v650 = vrot.slane %v446, 7
    %v651 = vrot.slane %v451, 7
    %v652 = vrot.slane %v454, 7
    %v653 = vrot.slane %v459, 7
    %v654 = vrot.slane %v462, 7
    %v655 = vrot.slane %v467, 7
    %v656 = vrot.slane %v470, 7
    %v657 = vrot.slane %v475, 7
    %v658 = vrot.slane %v478, 7
    %v659 = vrot.slane %v483, 7
    %v660 = vrot.slane %v486, 7
    %v661 = vrot.slane %v491, 7
    %v662 = vrot.slane %v494, 7
    %v663 = vrot.slane %v499, 7
    %v664 = vrot.slane %v502, 7
    %v665 = vrot.slane %v507, 7
    %v666 = vrot.slane %v510, 7
    %v667 = vrot.slane %v515, 7
    %v668 = vrot.slane %v518, 7
    %v669 = vrot.slane %v523, 7
    %v670 = vrot.slane %v526, 7
    %v671 = vrot.slane %v531, 7
    %v672 = vrot.slane %v534, 7
    %v673 = vrot.slane %v539, 7
    %v674 = vrot.slane %v542, 7
    %v675 = vrot.slane %v547, 7
    %v676 = vrot.slane %v550, 7
    %v677 = vrot.slane %v555, 7
    %v678 = vrot.slane %v558, 7
    %v679 = vrot.slane %v563, 7
    %v680 = vrot.slane %v566, 7
    %v681 = vrot.slane %v571, 7
    %v682 = vrot.slane %v574, 7
    %v683 = vrot.slane %v579, 7
    %v684 = vrot.slane %v582, 7
    %v685 = vrot.slane %v587, 7
    %v686 = vrot.slane %v590, 7
    %v687 = vrot.slane %v595, 7
    %v688 = vrot.slane %v598, 7
    %v689 = vrot.slane %v603, 7
    %v690 = vrot.slane %v606, 7
    %v691 = vrot.slane %v611, 7
    %v692 = vrot.slane %v614, 7
    %v693 = vrot.slane %v619, 7
    %v694 = vrot.slane %v622, 7
    %v695 = vrot.slane %v627, 7
    %v696 = vrot.slane %v630, 7
    %vm697 = vcmp.lt.s32.totalorder %v34, 1
    %v698 = vsel %vm697, %v695, %v696
    %v699 = vsel %vm697, %v694, %v695
    %v700 = vsel %vm697, %v693, %v694
    %v701 = vsel %vm697, %v692, %v693
    %v702 = vsel %vm697, %v691, %v692
    %v703 = vsel %vm697, %v690, %v691
    %v704 = vsel %vm697, %v689, %v690
    %v705 = vsel %vm697, %v688, %v689
    %v706 = vsel %vm697, %v687, %v688
    %v707 = vsel %vm697, %v686, %v687
    %v708 = vsel %vm697, %v685, %v686
    %v709 = vsel %vm697, %v684, %v685
    %v710 = vsel %vm697, %v683, %v684
    %v711 = vsel %vm697, %v682, %v683
    %v712 = vsel %vm697, %v681, %v682
    %v713 = vsel %vm697, %v680, %v681
    %v714 = vsel %vm697, %v679, %v680
    %v715 = vsel %vm697, %v678, %v679
    %v716 = vsel %vm697, %v677, %v678
    %v717 = vsel %vm697, %v676, %v677
    %v718 = vsel %vm697, %v675, %v676
    %v719 = vsel %vm697, %v674, %v675
    %v720 = vsel %vm697, %v673, %v674
    %v721 = vsel %vm697, %v672, %v673
    %v722 = vsel %vm697, %v671, %v672
    %v723 = vsel %vm697, %v670, %v671
    %v724 = vsel %vm697, %v669, %v670
    %v725 = vsel %vm697, %v668, %v669
    %v726 = vsel %vm697, %v667, %v668
    %v727 = vsel %vm697, %v666, %v667
    %v728 = vsel %vm697, %v665, %v666
    %v729 = vsel %vm697, %v664, %v665
    %v730 = vsel %vm697, %v663, %v664
    %v731 = vsel %vm697, %v662, %v663
    %v732 = vsel %vm697, %v661, %v662
    %v733 = vsel %vm697, %v660, %v661
    %v734 = vsel %vm697, %v659, %v660
    %v735 = vsel %vm697, %v658, %v659
    %v736 = vsel %vm697, %v657, %v658
    %v737 = vsel %vm697, %v656, %v657
    %v738 = vsel %vm697, %v655, %v656
    %v739 = vsel %vm697, %v654, %v655
    %v740 = vsel %vm697, %v653, %v654
    %v741 = vsel %vm697, %v652, %v653
    %v742 = vsel %vm697, %v651, %v652
    %v743 = vsel %vm697, %v650, %v651
    %v744 = vsel %vm697, %v649, %v650
    %v745 = vsel %vm697, %v648, %v649
    %v746 = vsel %vm697, %v647, %v648
    %v747 = vsel %vm697, %v646, %v647
    %v748 = vsel %vm697, %v645, %v646
    %v749 = vsel %vm697, %v644, %v645
    %v750 = vsel %vm697, %v643, %v644
    %v751 = vsel %vm697, %v642, %v643
    %v752 = vsel %vm697, %v641, %v642
    %v753 = vsel %vm697, %v640, %v641
    %v754 = vsel %vm697, %v639, %v640
    %v755 = vsel %vm697, %v638, %v639
    %v756 = vsel %vm697, %v637, %v638
    %v757 = vsel %vm697, %v636, %v637
    %v758 = vsel %vm697, %v635, %v636
    %v759 = vsel %vm697, %v634, %v635
    %v760 = vsel %vm697, %v633, %v634
    %v761 = vsel %vm697, %v696, %v633
    %v762 = vsel %vm36, %v761, 0.0
    %v763 = vsel %vm37, %v760, 0.0
    %v764 = vsel %vm36, %v759, 0.0
    %v765 = vsel %vm37, %v758, 0.0
    %v766 = vsel %vm36, %v757, 0.0
    %v767 = vsel %vm37, %v756, 0.0
    %v768 = vsel %vm36, %v755, 0.0
    %v769 = vsel %vm37, %v754, 0.0
    %v770 = vsel %vm36, %v753, 0.0
    %v771 = vsel %vm37, %v752, 0.0
    %v772 = vsel %vm36, %v751, 0.0
    %v773 = vsel %vm37, %v750, 0.0
    %v774 = vsel %vm36, %v749, 0.0
    %v775 = vsel %vm37, %v748, 0.0
    %v776 = vsel %vm36, %v747, 0.0
    %v777 = vsel %vm37, %v746, 0.0
    %v778 = vsel %vm36, %v745, 0.0
    %v779 = vsel %vm37, %v744, 0.0
    %v780 = vsel %vm36, %v743, 0.0
    %v781 = vsel %vm37, %v742, 0.0
    %v782 = vsel %vm36, %v741, 0.0
    %v783 = vsel %vm37, %v740, 0.0
    %v784 = vsel %vm36, %v739, 0.0
    %v785 = vsel %vm37, %v738, 0.0
    %v786 = vsel %vm36, %v737, 0.0
    %v787 = vsel %vm37, %v736, 0.0
    %v788 = vsel %vm36, %v735, 0.0
    %v789 = vsel %vm37, %v734, 0.0
    %v790 = vsel %vm36, %v733, 0.0
    %v791 = vsel %vm37, %v732, 0.0
    %v792 = vsel %vm36, %v731, 0.0
    %v793 = vsel %vm37, %v730, 0.0
    %v794 = vsel %vm36, %v729, 0.0
    %v795 = vsel %vm37, %v728, 0.0
    %v796 = vsel %vm36, %v727, 0.0
    %v797 = vsel %vm37, %v726, 0.0
    %v798 = vsel %vm36, %v725, 0.0
    %v799 = vsel %vm37, %v724, 0.0
    %v800 = vsel %vm36, %v723, 0.0
    %v801 = vsel %vm37, %v722, 0.0
    %v802 = vsel %vm36, %v721, 0.0
    %v803 = vsel %vm37, %v720, 0.0
    %v804 = vsel %vm36, %v719, 0.0
    %v805 = vsel %vm37, %v718, 0.0
    %v806 = vsel %vm36, %v717, 0.0
    %v807 = vsel %vm37, %v716, 0.0
    %v808 = vsel %vm36, %v715, 0.0
    %v809 = vsel %vm37, %v714, 0.0
    %v810 = vsel %vm36, %v713, 0.0
    %v811 = vsel %vm37, %v712, 0.0
    %v812 = vsel %vm36, %v711, 0.0
    %v813 = vsel %vm37, %v710, 0.0
    %v814 = vsel %vm36, %v709, 0.0
    %v815 = vsel %vm37, %v708, 0.0
    %v816 = vsel %vm36, %v707, 0.0
    %v817 = vsel %vm37, %v706, 0.0
    %v818 = vsel %vm36, %v705, 0.0
    %v819 = vsel %vm37, %v704, 0.0
    %v820 = vsel %vm36, %v703, 0.0
    %v821 = vsel %vm37, %v702, 0.0
    %v822 = vsel %vm36, %v701, 0.0
    %v823 = vsel %vm37, %v700, 0.0
    %v824 = vsel %vm36, %v699, 0.0
    %v825 = vsel %vm37, %v698, 0.0
    %v834 = vunpack.c.l.b16 %v208
    %v835 = vunpack.c.l.b16 %v209
    %v836 = vunpack.c.l.b16 %v210
    %v837 = vunpack.c.l.b16 %v211
    %v838 = vunpack.c.l.b16 %v212
    %v839 = vunpack.c.l.b16 %v213
    %v840 = vunpack.c.l.b16 %v214
    %v841 = vunpack.c.l.b16 %v215
    %v842 = vpack.c.b16 %v835, %v834
    %v843 = vpack.c.b16 %v837, %v836
    %v844 = vpack.c.b16 %v839, %v838
    %v845 = vpack.c.b16 %v841, %v840
    %850 = vmatprep.subr.bf16.mxu0 0
    %851 = vmatpush1.bf16.msra.mxu0 %v842
    %852 = vmatprep.subr.bf16.mxu0 0
    %853 = vmatpush1.bf16.msra.mxu0 %v843
    %854 = vmatprep.subr.bf16.mxu0 0
    %855 = vmatpush1.bf16.msra.mxu0 %v844
    %856 = vmatprep.subr.bf16.mxu0 0
    %857 = vmatpush1.bf16.msra.mxu0 %v845
    %858 = vmatprep.subr.bf16.mxu0 0
    %859 = vmatpush1.bf16.msra.mxu0 0
    %860 = vmatprep.subr.bf16.mxu0 0
    %861 = vmatpush1.bf16.msra.mxu0 0
    %862 = vmatprep.subr.bf16.mxu0 0
    %863 = vmatpush1.bf16.msra.mxu0 0
    %864 = vmatprep.subr.bf16.mxu0 0
    %865 = vmatpush1.bf16.msra.mxu0 0
    %866 = vmatprep.subr.bf16.mxu0 0
    %867 = vmatpush1.bf16.msra.mxu0 0
    %868 = vmatprep.subr.bf16.mxu0 0
    %869 = vmatpush1.bf16.msra.mxu0 0
    %870 = vmatprep.subr.bf16.mxu0 0
    %871 = vmatpush1.bf16.msra.mxu0 0
    %872 = vmatprep.subr.bf16.mxu0 0
    %873 = vmatpush1.bf16.msra.mxu0 0
    %874 = vmatprep.subr.bf16.mxu0 0
    %875 = vmatpush1.bf16.msra.mxu0 0
    %876 = vmatprep.subr.bf16.mxu0 0
    %877 = vmatpush1.bf16.msra.mxu0 0
    %878 = vmatprep.subr.bf16.mxu0 0
    %879 = vmatpush1.bf16.msra.mxu0 0
    %880 = vmatprep.subr.bf16.mxu0 0
    %881 = vmatpush1.bf16.msra.mxu0 0
    %882 = vmatprep.mubr.bf16.mxu0 0
    %883 = vmatmul.mubr.bf16.gmra.mrb[0].mxu0 %v249
    %v884 = vpop.f32.mrb[0].mxu0
    %v885 = vadd.f32 %v762, %v884
    %v886 = vpop.f32.mrb[0].mxu0
    %v887 = vpop.f32.mrb[0].mxu0
    %v888 = vadd.f32 %v763, %v887
    %v889 = vpop.f32.mrb[0].mxu0
    %890 = vmatprep.mubr.bf16.mxu0 0
    %891 = vmatmul.mubr.bf16.gmra.mrb[0].mxu0 %v252
    %v892 = vpop.f32.mrb[0].mxu0
    %v893 = vadd.f32 %v764, %v892
    %v894 = vpop.f32.mrb[0].mxu0
    %v895 = vpop.f32.mrb[0].mxu0
    %v896 = vadd.f32 %v765, %v895
    %v897 = vpop.f32.mrb[0].mxu0
    %898 = vmatprep.mubr.bf16.mxu0 0
    %899 = vmatmul.mubr.bf16.gmra.mrb[0].mxu0 %v255
    %v900 = vpop.f32.mrb[0].mxu0
    %v901 = vadd.f32 %v766, %v900
    %v902 = vpop.f32.mrb[0].mxu0
    %v903 = vpop.f32.mrb[0].mxu0
    %v904 = vadd.f32 %v767, %v903
    %v905 = vpop.f32.mrb[0].mxu0
    %906 = vmatprep.mubr.bf16.mxu0 0
    %907 = vmatmul.mubr.bf16.gmra.mrb[0].mxu0 %v258
    %v908 = vpop.f32.mrb[0].mxu0
    %v909 = vadd.f32 %v768, %v908
    %v910 = vpop.f32.mrb[0].mxu0
    %v911 = vpop.f32.mrb[0].mxu0
    %v912 = vadd.f32 %v769, %v911
    %v913 = vpop.f32.mrb[0].mxu0
    %914 = vmatprep.mubr.bf16.mxu0 0
    %915 = vmatmul.mubr.bf16.gmra.mrb[0].mxu0 %v261
    %v916 = vpop.f32.mrb[0].mxu0
    %v917 = vadd.f32 %v770, %v916
    %v918 = vpop.f32.mrb[0].mxu0
    %v919 = vpop.f32.mrb[0].mxu0
    %v920 = vadd.f32 %v771, %v919
    %v921 = vpop.f32.mrb[0].mxu0
    %922 = vmatprep.mubr.bf16.mxu0 0
    %923 = vmatmul.mubr.bf16.gmra.mrb[0].mxu0 %v264
    %v924 = vpop.f32.mrb[0].mxu0
    %v925 = vadd.f32 %v772, %v924
    %v926 = vpop.f32.mrb[0].mxu0
    %v927 = vpop.f32.mrb[0].mxu0
    %v928 = vadd.f32 %v773, %v927
    %v929 = vpop.f32.mrb[0].mxu0
    %930 = vmatprep.mubr.bf16.mxu0 0
    %931 = vmatmul.mubr.bf16.gmra.mrb[0].mxu0 %v267
    %v932 = vpop.f32.mrb[0].mxu0
    %v933 = vadd.f32 %v774, %v932
    %v934 = vpop.f32.mrb[0].mxu0
    %v935 = vpop.f32.mrb[0].mxu0
    %v936 = vadd.f32 %v775, %v935
    %v937 = vpop.f32.mrb[0].mxu0
    %938 = vmatprep.mubr.bf16.mxu0 0
    %939 = vmatmul.mubr.bf16.gmra.mrb[0].mxu0 %v270
    %v940 = vpop.f32.mrb[0].mxu0
    %v941 = vadd.f32 %v776, %v940
    %v942 = vpop.f32.mrb[0].mxu0
    %v943 = vpop.f32.mrb[0].mxu0
    %v944 = vadd.f32 %v777, %v943
    %v945 = vpop.f32.mrb[0].mxu0
    %946 = vmatprep.mubr.bf16.mxu0 0
    %947 = vmatmul.mubr.bf16.gmra.mrb[0].mxu0 %v273
    %v948 = vpop.f32.mrb[0].mxu0
    %v949 = vadd.f32 %v778, %v948
    %v950 = vpop.f32.mrb[0].mxu0
    %v951 = vpop.f32.mrb[0].mxu0
    %v952 = vadd.f32 %v779, %v951
    %v953 = vpop.f32.mrb[0].mxu0
    %954 = vmatprep.mubr.bf16.mxu0 0
    %955 = vmatmul.mubr.bf16.gmra.mrb[0].mxu0 %v276
    %v956 = vpop.f32.mrb[0].mxu0
    %v957 = vadd.f32 %v780, %v956
    %v958 = vpop.f32.mrb[0].mxu0
    %v959 = vpop.f32.mrb[0].mxu0
    %v960 = vadd.f32 %v781, %v959
    %v961 = vpop.f32.mrb[0].mxu0
    %962 = vmatprep.mubr.bf16.mxu0 0
    %963 = vmatmul.mubr.bf16.gmra.mrb[0].mxu0 %v279
    %v964 = vpop.f32.mrb[0].mxu0
    %v965 = vadd.f32 %v782, %v964
    %v966 = vpop.f32.mrb[0].mxu0
    %v967 = vpop.f32.mrb[0].mxu0
    %v968 = vadd.f32 %v783, %v967
    %v969 = vpop.f32.mrb[0].mxu0
    %970 = vmatprep.mubr.bf16.mxu0 0
    %971 = vmatmul.mubr.bf16.gmra.mrb[0].mxu0 %v282
    %v972 = vpop.f32.mrb[0].mxu0
    %v973 = vadd.f32 %v784, %v972
    %v974 = vpop.f32.mrb[0].mxu0
    %v975 = vpop.f32.mrb[0].mxu0
    %v976 = vadd.f32 %v785, %v975
    %v977 = vpop.f32.mrb[0].mxu0
    %978 = vmatprep.mubr.bf16.mxu0 0
    %979 = vmatmul.mubr.bf16.gmra.mrb[0].mxu0 %v285
    %v980 = vpop.f32.mrb[0].mxu0
    %v981 = vadd.f32 %v786, %v980
    %v982 = vpop.f32.mrb[0].mxu0
    %v983 = vpop.f32.mrb[0].mxu0
    %v984 = vadd.f32 %v787, %v983
    %v985 = vpop.f32.mrb[0].mxu0
    %986 = vmatprep.mubr.bf16.mxu0 0
    %987 = vmatmul.mubr.bf16.gmra.mrb[0].mxu0 %v288
    %v988 = vpop.f32.mrb[0].mxu0
    %v989 = vadd.f32 %v788, %v988
    %v990 = vpop.f32.mrb[0].mxu0
    %v991 = vpop.f32.mrb[0].mxu0
    %v992 = vadd.f32 %v789, %v991
    %v993 = vpop.f32.mrb[0].mxu0
    %994 = vmatprep.mubr.bf16.mxu0 0
    %995 = vmatmul.mubr.bf16.gmra.mrb[0].mxu0 %v291
    %v996 = vpop.f32.mrb[0].mxu0
    %v997 = vadd.f32 %v790, %v996
    %v998 = vpop.f32.mrb[0].mxu0
    %v999 = vpop.f32.mrb[0].mxu0
    %v1000 = vadd.f32 %v791, %v999
    %v1001 = vpop.f32.mrb[0].mxu0
    %1002 = vmatprep.mubr.bf16.mxu0 0
    %1003 = vmatmul.mubr.bf16.gmra.mrb[0].mxu0 %v294
    %v1004 = vpop.f32.mrb[0].mxu0
    %v1005 = vadd.f32 %v792, %v1004
    %v1006 = vpop.f32.mrb[0].mxu0
    %v1007 = vpop.f32.mrb[0].mxu0
    %v1008 = vadd.f32 %v793, %v1007
    %v1009 = vpop.f32.mrb[0].mxu0
    %1010 = vmatprep.mubr.bf16.mxu0 0
    %1011 = vmatmul.mubr.bf16.gmra.mrb[0].mxu0 %v297
    %v1012 = vpop.f32.mrb[0].mxu0
    %v1013 = vadd.f32 %v794, %v1012
    %v1014 = vpop.f32.mrb[0].mxu0
    %v1015 = vpop.f32.mrb[0].mxu0
    %v1016 = vadd.f32 %v795, %v1015
    %v1017 = vpop.f32.mrb[0].mxu0
    %1018 = vmatprep.mubr.bf16.mxu0 0
    %1019 = vmatmul.mubr.bf16.gmra.mrb[0].mxu0 %v300
    %v1020 = vpop.f32.mrb[0].mxu0
    %v1021 = vadd.f32 %v796, %v1020
    %v1022 = vpop.f32.mrb[0].mxu0
    %v1023 = vpop.f32.mrb[0].mxu0
    %v1024 = vadd.f32 %v797, %v1023
    %v1025 = vpop.f32.mrb[0].mxu0
    %1026 = vmatprep.mubr.bf16.mxu0 0
    %1027 = vmatmul.mubr.bf16.gmra.mrb[0].mxu0 %v303
    %v1028 = vpop.f32.mrb[0].mxu0
    %v1029 = vadd.f32 %v798, %v1028
    %v1030 = vpop.f32.mrb[0].mxu0
    %v1031 = vpop.f32.mrb[0].mxu0
    %v1032 = vadd.f32 %v799, %v1031
    %v1033 = vpop.f32.mrb[0].mxu0
    %1034 = vmatprep.mubr.bf16.mxu0 0
    %1035 = vmatmul.mubr.bf16.gmra.mrb[0].mxu0 %v306
    %v1036 = vpop.f32.mrb[0].mxu0
    %v1037 = vadd.f32 %v800, %v1036
    %v1038 = vpop.f32.mrb[0].mxu0
    %v1039 = vpop.f32.mrb[0].mxu0
    %v1040 = vadd.f32 %v801, %v1039
    %v1041 = vpop.f32.mrb[0].mxu0
    %1042 = vmatprep.mubr.bf16.mxu0 0
    %1043 = vmatmul.mubr.bf16.gmra.mrb[0].mxu0 %v309
    %v1044 = vpop.f32.mrb[0].mxu0
    %v1045 = vadd.f32 %v802, %v1044
    %v1046 = vpop.f32.mrb[0].mxu0
    %v1047 = vpop.f32.mrb[0].mxu0
    %v1048 = vadd.f32 %v803, %v1047
    %v1049 = vpop.f32.mrb[0].mxu0
    %1050 = vmatprep.mubr.bf16.mxu0 0
    %1051 = vmatmul.mubr.bf16.gmra.mrb[0].mxu0 %v312
    %v1052 = vpop.f32.mrb[0].mxu0
    %v1053 = vadd.f32 %v804, %v1052
    %v1054 = vpop.f32.mrb[0].mxu0
    %v1055 = vpop.f32.mrb[0].mxu0
    %v1056 = vadd.f32 %v805, %v1055
    %v1057 = vpop.f32.mrb[0].mxu0
    %1058 = vmatprep.mubr.bf16.mxu0 0
    %1059 = vmatmul.mubr.bf16.gmra.mrb[0].mxu0 %v315
    %v1060 = vpop.f32.mrb[0].mxu0
    %v1061 = vadd.f32 %v806, %v1060
    %v1062 = vpop.f32.mrb[0].mxu0
    %v1063 = vpop.f32.mrb[0].mxu0
    %v1064 = vadd.f32 %v807, %v1063
    %v1065 = vpop.f32.mrb[0].mxu0
    %1066 = vmatprep.mubr.bf16.mxu0 0
    %1067 = vmatmul.mubr.bf16.gmra.mrb[0].mxu0 %v318
    %v1068 = vpop.f32.mrb[0].mxu0
    %v1069 = vadd.f32 %v808, %v1068
    %v1070 = vpop.f32.mrb[0].mxu0
    %v1071 = vpop.f32.mrb[0].mxu0
    %v1072 = vadd.f32 %v809, %v1071
    %v1073 = vpop.f32.mrb[0].mxu0
    %1074 = vmatprep.mubr.bf16.mxu0 0
    %1075 = vmatmul.mubr.bf16.gmra.mrb[0].mxu0 %v321
    %v1076 = vpop.f32.mrb[0].mxu0
    %v1077 = vadd.f32 %v810, %v1076
    %v1078 = vpop.f32.mrb[0].mxu0
    %v1079 = vpop.f32.mrb[0].mxu0
    %v1080 = vadd.f32 %v811, %v1079
    %v1081 = vpop.f32.mrb[0].mxu0
    %1082 = vmatprep.mubr.bf16.mxu0 0
    %1083 = vmatmul.mubr.bf16.gmra.mrb[0].mxu0 %v324
    %v1084 = vpop.f32.mrb[0].mxu0
    %v1085 = vadd.f32 %v812, %v1084
    %v1086 = vpop.f32.mrb[0].mxu0
    %v1087 = vpop.f32.mrb[0].mxu0
    %v1088 = vadd.f32 %v813, %v1087
    %v1089 = vpop.f32.mrb[0].mxu0
    %1090 = vmatprep.mubr.bf16.mxu0 0
    %1091 = vmatmul.mubr.bf16.gmra.mrb[0].mxu0 %v327
    %v1092 = vpop.f32.mrb[0].mxu0
    %v1093 = vadd.f32 %v814, %v1092
    %v1094 = vpop.f32.mrb[0].mxu0
    %v1095 = vpop.f32.mrb[0].mxu0
    %v1096 = vadd.f32 %v815, %v1095
    %v1097 = vpop.f32.mrb[0].mxu0
    %1098 = vmatprep.mubr.bf16.mxu0 0
    %1099 = vmatmul.mubr.bf16.gmra.mrb[0].mxu0 %v330
    %v1100 = vpop.f32.mrb[0].mxu0
    %v1101 = vadd.f32 %v816, %v1100
    %v1102 = vpop.f32.mrb[0].mxu0
    %v1103 = vpop.f32.mrb[0].mxu0
    %v1104 = vadd.f32 %v817, %v1103
    %v1105 = vpop.f32.mrb[0].mxu0
    %1106 = vmatprep.mubr.bf16.mxu0 0
    %1107 = vmatmul.mubr.bf16.gmra.mrb[0].mxu0 %v333
    %v1108 = vpop.f32.mrb[0].mxu0
    %v1109 = vadd.f32 %v818, %v1108
    %v1110 = vpop.f32.mrb[0].mxu0
    %v1111 = vpop.f32.mrb[0].mxu0
    %v1112 = vadd.f32 %v819, %v1111
    %v1113 = vpop.f32.mrb[0].mxu0
    %1114 = vmatprep.mubr.bf16.mxu0 0
    %1115 = vmatmul.mubr.bf16.gmra.mrb[0].mxu0 %v336
    %v1116 = vpop.f32.mrb[0].mxu0
    %v1117 = vadd.f32 %v820, %v1116
    %v1118 = vpop.f32.mrb[0].mxu0
    %v1119 = vpop.f32.mrb[0].mxu0
    %v1120 = vadd.f32 %v821, %v1119
    %v1121 = vpop.f32.mrb[0].mxu0
    %1122 = vmatprep.mubr.bf16.mxu0 0
    %1123 = vmatmul.mubr.bf16.gmra.mrb[0].mxu0 %v339
    %v1124 = vpop.f32.mrb[0].mxu0
    %v1125 = vadd.f32 %v822, %v1124
    %v1126 = vpop.f32.mrb[0].mxu0
    %v1127 = vpop.f32.mrb[0].mxu0
    %v1128 = vadd.f32 %v823, %v1127
    %v1129 = vpop.f32.mrb[0].mxu0
    %1130 = vmatprep.mubr.bf16.mxu0 0
    %1131 = vmatmul.mubr.bf16.gmra.mrb[0].mxu0 %v342
    %v1132 = vpop.f32.mrb[0].mxu0
    %v1133 = vadd.f32 %v824, %v1132
    %v1134 = vpop.f32.mrb[0].mxu0
    %v1135 = vpop.f32.mrb[0].mxu0
    %v1136 = vadd.f32 %v825, %v1135
    %v1137 = vpop.f32.mrb[0].mxu0
    %1138 = vdwg.mxu0
    %s1139 = scalar_lea.vmem %s1, 64
    %v1140 = vld [vmem:[%s1139] sm:$0xf]
    %v1141 = vld [vmem:[%s1139 + $0x4] sm:$0xf]
    %v1142 = vld [vmem:[%s1139 + $0x8] sm:$0xf]
    %v1143 = vld [vmem:[%s1139 + $0xc] sm:$0xf]
    %v1144 = vld [vmem:[%s1139 + $0x10] sm:$0xf]
    %v1145 = vld [vmem:[%s1139 + $0x14] sm:$0xf]
    %v1146 = vld [vmem:[%s1139 + $0x18] sm:$0xf]
    %v1147 = vld [vmem:[%s1139 + $0x1c] sm:$0xf]
    %v1156 = vunpack.c.l.b16 %v1140
    %v1157 = vunpack.c.l.b16 %v1141
    %v1158 = vunpack.c.l.b16 %v1142
    %v1159 = vunpack.c.l.b16 %v1143
    %v1160 = vunpack.c.l.b16 %v1144
    %v1161 = vunpack.c.l.b16 %v1145
    %v1162 = vunpack.c.l.b16 %v1146
    %v1163 = vunpack.c.l.b16 %v1147
    %v1164 = vpack.c.b16 %v1157, %v1156
    %v1165 = vpack.c.b16 %v1159, %v1158
    %v1166 = vpack.c.b16 %v1161, %v1160
    %v1167 = vpack.c.b16 %v1163, %v1162
    %1172 = vmatprep.subr.bf16.mxu0 0
    %1173 = vmatpush1.bf16.msra.mxu0 %v1164
    %1174 = vmatprep.subr.bf16.mxu0 0
    %1175 = vmatpush1.bf16.msra.mxu0 %v1165
    %1176 = vmatprep.subr.bf16.mxu0 0
    %1177 = vmatpush1.bf16.msra.mxu0 %v1166
    %1178 = vmatprep.subr.bf16.mxu0 0
    %1179 = vmatpush1.bf16.msra.mxu0 %v1167
    %1180 = vmatprep.subr.bf16.mxu0 0
    %1181 = vmatpush1.bf16.msra.mxu0 0
    %1182 = vmatprep.subr.bf16.mxu0 0
    %1183 = vmatpush1.bf16.msra.mxu0 0
    %1184 = vmatprep.subr.bf16.mxu0 0
    %1185 = vmatpush1.bf16.msra.mxu0 0
    %1186 = vmatprep.subr.bf16.mxu0 0
    %1187 = vmatpush1.bf16.msra.mxu0 0
    %1188 = vmatprep.subr.bf16.mxu0 0
    %1189 = vmatpush1.bf16.msra.mxu0 0
    %1190 = vmatprep.subr.bf16.mxu0 0
    %1191 = vmatpush1.bf16.msra.mxu0 0
    %1192 = vmatprep.subr.bf16.mxu0 0
    %1193 = vmatpush1.bf16.msra.mxu0 0
    %1194 = vmatprep.subr.bf16.mxu0 0
    %1195 = vmatpush1.bf16.msra.mxu0 0
    %1196 = vmatprep.subr.bf16.mxu0 0
    %1197 = vmatpush1.bf16.msra.mxu0 0
    %1198 = vmatprep.subr.bf16.mxu0 0
    %1199 = vmatpush1.bf16.msra.mxu0 0
    %1200 = vmatprep.subr.bf16.mxu0 0
    %1201 = vmatpush1.bf16.msra.mxu0 0
    %1202 = vmatprep.subr.bf16.mxu0 0
    %1203 = vmatpush1.bf16.msra.mxu0 0
    %1204 = vmatprep.mubr.bf16.mxu0 0
    %1205 = vmatmul.mubr.bf16.gmra.mrb[0].mxu0 %v249
    %v1206 = vpop.f32.mrb[0].mxu0
    %v1207 = vadd.f32 0.0, %v1206
    %v1208 = vpop.f32.mrb[0].mxu0
    %v1209 = vpop.f32.mrb[0].mxu0
    %v1210 = vadd.f32 0.0, %v1209
    %v1211 = vpop.f32.mrb[0].mxu0
    %1212 = vmatprep.mubr.bf16.mxu0 0
    %1213 = vmatmul.mubr.bf16.gmra.mrb[0].mxu0 %v252
    %v1214 = vpop.f32.mrb[0].mxu0
    %v1215 = vadd.f32 0.0, %v1214
    %v1216 = vpop.f32.mrb[0].mxu0
    %v1217 = vpop.f32.mrb[0].mxu0
    %v1218 = vadd.f32 0.0, %v1217
    %v1219 = vpop.f32.mrb[0].mxu0
    %1220 = vmatprep.mubr.bf16.mxu0 0
    %1221 = vmatmul.mubr.bf16.gmra.mrb[0].mxu0 %v255
    %v1222 = vpop.f32.mrb[0].mxu0
    %v1223 = vadd.f32 0.0, %v1222
    %v1224 = vpop.f32.mrb[0].mxu0
    %v1225 = vpop.f32.mrb[0].mxu0
    %v1226 = vadd.f32 0.0, %v1225
    %v1227 = vpop.f32.mrb[0].mxu0
    %1228 = vmatprep.mubr.bf16.mxu0 0
    %1229 = vmatmul.mubr.bf16.gmra.mrb[0].mxu0 %v258
    %v1230 = vpop.f32.mrb[0].mxu0
    %v1231 = vadd.f32 0.0, %v1230
    %v1232 = vpop.f32.mrb[0].mxu0
    %v1233 = vpop.f32.mrb[0].mxu0
    %v1234 = vadd.f32 0.0, %v1233
    %v1235 = vpop.f32.mrb[0].mxu0
    %1236 = vmatprep.mubr.bf16.mxu0 0
    %1237 = vmatmul.mubr.bf16.gmra.mrb[0].mxu0 %v261
    %v1238 = vpop.f32.mrb[0].mxu0
    %v1239 = vadd.f32 0.0, %v1238
    %v1240 = vpop.f32.mrb[0].mxu0
    %v1241 = vpop.f32.mrb[0].mxu0
    %v1242 = vadd.f32 0.0, %v1241
    %v1243 = vpop.f32.mrb[0].mxu0
    %1244 = vmatprep.mubr.bf16.mxu0 0
    %1245 = vmatmul.mubr.bf16.gmra.mrb[0].mxu0 %v264
    %v1246 = vpop.f32.mrb[0].mxu0
    %v1247 = vadd.f32 0.0, %v1246
    %v1248 = vpop.f32.mrb[0].mxu0
    %v1249 = vpop.f32.mrb[0].mxu0
    %v1250 = vadd.f32 0.0, %v1249
    %v1251 = vpop.f32.mrb[0].mxu0
    %1252 = vmatprep.mubr.bf16.mxu0 0
    %1253 = vmatmul.mubr.bf16.gmra.mrb[0].mxu0 %v267
    %v1254 = vpop.f32.mrb[0].mxu0
    %v1255 = vadd.f32 0.0, %v1254
    %v1256 = vpop.f32.mrb[0].mxu0
    %v1257 = vpop.f32.mrb[0].mxu0
    %v1258 = vadd.f32 0.0, %v1257
    %v1259 = vpop.f32.mrb[0].mxu0
    %1260 = vmatprep.mubr.bf16.mxu0 0
    %1261 = vmatmul.mubr.bf16.gmra.mrb[0].mxu0 %v270
    %v1262 = vpop.f32.mrb[0].mxu0
    %v1263 = vadd.f32 0.0, %v1262
    %v1264 = vpop.f32.mrb[0].mxu0
    %v1265 = vpop.f32.mrb[0].mxu0
    %v1266 = vadd.f32 0.0, %v1265
    %v1267 = vpop.f32.mrb[0].mxu0
    %1268 = vmatprep.mubr.bf16.mxu0 0
    %1269 = vmatmul.mubr.bf16.gmra.mrb[0].mxu0 %v273
    %v1270 = vpop.f32.mrb[0].mxu0
    %v1271 = vadd.f32 0.0, %v1270
    %v1272 = vpop.f32.mrb[0].mxu0
    %v1273 = vpop.f32.mrb[0].mxu0
    %v1274 = vadd.f32 0.0, %v1273
    %v1275 = vpop.f32.mrb[0].mxu0
    %1276 = vmatprep.mubr.bf16.mxu0 0
    %1277 = vmatmul.mubr.bf16.gmra.mrb[0].mxu0 %v276
    %v1278 = vpop.f32.mrb[0].mxu0
    %v1279 = vadd.f32 0.0, %v1278
    %v1280 = vpop.f32.mrb[0].mxu0
    %v1281 = vpop.f32.mrb[0].mxu0
    %v1282 = vadd.f32 0.0, %v1281
    %v1283 = vpop.f32.mrb[0].mxu0
    %1284 = vmatprep.mubr.bf16.mxu0 0
    %1285 = vmatmul.mubr.bf16.gmra.mrb[0].mxu0 %v279
    %v1286 = vpop.f32.mrb[0].mxu0
    %v1287 = vadd.f32 0.0, %v1286
    %v1288 = vpop.f32.mrb[0].mxu0
    %v1289 = vpop.f32.mrb[0].mxu0
    %v1290 = vadd.f32 0.0, %v1289
    %v1291 = vpop.f32.mrb[0].mxu0
    %1292 = vmatprep.mubr.bf16.mxu0 0
    %1293 = vmatmul.mubr.bf16.gmra.mrb[0].mxu0 %v282
    %v1294 = vpop.f32.mrb[0].mxu0
    %v1295 = vadd.f32 0.0, %v1294
    %v1296 = vpop.f32.mrb[0].mxu0
    %v1297 = vpop.f32.mrb[0].mxu0
    %v1298 = vadd.f32 0.0, %v1297
    %v1299 = vpop.f32.mrb[0].mxu0
    %1300 = vmatprep.mubr.bf16.mxu0 0
    %1301 = vmatmul.mubr.bf16.gmra.mrb[0].mxu0 %v285
    %v1302 = vpop.f32.mrb[0].mxu0
    %v1303 = vadd.f32 0.0, %v1302
    %v1304 = vpop.f32.mrb[0].mxu0
    %v1305 = vpop.f32.mrb[0].mxu0
    %v1306 = vadd.f32 0.0, %v1305
    %v1307 = vpop.f32.mrb[0].mxu0
    %1308 = vmatprep.mubr.bf16.mxu0 0
    %1309 = vmatmul.mubr.bf16.gmra.mrb[0].mxu0 %v288
    %v1310 = vpop.f32.mrb[0].mxu0
    %v1311 = vadd.f32 0.0, %v1310
    %v1312 = vpop.f32.mrb[0].mxu0
    %v1313 = vpop.f32.mrb[0].mxu0
    %v1314 = vadd.f32 0.0, %v1313
    %v1315 = vpop.f32.mrb[0].mxu0
    %1316 = vmatprep.mubr.bf16.mxu0 0
    %1317 = vmatmul.mubr.bf16.gmra.mrb[0].mxu0 %v291
    %v1318 = vpop.f32.mrb[0].mxu0
    %v1319 = vadd.f32 0.0, %v1318
    %v1320 = vpop.f32.mrb[0].mxu0
    %v1321 = vpop.f32.mrb[0].mxu0
    %v1322 = vadd.f32 0.0, %v1321
    %v1323 = vpop.f32.mrb[0].mxu0
    %1324 = vmatprep.mubr.bf16.mxu0 0
    %1325 = vmatmul.mubr.bf16.gmra.mrb[0].mxu0 %v294
    %v1326 = vpop.f32.mrb[0].mxu0
    %v1327 = vadd.f32 0.0, %v1326
    %v1328 = vpop.f32.mrb[0].mxu0
    %v1329 = vpop.f32.mrb[0].mxu0
    %v1330 = vadd.f32 0.0, %v1329
    %v1331 = vpop.f32.mrb[0].mxu0
    %1332 = vmatprep.mubr.bf16.mxu0 0
    %1333 = vmatmul.mubr.bf16.gmra.mrb[0].mxu0 %v297
    %v1334 = vpop.f32.mrb[0].mxu0
    %v1335 = vadd.f32 0.0, %v1334
    %v1336 = vpop.f32.mrb[0].mxu0
    %v1337 = vpop.f32.mrb[0].mxu0
    %v1338 = vadd.f32 0.0, %v1337
    %v1339 = vpop.f32.mrb[0].mxu0
    %1340 = vmatprep.mubr.bf16.mxu0 0
    %1341 = vmatmul.mubr.bf16.gmra.mrb[0].mxu0 %v300
    %v1342 = vpop.f32.mrb[0].mxu0
    %v1343 = vadd.f32 0.0, %v1342
    %v1344 = vpop.f32.mrb[0].mxu0
    %v1345 = vpop.f32.mrb[0].mxu0
    %v1346 = vadd.f32 0.0, %v1345
    %v1347 = vpop.f32.mrb[0].mxu0
    %1348 = vmatprep.mubr.bf16.mxu0 0
    %1349 = vmatmul.mubr.bf16.gmra.mrb[0].mxu0 %v303
    %v1350 = vpop.f32.mrb[0].mxu0
    %v1351 = vadd.f32 0.0, %v1350
    %v1352 = vpop.f32.mrb[0].mxu0
    %v1353 = vpop.f32.mrb[0].mxu0
    %v1354 = vadd.f32 0.0, %v1353
    %v1355 = vpop.f32.mrb[0].mxu0
    %1356 = vmatprep.mubr.bf16.mxu0 0
    %1357 = vmatmul.mubr.bf16.gmra.mrb[0].mxu0 %v306
    %v1358 = vpop.f32.mrb[0].mxu0
    %v1359 = vadd.f32 0.0, %v1358
    %v1360 = vpop.f32.mrb[0].mxu0
    %v1361 = vpop.f32.mrb[0].mxu0
    %v1362 = vadd.f32 0.0, %v1361
    %v1363 = vpop.f32.mrb[0].mxu0
    %1364 = vmatprep.mubr.bf16.mxu0 0
    %1365 = vmatmul.mubr.bf16.gmra.mrb[0].mxu0 %v309
    %v1366 = vpop.f32.mrb[0].mxu0
    %v1367 = vadd.f32 0.0, %v1366
    %v1368 = vpop.f32.mrb[0].mxu0
    %v1369 = vpop.f32.mrb[0].mxu0
    %v1370 = vadd.f32 0.0, %v1369
    %v1371 = vpop.f32.mrb[0].mxu0
    %1372 = vmatprep.mubr.bf16.mxu0 0
    %1373 = vmatmul.mubr.bf16.gmra.mrb[0].mxu0 %v312
    %v1374 = vpop.f32.mrb[0].mxu0
    %v1375 = vadd.f32 0.0, %v1374
    %v1376 = vpop.f32.mrb[0].mxu0
    %v1377 = vpop.f32.mrb[0].mxu0
    %v1378 = vadd.f32 0.0, %v1377
    %v1379 = vpop.f32.mrb[0].mxu0
    %1380 = vmatprep.mubr.bf16.mxu0 0
    %1381 = vmatmul.mubr.bf16.gmra.mrb[0].mxu0 %v315
    %v1382 = vpop.f32.mrb[0].mxu0
    %v1383 = vadd.f32 0.0, %v1382
    %v1384 = vpop.f32.mrb[0].mxu0
    %v1385 = vpop.f32.mrb[0].mxu0
    %v1386 = vadd.f32 0.0, %v1385
    %v1387 = vpop.f32.mrb[0].mxu0
    %1388 = vmatprep.mubr.bf16.mxu0 0
    %1389 = vmatmul.mubr.bf16.gmra.mrb[0].mxu0 %v318
    %v1390 = vpop.f32.mrb[0].mxu0
    %v1391 = vadd.f32 0.0, %v1390
    %v1392 = vpop.f32.mrb[0].mxu0
    %v1393 = vpop.f32.mrb[0].mxu0
    %v1394 = vadd.f32 0.0, %v1393
    %v1395 = vpop.f32.mrb[0].mxu0
    %1396 = vmatprep.mubr.bf16.mxu0 0
    %1397 = vmatmul.mubr.bf16.gmra.mrb[0].mxu0 %v321
    %v1398 = vpop.f32.mrb[0].mxu0
    %v1399 = vadd.f32 0.0, %v1398
    %v1400 = vpop.f32.mrb[0].mxu0
    %v1401 = vpop.f32.mrb[0].mxu0
    %v1402 = vadd.f32 0.0, %v1401
    %v1403 = vpop.f32.mrb[0].mxu0
    %1404 = vmatprep.mubr.bf16.mxu0 0
    %1405 = vmatmul.mubr.bf16.gmra.mrb[0].mxu0 %v324
    %v1406 = vpop.f32.mrb[0].mxu0
    %v1407 = vadd.f32 0.0, %v1406
    %v1408 = vpop.f32.mrb[0].mxu0
    %v1409 = vpop.f32.mrb[0].mxu0
    %v1410 = vadd.f32 0.0, %v1409
    %v1411 = vpop.f32.mrb[0].mxu0
    %1412 = vmatprep.mubr.bf16.mxu0 0
    %1413 = vmatmul.mubr.bf16.gmra.mrb[0].mxu0 %v327
    %v1414 = vpop.f32.mrb[0].mxu0
    %v1415 = vadd.f32 0.0, %v1414
    %v1416 = vpop.f32.mrb[0].mxu0
    %v1417 = vpop.f32.mrb[0].mxu0
    %v1418 = vadd.f32 0.0, %v1417
    %v1419 = vpop.f32.mrb[0].mxu0
    %1420 = vmatprep.mubr.bf16.mxu0 0
    %1421 = vmatmul.mubr.bf16.gmra.mrb[0].mxu0 %v330
    %v1422 = vpop.f32.mrb[0].mxu0
    %v1423 = vadd.f32 0.0, %v1422
    %v1424 = vpop.f32.mrb[0].mxu0
    %v1425 = vpop.f32.mrb[0].mxu0
    %v1426 = vadd.f32 0.0, %v1425
    %v1427 = vpop.f32.mrb[0].mxu0
    %1428 = vmatprep.mubr.bf16.mxu0 0
    %1429 = vmatmul.mubr.bf16.gmra.mrb[0].mxu0 %v333
    %v1430 = vpop.f32.mrb[0].mxu0
    %v1431 = vadd.f32 0.0, %v1430
    %v1432 = vpop.f32.mrb[0].mxu0
    %v1433 = vpop.f32.mrb[0].mxu0
    %v1434 = vadd.f32 0.0, %v1433
    %v1435 = vpop.f32.mrb[0].mxu0
    %1436 = vmatprep.mubr.bf16.mxu0 0
    %1437 = vmatmul.mubr.bf16.gmra.mrb[0].mxu0 %v336
    %v1438 = vpop.f32.mrb[0].mxu0
    %v1439 = vadd.f32 0.0, %v1438
    %v1440 = vpop.f32.mrb[0].mxu0
    %v1441 = vpop.f32.mrb[0].mxu0
    %v1442 = vadd.f32 0.0, %v1441
    %v1443 = vpop.f32.mrb[0].mxu0
    %1444 = vmatprep.mubr.bf16.mxu0 0
    %1445 = vmatmul.mubr.bf16.gmra.mrb[0].mxu0 %v339
    %v1446 = vpop.f32.mrb[0].mxu0
    %v1447 = vadd.f32 0.0, %v1446
    %v1448 = vpop.f32.mrb[0].mxu0
    %v1449 = vpop.f32.mrb[0].mxu0
    %v1450 = vadd.f32 0.0, %v1449
    %v1451 = vpop.f32.mrb[0].mxu0
    %1452 = vmatprep.mubr.bf16.mxu0 0
    %1453 = vmatmul.mubr.bf16.gmra.mrb[0].mxu0 %v342
    %v1454 = vpop.f32.mrb[0].mxu0
    %v1455 = vadd.f32 0.0, %v1454
    %v1456 = vpop.f32.mrb[0].mxu0
    %v1457 = vpop.f32.mrb[0].mxu0
    %v1458 = vadd.f32 0.0, %v1457
    %v1459 = vpop.f32.mrb[0].mxu0
    %1460 = vdwg.mxu0
    %v1461 = vrot.slane %v1207, 1
    %v1462 = vrot.slane %v1210, 1
    %v1463 = vrot.slane %v1215, 1
    %v1464 = vrot.slane %v1218, 1
    %v1465 = vrot.slane %v1223, 1
    %v1466 = vrot.slane %v1226, 1
    %v1467 = vrot.slane %v1231, 1
    %v1468 = vrot.slane %v1234, 1
    %v1469 = vrot.slane %v1239, 1
    %v1470 = vrot.slane %v1242, 1
    %v1471 = vrot.slane %v1247, 1
    %v1472 = vrot.slane %v1250, 1
    %v1473 = vrot.slane %v1255, 1
    %v1474 = vrot.slane %v1258, 1
    %v1475 = vrot.slane %v1263, 1
    %v1476 = vrot.slane %v1266, 1
    %v1477 = vrot.slane %v1271, 1
    %v1478 = vrot.slane %v1274, 1
    %v1479 = vrot.slane %v1279, 1
    %v1480 = vrot.slane %v1282, 1
    %v1481 = vrot.slane %v1287, 1
    %v1482 = vrot.slane %v1290, 1
    %v1483 = vrot.slane %v1295, 1
    %v1484 = vrot.slane %v1298, 1
    %v1485 = vrot.slane %v1303, 1
    %v1486 = vrot.slane %v1306, 1
    %v1487 = vrot.slane %v1311, 1
    %v1488 = vrot.slane %v1314, 1
    %v1489 = vrot.slane %v1319, 1
    %v1490 = vrot.slane %v1322, 1
    %v1491 = vrot.slane %v1327, 1
    %v1492 = vrot.slane %v1330, 1
    %v1493 = vrot.slane %v1335, 1
    %v1494 = vrot.slane %v1338, 1
    %v1495 = vrot.slane %v1343, 1
    %v1496 = vrot.slane %v1346, 1
    %v1497 = vrot.slane %v1351, 1
    %v1498 = vrot.slane %v1354, 1
    %v1499 = vrot.slane %v1359, 1
    %v1500 = vrot.slane %v1362, 1
    %v1501 = vrot.slane %v1367, 1
    %v1502 = vrot.slane %v1370, 1
    %v1503 = vrot.slane %v1375, 1
    %v1504 = vrot.slane %v1378, 1
    %v1505 = vrot.slane %v1383, 1
    %v1506 = vrot.slane %v1386, 1
    %v1507 = vrot.slane %v1391, 1
    %v1508 = vrot.slane %v1394, 1
    %v1509 = vrot.slane %v1399, 1
    %v1510 = vrot.slane %v1402, 1
    %v1511 = vrot.slane %v1407, 1
    %v1512 = vrot.slane %v1410, 1
    %v1513 = vrot.slane %v1415, 1
    %v1514 = vrot.slane %v1418, 1
    %v1515 = vrot.slane %v1423, 1
    %v1516 = vrot.slane %v1426, 1
    %v1517 = vrot.slane %v1431, 1
    %v1518 = vrot.slane %v1434, 1
    %v1519 = vrot.slane %v1439, 1
    %v1520 = vrot.slane %v1442, 1
    %v1521 = vrot.slane %v1447, 1
    %v1522 = vrot.slane %v1450, 1
    %v1523 = vrot.slane %v1455, 1
    %v1524 = vrot.slane %v1458, 1
    %vm1525 = vcmp.lt.s32.totalorder %v34, 7
    %v1526 = vsel %vm1525, %v1523, %v1524
    %v1527 = vsel %vm1525, %v1522, %v1523
    %v1528 = vsel %vm1525, %v1521, %v1522
    %v1529 = vsel %vm1525, %v1520, %v1521
    %v1530 = vsel %vm1525, %v1519, %v1520
    %v1531 = vsel %vm1525, %v1518, %v1519
    %v1532 = vsel %vm1525, %v1517, %v1518
    %v1533 = vsel %vm1525, %v1516, %v1517
    %v1534 = vsel %vm1525, %v1515, %v1516
    %v1535 = vsel %vm1525, %v1514, %v1515
    %v1536 = vsel %vm1525, %v1513, %v1514
    %v1537 = vsel %vm1525, %v1512, %v1513
    %v1538 = vsel %vm1525, %v1511, %v1512
    %v1539 = vsel %vm1525, %v1510, %v1511
    %v1540 = vsel %vm1525, %v1509, %v1510
    %v1541 = vsel %vm1525, %v1508, %v1509
    %v1542 = vsel %vm1525, %v1507, %v1508
    %v1543 = vsel %vm1525, %v1506, %v1507
    %v1544 = vsel %vm1525, %v1505, %v1506
    %v1545 = vsel %vm1525, %v1504, %v1505
    %v1546 = vsel %vm1525, %v1503, %v1504
    %v1547 = vsel %vm1525, %v1502, %v1503
    %v1548 = vsel %vm1525, %v1501, %v1502
    %v1549 = vsel %vm1525, %v1500, %v1501
    %v1550 = vsel %vm1525, %v1499, %v1500
    %v1551 = vsel %vm1525, %v1498, %v1499
    %v1552 = vsel %vm1525, %v1497, %v1498
    %v1553 = vsel %vm1525, %v1496, %v1497
    %v1554 = vsel %vm1525, %v1495, %v1496
    %v1555 = vsel %vm1525, %v1494, %v1495
    %v1556 = vsel %vm1525, %v1493, %v1494
    %v1557 = vsel %vm1525, %v1492, %v1493
    %v1558 = vsel %vm1525, %v1491, %v1492
    %v1559 = vsel %vm1525, %v1490, %v1491
    %v1560 = vsel %vm1525, %v1489, %v1490
    %v1561 = vsel %vm1525, %v1488, %v1489
    %v1562 = vsel %vm1525, %v1487, %v1488
    %v1563 = vsel %vm1525, %v1486, %v1487
    %v1564 = vsel %vm1525, %v1485, %v1486
    %v1565 = vsel %vm1525, %v1484, %v1485
    %v1566 = vsel %vm1525, %v1483, %v1484
    %v1567 = vsel %vm1525, %v1482, %v1483
    %v1568 = vsel %vm1525, %v1481, %v1482
    %v1569 = vsel %vm1525, %v1480, %v1481
    %v1570 = vsel %vm1525, %v1479, %v1480
    %v1571 = vsel %vm1525, %v1478, %v1479
    %v1572 = vsel %vm1525, %v1477, %v1478
    %v1573 = vsel %vm1525, %v1476, %v1477
    %v1574 = vsel %vm1525, %v1475, %v1476
    %v1575 = vsel %vm1525, %v1474, %v1475
    %v1576 = vsel %vm1525, %v1473, %v1474
    %v1577 = vsel %vm1525, %v1472, %v1473
    %v1578 = vsel %vm1525, %v1471, %v1472
    %v1579 = vsel %vm1525, %v1470, %v1471
    %v1580 = vsel %vm1525, %v1469, %v1470
    %v1581 = vsel %vm1525, %v1468, %v1469
    %v1582 = vsel %vm1525, %v1467, %v1468
    %v1583 = vsel %vm1525, %v1466, %v1467
    %v1584 = vsel %vm1525, %v1465, %v1466
    %v1585 = vsel %vm1525, %v1464, %v1465
    %v1586 = vsel %vm1525, %v1463, %v1464
    %v1587 = vsel %vm1525, %v1462, %v1463
    %v1588 = vsel %vm1525, %v1461, %v1462
    %v1589 = vsel %vm1525, %v1524, %v1461
    %v1590 = vsel %vm38, %v1588, 0.0
    %v1591 = vsel %vm39, %v1587, 0.0
    %v1592 = vsel %vm38, %v1586, 0.0
    %v1593 = vsel %vm39, %v1585, 0.0
    %v1594 = vsel %vm38, %v1584, 0.0
    %v1595 = vsel %vm39, %v1583, 0.0
    %v1596 = vsel %vm38, %v1582, 0.0
    %v1597 = vsel %vm39, %v1581, 0.0
    %v1598 = vsel %vm38, %v1580, 0.0
    %v1599 = vsel %vm39, %v1579, 0.0
    %v1600 = vsel %vm38, %v1578, 0.0
    %v1601 = vsel %vm39, %v1577, 0.0
    %v1602 = vsel %vm38, %v1576, 0.0
    %v1603 = vsel %vm39, %v1575, 0.0
    %v1604 = vsel %vm38, %v1574, 0.0
    %v1605 = vsel %vm39, %v1573, 0.0
    %v1606 = vsel %vm38, %v1572, 0.0
    %v1607 = vsel %vm39, %v1571, 0.0
    %v1608 = vsel %vm38, %v1570, 0.0
    %v1609 = vsel %vm39, %v1569, 0.0
    %v1610 = vsel %vm38, %v1568, 0.0
    %v1611 = vsel %vm39, %v1567, 0.0
    %v1612 = vsel %vm38, %v1566, 0.0
    %v1613 = vsel %vm39, %v1565, 0.0
    %v1614 = vsel %vm38, %v1564, 0.0
    %v1615 = vsel %vm39, %v1563, 0.0
    %v1616 = vsel %vm38, %v1562, 0.0
    %v1617 = vsel %vm39, %v1561, 0.0
    %v1618 = vsel %vm38, %v1560, 0.0
    %v1619 = vsel %vm39, %v1559, 0.0
    %v1620 = vsel %vm38, %v1558, 0.0
    %v1621 = vsel %vm39, %v1557, 0.0
    %v1622 = vsel %vm38, %v1556, 0.0
    %v1623 = vsel %vm39, %v1555, 0.0
    %v1624 = vsel %vm38, %v1554, 0.0
    %v1625 = vsel %vm39, %v1553, 0.0
    %v1626 = vsel %vm38, %v1552, 0.0
    %v1627 = vsel %vm39, %v1551, 0.0
    %v1628 = vsel %vm38, %v1550, 0.0
    %v1629 = vsel %vm39, %v1549, 0.0
    %v1630 = vsel %vm38, %v1548, 0.0
    %v1631 = vsel %vm39, %v1547, 0.0
    %v1632 = vsel %vm38, %v1546, 0.0
    %v1633 = vsel %vm39, %v1545, 0.0
    %v1634 = vsel %vm38, %v1544, 0.0
    %v1635 = vsel %vm39, %v1543, 0.0
    %v1636 = vsel %vm38, %v1542, 0.0
    %v1637 = vsel %vm39, %v1541, 0.0
    %v1638 = vsel %vm38, %v1540, 0.0
    %v1639 = vsel %vm39, %v1539, 0.0
    %v1640 = vsel %vm38, %v1538, 0.0
    %v1641 = vsel %vm39, %v1537, 0.0
    %v1642 = vsel %vm38, %v1536, 0.0
    %v1643 = vsel %vm39, %v1535, 0.0
    %v1644 = vsel %vm38, %v1534, 0.0
    %v1645 = vsel %vm39, %v1533, 0.0
    %v1646 = vsel %vm38, %v1532, 0.0
    %v1647 = vsel %vm39, %v1531, 0.0
    %v1648 = vsel %vm38, %v1530, 0.0
    %v1649 = vsel %vm39, %v1529, 0.0
    %v1650 = vsel %vm38, %v1528, 0.0
    %v1651 = vsel %vm39, %v1527, 0.0
    %v1652 = vsel %vm38, %v1526, 0.0
    %v1653 = vsel %vm39, %v1589, 0.0
    %v1654 = vadd.f32 %v885, %v1590
    %v1655 = vadd.f32 %v888, %v1591
    %v1656 = vadd.f32 %v893, %v1592
    %v1657 = vadd.f32 %v896, %v1593
    %v1658 = vadd.f32 %v901, %v1594
    %v1659 = vadd.f32 %v904, %v1595
    %v1660 = vadd.f32 %v909, %v1596
    %v1661 = vadd.f32 %v912, %v1597
    %v1662 = vadd.f32 %v917, %v1598
    %v1663 = vadd.f32 %v920, %v1599
    %v1664 = vadd.f32 %v925, %v1600
    %v1665 = vadd.f32 %v928, %v1601
    %v1666 = vadd.f32 %v933, %v1602
    %v1667 = vadd.f32 %v936, %v1603
    %v1668 = vadd.f32 %v941, %v1604
    %v1669 = vadd.f32 %v944, %v1605
    %v1670 = vadd.f32 %v949, %v1606
    %v1671 = vadd.f32 %v952, %v1607
    %v1672 = vadd.f32 %v957, %v1608
    %v1673 = vadd.f32 %v960, %v1609
    %v1674 = vadd.f32 %v965, %v1610
    %v1675 = vadd.f32 %v968, %v1611
    %v1676 = vadd.f32 %v973, %v1612
    %v1677 = vadd.f32 %v976, %v1613
    %v1678 = vadd.f32 %v981, %v1614
    %v1679 = vadd.f32 %v984, %v1615
    %v1680 = vadd.f32 %v989, %v1616
    %v1681 = vadd.f32 %v992, %v1617
    %v1682 = vadd.f32 %v997, %v1618
    %v1683 = vadd.f32 %v1000, %v1619
    %v1684 = vadd.f32 %v1005, %v1620
    %v1685 = vadd.f32 %v1008, %v1621
    %v1686 = vadd.f32 %v1013, %v1622
    %v1687 = vadd.f32 %v1016, %v1623
    %v1688 = vadd.f32 %v1021, %v1624
    %v1689 = vadd.f32 %v1024, %v1625
    %v1690 = vadd.f32 %v1029, %v1626
    %v1691 = vadd.f32 %v1032, %v1627
    %v1692 = vadd.f32 %v1037, %v1628
    %v1693 = vadd.f32 %v1040, %v1629
    %v1694 = vadd.f32 %v1045, %v1630
    %v1695 = vadd.f32 %v1048, %v1631
    %v1696 = vadd.f32 %v1053, %v1632
    %v1697 = vadd.f32 %v1056, %v1633
    %v1698 = vadd.f32 %v1061, %v1634
    %v1699 = vadd.f32 %v1064, %v1635
    %v1700 = vadd.f32 %v1069, %v1636
    %v1701 = vadd.f32 %v1072, %v1637
    %v1702 = vadd.f32 %v1077, %v1638
    %v1703 = vadd.f32 %v1080, %v1639
    %v1704 = vadd.f32 %v1085, %v1640
    %v1705 = vadd.f32 %v1088, %v1641
    %v1706 = vadd.f32 %v1093, %v1642
    %v1707 = vadd.f32 %v1096, %v1643
    %v1708 = vadd.f32 %v1101, %v1644
    %v1709 = vadd.f32 %v1104, %v1645
    %v1710 = vadd.f32 %v1109, %v1646
    %v1711 = vadd.f32 %v1112, %v1647
    %v1712 = vadd.f32 %v1117, %v1648
    %v1713 = vadd.f32 %v1120, %v1649
    %v1714 = vadd.f32 %v1125, %v1650
    %v1715 = vadd.f32 %v1128, %v1651
    %v1716 = vadd.f32 %v1133, %v1652
    %v1717 = vadd.f32 %v1136, %v1653
    %v1718 = vld [vmem:[%s142] sm:$0xff]
    %v1719 = vld [vmem:[%s142 + $0x8] sm:$0xff]
    %v1720 = vld [vmem:[%s142 + $0x10] sm:$0xff]
    %v1721 = vld [vmem:[%s142 + $0x18] sm:$0xff]
    %v1722 = vld [vmem:[%s142 + $0x20] sm:$0xff]
    %v1723 = vld [vmem:[%s142 + $0x28] sm:$0xff]
    %v1724 = vld [vmem:[%s142 + $0x30] sm:$0xff]
    %v1725 = vld [vmem:[%s142 + $0x38] sm:$0xff]
    %v1726 = vld [vmem:[%s142 + $0x40] sm:$0xff]
    %v1727 = vld [vmem:[%s142 + $0x48] sm:$0xff]
    %v1728 = vld [vmem:[%s142 + $0x50] sm:$0xff]
    %v1729 = vld [vmem:[%s142 + $0x58] sm:$0xff]
    %v1730 = vld [vmem:[%s142 + $0x60] sm:$0xff]
    %v1731 = vld [vmem:[%s142 + $0x68] sm:$0xff]
    %v1732 = vld [vmem:[%s142 + $0x70] sm:$0xff]
    %v1733 = vld [vmem:[%s142 + $0x78] sm:$0xff]
    %v1734 = vld [vmem:[%s142 + $0x90] sm:$0xff]
    %v1735 = vld [vmem:[%s142 + $0x98] sm:$0xff]
    %v1736 = vld [vmem:[%s142 + $0xa0] sm:$0xff]
    %v1737 = vld [vmem:[%s142 + $0xa8] sm:$0xff]
    %v1738 = vld [vmem:[%s142 + $0xb0] sm:$0xff]
    %v1739 = vld [vmem:[%s142 + $0xb8] sm:$0xff]
    %v1740 = vld [vmem:[%s142 + $0xc0] sm:$0xff]
    %v1741 = vld [vmem:[%s142 + $0xc8] sm:$0xff]
    %v1742 = vld [vmem:[%s142 + $0xd0] sm:$0xff]
    %v1743 = vld [vmem:[%s142 + $0xd8] sm:$0xff]
    %v1744 = vld [vmem:[%s142 + $0xe0] sm:$0xff]
    %v1745 = vld [vmem:[%s142 + $0xe8] sm:$0xff]
    %v1746 = vld [vmem:[%s142 + $0xf0] sm:$0xff]
    %v1747 = vld [vmem:[%s142 + $0xf8] sm:$0xff]
    %v1748 = vld [vmem:[%s142 + $0x100] sm:$0xff]
    %v1749 = vld [vmem:[%s142 + $0x108] sm:$0xff]
    %s1750 = scalar_lea.vmem %s1, 128
    %v1751 = vld [vmem:[%s1750] sm:$0xf]
    %v1752 = vld [vmem:[%s1750 + $0x4] sm:$0xf]
    %v1753 = vld [vmem:[%s1750 + $0x8] sm:$0xf]
    %v1754 = vld [vmem:[%s1750 + $0xc] sm:$0xf]
    %v1755 = vld [vmem:[%s1750 + $0x10] sm:$0xf]
    %v1756 = vld [vmem:[%s1750 + $0x14] sm:$0xf]
    %v1757 = vld [vmem:[%s1750 + $0x18] sm:$0xf]
    %v1758 = vld [vmem:[%s1750 + $0x1c] sm:$0xf]
    %v1767 = vunpack.c.l.b16 %v1751
    %v1768 = vunpack.c.l.b16 %v1752
    %v1769 = vunpack.c.l.b16 %v1753
    %v1770 = vunpack.c.l.b16 %v1754
    %v1771 = vunpack.c.l.b16 %v1755
    %v1772 = vunpack.c.l.b16 %v1756
    %v1773 = vunpack.c.l.b16 %v1757
    %v1774 = vunpack.c.l.b16 %v1758
    %v1775 = vpack.c.b16 %v1768, %v1767
    %v1776 = vpack.c.b16 %v1770, %v1769
    %v1777 = vpack.c.b16 %v1772, %v1771
    %v1778 = vpack.c.b16 %v1774, %v1773
    %v1784 = vsel %vm40, %v1718, 0
    %v1787 = vsel %vm40, %v1719, 0
    %v1790 = vsel %vm40, %v1720, 0
    %v1793 = vsel %vm40, %v1721, 0
    %v1796 = vsel %vm40, %v1722, 0
    %v1799 = vsel %vm40, %v1723, 0
    %v1802 = vsel %vm40, %v1724, 0
    %v1805 = vsel %vm40, %v1725, 0
    %v1808 = vsel %vm40, %v1726, 0
    %v1811 = vsel %vm40, %v1727, 0
    %v1814 = vsel %vm40, %v1728, 0
    %v1817 = vsel %vm40, %v1729, 0
    %v1820 = vsel %vm40, %v1730, 0
    %v1823 = vsel %vm40, %v1731, 0
    %v1826 = vsel %vm40, %v1732, 0
    %v1829 = vsel %vm40, %v1733, 0
    %v1832 = vsel %vm40, %v1734, 0
    %v1835 = vsel %vm40, %v1735, 0
    %v1838 = vsel %vm40, %v1736, 0
    %v1841 = vsel %vm40, %v1737, 0
    %v1844 = vsel %vm40, %v1738, 0
    %v1847 = vsel %vm40, %v1739, 0
    %v1850 = vsel %vm40, %v1740, 0
    %v1853 = vsel %vm40, %v1741, 0
    %v1856 = vsel %vm40, %v1742, 0
    %v1859 = vsel %vm40, %v1743, 0
    %v1862 = vsel %vm40, %v1744, 0
    %v1865 = vsel %vm40, %v1745, 0
    %v1868 = vsel %vm40, %v1746, 0
    %v1871 = vsel %vm40, %v1747, 0
    %v1874 = vsel %vm40, %v1748, 0
    %v1877 = vsel %vm40, %v1749, 0
    %1879 = vmatprep.subr.bf16.mxu0 0
    %1880 = vmatpush1.bf16.msra.mxu0 %v1775
    %1881 = vmatprep.subr.bf16.mxu0 0
    %1882 = vmatpush1.bf16.msra.mxu0 %v1776
    %1883 = vmatprep.subr.bf16.mxu0 0
    %1884 = vmatpush1.bf16.msra.mxu0 %v1777
    %1885 = vmatprep.subr.bf16.mxu0 0
    %1886 = vmatpush1.bf16.msra.mxu0 %v1778
    %1887 = vmatprep.subr.bf16.mxu0 0
    %1888 = vmatpush1.bf16.msra.mxu0 0
    %1889 = vmatprep.subr.bf16.mxu0 0
    %1890 = vmatpush1.bf16.msra.mxu0 0
    %1891 = vmatprep.subr.bf16.mxu0 0
    %1892 = vmatpush1.bf16.msra.mxu0 0
    %1893 = vmatprep.subr.bf16.mxu0 0
    %1894 = vmatpush1.bf16.msra.mxu0 0
    %1895 = vmatprep.subr.bf16.mxu0 0
    %1896 = vmatpush1.bf16.msra.mxu0 0
    %1897 = vmatprep.subr.bf16.mxu0 0
    %1898 = vmatpush1.bf16.msra.mxu0 0
    %1899 = vmatprep.subr.bf16.mxu0 0
    %1900 = vmatpush1.bf16.msra.mxu0 0
    %1901 = vmatprep.subr.bf16.mxu0 0
    %1902 = vmatpush1.bf16.msra.mxu0 0
    %1903 = vmatprep.subr.bf16.mxu0 0
    %1904 = vmatpush1.bf16.msra.mxu0 0
    %1905 = vmatprep.subr.bf16.mxu0 0
    %1906 = vmatpush1.bf16.msra.mxu0 0
    %1907 = vmatprep.subr.bf16.mxu0 0
    %1908 = vmatpush1.bf16.msra.mxu0 0
    %1909 = vmatprep.subr.bf16.mxu0 0
    %1910 = vmatpush1.bf16.msra.mxu0 0
    %1911 = vmatprep.mubr.bf16.mxu0 0
    %1912 = vmatmul.mubr.bf16.gmra.mrb[0].mxu0 %v1784
    %v1913 = vpop.f32.mrb[0].mxu0
    %v1914 = vadd.f32 0.0, %v1913
    %v1915 = vpop.f32.mrb[0].mxu0
    %v1916 = vpop.f32.mrb[0].mxu0
    %v1917 = vadd.f32 0.0, %v1916
    %v1918 = vpop.f32.mrb[0].mxu0
    %1919 = vmatprep.mubr.bf16.mxu0 0
    %1920 = vmatmul.mubr.bf16.gmra.mrb[0].mxu0 %v1787
    %v1921 = vpop.f32.mrb[0].mxu0
    %v1922 = vadd.f32 0.0, %v1921
    %v1923 = vpop.f32.mrb[0].mxu0
    %v1924 = vpop.f32.mrb[0].mxu0
    %v1925 = vadd.f32 0.0, %v1924
    %v1926 = vpop.f32.mrb[0].mxu0
    %1927 = vmatprep.mubr.bf16.mxu0 0
    %1928 = vmatmul.mubr.bf16.gmra.mrb[0].mxu0 %v1790
    %v1929 = vpop.f32.mrb[0].mxu0
    %v1930 = vadd.f32 0.0, %v1929
    %v1931 = vpop.f32.mrb[0].mxu0
    %v1932 = vpop.f32.mrb[0].mxu0
    %v1933 = vadd.f32 0.0, %v1932
    %v1934 = vpop.f32.mrb[0].mxu0
    %1935 = vmatprep.mubr.bf16.mxu0 0
    %1936 = vmatmul.mubr.bf16.gmra.mrb[0].mxu0 %v1793
    %v1937 = vpop.f32.mrb[0].mxu0
    %v1938 = vadd.f32 0.0, %v1937
    %v1939 = vpop.f32.mrb[0].mxu0
    %v1940 = vpop.f32.mrb[0].mxu0
    %v1941 = vadd.f32 0.0, %v1940
    %v1942 = vpop.f32.mrb[0].mxu0
    %1943 = vmatprep.mubr.bf16.mxu0 0
    %1944 = vmatmul.mubr.bf16.gmra.mrb[0].mxu0 %v1796
    %v1945 = vpop.f32.mrb[0].mxu0
    %v1946 = vadd.f32 0.0, %v1945
    %v1947 = vpop.f32.mrb[0].mxu0
    %v1948 = vpop.f32.mrb[0].mxu0
    %v1949 = vadd.f32 0.0, %v1948
    %v1950 = vpop.f32.mrb[0].mxu0
    %1951 = vmatprep.mubr.bf16.mxu0 0
    %1952 = vmatmul.mubr.bf16.gmra.mrb[0].mxu0 %v1799
    %v1953 = vpop.f32.mrb[0].mxu0
    %v1954 = vadd.f32 0.0, %v1953
    %v1955 = vpop.f32.mrb[0].mxu0
    %v1956 = vpop.f32.mrb[0].mxu0
    %v1957 = vadd.f32 0.0, %v1956
    %v1958 = vpop.f32.mrb[0].mxu0
    %1959 = vmatprep.mubr.bf16.mxu0 0
    %1960 = vmatmul.mubr.bf16.gmra.mrb[0].mxu0 %v1802
    %v1961 = vpop.f32.mrb[0].mxu0
    %v1962 = vadd.f32 0.0, %v1961
    %v1963 = vpop.f32.mrb[0].mxu0
    %v1964 = vpop.f32.mrb[0].mxu0
    %v1965 = vadd.f32 0.0, %v1964
    %v1966 = vpop.f32.mrb[0].mxu0
    %1967 = vmatprep.mubr.bf16.mxu0 0
    %1968 = vmatmul.mubr.bf16.gmra.mrb[0].mxu0 %v1805
    %v1969 = vpop.f32.mrb[0].mxu0
    %v1970 = vadd.f32 0.0, %v1969
    %v1971 = vpop.f32.mrb[0].mxu0
    %v1972 = vpop.f32.mrb[0].mxu0
    %v1973 = vadd.f32 0.0, %v1972
    %v1974 = vpop.f32.mrb[0].mxu0
    %1975 = vmatprep.mubr.bf16.mxu0 0
    %1976 = vmatmul.mubr.bf16.gmra.mrb[0].mxu0 %v1808
    %v1977 = vpop.f32.mrb[0].mxu0
    %v1978 = vadd.f32 0.0, %v1977
    %v1979 = vpop.f32.mrb[0].mxu0
    %v1980 = vpop.f32.mrb[0].mxu0
    %v1981 = vadd.f32 0.0, %v1980
    %v1982 = vpop.f32.mrb[0].mxu0
    %1983 = vmatprep.mubr.bf16.mxu0 0
    %1984 = vmatmul.mubr.bf16.gmra.mrb[0].mxu0 %v1811
    %v1985 = vpop.f32.mrb[0].mxu0
    %v1986 = vadd.f32 0.0, %v1985
    %v1987 = vpop.f32.mrb[0].mxu0
    %v1988 = vpop.f32.mrb[0].mxu0
    %v1989 = vadd.f32 0.0, %v1988
    %v1990 = vpop.f32.mrb[0].mxu0
    %1991 = vmatprep.mubr.bf16.mxu0 0
    %1992 = vmatmul.mubr.bf16.gmra.mrb[0].mxu0 %v1814
    %v1993 = vpop.f32.mrb[0].mxu0
    %v1994 = vadd.f32 0.0, %v1993
    %v1995 = vpop.f32.mrb[0].mxu0
    %v1996 = vpop.f32.mrb[0].mxu0
    %v1997 = vadd.f32 0.0, %v1996
    %v1998 = vpop.f32.mrb[0].mxu0
    %1999 = vmatprep.mubr.bf16.mxu0 0
    %2000 = vmatmul.mubr.bf16.gmra.mrb[0].mxu0 %v1817
    %v2001 = vpop.f32.mrb[0].mxu0
    %v2002 = vadd.f32 0.0, %v2001
    %v2003 = vpop.f32.mrb[0].mxu0
    %v2004 = vpop.f32.mrb[0].mxu0
    %v2005 = vadd.f32 0.0, %v2004
    %v2006 = vpop.f32.mrb[0].mxu0
    %2007 = vmatprep.mubr.bf16.mxu0 0
    %2008 = vmatmul.mubr.bf16.gmra.mrb[0].mxu0 %v1820
    %v2009 = vpop.f32.mrb[0].mxu0
    %v2010 = vadd.f32 0.0, %v2009
    %v2011 = vpop.f32.mrb[0].mxu0
    %v2012 = vpop.f32.mrb[0].mxu0
    %v2013 = vadd.f32 0.0, %v2012
    %v2014 = vpop.f32.mrb[0].mxu0
    %2015 = vmatprep.mubr.bf16.mxu0 0
    %2016 = vmatmul.mubr.bf16.gmra.mrb[0].mxu0 %v1823
    %v2017 = vpop.f32.mrb[0].mxu0
    %v2018 = vadd.f32 0.0, %v2017
    %v2019 = vpop.f32.mrb[0].mxu0
    %v2020 = vpop.f32.mrb[0].mxu0
    %v2021 = vadd.f32 0.0, %v2020
    %v2022 = vpop.f32.mrb[0].mxu0
    %2023 = vmatprep.mubr.bf16.mxu0 0
    %2024 = vmatmul.mubr.bf16.gmra.mrb[0].mxu0 %v1826
    %v2025 = vpop.f32.mrb[0].mxu0
    %v2026 = vadd.f32 0.0, %v2025
    %v2027 = vpop.f32.mrb[0].mxu0
    %v2028 = vpop.f32.mrb[0].mxu0
    %v2029 = vadd.f32 0.0, %v2028
    %v2030 = vpop.f32.mrb[0].mxu0
    %2031 = vmatprep.mubr.bf16.mxu0 0
    %2032 = vmatmul.mubr.bf16.gmra.mrb[0].mxu0 %v1829
    %v2033 = vpop.f32.mrb[0].mxu0
    %v2034 = vadd.f32 0.0, %v2033
    %v2035 = vpop.f32.mrb[0].mxu0
    %v2036 = vpop.f32.mrb[0].mxu0
    %v2037 = vadd.f32 0.0, %v2036
    %v2038 = vpop.f32.mrb[0].mxu0
    %2039 = vmatprep.mubr.bf16.mxu0 0
    %2040 = vmatmul.mubr.bf16.gmra.mrb[0].mxu0 %v1832
    %v2041 = vpop.f32.mrb[0].mxu0
    %v2042 = vadd.f32 0.0, %v2041
    %v2043 = vpop.f32.mrb[0].mxu0
    %v2044 = vpop.f32.mrb[0].mxu0
    %v2045 = vadd.f32 0.0, %v2044
    %v2046 = vpop.f32.mrb[0].mxu0
    %2047 = vmatprep.mubr.bf16.mxu0 0
    %2048 = vmatmul.mubr.bf16.gmra.mrb[0].mxu0 %v1835
    %v2049 = vpop.f32.mrb[0].mxu0
    %v2050 = vadd.f32 0.0, %v2049
    %v2051 = vpop.f32.mrb[0].mxu0
    %v2052 = vpop.f32.mrb[0].mxu0
    %v2053 = vadd.f32 0.0, %v2052
    %v2054 = vpop.f32.mrb[0].mxu0
    %2055 = vmatprep.mubr.bf16.mxu0 0
    %2056 = vmatmul.mubr.bf16.gmra.mrb[0].mxu0 %v1838
    %v2057 = vpop.f32.mrb[0].mxu0
    %v2058 = vadd.f32 0.0, %v2057
    %v2059 = vpop.f32.mrb[0].mxu0
    %v2060 = vpop.f32.mrb[0].mxu0
    %v2061 = vadd.f32 0.0, %v2060
    %v2062 = vpop.f32.mrb[0].mxu0
    %2063 = vmatprep.mubr.bf16.mxu0 0
    %2064 = vmatmul.mubr.bf16.gmra.mrb[0].mxu0 %v1841
    %v2065 = vpop.f32.mrb[0].mxu0
    %v2066 = vadd.f32 0.0, %v2065
    %v2067 = vpop.f32.mrb[0].mxu0
    %v2068 = vpop.f32.mrb[0].mxu0
    %v2069 = vadd.f32 0.0, %v2068
    %v2070 = vpop.f32.mrb[0].mxu0
    %2071 = vmatprep.mubr.bf16.mxu0 0
    %2072 = vmatmul.mubr.bf16.gmra.mrb[0].mxu0 %v1844
    %v2073 = vpop.f32.mrb[0].mxu0
    %v2074 = vadd.f32 0.0, %v2073
    %v2075 = vpop.f32.mrb[0].mxu0
    %v2076 = vpop.f32.mrb[0].mxu0
    %v2077 = vadd.f32 0.0, %v2076
    %v2078 = vpop.f32.mrb[0].mxu0
    %2079 = vmatprep.mubr.bf16.mxu0 0
    %2080 = vmatmul.mubr.bf16.gmra.mrb[0].mxu0 %v1847
    %v2081 = vpop.f32.mrb[0].mxu0
    %v2082 = vadd.f32 0.0, %v2081
    %v2083 = vpop.f32.mrb[0].mxu0
    %v2084 = vpop.f32.mrb[0].mxu0
    %v2085 = vadd.f32 0.0, %v2084
    %v2086 = vpop.f32.mrb[0].mxu0
    %2087 = vmatprep.mubr.bf16.mxu0 0
    %2088 = vmatmul.mubr.bf16.gmra.mrb[0].mxu0 %v1850
    %v2089 = vpop.f32.mrb[0].mxu0
    %v2090 = vadd.f32 0.0, %v2089
    %v2091 = vpop.f32.mrb[0].mxu0
    %v2092 = vpop.f32.mrb[0].mxu0
    %v2093 = vadd.f32 0.0, %v2092
    %v2094 = vpop.f32.mrb[0].mxu0
    %2095 = vmatprep.mubr.bf16.mxu0 0
    %2096 = vmatmul.mubr.bf16.gmra.mrb[0].mxu0 %v1853
    %v2097 = vpop.f32.mrb[0].mxu0
    %v2098 = vadd.f32 0.0, %v2097
    %v2099 = vpop.f32.mrb[0].mxu0
    %v2100 = vpop.f32.mrb[0].mxu0
    %v2101 = vadd.f32 0.0, %v2100
    %v2102 = vpop.f32.mrb[0].mxu0
    %2103 = vmatprep.mubr.bf16.mxu0 0
    %2104 = vmatmul.mubr.bf16.gmra.mrb[0].mxu0 %v1856
    %v2105 = vpop.f32.mrb[0].mxu0
    %v2106 = vadd.f32 0.0, %v2105
    %v2107 = vpop.f32.mrb[0].mxu0
    %v2108 = vpop.f32.mrb[0].mxu0
    %v2109 = vadd.f32 0.0, %v2108
    %v2110 = vpop.f32.mrb[0].mxu0
    %2111 = vmatprep.mubr.bf16.mxu0 0
    %2112 = vmatmul.mubr.bf16.gmra.mrb[0].mxu0 %v1859
    %v2113 = vpop.f32.mrb[0].mxu0
    %v2114 = vadd.f32 0.0, %v2113
    %v2115 = vpop.f32.mrb[0].mxu0
    %v2116 = vpop.f32.mrb[0].mxu0
    %v2117 = vadd.f32 0.0, %v2116
    %v2118 = vpop.f32.mrb[0].mxu0
    %2119 = vmatprep.mubr.bf16.mxu0 0
    %2120 = vmatmul.mubr.bf16.gmra.mrb[0].mxu0 %v1862
    %v2121 = vpop.f32.mrb[0].mxu0
    %v2122 = vadd.f32 0.0, %v2121
    %v2123 = vpop.f32.mrb[0].mxu0
    %v2124 = vpop.f32.mrb[0].mxu0
    %v2125 = vadd.f32 0.0, %v2124
    %v2126 = vpop.f32.mrb[0].mxu0
    %2127 = vmatprep.mubr.bf16.mxu0 0
    %2128 = vmatmul.mubr.bf16.gmra.mrb[0].mxu0 %v1865
    %v2129 = vpop.f32.mrb[0].mxu0
    %v2130 = vadd.f32 0.0, %v2129
    %v2131 = vpop.f32.mrb[0].mxu0
    %v2132 = vpop.f32.mrb[0].mxu0
    %v2133 = vadd.f32 0.0, %v2132
    %v2134 = vpop.f32.mrb[0].mxu0
    %2135 = vmatprep.mubr.bf16.mxu0 0
    %2136 = vmatmul.mubr.bf16.gmra.mrb[0].mxu0 %v1868
    %v2137 = vpop.f32.mrb[0].mxu0
    %v2138 = vadd.f32 0.0, %v2137
    %v2139 = vpop.f32.mrb[0].mxu0
    %v2140 = vpop.f32.mrb[0].mxu0
    %v2141 = vadd.f32 0.0, %v2140
    %v2142 = vpop.f32.mrb[0].mxu0
    %2143 = vmatprep.mubr.bf16.mxu0 0
    %2144 = vmatmul.mubr.bf16.gmra.mrb[0].mxu0 %v1871
    %v2145 = vpop.f32.mrb[0].mxu0
    %v2146 = vadd.f32 0.0, %v2145
    %v2147 = vpop.f32.mrb[0].mxu0
    %v2148 = vpop.f32.mrb[0].mxu0
    %v2149 = vadd.f32 0.0, %v2148
    %v2150 = vpop.f32.mrb[0].mxu0
    %2151 = vmatprep.mubr.bf16.mxu0 0
    %2152 = vmatmul.mubr.bf16.gmra.mrb[0].mxu0 %v1874
    %v2153 = vpop.f32.mrb[0].mxu0
    %v2154 = vadd.f32 0.0, %v2153
    %v2155 = vpop.f32.mrb[0].mxu0
    %v2156 = vpop.f32.mrb[0].mxu0
    %v2157 = vadd.f32 0.0, %v2156
    %v2158 = vpop.f32.mrb[0].mxu0
    %2159 = vmatprep.mubr.bf16.mxu0 0
    %2160 = vmatmul.mubr.bf16.gmra.mrb[0].mxu0 %v1877
    %v2161 = vpop.f32.mrb[0].mxu0
    %v2162 = vadd.f32 0.0, %v2161
    %v2163 = vpop.f32.mrb[0].mxu0
    %v2164 = vpop.f32.mrb[0].mxu0
    %v2165 = vadd.f32 0.0, %v2164
    %v2166 = vpop.f32.mrb[0].mxu0
    %2167 = vdwg.mxu0
    %v2168 = vadd.f32 %v1654, %v1914
    %v2169 = vadd.f32 %v1655, %v1917
    %v2170 = vadd.f32 %v1656, %v1922
    %v2171 = vadd.f32 %v1657, %v1925
    %v2172 = vadd.f32 %v1658, %v1930
    %v2173 = vadd.f32 %v1659, %v1933
    %v2174 = vadd.f32 %v1660, %v1938
    %v2175 = vadd.f32 %v1661, %v1941
    %v2176 = vadd.f32 %v1662, %v1946
    %v2177 = vadd.f32 %v1663, %v1949
    %v2178 = vadd.f32 %v1664, %v1954
    %v2179 = vadd.f32 %v1665, %v1957
    %v2180 = vadd.f32 %v1666, %v1962
    %v2181 = vadd.f32 %v1667, %v1965
    %v2182 = vadd.f32 %v1668, %v1970
    %v2183 = vadd.f32 %v1669, %v1973
    %v2184 = vadd.f32 %v1670, %v1978
    %v2185 = vadd.f32 %v1671, %v1981
    %v2186 = vadd.f32 %v1672, %v1986
    %v2187 = vadd.f32 %v1673, %v1989
    %v2188 = vadd.f32 %v1674, %v1994
    %v2189 = vadd.f32 %v1675, %v1997
    %v2190 = vadd.f32 %v1676, %v2002
    %v2191 = vadd.f32 %v1677, %v2005
    %v2192 = vadd.f32 %v1678, %v2010
    %v2193 = vadd.f32 %v1679, %v2013
    %v2194 = vadd.f32 %v1680, %v2018
    %v2195 = vadd.f32 %v1681, %v2021
    %v2196 = vadd.f32 %v1682, %v2026
    %v2197 = vadd.f32 %v1683, %v2029
    %v2198 = vadd.f32 %v1684, %v2034
    %v2199 = vadd.f32 %v1685, %v2037
    %v2200 = vadd.f32 %v1686, %v2042
    %v2201 = vadd.f32 %v1687, %v2045
    %v2202 = vadd.f32 %v1688, %v2050
    %v2203 = vadd.f32 %v1689, %v2053
    %v2204 = vadd.f32 %v1690, %v2058
    %v2205 = vadd.f32 %v1691, %v2061
    %v2206 = vadd.f32 %v1692, %v2066
    %v2207 = vadd.f32 %v1693, %v2069
    %v2208 = vadd.f32 %v1694, %v2074
    %v2209 = vadd.f32 %v1695, %v2077
    %v2210 = vadd.f32 %v1696, %v2082
    %v2211 = vadd.f32 %v1697, %v2085
    %v2212 = vadd.f32 %v1698, %v2090
    %v2213 = vadd.f32 %v1699, %v2093
    %v2214 = vadd.f32 %v1700, %v2098
    %v2215 = vadd.f32 %v1701, %v2101
    %v2216 = vadd.f32 %v1702, %v2106
    %v2217 = vadd.f32 %v1703, %v2109
    %v2218 = vadd.f32 %v1704, %v2114
    %v2219 = vadd.f32 %v1705, %v2117
    %v2220 = vadd.f32 %v1706, %v2122
    %v2221 = vadd.f32 %v1707, %v2125
    %v2222 = vadd.f32 %v1708, %v2130
    %v2223 = vadd.f32 %v1709, %v2133
    %v2224 = vadd.f32 %v1710, %v2138
    %v2225 = vadd.f32 %v1711, %v2141
    %v2226 = vadd.f32 %v1712, %v2146
    %v2227 = vadd.f32 %v1713, %v2149
    %v2228 = vadd.f32 %v1714, %v2154
    %v2229 = vadd.f32 %v1715, %v2157
    %v2230 = vadd.f32 %v1716, %v2162
    %v2231 = vadd.f32 %v1717, %v2165
    %s2232 = scalar_lea.vmem %s1, 96
    %v2233 = vld [vmem:[%s2232] sm:$0xf]
    %v2234 = vld [vmem:[%s2232 + $0x4] sm:$0xf]
    %v2235 = vld [vmem:[%s2232 + $0x8] sm:$0xf]
    %v2236 = vld [vmem:[%s2232 + $0xc] sm:$0xf]
    %v2237 = vld [vmem:[%s2232 + $0x10] sm:$0xf]
    %v2238 = vld [vmem:[%s2232 + $0x14] sm:$0xf]
    %v2239 = vld [vmem:[%s2232 + $0x18] sm:$0xf]
    %v2240 = vld [vmem:[%s2232 + $0x1c] sm:$0xf]
    %v2249 = vunpack.c.l.b16 %v2233
    %v2250 = vunpack.c.l.b16 %v2234
    %v2251 = vunpack.c.l.b16 %v2235
    %v2252 = vunpack.c.l.b16 %v2236
    %v2253 = vunpack.c.l.b16 %v2237
    %v2254 = vunpack.c.l.b16 %v2238
    %v2255 = vunpack.c.l.b16 %v2239
    %v2256 = vunpack.c.l.b16 %v2240
    %v2257 = vpack.c.b16 %v2250, %v2249
    %v2258 = vpack.c.b16 %v2252, %v2251
    %v2259 = vpack.c.b16 %v2254, %v2253
    %v2260 = vpack.c.b16 %v2256, %v2255
    %2265 = vmatprep.subr.bf16.mxu0 0
    %2266 = vmatpush1.bf16.msra.mxu0 %v2257
    %2267 = vmatprep.subr.bf16.mxu0 0
    %2268 = vmatpush1.bf16.msra.mxu0 %v2258
    %2269 = vmatprep.subr.bf16.mxu0 0
    %2270 = vmatpush1.bf16.msra.mxu0 %v2259
    %2271 = vmatprep.subr.bf16.mxu0 0
    %2272 = vmatpush1.bf16.msra.mxu0 %v2260
    %2273 = vmatprep.subr.bf16.mxu0 0
    %2274 = vmatpush1.bf16.msra.mxu0 0
    %2275 = vmatprep.subr.bf16.mxu0 0
    %2276 = vmatpush1.bf16.msra.mxu0 0
    %2277 = vmatprep.subr.bf16.mxu0 0
    %2278 = vmatpush1.bf16.msra.mxu0 0
    %2279 = vmatprep.subr.bf16.mxu0 0
    %2280 = vmatpush1.bf16.msra.mxu0 0
    %2281 = vmatprep.subr.bf16.mxu0 0
    %2282 = vmatpush1.bf16.msra.mxu0 0
    %2283 = vmatprep.subr.bf16.mxu0 0
    %2284 = vmatpush1.bf16.msra.mxu0 0
    %2285 = vmatprep.subr.bf16.mxu0 0
    %2286 = vmatpush1.bf16.msra.mxu0 0
    %2287 = vmatprep.subr.bf16.mxu0 0
    %2288 = vmatpush1.bf16.msra.mxu0 0
    %2289 = vmatprep.subr.bf16.mxu0 0
    %2290 = vmatpush1.bf16.msra.mxu0 0
    %2291 = vmatprep.subr.bf16.mxu0 0
    %2292 = vmatpush1.bf16.msra.mxu0 0
    %2293 = vmatprep.subr.bf16.mxu0 0
    %2294 = vmatpush1.bf16.msra.mxu0 0
    %2295 = vmatprep.subr.bf16.mxu0 0
    %2296 = vmatpush1.bf16.msra.mxu0 0
    %2297 = vmatprep.mubr.bf16.mxu0 0
    %2298 = vmatmul.mubr.bf16.gmra.mrb[0].mxu0 %v1784
    %v2299 = vpop.f32.mrb[0].mxu0
    %v2300 = vadd.f32 0.0, %v2299
    %v2301 = vpop.f32.mrb[0].mxu0
    %v2302 = vpop.f32.mrb[0].mxu0
    %v2303 = vadd.f32 0.0, %v2302
    %v2304 = vpop.f32.mrb[0].mxu0
    %2305 = vmatprep.mubr.bf16.mxu0 0
    %2306 = vmatmul.mubr.bf16.gmra.mrb[0].mxu0 %v1787
    %v2307 = vpop.f32.mrb[0].mxu0
    %v2308 = vadd.f32 0.0, %v2307
    %v2309 = vpop.f32.mrb[0].mxu0
    %v2310 = vpop.f32.mrb[0].mxu0
    %v2311 = vadd.f32 0.0, %v2310
    %v2312 = vpop.f32.mrb[0].mxu0
    %2313 = vmatprep.mubr.bf16.mxu0 0
    %2314 = vmatmul.mubr.bf16.gmra.mrb[0].mxu0 %v1790
    %v2315 = vpop.f32.mrb[0].mxu0
    %v2316 = vadd.f32 0.0, %v2315
    %v2317 = vpop.f32.mrb[0].mxu0
    %v2318 = vpop.f32.mrb[0].mxu0
    %v2319 = vadd.f32 0.0, %v2318
    %v2320 = vpop.f32.mrb[0].mxu0
    %2321 = vmatprep.mubr.bf16.mxu0 0
    %2322 = vmatmul.mubr.bf16.gmra.mrb[0].mxu0 %v1793
    %v2323 = vpop.f32.mrb[0].mxu0
    %v2324 = vadd.f32 0.0, %v2323
    %v2325 = vpop.f32.mrb[0].mxu0
    %v2326 = vpop.f32.mrb[0].mxu0
    %v2327 = vadd.f32 0.0, %v2326
    %v2328 = vpop.f32.mrb[0].mxu0
    %2329 = vmatprep.mubr.bf16.mxu0 0
    %2330 = vmatmul.mubr.bf16.gmra.mrb[0].mxu0 %v1796
    %v2331 = vpop.f32.mrb[0].mxu0
    %v2332 = vadd.f32 0.0, %v2331
    %v2333 = vpop.f32.mrb[0].mxu0
    %v2334 = vpop.f32.mrb[0].mxu0
    %v2335 = vadd.f32 0.0, %v2334
    %v2336 = vpop.f32.mrb[0].mxu0
    %2337 = vmatprep.mubr.bf16.mxu0 0
    %2338 = vmatmul.mubr.bf16.gmra.mrb[0].mxu0 %v1799
    %v2339 = vpop.f32.mrb[0].mxu0
    %v2340 = vadd.f32 0.0, %v2339
    %v2341 = vpop.f32.mrb[0].mxu0
    %v2342 = vpop.f32.mrb[0].mxu0
    %v2343 = vadd.f32 0.0, %v2342
    %v2344 = vpop.f32.mrb[0].mxu0
    %2345 = vmatprep.mubr.bf16.mxu0 0
    %2346 = vmatmul.mubr.bf16.gmra.mrb[0].mxu0 %v1802
    %v2347 = vpop.f32.mrb[0].mxu0
    %v2348 = vadd.f32 0.0, %v2347
    %v2349 = vpop.f32.mrb[0].mxu0
    %v2350 = vpop.f32.mrb[0].mxu0
    %v2351 = vadd.f32 0.0, %v2350
    %v2352 = vpop.f32.mrb[0].mxu0
    %2353 = vmatprep.mubr.bf16.mxu0 0
    %2354 = vmatmul.mubr.bf16.gmra.mrb[0].mxu0 %v1805
    %v2355 = vpop.f32.mrb[0].mxu0
    %v2356 = vadd.f32 0.0, %v2355
    %v2357 = vpop.f32.mrb[0].mxu0
    %v2358 = vpop.f32.mrb[0].mxu0
    %v2359 = vadd.f32 0.0, %v2358
    %v2360 = vpop.f32.mrb[0].mxu0
    %2361 = vmatprep.mubr.bf16.mxu0 0
    %2362 = vmatmul.mubr.bf16.gmra.mrb[0].mxu0 %v1808
    %v2363 = vpop.f32.mrb[0].mxu0
    %v2364 = vadd.f32 0.0, %v2363
    %v2365 = vpop.f32.mrb[0].mxu0
    %v2366 = vpop.f32.mrb[0].mxu0
    %v2367 = vadd.f32 0.0, %v2366
    %v2368 = vpop.f32.mrb[0].mxu0
    %2369 = vmatprep.mubr.bf16.mxu0 0
    %2370 = vmatmul.mubr.bf16.gmra.mrb[0].mxu0 %v1811
    %v2371 = vpop.f32.mrb[0].mxu0
    %v2372 = vadd.f32 0.0, %v2371
    %v2373 = vpop.f32.mrb[0].mxu0
    %v2374 = vpop.f32.mrb[0].mxu0
    %v2375 = vadd.f32 0.0, %v2374
    %v2376 = vpop.f32.mrb[0].mxu0
    %2377 = vmatprep.mubr.bf16.mxu0 0
    %2378 = vmatmul.mubr.bf16.gmra.mrb[0].mxu0 %v1814
    %v2379 = vpop.f32.mrb[0].mxu0
    %v2380 = vadd.f32 0.0, %v2379
    %v2381 = vpop.f32.mrb[0].mxu0
    %v2382 = vpop.f32.mrb[0].mxu0
    %v2383 = vadd.f32 0.0, %v2382
    %v2384 = vpop.f32.mrb[0].mxu0
    %2385 = vmatprep.mubr.bf16.mxu0 0
    %2386 = vmatmul.mubr.bf16.gmra.mrb[0].mxu0 %v1817
    %v2387 = vpop.f32.mrb[0].mxu0
    %v2388 = vadd.f32 0.0, %v2387
    %v2389 = vpop.f32.mrb[0].mxu0
    %v2390 = vpop.f32.mrb[0].mxu0
    %v2391 = vadd.f32 0.0, %v2390
    %v2392 = vpop.f32.mrb[0].mxu0
    %2393 = vmatprep.mubr.bf16.mxu0 0
    %2394 = vmatmul.mubr.bf16.gmra.mrb[0].mxu0 %v1820
    %v2395 = vpop.f32.mrb[0].mxu0
    %v2396 = vadd.f32 0.0, %v2395
    %v2397 = vpop.f32.mrb[0].mxu0
    %v2398 = vpop.f32.mrb[0].mxu0
    %v2399 = vadd.f32 0.0, %v2398
    %v2400 = vpop.f32.mrb[0].mxu0
    %2401 = vmatprep.mubr.bf16.mxu0 0
    %2402 = vmatmul.mubr.bf16.gmra.mrb[0].mxu0 %v1823
    %v2403 = vpop.f32.mrb[0].mxu0
    %v2404 = vadd.f32 0.0, %v2403
    %v2405 = vpop.f32.mrb[0].mxu0
    %v2406 = vpop.f32.mrb[0].mxu0
    %v2407 = vadd.f32 0.0, %v2406
    %v2408 = vpop.f32.mrb[0].mxu0
    %2409 = vmatprep.mubr.bf16.mxu0 0
    %2410 = vmatmul.mubr.bf16.gmra.mrb[0].mxu0 %v1826
    %v2411 = vpop.f32.mrb[0].mxu0
    %v2412 = vadd.f32 0.0, %v2411
    %v2413 = vpop.f32.mrb[0].mxu0
    %v2414 = vpop.f32.mrb[0].mxu0
    %v2415 = vadd.f32 0.0, %v2414
    %v2416 = vpop.f32.mrb[0].mxu0
    %2417 = vmatprep.mubr.bf16.mxu0 0
    %2418 = vmatmul.mubr.bf16.gmra.mrb[0].mxu0 %v1829
    %v2419 = vpop.f32.mrb[0].mxu0
    %v2420 = vadd.f32 0.0, %v2419
    %v2421 = vpop.f32.mrb[0].mxu0
    %v2422 = vpop.f32.mrb[0].mxu0
    %v2423 = vadd.f32 0.0, %v2422
    %v2424 = vpop.f32.mrb[0].mxu0
    %2425 = vmatprep.mubr.bf16.mxu0 0
    %2426 = vmatmul.mubr.bf16.gmra.mrb[0].mxu0 %v1832
    %v2427 = vpop.f32.mrb[0].mxu0
    %v2428 = vadd.f32 0.0, %v2427
    %v2429 = vpop.f32.mrb[0].mxu0
    %v2430 = vpop.f32.mrb[0].mxu0
    %v2431 = vadd.f32 0.0, %v2430
    %v2432 = vpop.f32.mrb[0].mxu0
    %2433 = vmatprep.mubr.bf16.mxu0 0
    %2434 = vmatmul.mubr.bf16.gmra.mrb[0].mxu0 %v1835
    %v2435 = vpop.f32.mrb[0].mxu0
    %v2436 = vadd.f32 0.0, %v2435
    %v2437 = vpop.f32.mrb[0].mxu0
    %v2438 = vpop.f32.mrb[0].mxu0
    %v2439 = vadd.f32 0.0, %v2438
    %v2440 = vpop.f32.mrb[0].mxu0
    %2441 = vmatprep.mubr.bf16.mxu0 0
    %2442 = vmatmul.mubr.bf16.gmra.mrb[0].mxu0 %v1838
    %v2443 = vpop.f32.mrb[0].mxu0
    %v2444 = vadd.f32 0.0, %v2443
    %v2445 = vpop.f32.mrb[0].mxu0
    %v2446 = vpop.f32.mrb[0].mxu0
    %v2447 = vadd.f32 0.0, %v2446
    %v2448 = vpop.f32.mrb[0].mxu0
    %2449 = vmatprep.mubr.bf16.mxu0 0
    %2450 = vmatmul.mubr.bf16.gmra.mrb[0].mxu0 %v1841
    %v2451 = vpop.f32.mrb[0].mxu0
    %v2452 = vadd.f32 0.0, %v2451
    %v2453 = vpop.f32.mrb[0].mxu0
    %v2454 = vpop.f32.mrb[0].mxu0
    %v2455 = vadd.f32 0.0, %v2454
    %v2456 = vpop.f32.mrb[0].mxu0
    %2457 = vmatprep.mubr.bf16.mxu0 0
    %2458 = vmatmul.mubr.bf16.gmra.mrb[0].mxu0 %v1844
    %v2459 = vpop.f32.mrb[0].mxu0
    %v2460 = vadd.f32 0.0, %v2459
    %v2461 = vpop.f32.mrb[0].mxu0
    %v2462 = vpop.f32.mrb[0].mxu0
    %v2463 = vadd.f32 0.0, %v2462
    %v2464 = vpop.f32.mrb[0].mxu0
    %2465 = vmatprep.mubr.bf16.mxu0 0
    %2466 = vmatmul.mubr.bf16.gmra.mrb[0].mxu0 %v1847
    %v2467 = vpop.f32.mrb[0].mxu0
    %v2468 = vadd.f32 0.0, %v2467
    %v2469 = vpop.f32.mrb[0].mxu0
    %v2470 = vpop.f32.mrb[0].mxu0
    %v2471 = vadd.f32 0.0, %v2470
    %v2472 = vpop.f32.mrb[0].mxu0
    %2473 = vmatprep.mubr.bf16.mxu0 0
    %2474 = vmatmul.mubr.bf16.gmra.mrb[0].mxu0 %v1850
    %v2475 = vpop.f32.mrb[0].mxu0
    %v2476 = vadd.f32 0.0, %v2475
    %v2477 = vpop.f32.mrb[0].mxu0
    %v2478 = vpop.f32.mrb[0].mxu0
    %v2479 = vadd.f32 0.0, %v2478
    %v2480 = vpop.f32.mrb[0].mxu0
    %2481 = vmatprep.mubr.bf16.mxu0 0
    %2482 = vmatmul.mubr.bf16.gmra.mrb[0].mxu0 %v1853
    %v2483 = vpop.f32.mrb[0].mxu0
    %v2484 = vadd.f32 0.0, %v2483
    %v2485 = vpop.f32.mrb[0].mxu0
    %v2486 = vpop.f32.mrb[0].mxu0
    %v2487 = vadd.f32 0.0, %v2486
    %v2488 = vpop.f32.mrb[0].mxu0
    %2489 = vmatprep.mubr.bf16.mxu0 0
    %2490 = vmatmul.mubr.bf16.gmra.mrb[0].mxu0 %v1856
    %v2491 = vpop.f32.mrb[0].mxu0
    %v2492 = vadd.f32 0.0, %v2491
    %v2493 = vpop.f32.mrb[0].mxu0
    %v2494 = vpop.f32.mrb[0].mxu0
    %v2495 = vadd.f32 0.0, %v2494
    %v2496 = vpop.f32.mrb[0].mxu0
    %2497 = vmatprep.mubr.bf16.mxu0 0
    %2498 = vmatmul.mubr.bf16.gmra.mrb[0].mxu0 %v1859
    %v2499 = vpop.f32.mrb[0].mxu0
    %v2500 = vadd.f32 0.0, %v2499
    %v2501 = vpop.f32.mrb[0].mxu0
    %v2502 = vpop.f32.mrb[0].mxu0
    %v2503 = vadd.f32 0.0, %v2502
    %v2504 = vpop.f32.mrb[0].mxu0
    %2505 = vmatprep.mubr.bf16.mxu0 0
    %2506 = vmatmul.mubr.bf16.gmra.mrb[0].mxu0 %v1862
    %v2507 = vpop.f32.mrb[0].mxu0
    %v2508 = vadd.f32 0.0, %v2507
    %v2509 = vpop.f32.mrb[0].mxu0
    %v2510 = vpop.f32.mrb[0].mxu0
    %v2511 = vadd.f32 0.0, %v2510
    %v2512 = vpop.f32.mrb[0].mxu0
    %2513 = vmatprep.mubr.bf16.mxu0 0
    %2514 = vmatmul.mubr.bf16.gmra.mrb[0].mxu0 %v1865
    %v2515 = vpop.f32.mrb[0].mxu0
    %v2516 = vadd.f32 0.0, %v2515
    %v2517 = vpop.f32.mrb[0].mxu0
    %v2518 = vpop.f32.mrb[0].mxu0
    %v2519 = vadd.f32 0.0, %v2518
    %v2520 = vpop.f32.mrb[0].mxu0
    %2521 = vmatprep.mubr.bf16.mxu0 0
    %2522 = vmatmul.mubr.bf16.gmra.mrb[0].mxu0 %v1868
    %v2523 = vpop.f32.mrb[0].mxu0
    %v2524 = vadd.f32 0.0, %v2523
    %v2525 = vpop.f32.mrb[0].mxu0
    %v2526 = vpop.f32.mrb[0].mxu0
    %v2527 = vadd.f32 0.0, %v2526
    %v2528 = vpop.f32.mrb[0].mxu0
    %2529 = vmatprep.mubr.bf16.mxu0 0
    %2530 = vmatmul.mubr.bf16.gmra.mrb[0].mxu0 %v1871
    %v2531 = vpop.f32.mrb[0].mxu0
    %v2532 = vadd.f32 0.0, %v2531
    %v2533 = vpop.f32.mrb[0].mxu0
    %v2534 = vpop.f32.mrb[0].mxu0
    %v2535 = vadd.f32 0.0, %v2534
    %v2536 = vpop.f32.mrb[0].mxu0
    %2537 = vmatprep.mubr.bf16.mxu0 0
    %2538 = vmatmul.mubr.bf16.gmra.mrb[0].mxu0 %v1874
    %v2539 = vpop.f32.mrb[0].mxu0
    %v2540 = vadd.f32 0.0, %v2539
    %v2541 = vpop.f32.mrb[0].mxu0
    %v2542 = vpop.f32.mrb[0].mxu0
    %v2543 = vadd.f32 0.0, %v2542
    %v2544 = vpop.f32.mrb[0].mxu0
    %2545 = vmatprep.mubr.bf16.mxu0 0
    %2546 = vmatmul.mubr.bf16.gmra.mrb[0].mxu0 %v1877
    %v2547 = vpop.f32.mrb[0].mxu0
    %v2548 = vadd.f32 0.0, %v2547
    %v2549 = vpop.f32.mrb[0].mxu0
    %v2550 = vpop.f32.mrb[0].mxu0
    %v2551 = vadd.f32 0.0, %v2550
    %v2552 = vpop.f32.mrb[0].mxu0
    %2553 = vdwg.mxu0
    %v2554 = vrot.slane %v2300, 7
    %v2555 = vrot.slane %v2303, 7
    %v2556 = vrot.slane %v2308, 7
    %v2557 = vrot.slane %v2311, 7
    %v2558 = vrot.slane %v2316, 7
    %v2559 = vrot.slane %v2319, 7
    %v2560 = vrot.slane %v2324, 7
    %v2561 = vrot.slane %v2327, 7
    %v2562 = vrot.slane %v2332, 7
    %v2563 = vrot.slane %v2335, 7
    %v2564 = vrot.slane %v2340, 7
    %v2565 = vrot.slane %v2343, 7
    %v2566 = vrot.slane %v2348, 7
    %v2567 = vrot.slane %v2351, 7
    %v2568 = vrot.slane %v2356, 7
    %v2569 = vrot.slane %v2359, 7
    %v2570 = vrot.slane %v2364, 7
    %v2571 = vrot.slane %v2367, 7
    %v2572 = vrot.slane %v2372, 7
    %v2573 = vrot.slane %v2375, 7
    %v2574 = vrot.slane %v2380, 7
    %v2575 = vrot.slane %v2383, 7
    %v2576 = vrot.slane %v2388, 7
    %v2577 = vrot.slane %v2391, 7
    %v2578 = vrot.slane %v2396, 7
    %v2579 = vrot.slane %v2399, 7
    %v2580 = vrot.slane %v2404, 7
    %v2581 = vrot.slane %v2407, 7
    %v2582 = vrot.slane %v2412, 7
    %v2583 = vrot.slane %v2415, 7
    %v2584 = vrot.slane %v2420, 7
    %v2585 = vrot.slane %v2423, 7
    %v2586 = vrot.slane %v2428, 7
    %v2587 = vrot.slane %v2431, 7
    %v2588 = vrot.slane %v2436, 7
    %v2589 = vrot.slane %v2439, 7
    %v2590 = vrot.slane %v2444, 7
    %v2591 = vrot.slane %v2447, 7
    %v2592 = vrot.slane %v2452, 7
    %v2593 = vrot.slane %v2455, 7
    %v2594 = vrot.slane %v2460, 7
    %v2595 = vrot.slane %v2463, 7
    %v2596 = vrot.slane %v2468, 7
    %v2597 = vrot.slane %v2471, 7
    %v2598 = vrot.slane %v2476, 7
    %v2599 = vrot.slane %v2479, 7
    %v2600 = vrot.slane %v2484, 7
    %v2601 = vrot.slane %v2487, 7
    %v2602 = vrot.slane %v2492, 7
    %v2603 = vrot.slane %v2495, 7
    %v2604 = vrot.slane %v2500, 7
    %v2605 = vrot.slane %v2503, 7
    %v2606 = vrot.slane %v2508, 7
    %v2607 = vrot.slane %v2511, 7
    %v2608 = vrot.slane %v2516, 7
    %v2609 = vrot.slane %v2519, 7
    %v2610 = vrot.slane %v2524, 7
    %v2611 = vrot.slane %v2527, 7
    %v2612 = vrot.slane %v2532, 7
    %v2613 = vrot.slane %v2535, 7
    %v2614 = vrot.slane %v2540, 7
    %v2615 = vrot.slane %v2543, 7
    %v2616 = vrot.slane %v2548, 7
    %v2617 = vrot.slane %v2551, 7
    %v2618 = vsel %vm697, %v2616, %v2617
    %v2619 = vsel %vm697, %v2615, %v2616
    %v2620 = vsel %vm697, %v2614, %v2615
    %v2621 = vsel %vm697, %v2613, %v2614
    %v2622 = vsel %vm697, %v2612, %v2613
    %v2623 = vsel %vm697, %v2611, %v2612
    %v2624 = vsel %vm697, %v2610, %v2611
    %v2625 = vsel %vm697, %v2609, %v2610
    %v2626 = vsel %vm697, %v2608, %v2609
    %v2627 = vsel %vm697, %v2607, %v2608
    %v2628 = vsel %vm697, %v2606, %v2607
    %v2629 = vsel %vm697, %v2605, %v2606
    %v2630 = vsel %vm697, %v2604, %v2605
    %v2631 = vsel %vm697, %v2603, %v2604
    %v2632 = vsel %vm697, %v2602, %v2603
    %v2633 = vsel %vm697, %v2601, %v2602
    %v2634 = vsel %vm697, %v2600, %v2601
    %v2635 = vsel %vm697, %v2599, %v2600
    %v2636 = vsel %vm697, %v2598, %v2599
    %v2637 = vsel %vm697, %v2597, %v2598
    %v2638 = vsel %vm697, %v2596, %v2597
    %v2639 = vsel %vm697, %v2595, %v2596
    %v2640 = vsel %vm697, %v2594, %v2595
    %v2641 = vsel %vm697, %v2593, %v2594
    %v2642 = vsel %vm697, %v2592, %v2593
    %v2643 = vsel %vm697, %v2591, %v2592
    %v2644 = vsel %vm697, %v2590, %v2591
    %v2645 = vsel %vm697, %v2589, %v2590
    %v2646 = vsel %vm697, %v2588, %v2589
    %v2647 = vsel %vm697, %v2587, %v2588
    %v2648 = vsel %vm697, %v2586, %v2587
    %v2649 = vsel %vm697, %v2585, %v2586
    %v2650 = vsel %vm697, %v2584, %v2585
    %v2651 = vsel %vm697, %v2583, %v2584
    %v2652 = vsel %vm697, %v2582, %v2583
    %v2653 = vsel %vm697, %v2581, %v2582
    %v2654 = vsel %vm697, %v2580, %v2581
    %v2655 = vsel %vm697, %v2579, %v2580
    %v2656 = vsel %vm697, %v2578, %v2579
    %v2657 = vsel %vm697, %v2577, %v2578
    %v2658 = vsel %vm697, %v2576, %v2577
    %v2659 = vsel %vm697, %v2575, %v2576
    %v2660 = vsel %vm697, %v2574, %v2575
    %v2661 = vsel %vm697, %v2573, %v2574
    %v2662 = vsel %vm697, %v2572, %v2573
    %v2663 = vsel %vm697, %v2571, %v2572
    %v2664 = vsel %vm697, %v2570, %v2571
    %v2665 = vsel %vm697, %v2569, %v2570
    %v2666 = vsel %vm697, %v2568, %v2569
    %v2667 = vsel %vm697, %v2567, %v2568
    %v2668 = vsel %vm697, %v2566, %v2567
    %v2669 = vsel %vm697, %v2565, %v2566
    %v2670 = vsel %vm697, %v2564, %v2565
    %v2671 = vsel %vm697, %v2563, %v2564
    %v2672 = vsel %vm697, %v2562, %v2563
    %v2673 = vsel %vm697, %v2561, %v2562
    %v2674 = vsel %vm697, %v2560, %v2561
    %v2675 = vsel %vm697, %v2559, %v2560
    %v2676 = vsel %vm697, %v2558, %v2559
    %v2677 = vsel %vm697, %v2557, %v2558
    %v2678 = vsel %vm697, %v2556, %v2557
    %v2679 = vsel %vm697, %v2555, %v2556
    %v2680 = vsel %vm697, %v2554, %v2555
    %v2681 = vsel %vm697, %v2617, %v2554
    %v2682 = vsel %vm36, %v2681, 0.0
    %v2683 = vsel %vm37, %v2680, 0.0
    %v2684 = vsel %vm36, %v2679, 0.0
    %v2685 = vsel %vm37, %v2678, 0.0
    %v2686 = vsel %vm36, %v2677, 0.0
    %v2687 = vsel %vm37, %v2676, 0.0
    %v2688 = vsel %vm36, %v2675, 0.0
    %v2689 = vsel %vm37, %v2674, 0.0
    %v2690 = vsel %vm36, %v2673, 0.0
    %v2691 = vsel %vm37, %v2672, 0.0
    %v2692 = vsel %vm36, %v2671, 0.0
    %v2693 = vsel %vm37, %v2670, 0.0
    %v2694 = vsel %vm36, %v2669, 0.0
    %v2695 = vsel %vm37, %v2668, 0.0
    %v2696 = vsel %vm36, %v2667, 0.0
    %v2697 = vsel %vm37, %v2666, 0.0
    %v2698 = vsel %vm36, %v2665, 0.0
    %v2699 = vsel %vm37, %v2664, 0.0
    %v2700 = vsel %vm36, %v2663, 0.0
    %v2701 = vsel %vm37, %v2662, 0.0
    %v2702 = vsel %vm36, %v2661, 0.0
    %v2703 = vsel %vm37, %v2660, 0.0
    %v2704 = vsel %vm36, %v2659, 0.0
    %v2705 = vsel %vm37, %v2658, 0.0
    %v2706 = vsel %vm36, %v2657, 0.0
    %v2707 = vsel %vm37, %v2656, 0.0
    %v2708 = vsel %vm36, %v2655, 0.0
    %v2709 = vsel %vm37, %v2654, 0.0
    %v2710 = vsel %vm36, %v2653, 0.0
    %v2711 = vsel %vm37, %v2652, 0.0
    %v2712 = vsel %vm36, %v2651, 0.0
    %v2713 = vsel %vm37, %v2650, 0.0
    %v2714 = vsel %vm36, %v2649, 0.0
    %v2715 = vsel %vm37, %v2648, 0.0
    %v2716 = vsel %vm36, %v2647, 0.0
    %v2717 = vsel %vm37, %v2646, 0.0
    %v2718 = vsel %vm36, %v2645, 0.0
    %v2719 = vsel %vm37, %v2644, 0.0
    %v2720 = vsel %vm36, %v2643, 0.0
    %v2721 = vsel %vm37, %v2642, 0.0
    %v2722 = vsel %vm36, %v2641, 0.0
    %v2723 = vsel %vm37, %v2640, 0.0
    %v2724 = vsel %vm36, %v2639, 0.0
    %v2725 = vsel %vm37, %v2638, 0.0
    %v2726 = vsel %vm36, %v2637, 0.0
    %v2727 = vsel %vm37, %v2636, 0.0
    %v2728 = vsel %vm36, %v2635, 0.0
    %v2729 = vsel %vm37, %v2634, 0.0
    %v2730 = vsel %vm36, %v2633, 0.0
    %v2731 = vsel %vm37, %v2632, 0.0
    %v2732 = vsel %vm36, %v2631, 0.0
    %v2733 = vsel %vm37, %v2630, 0.0
    %v2734 = vsel %vm36, %v2629, 0.0
    %v2735 = vsel %vm37, %v2628, 0.0
    %v2736 = vsel %vm36, %v2627, 0.0
    %v2737 = vsel %vm37, %v2626, 0.0
    %v2738 = vsel %vm36, %v2625, 0.0
    %v2739 = vsel %vm37, %v2624, 0.0
    %v2740 = vsel %vm36, %v2623, 0.0
    %v2741 = vsel %vm37, %v2622, 0.0
    %v2742 = vsel %vm36, %v2621, 0.0
    %v2743 = vsel %vm37, %v2620, 0.0
    %v2744 = vsel %vm36, %v2619, 0.0
    %v2745 = vsel %vm37, %v2618, 0.0
    %v2746 = vadd.f32 %v2168, %v2682
    %v2747 = vadd.f32 %v2169, %v2683
    %v2748 = vadd.f32 %v2170, %v2684
    %v2749 = vadd.f32 %v2171, %v2685
    %v2750 = vadd.f32 %v2172, %v2686
    %v2751 = vadd.f32 %v2173, %v2687
    %v2752 = vadd.f32 %v2174, %v2688
    %v2753 = vadd.f32 %v2175, %v2689
    %v2754 = vadd.f32 %v2176, %v2690
    %v2755 = vadd.f32 %v2177, %v2691
    %v2756 = vadd.f32 %v2178, %v2692
    %v2757 = vadd.f32 %v2179, %v2693
    %v2758 = vadd.f32 %v2180, %v2694
    %v2759 = vadd.f32 %v2181, %v2695
    %v2760 = vadd.f32 %v2182, %v2696
    %v2761 = vadd.f32 %v2183, %v2697
    %v2762 = vadd.f32 %v2184, %v2698
    %v2763 = vadd.f32 %v2185, %v2699
    %v2764 = vadd.f32 %v2186, %v2700
    %v2765 = vadd.f32 %v2187, %v2701
    %v2766 = vadd.f32 %v2188, %v2702
    %v2767 = vadd.f32 %v2189, %v2703
    %v2768 = vadd.f32 %v2190, %v2704
    %v2769 = vadd.f32 %v2191, %v2705
    %v2770 = vadd.f32 %v2192, %v2706
    %v2771 = vadd.f32 %v2193, %v2707
    %v2772 = vadd.f32 %v2194, %v2708
    %v2773 = vadd.f32 %v2195, %v2709
    %v2774 = vadd.f32 %v2196, %v2710
    %v2775 = vadd.f32 %v2197, %v2711
    %v2776 = vadd.f32 %v2198, %v2712
    %v2777 = vadd.f32 %v2199, %v2713
    %v2778 = vadd.f32 %v2200, %v2714
    %v2779 = vadd.f32 %v2201, %v2715
    %v2780 = vadd.f32 %v2202, %v2716
    %v2781 = vadd.f32 %v2203, %v2717
    %v2782 = vadd.f32 %v2204, %v2718
    %v2783 = vadd.f32 %v2205, %v2719
    %v2784 = vadd.f32 %v2206, %v2720
    %v2785 = vadd.f32 %v2207, %v2721
    %v2786 = vadd.f32 %v2208, %v2722
    %v2787 = vadd.f32 %v2209, %v2723
    %v2788 = vadd.f32 %v2210, %v2724
    %v2789 = vadd.f32 %v2211, %v2725
    %v2790 = vadd.f32 %v2212, %v2726
    %v2791 = vadd.f32 %v2213, %v2727
    %v2792 = vadd.f32 %v2214, %v2728
    %v2793 = vadd.f32 %v2215, %v2729
    %v2794 = vadd.f32 %v2216, %v2730
    %v2795 = vadd.f32 %v2217, %v2731
    %v2796 = vadd.f32 %v2218, %v2732
    %v2797 = vadd.f32 %v2219, %v2733
    %v2798 = vadd.f32 %v2220, %v2734
    %v2799 = vadd.f32 %v2221, %v2735
    %v2800 = vadd.f32 %v2222, %v2736
    %v2801 = vadd.f32 %v2223, %v2737
    %v2802 = vadd.f32 %v2224, %v2738
    %v2803 = vadd.f32 %v2225, %v2739
    %v2804 = vadd.f32 %v2226, %v2740
    %v2805 = vadd.f32 %v2227, %v2741
    %v2806 = vadd.f32 %v2228, %v2742
    %v2807 = vadd.f32 %v2229, %v2743
    %v2808 = vadd.f32 %v2230, %v2744
    %v2809 = vadd.f32 %v2231, %v2745
    %s2810 = scalar_lea.vmem %s1, 160
    %v2811 = vld [vmem:[%s2810] sm:$0xf]
    %v2812 = vld [vmem:[%s2810 + $0x4] sm:$0xf]
    %v2813 = vld [vmem:[%s2810 + $0x8] sm:$0xf]
    %v2814 = vld [vmem:[%s2810 + $0xc] sm:$0xf]
    %v2815 = vld [vmem:[%s2810 + $0x10] sm:$0xf]
    %v2816 = vld [vmem:[%s2810 + $0x14] sm:$0xf]
    %v2817 = vld [vmem:[%s2810 + $0x18] sm:$0xf]
    %v2818 = vld [vmem:[%s2810 + $0x1c] sm:$0xf]
    %v2827 = vunpack.c.l.b16 %v2811
    %v2828 = vunpack.c.l.b16 %v2812
    %v2829 = vunpack.c.l.b16 %v2813
    %v2830 = vunpack.c.l.b16 %v2814
    %v2831 = vunpack.c.l.b16 %v2815
    %v2832 = vunpack.c.l.b16 %v2816
    %v2833 = vunpack.c.l.b16 %v2817
    %v2834 = vunpack.c.l.b16 %v2818
    %v2835 = vpack.c.b16 %v2828, %v2827
    %v2836 = vpack.c.b16 %v2830, %v2829
    %v2837 = vpack.c.b16 %v2832, %v2831
    %v2838 = vpack.c.b16 %v2834, %v2833
    %2843 = vmatprep.subr.bf16.mxu0 0
    %2844 = vmatpush1.bf16.msra.mxu0 %v2835
    %2845 = vmatprep.subr.bf16.mxu0 0
    %2846 = vmatpush1.bf16.msra.mxu0 %v2836
    %2847 = vmatprep.subr.bf16.mxu0 0
    %2848 = vmatpush1.bf16.msra.mxu0 %v2837
    %2849 = vmatprep.subr.bf16.mxu0 0
    %2850 = vmatpush1.bf16.msra.mxu0 %v2838
    %2851 = vmatprep.subr.bf16.mxu0 0
    %2852 = vmatpush1.bf16.msra.mxu0 0
    %2853 = vmatprep.subr.bf16.mxu0 0
    %2854 = vmatpush1.bf16.msra.mxu0 0
    %2855 = vmatprep.subr.bf16.mxu0 0
    %2856 = vmatpush1.bf16.msra.mxu0 0
    %2857 = vmatprep.subr.bf16.mxu0 0
    %2858 = vmatpush1.bf16.msra.mxu0 0
    %2859 = vmatprep.subr.bf16.mxu0 0
    %2860 = vmatpush1.bf16.msra.mxu0 0
    %2861 = vmatprep.subr.bf16.mxu0 0
    %2862 = vmatpush1.bf16.msra.mxu0 0
    %2863 = vmatprep.subr.bf16.mxu0 0
    %2864 = vmatpush1.bf16.msra.mxu0 0
    %2865 = vmatprep.subr.bf16.mxu0 0
    %2866 = vmatpush1.bf16.msra.mxu0 0
    %2867 = vmatprep.subr.bf16.mxu0 0
    %2868 = vmatpush1.bf16.msra.mxu0 0
    %2869 = vmatprep.subr.bf16.mxu0 0
    %2870 = vmatpush1.bf16.msra.mxu0 0
    %2871 = vmatprep.subr.bf16.mxu0 0
    %2872 = vmatpush1.bf16.msra.mxu0 0
    %2873 = vmatprep.subr.bf16.mxu0 0
    %2874 = vmatpush1.bf16.msra.mxu0 0
    %2875 = vmatprep.mubr.bf16.mxu0 0
    %2876 = vmatmul.mubr.bf16.gmra.mrb[0].mxu0 %v1784
    %v2877 = vpop.f32.mrb[0].mxu0
    %v2878 = vadd.f32 0.0, %v2877
    %v2879 = vpop.f32.mrb[0].mxu0
    %v2880 = vpop.f32.mrb[0].mxu0
    %v2881 = vadd.f32 0.0, %v2880
    %v2882 = vpop.f32.mrb[0].mxu0
    %2883 = vmatprep.mubr.bf16.mxu0 0
    %2884 = vmatmul.mubr.bf16.gmra.mrb[0].mxu0 %v1787
    %v2885 = vpop.f32.mrb[0].mxu0
    %v2886 = vadd.f32 0.0, %v2885
    %v2887 = vpop.f32.mrb[0].mxu0
    %v2888 = vpop.f32.mrb[0].mxu0
    %v2889 = vadd.f32 0.0, %v2888
    %v2890 = vpop.f32.mrb[0].mxu0
    %2891 = vmatprep.mubr.bf16.mxu0 0
    %2892 = vmatmul.mubr.bf16.gmra.mrb[0].mxu0 %v1790
    %v2893 = vpop.f32.mrb[0].mxu0
    %v2894 = vadd.f32 0.0, %v2893
    %v2895 = vpop.f32.mrb[0].mxu0
    %v2896 = vpop.f32.mrb[0].mxu0
    %v2897 = vadd.f32 0.0, %v2896
    %v2898 = vpop.f32.mrb[0].mxu0
    %2899 = vmatprep.mubr.bf16.mxu0 0
    %2900 = vmatmul.mubr.bf16.gmra.mrb[0].mxu0 %v1793
    %v2901 = vpop.f32.mrb[0].mxu0
    %v2902 = vadd.f32 0.0, %v2901
    %v2903 = vpop.f32.mrb[0].mxu0
    %v2904 = vpop.f32.mrb[0].mxu0
    %v2905 = vadd.f32 0.0, %v2904
    %v2906 = vpop.f32.mrb[0].mxu0
    %2907 = vmatprep.mubr.bf16.mxu0 0
    %2908 = vmatmul.mubr.bf16.gmra.mrb[0].mxu0 %v1796
    %v2909 = vpop.f32.mrb[0].mxu0
    %v2910 = vadd.f32 0.0, %v2909
    %v2911 = vpop.f32.mrb[0].mxu0
    %v2912 = vpop.f32.mrb[0].mxu0
    %v2913 = vadd.f32 0.0, %v2912
    %v2914 = vpop.f32.mrb[0].mxu0
    %2915 = vmatprep.mubr.bf16.mxu0 0
    %2916 = vmatmul.mubr.bf16.gmra.mrb[0].mxu0 %v1799
    %v2917 = vpop.f32.mrb[0].mxu0
    %v2918 = vadd.f32 0.0, %v2917
    %v2919 = vpop.f32.mrb[0].mxu0
    %v2920 = vpop.f32.mrb[0].mxu0
    %v2921 = vadd.f32 0.0, %v2920
    %v2922 = vpop.f32.mrb[0].mxu0
    %2923 = vmatprep.mubr.bf16.mxu0 0
    %2924 = vmatmul.mubr.bf16.gmra.mrb[0].mxu0 %v1802
    %v2925 = vpop.f32.mrb[0].mxu0
    %v2926 = vadd.f32 0.0, %v2925
    %v2927 = vpop.f32.mrb[0].mxu0
    %v2928 = vpop.f32.mrb[0].mxu0
    %v2929 = vadd.f32 0.0, %v2928
    %v2930 = vpop.f32.mrb[0].mxu0
    %2931 = vmatprep.mubr.bf16.mxu0 0
    %2932 = vmatmul.mubr.bf16.gmra.mrb[0].mxu0 %v1805
    %v2933 = vpop.f32.mrb[0].mxu0
    %v2934 = vadd.f32 0.0, %v2933
    %v2935 = vpop.f32.mrb[0].mxu0
    %v2936 = vpop.f32.mrb[0].mxu0
    %v2937 = vadd.f32 0.0, %v2936
    %v2938 = vpop.f32.mrb[0].mxu0
    %2939 = vmatprep.mubr.bf16.mxu0 0
    %2940 = vmatmul.mubr.bf16.gmra.mrb[0].mxu0 %v1808
    %v2941 = vpop.f32.mrb[0].mxu0
    %v2942 = vadd.f32 0.0, %v2941
    %v2943 = vpop.f32.mrb[0].mxu0
    %v2944 = vpop.f32.mrb[0].mxu0
    %v2945 = vadd.f32 0.0, %v2944
    %v2946 = vpop.f32.mrb[0].mxu0
    %2947 = vmatprep.mubr.bf16.mxu0 0
    %2948 = vmatmul.mubr.bf16.gmra.mrb[0].mxu0 %v1811
    %v2949 = vpop.f32.mrb[0].mxu0
    %v2950 = vadd.f32 0.0, %v2949
    %v2951 = vpop.f32.mrb[0].mxu0
    %v2952 = vpop.f32.mrb[0].mxu0
    %v2953 = vadd.f32 0.0, %v2952
    %v2954 = vpop.f32.mrb[0].mxu0
    %2955 = vmatprep.mubr.bf16.mxu0 0
    %2956 = vmatmul.mubr.bf16.gmra.mrb[0].mxu0 %v1814
    %v2957 = vpop.f32.mrb[0].mxu0
    %v2958 = vadd.f32 0.0, %v2957
    %v2959 = vpop.f32.mrb[0].mxu0
    %v2960 = vpop.f32.mrb[0].mxu0
    %v2961 = vadd.f32 0.0, %v2960
    %v2962 = vpop.f32.mrb[0].mxu0
    %2963 = vmatprep.mubr.bf16.mxu0 0
    %2964 = vmatmul.mubr.bf16.gmra.mrb[0].mxu0 %v1817
    %v2965 = vpop.f32.mrb[0].mxu0
    %v2966 = vadd.f32 0.0, %v2965
    %v2967 = vpop.f32.mrb[0].mxu0
    %v2968 = vpop.f32.mrb[0].mxu0
    %v2969 = vadd.f32 0.0, %v2968
    %v2970 = vpop.f32.mrb[0].mxu0
    %2971 = vmatprep.mubr.bf16.mxu0 0
    %2972 = vmatmul.mubr.bf16.gmra.mrb[0].mxu0 %v1820
    %v2973 = vpop.f32.mrb[0].mxu0
    %v2974 = vadd.f32 0.0, %v2973
    %v2975 = vpop.f32.mrb[0].mxu0
    %v2976 = vpop.f32.mrb[0].mxu0
    %v2977 = vadd.f32 0.0, %v2976
    %v2978 = vpop.f32.mrb[0].mxu0
    %2979 = vmatprep.mubr.bf16.mxu0 0
    %2980 = vmatmul.mubr.bf16.gmra.mrb[0].mxu0 %v1823
    %v2981 = vpop.f32.mrb[0].mxu0
    %v2982 = vadd.f32 0.0, %v2981
    %v2983 = vpop.f32.mrb[0].mxu0
    %v2984 = vpop.f32.mrb[0].mxu0
    %v2985 = vadd.f32 0.0, %v2984
    %v2986 = vpop.f32.mrb[0].mxu0
    %2987 = vmatprep.mubr.bf16.mxu0 0
    %2988 = vmatmul.mubr.bf16.gmra.mrb[0].mxu0 %v1826
    %v2989 = vpop.f32.mrb[0].mxu0
    %v2990 = vadd.f32 0.0, %v2989
    %v2991 = vpop.f32.mrb[0].mxu0
    %v2992 = vpop.f32.mrb[0].mxu0
    %v2993 = vadd.f32 0.0, %v2992
    %v2994 = vpop.f32.mrb[0].mxu0
    %2995 = vmatprep.mubr.bf16.mxu0 0
    %2996 = vmatmul.mubr.bf16.gmra.mrb[0].mxu0 %v1829
    %v2997 = vpop.f32.mrb[0].mxu0
    %v2998 = vadd.f32 0.0, %v2997
    %v2999 = vpop.f32.mrb[0].mxu0
    %v3000 = vpop.f32.mrb[0].mxu0
    %v3001 = vadd.f32 0.0, %v3000
    %v3002 = vpop.f32.mrb[0].mxu0
    %3003 = vmatprep.mubr.bf16.mxu0 0
    %3004 = vmatmul.mubr.bf16.gmra.mrb[0].mxu0 %v1832
    %v3005 = vpop.f32.mrb[0].mxu0
    %v3006 = vadd.f32 0.0, %v3005
    %v3007 = vpop.f32.mrb[0].mxu0
    %v3008 = vpop.f32.mrb[0].mxu0
    %v3009 = vadd.f32 0.0, %v3008
    %v3010 = vpop.f32.mrb[0].mxu0
    %3011 = vmatprep.mubr.bf16.mxu0 0
    %3012 = vmatmul.mubr.bf16.gmra.mrb[0].mxu0 %v1835
    %v3013 = vpop.f32.mrb[0].mxu0
    %v3014 = vadd.f32 0.0, %v3013
    %v3015 = vpop.f32.mrb[0].mxu0
    %v3016 = vpop.f32.mrb[0].mxu0
    %v3017 = vadd.f32 0.0, %v3016
    %v3018 = vpop.f32.mrb[0].mxu0
    %3019 = vmatprep.mubr.bf16.mxu0 0
    %3020 = vmatmul.mubr.bf16.gmra.mrb[0].mxu0 %v1838
    %v3021 = vpop.f32.mrb[0].mxu0
    %v3022 = vadd.f32 0.0, %v3021
    %v3023 = vpop.f32.mrb[0].mxu0
    %v3024 = vpop.f32.mrb[0].mxu0
    %v3025 = vadd.f32 0.0, %v3024
    %v3026 = vpop.f32.mrb[0].mxu0
    %3027 = vmatprep.mubr.bf16.mxu0 0
    %3028 = vmatmul.mubr.bf16.gmra.mrb[0].mxu0 %v1841
    %v3029 = vpop.f32.mrb[0].mxu0
    %v3030 = vadd.f32 0.0, %v3029
    %v3031 = vpop.f32.mrb[0].mxu0
    %v3032 = vpop.f32.mrb[0].mxu0
    %v3033 = vadd.f32 0.0, %v3032
    %v3034 = vpop.f32.mrb[0].mxu0
    %3035 = vmatprep.mubr.bf16.mxu0 0
    %3036 = vmatmul.mubr.bf16.gmra.mrb[0].mxu0 %v1844
    %v3037 = vpop.f32.mrb[0].mxu0
    %v3038 = vadd.f32 0.0, %v3037
    %v3039 = vpop.f32.mrb[0].mxu0
    %v3040 = vpop.f32.mrb[0].mxu0
    %v3041 = vadd.f32 0.0, %v3040
    %v3042 = vpop.f32.mrb[0].mxu0
    %3043 = vmatprep.mubr.bf16.mxu0 0
    %3044 = vmatmul.mubr.bf16.gmra.mrb[0].mxu0 %v1847
    %v3045 = vpop.f32.mrb[0].mxu0
    %v3046 = vadd.f32 0.0, %v3045
    %v3047 = vpop.f32.mrb[0].mxu0
    %v3048 = vpop.f32.mrb[0].mxu0
    %v3049 = vadd.f32 0.0, %v3048
    %v3050 = vpop.f32.mrb[0].mxu0
    %3051 = vmatprep.mubr.bf16.mxu0 0
    %3052 = vmatmul.mubr.bf16.gmra.mrb[0].mxu0 %v1850
    %v3053 = vpop.f32.mrb[0].mxu0
    %v3054 = vadd.f32 0.0, %v3053
    %v3055 = vpop.f32.mrb[0].mxu0
    %v3056 = vpop.f32.mrb[0].mxu0
    %v3057 = vadd.f32 0.0, %v3056
    %v3058 = vpop.f32.mrb[0].mxu0
    %3059 = vmatprep.mubr.bf16.mxu0 0
    %3060 = vmatmul.mubr.bf16.gmra.mrb[0].mxu0 %v1853
    %v3061 = vpop.f32.mrb[0].mxu0
    %v3062 = vadd.f32 0.0, %v3061
    %v3063 = vpop.f32.mrb[0].mxu0
    %v3064 = vpop.f32.mrb[0].mxu0
    %v3065 = vadd.f32 0.0, %v3064
    %v3066 = vpop.f32.mrb[0].mxu0
    %3067 = vmatprep.mubr.bf16.mxu0 0
    %3068 = vmatmul.mubr.bf16.gmra.mrb[0].mxu0 %v1856
    %v3069 = vpop.f32.mrb[0].mxu0
    %v3070 = vadd.f32 0.0, %v3069
    %v3071 = vpop.f32.mrb[0].mxu0
    %v3072 = vpop.f32.mrb[0].mxu0
    %v3073 = vadd.f32 0.0, %v3072
    %v3074 = vpop.f32.mrb[0].mxu0
    %3075 = vmatprep.mubr.bf16.mxu0 0
    %3076 = vmatmul.mubr.bf16.gmra.mrb[0].mxu0 %v1859
    %v3077 = vpop.f32.mrb[0].mxu0
    %v3078 = vadd.f32 0.0, %v3077
    %v3079 = vpop.f32.mrb[0].mxu0
    %v3080 = vpop.f32.mrb[0].mxu0
    %v3081 = vadd.f32 0.0, %v3080
    %v3082 = vpop.f32.mrb[0].mxu0
    %3083 = vmatprep.mubr.bf16.mxu0 0
    %3084 = vmatmul.mubr.bf16.gmra.mrb[0].mxu0 %v1862
    %v3085 = vpop.f32.mrb[0].mxu0
    %v3086 = vadd.f32 0.0, %v3085
    %v3087 = vpop.f32.mrb[0].mxu0
    %v3088 = vpop.f32.mrb[0].mxu0
    %v3089 = vadd.f32 0.0, %v3088
    %v3090 = vpop.f32.mrb[0].mxu0
    %3091 = vmatprep.mubr.bf16.mxu0 0
    %3092 = vmatmul.mubr.bf16.gmra.mrb[0].mxu0 %v1865
    %v3093 = vpop.f32.mrb[0].mxu0
    %v3094 = vadd.f32 0.0, %v3093
    %v3095 = vpop.f32.mrb[0].mxu0
    %v3096 = vpop.f32.mrb[0].mxu0
    %v3097 = vadd.f32 0.0, %v3096
    %v3098 = vpop.f32.mrb[0].mxu0
    %3099 = vmatprep.mubr.bf16.mxu0 0
    %3100 = vmatmul.mubr.bf16.gmra.mrb[0].mxu0 %v1868
    %v3101 = vpop.f32.mrb[0].mxu0
    %v3102 = vadd.f32 0.0, %v3101
    %v3103 = vpop.f32.mrb[0].mxu0
    %v3104 = vpop.f32.mrb[0].mxu0
    %v3105 = vadd.f32 0.0, %v3104
    %v3106 = vpop.f32.mrb[0].mxu0
    %3107 = vmatprep.mubr.bf16.mxu0 0
    %3108 = vmatmul.mubr.bf16.gmra.mrb[0].mxu0 %v1871
    %v3109 = vpop.f32.mrb[0].mxu0
    %v3110 = vadd.f32 0.0, %v3109
    %v3111 = vpop.f32.mrb[0].mxu0
    %v3112 = vpop.f32.mrb[0].mxu0
    %v3113 = vadd.f32 0.0, %v3112
    %v3114 = vpop.f32.mrb[0].mxu0
    %3115 = vmatprep.mubr.bf16.mxu0 0
    %3116 = vmatmul.mubr.bf16.gmra.mrb[0].mxu0 %v1874
    %v3117 = vpop.f32.mrb[0].mxu0
    %v3118 = vadd.f32 0.0, %v3117
    %v3119 = vpop.f32.mrb[0].mxu0
    %v3120 = vpop.f32.mrb[0].mxu0
    %v3121 = vadd.f32 0.0, %v3120
    %v3122 = vpop.f32.mrb[0].mxu0
    %3123 = vmatprep.mubr.bf16.mxu0 0
    %3124 = vmatmul.mubr.bf16.gmra.mrb[0].mxu0 %v1877
    %v3125 = vpop.f32.mrb[0].mxu0
    %v3126 = vadd.f32 0.0, %v3125
    %v3127 = vpop.f32.mrb[0].mxu0
    %v3128 = vpop.f32.mrb[0].mxu0
    %v3129 = vadd.f32 0.0, %v3128
    %v3130 = vpop.f32.mrb[0].mxu0
    %3131 = vdwg.mxu0
    %v3132 = vrot.slane %v2878, 1
    %v3133 = vrot.slane %v2881, 1
    %v3134 = vrot.slane %v2886, 1
    %v3135 = vrot.slane %v2889, 1
    %v3136 = vrot.slane %v2894, 1
    %v3137 = vrot.slane %v2897, 1
    %v3138 = vrot.slane %v2902, 1
    %v3139 = vrot.slane %v2905, 1
    %v3140 = vrot.slane %v2910, 1
    %v3141 = vrot.slane %v2913, 1
    %v3142 = vrot.slane %v2918, 1
    %v3143 = vrot.slane %v2921, 1
    %v3144 = vrot.slane %v2926, 1
    %v3145 = vrot.slane %v2929, 1
    %v3146 = vrot.slane %v2934, 1
    %v3147 = vrot.slane %v2937, 1
    %v3148 = vrot.slane %v2942, 1
    %v3149 = vrot.slane %v2945, 1
    %v3150 = vrot.slane %v2950, 1
    %v3151 = vrot.slane %v2953, 1
    %v3152 = vrot.slane %v2958, 1
    %v3153 = vrot.slane %v2961, 1
    %v3154 = vrot.slane %v2966, 1
    %v3155 = vrot.slane %v2969, 1
    %v3156 = vrot.slane %v2974, 1
    %v3157 = vrot.slane %v2977, 1
    %v3158 = vrot.slane %v2982, 1
    %v3159 = vrot.slane %v2985, 1
    %v3160 = vrot.slane %v2990, 1
    %v3161 = vrot.slane %v2993, 1
    %v3162 = vrot.slane %v2998, 1
    %v3163 = vrot.slane %v3001, 1
    %v3164 = vrot.slane %v3006, 1
    %v3165 = vrot.slane %v3009, 1
    %v3166 = vrot.slane %v3014, 1
    %v3167 = vrot.slane %v3017, 1
    %v3168 = vrot.slane %v3022, 1
    %v3169 = vrot.slane %v3025, 1
    %v3170 = vrot.slane %v3030, 1
    %v3171 = vrot.slane %v3033, 1
    %v3172 = vrot.slane %v3038, 1
    %v3173 = vrot.slane %v3041, 1
    %v3174 = vrot.slane %v3046, 1
    %v3175 = vrot.slane %v3049, 1
    %v3176 = vrot.slane %v3054, 1
    %v3177 = vrot.slane %v3057, 1
    %v3178 = vrot.slane %v3062, 1
    %v3179 = vrot.slane %v3065, 1
    %v3180 = vrot.slane %v3070, 1
    %v3181 = vrot.slane %v3073, 1
    %v3182 = vrot.slane %v3078, 1
    %v3183 = vrot.slane %v3081, 1
    %v3184 = vrot.slane %v3086, 1
    %v3185 = vrot.slane %v3089, 1
    %v3186 = vrot.slane %v3094, 1
    %v3187 = vrot.slane %v3097, 1
    %v3188 = vrot.slane %v3102, 1
    %v3189 = vrot.slane %v3105, 1
    %v3190 = vrot.slane %v3110, 1
    %v3191 = vrot.slane %v3113, 1
    %v3192 = vrot.slane %v3118, 1
    %v3193 = vrot.slane %v3121, 1
    %v3194 = vrot.slane %v3126, 1
    %v3195 = vrot.slane %v3129, 1
    %v3196 = vsel %vm1525, %v3194, %v3195
    %v3197 = vsel %vm1525, %v3193, %v3194
    %v3198 = vsel %vm1525, %v3192, %v3193
    %v3199 = vsel %vm1525, %v3191, %v3192
    %v3200 = vsel %vm1525, %v3190, %v3191
    %v3201 = vsel %vm1525, %v3189, %v3190
    %v3202 = vsel %vm1525, %v3188, %v3189
    %v3203 = vsel %vm1525, %v3187, %v3188
    %v3204 = vsel %vm1525, %v3186, %v3187
    %v3205 = vsel %vm1525, %v3185, %v3186
    %v3206 = vsel %vm1525, %v3184, %v3185
    %v3207 = vsel %vm1525, %v3183, %v3184
    %v3208 = vsel %vm1525, %v3182, %v3183
    %v3209 = vsel %vm1525, %v3181, %v3182
    %v3210 = vsel %vm1525, %v3180, %v3181
    %v3211 = vsel %vm1525, %v3179, %v3180
    %v3212 = vsel %vm1525, %v3178, %v3179
    %v3213 = vsel %vm1525, %v3177, %v3178
    %v3214 = vsel %vm1525, %v3176, %v3177
    %v3215 = vsel %vm1525, %v3175, %v3176
    %v3216 = vsel %vm1525, %v3174, %v3175
    %v3217 = vsel %vm1525, %v3173, %v3174
    %v3218 = vsel %vm1525, %v3172, %v3173
    %v3219 = vsel %vm1525, %v3171, %v3172
    %v3220 = vsel %vm1525, %v3170, %v3171
    %v3221 = vsel %vm1525, %v3169, %v3170
    %v3222 = vsel %vm1525, %v3168, %v3169
    %v3223 = vsel %vm1525, %v3167, %v3168
    %v3224 = vsel %vm1525, %v3166, %v3167
    %v3225 = vsel %vm1525, %v3165, %v3166
    %v3226 = vsel %vm1525, %v3164, %v3165
    %v3227 = vsel %vm1525, %v3163, %v3164
    %v3228 = vsel %vm1525, %v3162, %v3163
    %v3229 = vsel %vm1525, %v3161, %v3162
    %v3230 = vsel %vm1525, %v3160, %v3161
    %v3231 = vsel %vm1525, %v3159, %v3160
    %v3232 = vsel %vm1525, %v3158, %v3159
    %v3233 = vsel %vm1525, %v3157, %v3158
    %v3234 = vsel %vm1525, %v3156, %v3157
    %v3235 = vsel %vm1525, %v3155, %v3156
    %v3236 = vsel %vm1525, %v3154, %v3155
    %v3237 = vsel %vm1525, %v3153, %v3154
    %v3238 = vsel %vm1525, %v3152, %v3153
    %v3239 = vsel %vm1525, %v3151, %v3152
    %v3240 = vsel %vm1525, %v3150, %v3151
    %v3241 = vsel %vm1525, %v3149, %v3150
    %v3242 = vsel %vm1525, %v3148, %v3149
    %v3243 = vsel %vm1525, %v3147, %v3148
    %v3244 = vsel %vm1525, %v3146, %v3147
    %v3245 = vsel %vm1525, %v3145, %v3146
    %v3246 = vsel %vm1525, %v3144, %v3145
    %v3247 = vsel %vm1525, %v3143, %v3144
    %v3248 = vsel %vm1525, %v3142, %v3143
    %v3249 = vsel %vm1525, %v3141, %v3142
    %v3250 = vsel %vm1525, %v3140, %v3141
    %v3251 = vsel %vm1525, %v3139, %v3140
    %v3252 = vsel %vm1525, %v3138, %v3139
    %v3253 = vsel %vm1525, %v3137, %v3138
    %v3254 = vsel %vm1525, %v3136, %v3137
    %v3255 = vsel %vm1525, %v3135, %v3136
    %v3256 = vsel %vm1525, %v3134, %v3135
    %v3257 = vsel %vm1525, %v3133, %v3134
    %v3258 = vsel %vm1525, %v3132, %v3133
    %v3259 = vsel %vm1525, %v3195, %v3132
    %v3260 = vsel %vm38, %v3258, 0.0
    %v3261 = vsel %vm39, %v3257, 0.0
    %v3262 = vsel %vm38, %v3256, 0.0
    %v3263 = vsel %vm39, %v3255, 0.0
    %v3264 = vsel %vm38, %v3254, 0.0
    %v3265 = vsel %vm39, %v3253, 0.0
    %v3266 = vsel %vm38, %v3252, 0.0
    %v3267 = vsel %vm39, %v3251, 0.0
    %v3268 = vsel %vm38, %v3250, 0.0
    %v3269 = vsel %vm39, %v3249, 0.0
    %v3270 = vsel %vm38, %v3248, 0.0
    %v3271 = vsel %vm39, %v3247, 0.0
    %v3272 = vsel %vm38, %v3246, 0.0
    %v3273 = vsel %vm39, %v3245, 0.0
    %v3274 = vsel %vm38, %v3244, 0.0
    %v3275 = vsel %vm39, %v3243, 0.0
    %v3276 = vsel %vm38, %v3242, 0.0
    %v3277 = vsel %vm39, %v3241, 0.0
    %v3278 = vsel %vm38, %v3240, 0.0
    %v3279 = vsel %vm39, %v3239, 0.0
    %v3280 = vsel %vm38, %v3238, 0.0
    %v3281 = vsel %vm39, %v3237, 0.0
    %v3282 = vsel %vm38, %v3236, 0.0
    %v3283 = vsel %vm39, %v3235, 0.0
    %v3284 = vsel %vm38, %v3234, 0.0
    %v3285 = vsel %vm39, %v3233, 0.0
    %v3286 = vsel %vm38, %v3232, 0.0
    %v3287 = vsel %vm39, %v3231, 0.0
    %v3288 = vsel %vm38, %v3230, 0.0
    %v3289 = vsel %vm39, %v3229, 0.0
    %v3290 = vsel %vm38, %v3228, 0.0
    %v3291 = vsel %vm39, %v3227, 0.0
    %v3292 = vsel %vm38, %v3226, 0.0
    %v3293 = vsel %vm39, %v3225, 0.0
    %v3294 = vsel %vm38, %v3224, 0.0
    %v3295 = vsel %vm39, %v3223, 0.0
    %v3296 = vsel %vm38, %v3222, 0.0
    %v3297 = vsel %vm39, %v3221, 0.0
    %v3298 = vsel %vm38, %v3220, 0.0
    %v3299 = vsel %vm39, %v3219, 0.0
    %v3300 = vsel %vm38, %v3218, 0.0
    %v3301 = vsel %vm39, %v3217, 0.0
    %v3302 = vsel %vm38, %v3216, 0.0
    %v3303 = vsel %vm39, %v3215, 0.0
    %v3304 = vsel %vm38, %v3214, 0.0
    %v3305 = vsel %vm39, %v3213, 0.0
    %v3306 = vsel %vm38, %v3212, 0.0
    %v3307 = vsel %vm39, %v3211, 0.0
    %v3308 = vsel %vm38, %v3210, 0.0
    %v3309 = vsel %vm39, %v3209, 0.0
    %v3310 = vsel %vm38, %v3208, 0.0
    %v3311 = vsel %vm39, %v3207, 0.0
    %v3312 = vsel %vm38, %v3206, 0.0
    %v3313 = vsel %vm39, %v3205, 0.0
    %v3314 = vsel %vm38, %v3204, 0.0
    %v3315 = vsel %vm39, %v3203, 0.0
    %v3316 = vsel %vm38, %v3202, 0.0
    %v3317 = vsel %vm39, %v3201, 0.0
    %v3318 = vsel %vm38, %v3200, 0.0
    %v3319 = vsel %vm39, %v3199, 0.0
    %v3320 = vsel %vm38, %v3198, 0.0
    %v3321 = vsel %vm39, %v3197, 0.0
    %v3322 = vsel %vm38, %v3196, 0.0
    %v3323 = vsel %vm39, %v3259, 0.0
    %v3324 = vadd.f32 %v2746, %v3260
    %v3325 = vadd.f32 %v2747, %v3261
    %v3326 = vadd.f32 %v2748, %v3262
    %v3327 = vadd.f32 %v2749, %v3263
    %v3328 = vadd.f32 %v2750, %v3264
    %v3329 = vadd.f32 %v2751, %v3265
    %v3330 = vadd.f32 %v2752, %v3266
    %v3331 = vadd.f32 %v2753, %v3267
    %v3332 = vadd.f32 %v2754, %v3268
    %v3333 = vadd.f32 %v2755, %v3269
    %v3334 = vadd.f32 %v2756, %v3270
    %v3335 = vadd.f32 %v2757, %v3271
    %v3336 = vadd.f32 %v2758, %v3272
    %v3337 = vadd.f32 %v2759, %v3273
    %v3338 = vadd.f32 %v2760, %v3274
    %v3339 = vadd.f32 %v2761, %v3275
    %v3340 = vadd.f32 %v2762, %v3276
    %v3341 = vadd.f32 %v2763, %v3277
    %v3342 = vadd.f32 %v2764, %v3278
    %v3343 = vadd.f32 %v2765, %v3279
    %v3344 = vadd.f32 %v2766, %v3280
    %v3345 = vadd.f32 %v2767, %v3281
    %v3346 = vadd.f32 %v2768, %v3282
    %v3347 = vadd.f32 %v2769, %v3283
    %v3348 = vadd.f32 %v2770, %v3284
    %v3349 = vadd.f32 %v2771, %v3285
    %v3350 = vadd.f32 %v2772, %v3286
    %v3351 = vadd.f32 %v2773, %v3287
    %v3352 = vadd.f32 %v2774, %v3288
    %v3353 = vadd.f32 %v2775, %v3289
    %v3354 = vadd.f32 %v2776, %v3290
    %v3355 = vadd.f32 %v2777, %v3291
    %v3356 = vadd.f32 %v2778, %v3292
    %v3357 = vadd.f32 %v2779, %v3293
    %v3358 = vadd.f32 %v2780, %v3294
    %v3359 = vadd.f32 %v2781, %v3295
    %v3360 = vadd.f32 %v2782, %v3296
    %v3361 = vadd.f32 %v2783, %v3297
    %v3362 = vadd.f32 %v2784, %v3298
    %v3363 = vadd.f32 %v2785, %v3299
    %v3364 = vadd.f32 %v2786, %v3300
    %v3365 = vadd.f32 %v2787, %v3301
    %v3366 = vadd.f32 %v2788, %v3302
    %v3367 = vadd.f32 %v2789, %v3303
    %v3368 = vadd.f32 %v2790, %v3304
    %v3369 = vadd.f32 %v2791, %v3305
    %v3370 = vadd.f32 %v2792, %v3306
    %v3371 = vadd.f32 %v2793, %v3307
    %v3372 = vadd.f32 %v2794, %v3308
    %v3373 = vadd.f32 %v2795, %v3309
    %v3374 = vadd.f32 %v2796, %v3310
    %v3375 = vadd.f32 %v2797, %v3311
    %v3376 = vadd.f32 %v2798, %v3312
    %v3377 = vadd.f32 %v2799, %v3313
    %v3378 = vadd.f32 %v2800, %v3314
    %v3379 = vadd.f32 %v2801, %v3315
    %v3380 = vadd.f32 %v2802, %v3316
    %v3381 = vadd.f32 %v2803, %v3317
    %v3382 = vadd.f32 %v2804, %v3318
    %v3383 = vadd.f32 %v2805, %v3319
    %v3384 = vadd.f32 %v2806, %v3320
    %v3385 = vadd.f32 %v2807, %v3321
    %v3386 = vadd.f32 %v2808, %v3322
    %v3387 = vadd.f32 %v2809, %v3323
    %s3388 = scalar_lea.vmem [#allocation2], 16
    %v3389 = vld [vmem:[%s3388] sm:$0xff]
    %v3390 = vld [vmem:[%s3388 + $0x8] sm:$0xff]
    %v3391 = vld [vmem:[%s3388 + $0x10] sm:$0xff]
    %v3392 = vld [vmem:[%s3388 + $0x18] sm:$0xff]
    %v3393 = vld [vmem:[%s3388 + $0x20] sm:$0xff]
    %v3394 = vld [vmem:[%s3388 + $0x28] sm:$0xff]
    %v3395 = vld [vmem:[%s3388 + $0x30] sm:$0xff]
    %v3396 = vld [vmem:[%s3388 + $0x38] sm:$0xff]
    %v3397 = vld [vmem:[%s3388 + $0x40] sm:$0xff]
    %v3398 = vld [vmem:[%s3388 + $0x48] sm:$0xff]
    %v3399 = vld [vmem:[%s3388 + $0x50] sm:$0xff]
    %v3400 = vld [vmem:[%s3388 + $0x58] sm:$0xff]
    %v3401 = vld [vmem:[%s3388 + $0x60] sm:$0xff]
    %v3402 = vld [vmem:[%s3388 + $0x68] sm:$0xff]
    %v3403 = vld [vmem:[%s3388 + $0x70] sm:$0xff]
    %v3404 = vld [vmem:[%s3388 + $0x78] sm:$0xff]
    %v3405 = vld [vmem:[%s3388 + $0x90] sm:$0xff]
    %v3406 = vld [vmem:[%s3388 + $0x98] sm:$0xff]
    %v3407 = vld [vmem:[%s3388 + $0xa0] sm:$0xff]
    %v3408 = vld [vmem:[%s3388 + $0xa8] sm:$0xff]
    %v3409 = vld [vmem:[%s3388 + $0xb0] sm:$0xff]
    %v3410 = vld [vmem:[%s3388 + $0xb8] sm:$0xff]
    %v3411 = vld [vmem:[%s3388 + $0xc0] sm:$0xff]
    %v3412 = vld [vmem:[%s3388 + $0xc8] sm:$0xff]
    %v3413 = vld [vmem:[%s3388 + $0xd0] sm:$0xff]
    %v3414 = vld [vmem:[%s3388 + $0xd8] sm:$0xff]
    %v3415 = vld [vmem:[%s3388 + $0xe0] sm:$0xff]
    %v3416 = vld [vmem:[%s3388 + $0xe8] sm:$0xff]
    %v3417 = vld [vmem:[%s3388 + $0xf0] sm:$0xff]
    %v3418 = vld [vmem:[%s3388 + $0xf8] sm:$0xff]
    %v3419 = vld [vmem:[%s3388 + $0x100] sm:$0xff]
    %v3420 = vld [vmem:[%s3388 + $0x108] sm:$0xff]
    %s3421 = scalar_lea.vmem %s1, 224
    %v3422 = vld [vmem:[%s3421] sm:$0xf]
    %v3423 = vld [vmem:[%s3421 + $0x4] sm:$0xf]
    %v3424 = vld [vmem:[%s3421 + $0x8] sm:$0xf]
    %v3425 = vld [vmem:[%s3421 + $0xc] sm:$0xf]
    %v3426 = vld [vmem:[%s3421 + $0x10] sm:$0xf]
    %v3427 = vld [vmem:[%s3421 + $0x14] sm:$0xf]
    %v3428 = vld [vmem:[%s3421 + $0x18] sm:$0xf]
    %v3429 = vld [vmem:[%s3421 + $0x1c] sm:$0xf]
    %v3438 = vunpack.c.l.b16 %v3422
    %v3439 = vunpack.c.l.b16 %v3423
    %v3440 = vunpack.c.l.b16 %v3424
    %v3441 = vunpack.c.l.b16 %v3425
    %v3442 = vunpack.c.l.b16 %v3426
    %v3443 = vunpack.c.l.b16 %v3427
    %v3444 = vunpack.c.l.b16 %v3428
    %v3445 = vunpack.c.l.b16 %v3429
    %v3446 = vpack.c.b16 %v3439, %v3438
    %v3447 = vpack.c.b16 %v3441, %v3440
    %v3448 = vpack.c.b16 %v3443, %v3442
    %v3449 = vpack.c.b16 %v3445, %v3444
    %v3455 = vsel %vm40, %v3389, 0
    %v3458 = vsel %vm40, %v3390, 0
    %v3461 = vsel %vm40, %v3391, 0
    %v3464 = vsel %vm40, %v3392, 0
    %v3467 = vsel %vm40, %v3393, 0
    %v3470 = vsel %vm40, %v3394, 0
    %v3473 = vsel %vm40, %v3395, 0
    %v3476 = vsel %vm40, %v3396, 0
    %v3479 = vsel %vm40, %v3397, 0
    %v3482 = vsel %vm40, %v3398, 0
    %v3485 = vsel %vm40, %v3399, 0
    %v3488 = vsel %vm40, %v3400, 0
    %v3491 = vsel %vm40, %v3401, 0
    %v3494 = vsel %vm40, %v3402, 0
    %v3497 = vsel %vm40, %v3403, 0
    %v3500 = vsel %vm40, %v3404, 0
    %v3503 = vsel %vm40, %v3405, 0
    %v3506 = vsel %vm40, %v3406, 0
    %v3509 = vsel %vm40, %v3407, 0
    %v3512 = vsel %vm40, %v3408, 0
    %v3515 = vsel %vm40, %v3409, 0
    %v3518 = vsel %vm40, %v3410, 0
    %v3521 = vsel %vm40, %v3411, 0
    %v3524 = vsel %vm40, %v3412, 0
    %v3527 = vsel %vm40, %v3413, 0
    %v3530 = vsel %vm40, %v3414, 0
    %v3533 = vsel %vm40, %v3415, 0
    %v3536 = vsel %vm40, %v3416, 0
    %v3539 = vsel %vm40, %v3417, 0
    %v3542 = vsel %vm40, %v3418, 0
    %v3545 = vsel %vm40, %v3419, 0
    %v3548 = vsel %vm40, %v3420, 0
    %3550 = vmatprep.subr.bf16.mxu0 0
    %3551 = vmatpush1.bf16.msra.mxu0 %v3446
    %3552 = vmatprep.subr.bf16.mxu0 0
    %3553 = vmatpush1.bf16.msra.mxu0 %v3447
    %3554 = vmatprep.subr.bf16.mxu0 0
    %3555 = vmatpush1.bf16.msra.mxu0 %v3448
    %3556 = vmatprep.subr.bf16.mxu0 0
    %3557 = vmatpush1.bf16.msra.mxu0 %v3449
    %3558 = vmatprep.subr.bf16.mxu0 0
    %3559 = vmatpush1.bf16.msra.mxu0 0
    %3560 = vmatprep.subr.bf16.mxu0 0
    %3561 = vmatpush1.bf16.msra.mxu0 0
    %3562 = vmatprep.subr.bf16.mxu0 0
    %3563 = vmatpush1.bf16.msra.mxu0 0
    %3564 = vmatprep.subr.bf16.mxu0 0
    %3565 = vmatpush1.bf16.msra.mxu0 0
    %3566 = vmatprep.subr.bf16.mxu0 0
    %3567 = vmatpush1.bf16.msra.mxu0 0
    %3568 = vmatprep.subr.bf16.mxu0 0
    %3569 = vmatpush1.bf16.msra.mxu0 0
    %3570 = vmatprep.subr.bf16.mxu0 0
    %3571 = vmatpush1.bf16.msra.mxu0 0
    %3572 = vmatprep.subr.bf16.mxu0 0
    %3573 = vmatpush1.bf16.msra.mxu0 0
    %3574 = vmatprep.subr.bf16.mxu0 0
    %3575 = vmatpush1.bf16.msra.mxu0 0
    %3576 = vmatprep.subr.bf16.mxu0 0
    %3577 = vmatpush1.bf16.msra.mxu0 0
    %3578 = vmatprep.subr.bf16.mxu0 0
    %3579 = vmatpush1.bf16.msra.mxu0 0
    %3580 = vmatprep.subr.bf16.mxu0 0
    %3581 = vmatpush1.bf16.msra.mxu0 0
    %3582 = vmatprep.mubr.bf16.mxu0 0
    %3583 = vmatmul.mubr.bf16.gmra.mrb[0].mxu0 %v3455
    %v3584 = vpop.f32.mrb[0].mxu0
    %v3585 = vadd.f32 0.0, %v3584
    %v3586 = vpop.f32.mrb[0].mxu0
    %v3587 = vpop.f32.mrb[0].mxu0
    %v3588 = vadd.f32 0.0, %v3587
    %v3589 = vpop.f32.mrb[0].mxu0
    %3590 = vmatprep.mubr.bf16.mxu0 0
    %3591 = vmatmul.mubr.bf16.gmra.mrb[0].mxu0 %v3458
    %v3592 = vpop.f32.mrb[0].mxu0
    %v3593 = vadd.f32 0.0, %v3592
    %v3594 = vpop.f32.mrb[0].mxu0
    %v3595 = vpop.f32.mrb[0].mxu0
    %v3596 = vadd.f32 0.0, %v3595
    %v3597 = vpop.f32.mrb[0].mxu0
    %3598 = vmatprep.mubr.bf16.mxu0 0
    %3599 = vmatmul.mubr.bf16.gmra.mrb[0].mxu0 %v3461
    %v3600 = vpop.f32.mrb[0].mxu0
    %v3601 = vadd.f32 0.0, %v3600
    %v3602 = vpop.f32.mrb[0].mxu0
    %v3603 = vpop.f32.mrb[0].mxu0
    %v3604 = vadd.f32 0.0, %v3603
    %v3605 = vpop.f32.mrb[0].mxu0
    %3606 = vmatprep.mubr.bf16.mxu0 0
    %3607 = vmatmul.mubr.bf16.gmra.mrb[0].mxu0 %v3464
    %v3608 = vpop.f32.mrb[0].mxu0
    %v3609 = vadd.f32 0.0, %v3608
    %v3610 = vpop.f32.mrb[0].mxu0
    %v3611 = vpop.f32.mrb[0].mxu0
    %v3612 = vadd.f32 0.0, %v3611
    %v3613 = vpop.f32.mrb[0].mxu0
    %3614 = vmatprep.mubr.bf16.mxu0 0
    %3615 = vmatmul.mubr.bf16.gmra.mrb[0].mxu0 %v3467
    %v3616 = vpop.f32.mrb[0].mxu0
    %v3617 = vadd.f32 0.0, %v3616
    %v3618 = vpop.f32.mrb[0].mxu0
    %v3619 = vpop.f32.mrb[0].mxu0
    %v3620 = vadd.f32 0.0, %v3619
    %v3621 = vpop.f32.mrb[0].mxu0
    %3622 = vmatprep.mubr.bf16.mxu0 0
    %3623 = vmatmul.mubr.bf16.gmra.mrb[0].mxu0 %v3470
    %v3624 = vpop.f32.mrb[0].mxu0
    %v3625 = vadd.f32 0.0, %v3624
    %v3626 = vpop.f32.mrb[0].mxu0
    %v3627 = vpop.f32.mrb[0].mxu0
    %v3628 = vadd.f32 0.0, %v3627
    %v3629 = vpop.f32.mrb[0].mxu0
    %3630 = vmatprep.mubr.bf16.mxu0 0
    %3631 = vmatmul.mubr.bf16.gmra.mrb[0].mxu0 %v3473
    %v3632 = vpop.f32.mrb[0].mxu0
    %v3633 = vadd.f32 0.0, %v3632
    %v3634 = vpop.f32.mrb[0].mxu0
    %v3635 = vpop.f32.mrb[0].mxu0
    %v3636 = vadd.f32 0.0, %v3635
    %v3637 = vpop.f32.mrb[0].mxu0
    %3638 = vmatprep.mubr.bf16.mxu0 0
    %3639 = vmatmul.mubr.bf16.gmra.mrb[0].mxu0 %v3476
    %v3640 = vpop.f32.mrb[0].mxu0
    %v3641 = vadd.f32 0.0, %v3640
    %v3642 = vpop.f32.mrb[0].mxu0
    %v3643 = vpop.f32.mrb[0].mxu0
    %v3644 = vadd.f32 0.0, %v3643
    %v3645 = vpop.f32.mrb[0].mxu0
    %3646 = vmatprep.mubr.bf16.mxu0 0
    %3647 = vmatmul.mubr.bf16.gmra.mrb[0].mxu0 %v3479
    %v3648 = vpop.f32.mrb[0].mxu0
    %v3649 = vadd.f32 0.0, %v3648
    %v3650 = vpop.f32.mrb[0].mxu0
    %v3651 = vpop.f32.mrb[0].mxu0
    %v3652 = vadd.f32 0.0, %v3651
    %v3653 = vpop.f32.mrb[0].mxu0
    %3654 = vmatprep.mubr.bf16.mxu0 0
    %3655 = vmatmul.mubr.bf16.gmra.mrb[0].mxu0 %v3482
    %v3656 = vpop.f32.mrb[0].mxu0
    %v3657 = vadd.f32 0.0, %v3656
    %v3658 = vpop.f32.mrb[0].mxu0
    %v3659 = vpop.f32.mrb[0].mxu0
    %v3660 = vadd.f32 0.0, %v3659
    %v3661 = vpop.f32.mrb[0].mxu0
    %3662 = vmatprep.mubr.bf16.mxu0 0
    %3663 = vmatmul.mubr.bf16.gmra.mrb[0].mxu0 %v3485
    %v3664 = vpop.f32.mrb[0].mxu0
    %v3665 = vadd.f32 0.0, %v3664
    %v3666 = vpop.f32.mrb[0].mxu0
    %v3667 = vpop.f32.mrb[0].mxu0
    %v3668 = vadd.f32 0.0, %v3667
    %v3669 = vpop.f32.mrb[0].mxu0
    %3670 = vmatprep.mubr.bf16.mxu0 0
    %3671 = vmatmul.mubr.bf16.gmra.mrb[0].mxu0 %v3488
    %v3672 = vpop.f32.mrb[0].mxu0
    %v3673 = vadd.f32 0.0, %v3672
    %v3674 = vpop.f32.mrb[0].mxu0
    %v3675 = vpop.f32.mrb[0].mxu0
    %v3676 = vadd.f32 0.0, %v3675
    %v3677 = vpop.f32.mrb[0].mxu0
    %3678 = vmatprep.mubr.bf16.mxu0 0
    %3679 = vmatmul.mubr.bf16.gmra.mrb[0].mxu0 %v3491
    %v3680 = vpop.f32.mrb[0].mxu0
    %v3681 = vadd.f32 0.0, %v3680
    %v3682 = vpop.f32.mrb[0].mxu0
    %v3683 = vpop.f32.mrb[0].mxu0
    %v3684 = vadd.f32 0.0, %v3683
    %v3685 = vpop.f32.mrb[0].mxu0
    %3686 = vmatprep.mubr.bf16.mxu0 0
    %3687 = vmatmul.mubr.bf16.gmra.mrb[0].mxu0 %v3494
    %v3688 = vpop.f32.mrb[0].mxu0
    %v3689 = vadd.f32 0.0, %v3688
    %v3690 = vpop.f32.mrb[0].mxu0
    %v3691 = vpop.f32.mrb[0].mxu0
    %v3692 = vadd.f32 0.0, %v3691
    %v3693 = vpop.f32.mrb[0].mxu0
    %3694 = vmatprep.mubr.bf16.mxu0 0
    %3695 = vmatmul.mubr.bf16.gmra.mrb[0].mxu0 %v3497
    %v3696 = vpop.f32.mrb[0].mxu0
    %v3697 = vadd.f32 0.0, %v3696
    %v3698 = vpop.f32.mrb[0].mxu0
    %v3699 = vpop.f32.mrb[0].mxu0
    %v3700 = vadd.f32 0.0, %v3699
    %v3701 = vpop.f32.mrb[0].mxu0
    %3702 = vmatprep.mubr.bf16.mxu0 0
    %3703 = vmatmul.mubr.bf16.gmra.mrb[0].mxu0 %v3500
    %v3704 = vpop.f32.mrb[0].mxu0
    %v3705 = vadd.f32 0.0, %v3704
    %v3706 = vpop.f32.mrb[0].mxu0
    %v3707 = vpop.f32.mrb[0].mxu0
    %v3708 = vadd.f32 0.0, %v3707
    %v3709 = vpop.f32.mrb[0].mxu0
    %3710 = vmatprep.mubr.bf16.mxu0 0
    %3711 = vmatmul.mubr.bf16.gmra.mrb[0].mxu0 %v3503
    %v3712 = vpop.f32.mrb[0].mxu0
    %v3713 = vadd.f32 0.0, %v3712
    %v3714 = vpop.f32.mrb[0].mxu0
    %v3715 = vpop.f32.mrb[0].mxu0
    %v3716 = vadd.f32 0.0, %v3715
    %v3717 = vpop.f32.mrb[0].mxu0
    %3718 = vmatprep.mubr.bf16.mxu0 0
    %3719 = vmatmul.mubr.bf16.gmra.mrb[0].mxu0 %v3506
    %v3720 = vpop.f32.mrb[0].mxu0
    %v3721 = vadd.f32 0.0, %v3720
    %v3722 = vpop.f32.mrb[0].mxu0
    %v3723 = vpop.f32.mrb[0].mxu0
    %v3724 = vadd.f32 0.0, %v3723
    %v3725 = vpop.f32.mrb[0].mxu0
    %3726 = vmatprep.mubr.bf16.mxu0 0
    %3727 = vmatmul.mubr.bf16.gmra.mrb[0].mxu0 %v3509
    %v3728 = vpop.f32.mrb[0].mxu0
    %v3729 = vadd.f32 0.0, %v3728
    %v3730 = vpop.f32.mrb[0].mxu0
    %v3731 = vpop.f32.mrb[0].mxu0
    %v3732 = vadd.f32 0.0, %v3731
    %v3733 = vpop.f32.mrb[0].mxu0
    %3734 = vmatprep.mubr.bf16.mxu0 0
    %3735 = vmatmul.mubr.bf16.gmra.mrb[0].mxu0 %v3512
    %v3736 = vpop.f32.mrb[0].mxu0
    %v3737 = vadd.f32 0.0, %v3736
    %v3738 = vpop.f32.mrb[0].mxu0
    %v3739 = vpop.f32.mrb[0].mxu0
    %v3740 = vadd.f32 0.0, %v3739
    %v3741 = vpop.f32.mrb[0].mxu0
    %3742 = vmatprep.mubr.bf16.mxu0 0
    %3743 = vmatmul.mubr.bf16.gmra.mrb[0].mxu0 %v3515
    %v3744 = vpop.f32.mrb[0].mxu0
    %v3745 = vadd.f32 0.0, %v3744
    %v3746 = vpop.f32.mrb[0].mxu0
    %v3747 = vpop.f32.mrb[0].mxu0
    %v3748 = vadd.f32 0.0, %v3747
    %v3749 = vpop.f32.mrb[0].mxu0
    %3750 = vmatprep.mubr.bf16.mxu0 0
    %3751 = vmatmul.mubr.bf16.gmra.mrb[0].mxu0 %v3518
    %v3752 = vpop.f32.mrb[0].mxu0
    %v3753 = vadd.f32 0.0, %v3752
    %v3754 = vpop.f32.mrb[0].mxu0
    %v3755 = vpop.f32.mrb[0].mxu0
    %v3756 = vadd.f32 0.0, %v3755
    %v3757 = vpop.f32.mrb[0].mxu0
    %3758 = vmatprep.mubr.bf16.mxu0 0
    %3759 = vmatmul.mubr.bf16.gmra.mrb[0].mxu0 %v3521
    %v3760 = vpop.f32.mrb[0].mxu0
    %v3761 = vadd.f32 0.0, %v3760
    %v3762 = vpop.f32.mrb[0].mxu0
    %v3763 = vpop.f32.mrb[0].mxu0
    %v3764 = vadd.f32 0.0, %v3763
    %v3765 = vpop.f32.mrb[0].mxu0
    %3766 = vmatprep.mubr.bf16.mxu0 0
    %3767 = vmatmul.mubr.bf16.gmra.mrb[0].mxu0 %v3524
    %v3768 = vpop.f32.mrb[0].mxu0
    %v3769 = vadd.f32 0.0, %v3768
    %v3770 = vpop.f32.mrb[0].mxu0
    %v3771 = vpop.f32.mrb[0].mxu0
    %v3772 = vadd.f32 0.0, %v3771
    %v3773 = vpop.f32.mrb[0].mxu0
    %3774 = vmatprep.mubr.bf16.mxu0 0
    %3775 = vmatmul.mubr.bf16.gmra.mrb[0].mxu0 %v3527
    %v3776 = vpop.f32.mrb[0].mxu0
    %v3777 = vadd.f32 0.0, %v3776
    %v3778 = vpop.f32.mrb[0].mxu0
    %v3779 = vpop.f32.mrb[0].mxu0
    %v3780 = vadd.f32 0.0, %v3779
    %v3781 = vpop.f32.mrb[0].mxu0
    %3782 = vmatprep.mubr.bf16.mxu0 0
    %3783 = vmatmul.mubr.bf16.gmra.mrb[0].mxu0 %v3530
    %v3784 = vpop.f32.mrb[0].mxu0
    %v3785 = vadd.f32 0.0, %v3784
    %v3786 = vpop.f32.mrb[0].mxu0
    %v3787 = vpop.f32.mrb[0].mxu0
    %v3788 = vadd.f32 0.0, %v3787
    %v3789 = vpop.f32.mrb[0].mxu0
    %3790 = vmatprep.mubr.bf16.mxu0 0
    %3791 = vmatmul.mubr.bf16.gmra.mrb[0].mxu0 %v3533
    %v3792 = vpop.f32.mrb[0].mxu0
    %v3793 = vadd.f32 0.0, %v3792
    %v3794 = vpop.f32.mrb[0].mxu0
    %v3795 = vpop.f32.mrb[0].mxu0
    %v3796 = vadd.f32 0.0, %v3795
    %v3797 = vpop.f32.mrb[0].mxu0
    %3798 = vmatprep.mubr.bf16.mxu0 0
    %3799 = vmatmul.mubr.bf16.gmra.mrb[0].mxu0 %v3536
    %v3800 = vpop.f32.mrb[0].mxu0
    %v3801 = vadd.f32 0.0, %v3800
    %v3802 = vpop.f32.mrb[0].mxu0
    %v3803 = vpop.f32.mrb[0].mxu0
    %v3804 = vadd.f32 0.0, %v3803
    %v3805 = vpop.f32.mrb[0].mxu0
    %3806 = vmatprep.mubr.bf16.mxu0 0
    %3807 = vmatmul.mubr.bf16.gmra.mrb[0].mxu0 %v3539
    %v3808 = vpop.f32.mrb[0].mxu0
    %v3809 = vadd.f32 0.0, %v3808
    %v3810 = vpop.f32.mrb[0].mxu0
    %v3811 = vpop.f32.mrb[0].mxu0
    %v3812 = vadd.f32 0.0, %v3811
    %v3813 = vpop.f32.mrb[0].mxu0
    %3814 = vmatprep.mubr.bf16.mxu0 0
    %3815 = vmatmul.mubr.bf16.gmra.mrb[0].mxu0 %v3542
    %v3816 = vpop.f32.mrb[0].mxu0
    %v3817 = vadd.f32 0.0, %v3816
    %v3818 = vpop.f32.mrb[0].mxu0
    %v3819 = vpop.f32.mrb[0].mxu0
    %v3820 = vadd.f32 0.0, %v3819
    %v3821 = vpop.f32.mrb[0].mxu0
    %3822 = vmatprep.mubr.bf16.mxu0 0
    %3823 = vmatmul.mubr.bf16.gmra.mrb[0].mxu0 %v3545
    %v3824 = vpop.f32.mrb[0].mxu0
    %v3825 = vadd.f32 0.0, %v3824
    %v3826 = vpop.f32.mrb[0].mxu0
    %v3827 = vpop.f32.mrb[0].mxu0
    %v3828 = vadd.f32 0.0, %v3827
    %v3829 = vpop.f32.mrb[0].mxu0
    %3830 = vmatprep.mubr.bf16.mxu0 0
    %3831 = vmatmul.mubr.bf16.gmra.mrb[0].mxu0 %v3548
    %v3832 = vpop.f32.mrb[0].mxu0
    %v3833 = vadd.f32 0.0, %v3832
    %v3834 = vpop.f32.mrb[0].mxu0
    %v3835 = vpop.f32.mrb[0].mxu0
    %v3836 = vadd.f32 0.0, %v3835
    %v3837 = vpop.f32.mrb[0].mxu0
    %3838 = vdwg.mxu0
    %v3839 = vadd.f32 %v3324, %v3585
    %v3840 = vadd.f32 %v3325, %v3588
    %v3841 = vadd.f32 %v3326, %v3593
    %v3842 = vadd.f32 %v3327, %v3596
    %v3843 = vadd.f32 %v3328, %v3601
    %v3844 = vadd.f32 %v3329, %v3604
    %v3845 = vadd.f32 %v3330, %v3609
    %v3846 = vadd.f32 %v3331, %v3612
    %v3847 = vadd.f32 %v3332, %v3617
    %v3848 = vadd.f32 %v3333, %v3620
    %v3849 = vadd.f32 %v3334, %v3625
    %v3850 = vadd.f32 %v3335, %v3628
    %v3851 = vadd.f32 %v3336, %v3633
    %v3852 = vadd.f32 %v3337, %v3636
    %v3853 = vadd.f32 %v3338, %v3641
    %v3854 = vadd.f32 %v3339, %v3644
    %v3855 = vadd.f32 %v3340, %v3649
    %v3856 = vadd.f32 %v3341, %v3652
    %v3857 = vadd.f32 %v3342, %v3657
    %v3858 = vadd.f32 %v3343, %v3660
    %v3859 = vadd.f32 %v3344, %v3665
    %v3860 = vadd.f32 %v3345, %v3668
    %v3861 = vadd.f32 %v3346, %v3673
    %v3862 = vadd.f32 %v3347, %v3676
    %v3863 = vadd.f32 %v3348, %v3681
    %v3864 = vadd.f32 %v3349, %v3684
    %v3865 = vadd.f32 %v3350, %v3689
    %v3866 = vadd.f32 %v3351, %v3692
    %v3867 = vadd.f32 %v3352, %v3697
    %v3868 = vadd.f32 %v3353, %v3700
    %v3869 = vadd.f32 %v3354, %v3705
    %v3870 = vadd.f32 %v3355, %v3708
    %v3871 = vadd.f32 %v3356, %v3713
    %v3872 = vadd.f32 %v3357, %v3716
    %v3873 = vadd.f32 %v3358, %v3721
    %v3874 = vadd.f32 %v3359, %v3724
    %v3875 = vadd.f32 %v3360, %v3729
    %v3876 = vadd.f32 %v3361, %v3732
    %v3877 = vadd.f32 %v3362, %v3737
    %v3878 = vadd.f32 %v3363, %v3740
    %v3879 = vadd.f32 %v3364, %v3745
    %v3880 = vadd.f32 %v3365, %v3748
    %v3881 = vadd.f32 %v3366, %v3753
    %v3882 = vadd.f32 %v3367, %v3756
    %v3883 = vadd.f32 %v3368, %v3761
    %v3884 = vadd.f32 %v3369, %v3764
    %v3885 = vadd.f32 %v3370, %v3769
    %v3886 = vadd.f32 %v3371, %v3772
    %v3887 = vadd.f32 %v3372, %v3777
    %v3888 = vadd.f32 %v3373, %v3780
    %v3889 = vadd.f32 %v3374, %v3785
    %v3890 = vadd.f32 %v3375, %v3788
    %v3891 = vadd.f32 %v3376, %v3793
    %v3892 = vadd.f32 %v3377, %v3796
    %v3893 = vadd.f32 %v3378, %v3801
    %v3894 = vadd.f32 %v3379, %v3804
    %v3895 = vadd.f32 %v3380, %v3809
    %v3896 = vadd.f32 %v3381, %v3812
    %v3897 = vadd.f32 %v3382, %v3817
    %v3898 = vadd.f32 %v3383, %v3820
    %v3899 = vadd.f32 %v3384, %v3825
    %v3900 = vadd.f32 %v3385, %v3828
    %v3901 = vadd.f32 %v3386, %v3833
    %v3902 = vadd.f32 %v3387, %v3836
    %s3903 = scalar_lea.vmem %s1, 192
    %v3904 = vld [vmem:[%s3903] sm:$0xf]
    %v3905 = vld [vmem:[%s3903 + $0x4] sm:$0xf]
    %v3906 = vld [vmem:[%s3903 + $0x8] sm:$0xf]
    %v3907 = vld [vmem:[%s3903 + $0xc] sm:$0xf]
    %v3908 = vld [vmem:[%s3903 + $0x10] sm:$0xf]
    %v3909 = vld [vmem:[%s3903 + $0x14] sm:$0xf]
    %v3910 = vld [vmem:[%s3903 + $0x18] sm:$0xf]
    %v3911 = vld [vmem:[%s3903 + $0x1c] sm:$0xf]
    %v3920 = vunpack.c.l.b16 %v3904
    %v3921 = vunpack.c.l.b16 %v3905
    %v3922 = vunpack.c.l.b16 %v3906
    %v3923 = vunpack.c.l.b16 %v3907
    %v3924 = vunpack.c.l.b16 %v3908
    %v3925 = vunpack.c.l.b16 %v3909
    %v3926 = vunpack.c.l.b16 %v3910
    %v3927 = vunpack.c.l.b16 %v3911
    %v3928 = vpack.c.b16 %v3921, %v3920
    %v3929 = vpack.c.b16 %v3923, %v3922
    %v3930 = vpack.c.b16 %v3925, %v3924
    %v3931 = vpack.c.b16 %v3927, %v3926
    %3936 = vmatprep.subr.bf16.mxu0 0
    %3937 = vmatpush1.bf16.msra.mxu0 %v3928
    %3938 = vmatprep.subr.bf16.mxu0 0
    %3939 = vmatpush1.bf16.msra.mxu0 %v3929
    %3940 = vmatprep.subr.bf16.mxu0 0
    %3941 = vmatpush1.bf16.msra.mxu0 %v3930
    %3942 = vmatprep.subr.bf16.mxu0 0
    %3943 = vmatpush1.bf16.msra.mxu0 %v3931
    %3944 = vmatprep.subr.bf16.mxu0 0
    %3945 = vmatpush1.bf16.msra.mxu0 0
    %3946 = vmatprep.subr.bf16.mxu0 0
    %3947 = vmatpush1.bf16.msra.mxu0 0
    %3948 = vmatprep.subr.bf16.mxu0 0
    %3949 = vmatpush1.bf16.msra.mxu0 0
    %3950 = vmatprep.subr.bf16.mxu0 0
    %3951 = vmatpush1.bf16.msra.mxu0 0
    %3952 = vmatprep.subr.bf16.mxu0 0
    %3953 = vmatpush1.bf16.msra.mxu0 0
    %3954 = vmatprep.subr.bf16.mxu0 0
    %3955 = vmatpush1.bf16.msra.mxu0 0
    %3956 = vmatprep.subr.bf16.mxu0 0
    %3957 = vmatpush1.bf16.msra.mxu0 0
    %3958 = vmatprep.subr.bf16.mxu0 0
    %3959 = vmatpush1.bf16.msra.mxu0 0
    %3960 = vmatprep.subr.bf16.mxu0 0
    %3961 = vmatpush1.bf16.msra.mxu0 0
    %3962 = vmatprep.subr.bf16.mxu0 0
    %3963 = vmatpush1.bf16.msra.mxu0 0
    %3964 = vmatprep.subr.bf16.mxu0 0
    %3965 = vmatpush1.bf16.msra.mxu0 0
    %3966 = vmatprep.subr.bf16.mxu0 0
    %3967 = vmatpush1.bf16.msra.mxu0 0
    %3968 = vmatprep.mubr.bf16.mxu0 0
    %3969 = vmatmul.mubr.bf16.gmra.mrb[0].mxu0 %v3455
    %v3970 = vpop.f32.mrb[0].mxu0
    %v3971 = vadd.f32 0.0, %v3970
    %v3972 = vpop.f32.mrb[0].mxu0
    %v3973 = vpop.f32.mrb[0].mxu0
    %v3974 = vadd.f32 0.0, %v3973
    %v3975 = vpop.f32.mrb[0].mxu0
    %3976 = vmatprep.mubr.bf16.mxu0 0
    %3977 = vmatmul.mubr.bf16.gmra.mrb[0].mxu0 %v3458
    %v3978 = vpop.f32.mrb[0].mxu0
    %v3979 = vadd.f32 0.0, %v3978
    %v3980 = vpop.f32.mrb[0].mxu0
    %v3981 = vpop.f32.mrb[0].mxu0
    %v3982 = vadd.f32 0.0, %v3981
    %v3983 = vpop.f32.mrb[0].mxu0
    %3984 = vmatprep.mubr.bf16.mxu0 0
    %3985 = vmatmul.mubr.bf16.gmra.mrb[0].mxu0 %v3461
    %v3986 = vpop.f32.mrb[0].mxu0
    %v3987 = vadd.f32 0.0, %v3986
    %v3988 = vpop.f32.mrb[0].mxu0
    %v3989 = vpop.f32.mrb[0].mxu0
    %v3990 = vadd.f32 0.0, %v3989
    %v3991 = vpop.f32.mrb[0].mxu0
    %3992 = vmatprep.mubr.bf16.mxu0 0
    %3993 = vmatmul.mubr.bf16.gmra.mrb[0].mxu0 %v3464
    %v3994 = vpop.f32.mrb[0].mxu0
    %v3995 = vadd.f32 0.0, %v3994
    %v3996 = vpop.f32.mrb[0].mxu0
    %v3997 = vpop.f32.mrb[0].mxu0
    %v3998 = vadd.f32 0.0, %v3997
    %v3999 = vpop.f32.mrb[0].mxu0
    %4000 = vmatprep.mubr.bf16.mxu0 0
    %4001 = vmatmul.mubr.bf16.gmra.mrb[0].mxu0 %v3467
    %v4002 = vpop.f32.mrb[0].mxu0
    %v4003 = vadd.f32 0.0, %v4002
    %v4004 = vpop.f32.mrb[0].mxu0
    %v4005 = vpop.f32.mrb[0].mxu0
    %v4006 = vadd.f32 0.0, %v4005
    %v4007 = vpop.f32.mrb[0].mxu0
    %4008 = vmatprep.mubr.bf16.mxu0 0
    %4009 = vmatmul.mubr.bf16.gmra.mrb[0].mxu0 %v3470
    %v4010 = vpop.f32.mrb[0].mxu0
    %v4011 = vadd.f32 0.0, %v4010
    %v4012 = vpop.f32.mrb[0].mxu0
    %v4013 = vpop.f32.mrb[0].mxu0
    %v4014 = vadd.f32 0.0, %v4013
    %v4015 = vpop.f32.mrb[0].mxu0
    %4016 = vmatprep.mubr.bf16.mxu0 0
    %4017 = vmatmul.mubr.bf16.gmra.mrb[0].mxu0 %v3473
    %v4018 = vpop.f32.mrb[0].mxu0
    %v4019 = vadd.f32 0.0, %v4018
    %v4020 = vpop.f32.mrb[0].mxu0
    %v4021 = vpop.f32.mrb[0].mxu0
    %v4022 = vadd.f32 0.0, %v4021
    %v4023 = vpop.f32.mrb[0].mxu0
    %4024 = vmatprep.mubr.bf16.mxu0 0
    %4025 = vmatmul.mubr.bf16.gmra.mrb[0].mxu0 %v3476
    %v4026 = vpop.f32.mrb[0].mxu0
    %v4027 = vadd.f32 0.0, %v4026
    %v4028 = vpop.f32.mrb[0].mxu0
    %v4029 = vpop.f32.mrb[0].mxu0
    %v4030 = vadd.f32 0.0, %v4029
    %v4031 = vpop.f32.mrb[0].mxu0
    %4032 = vmatprep.mubr.bf16.mxu0 0
    %4033 = vmatmul.mubr.bf16.gmra.mrb[0].mxu0 %v3479
    %v4034 = vpop.f32.mrb[0].mxu0
    %v4035 = vadd.f32 0.0, %v4034
    %v4036 = vpop.f32.mrb[0].mxu0
    %v4037 = vpop.f32.mrb[0].mxu0
    %v4038 = vadd.f32 0.0, %v4037
    %v4039 = vpop.f32.mrb[0].mxu0
    %4040 = vmatprep.mubr.bf16.mxu0 0
    %4041 = vmatmul.mubr.bf16.gmra.mrb[0].mxu0 %v3482
    %v4042 = vpop.f32.mrb[0].mxu0
    %v4043 = vadd.f32 0.0, %v4042
    %v4044 = vpop.f32.mrb[0].mxu0
    %v4045 = vpop.f32.mrb[0].mxu0
    %v4046 = vadd.f32 0.0, %v4045
    %v4047 = vpop.f32.mrb[0].mxu0
    %4048 = vmatprep.mubr.bf16.mxu0 0
    %4049 = vmatmul.mubr.bf16.gmra.mrb[0].mxu0 %v3485
    %v4050 = vpop.f32.mrb[0].mxu0
    %v4051 = vadd.f32 0.0, %v4050
    %v4052 = vpop.f32.mrb[0].mxu0
    %v4053 = vpop.f32.mrb[0].mxu0
    %v4054 = vadd.f32 0.0, %v4053
    %v4055 = vpop.f32.mrb[0].mxu0
    %4056 = vmatprep.mubr.bf16.mxu0 0
    %4057 = vmatmul.mubr.bf16.gmra.mrb[0].mxu0 %v3488
    %v4058 = vpop.f32.mrb[0].mxu0
    %v4059 = vadd.f32 0.0, %v4058
    %v4060 = vpop.f32.mrb[0].mxu0
    %v4061 = vpop.f32.mrb[0].mxu0
    %v4062 = vadd.f32 0.0, %v4061
    %v4063 = vpop.f32.mrb[0].mxu0
    %4064 = vmatprep.mubr.bf16.mxu0 0
    %4065 = vmatmul.mubr.bf16.gmra.mrb[0].mxu0 %v3491
    %v4066 = vpop.f32.mrb[0].mxu0
    %v4067 = vadd.f32 0.0, %v4066
    %v4068 = vpop.f32.mrb[0].mxu0
    %v4069 = vpop.f32.mrb[0].mxu0
    %v4070 = vadd.f32 0.0, %v4069
    %v4071 = vpop.f32.mrb[0].mxu0
    %4072 = vmatprep.mubr.bf16.mxu0 0
    %4073 = vmatmul.mubr.bf16.gmra.mrb[0].mxu0 %v3494
    %v4074 = vpop.f32.mrb[0].mxu0
    %v4075 = vadd.f32 0.0, %v4074
    %v4076 = vpop.f32.mrb[0].mxu0
    %v4077 = vpop.f32.mrb[0].mxu0
    %v4078 = vadd.f32 0.0, %v4077
    %v4079 = vpop.f32.mrb[0].mxu0
    %4080 = vmatprep.mubr.bf16.mxu0 0
    %4081 = vmatmul.mubr.bf16.gmra.mrb[0].mxu0 %v3497
    %v4082 = vpop.f32.mrb[0].mxu0
    %v4083 = vadd.f32 0.0, %v4082
    %v4084 = vpop.f32.mrb[0].mxu0
    %v4085 = vpop.f32.mrb[0].mxu0
    %v4086 = vadd.f32 0.0, %v4085
    %v4087 = vpop.f32.mrb[0].mxu0
    %4088 = vmatprep.mubr.bf16.mxu0 0
    %4089 = vmatmul.mubr.bf16.gmra.mrb[0].mxu0 %v3500
    %v4090 = vpop.f32.mrb[0].mxu0
    %v4091 = vadd.f32 0.0, %v4090
    %v4092 = vpop.f32.mrb[0].mxu0
    %v4093 = vpop.f32.mrb[0].mxu0
    %v4094 = vadd.f32 0.0, %v4093
    %v4095 = vpop.f32.mrb[0].mxu0
    %4096 = vmatprep.mubr.bf16.mxu0 0
    %4097 = vmatmul.mubr.bf16.gmra.mrb[0].mxu0 %v3503
    %v4098 = vpop.f32.mrb[0].mxu0
    %v4099 = vadd.f32 0.0, %v4098
    %v4100 = vpop.f32.mrb[0].mxu0
    %v4101 = vpop.f32.mrb[0].mxu0
    %v4102 = vadd.f32 0.0, %v4101
    %v4103 = vpop.f32.mrb[0].mxu0
    %4104 = vmatprep.mubr.bf16.mxu0 0
    %4105 = vmatmul.mubr.bf16.gmra.mrb[0].mxu0 %v3506
    %v4106 = vpop.f32.mrb[0].mxu0
    %v4107 = vadd.f32 0.0, %v4106
    %v4108 = vpop.f32.mrb[0].mxu0
    %v4109 = vpop.f32.mrb[0].mxu0
    %v4110 = vadd.f32 0.0, %v4109
    %v4111 = vpop.f32.mrb[0].mxu0
    %4112 = vmatprep.mubr.bf16.mxu0 0
    %4113 = vmatmul.mubr.bf16.gmra.mrb[0].mxu0 %v3509
    %v4114 = vpop.f32.mrb[0].mxu0
    %v4115 = vadd.f32 0.0, %v4114
    %v4116 = vpop.f32.mrb[0].mxu0
    %v4117 = vpop.f32.mrb[0].mxu0
    %v4118 = vadd.f32 0.0, %v4117
    %v4119 = vpop.f32.mrb[0].mxu0
    %4120 = vmatprep.mubr.bf16.mxu0 0
    %4121 = vmatmul.mubr.bf16.gmra.mrb[0].mxu0 %v3512
    %v4122 = vpop.f32.mrb[0].mxu0
    %v4123 = vadd.f32 0.0, %v4122
    %v4124 = vpop.f32.mrb[0].mxu0
    %v4125 = vpop.f32.mrb[0].mxu0
    %v4126 = vadd.f32 0.0, %v4125
    %v4127 = vpop.f32.mrb[0].mxu0
    %4128 = vmatprep.mubr.bf16.mxu0 0
    %4129 = vmatmul.mubr.bf16.gmra.mrb[0].mxu0 %v3515
    %v4130 = vpop.f32.mrb[0].mxu0
    %v4131 = vadd.f32 0.0, %v4130
    %v4132 = vpop.f32.mrb[0].mxu0
    %v4133 = vpop.f32.mrb[0].mxu0
    %v4134 = vadd.f32 0.0, %v4133
    %v4135 = vpop.f32.mrb[0].mxu0
    %4136 = vmatprep.mubr.bf16.mxu0 0
    %4137 = vmatmul.mubr.bf16.gmra.mrb[0].mxu0 %v3518
    %v4138 = vpop.f32.mrb[0].mxu0
    %v4139 = vadd.f32 0.0, %v4138
    %v4140 = vpop.f32.mrb[0].mxu0
    %v4141 = vpop.f32.mrb[0].mxu0
    %v4142 = vadd.f32 0.0, %v4141
    %v4143 = vpop.f32.mrb[0].mxu0
    %4144 = vmatprep.mubr.bf16.mxu0 0
    %4145 = vmatmul.mubr.bf16.gmra.mrb[0].mxu0 %v3521
    %v4146 = vpop.f32.mrb[0].mxu0
    %v4147 = vadd.f32 0.0, %v4146
    %v4148 = vpop.f32.mrb[0].mxu0
    %v4149 = vpop.f32.mrb[0].mxu0
    %v4150 = vadd.f32 0.0, %v4149
    %v4151 = vpop.f32.mrb[0].mxu0
    %4152 = vmatprep.mubr.bf16.mxu0 0
    %4153 = vmatmul.mubr.bf16.gmra.mrb[0].mxu0 %v3524
    %v4154 = vpop.f32.mrb[0].mxu0
    %v4155 = vadd.f32 0.0, %v4154
    %v4156 = vpop.f32.mrb[0].mxu0
    %v4157 = vpop.f32.mrb[0].mxu0
    %v4158 = vadd.f32 0.0, %v4157
    %v4159 = vpop.f32.mrb[0].mxu0
    %4160 = vmatprep.mubr.bf16.mxu0 0
    %4161 = vmatmul.mubr.bf16.gmra.mrb[0].mxu0 %v3527
    %v4162 = vpop.f32.mrb[0].mxu0
    %v4163 = vadd.f32 0.0, %v4162
    %v4164 = vpop.f32.mrb[0].mxu0
    %v4165 = vpop.f32.mrb[0].mxu0
    %v4166 = vadd.f32 0.0, %v4165
    %v4167 = vpop.f32.mrb[0].mxu0
    %4168 = vmatprep.mubr.bf16.mxu0 0
    %4169 = vmatmul.mubr.bf16.gmra.mrb[0].mxu0 %v3530
    %v4170 = vpop.f32.mrb[0].mxu0
    %v4171 = vadd.f32 0.0, %v4170
    %v4172 = vpop.f32.mrb[0].mxu0
    %v4173 = vpop.f32.mrb[0].mxu0
    %v4174 = vadd.f32 0.0, %v4173
    %v4175 = vpop.f32.mrb[0].mxu0
    %4176 = vmatprep.mubr.bf16.mxu0 0
    %4177 = vmatmul.mubr.bf16.gmra.mrb[0].mxu0 %v3533
    %v4178 = vpop.f32.mrb[0].mxu0
    %v4179 = vadd.f32 0.0, %v4178
    %v4180 = vpop.f32.mrb[0].mxu0
    %v4181 = vpop.f32.mrb[0].mxu0
    %v4182 = vadd.f32 0.0, %v4181
    %v4183 = vpop.f32.mrb[0].mxu0
    %4184 = vmatprep.mubr.bf16.mxu0 0
    %4185 = vmatmul.mubr.bf16.gmra.mrb[0].mxu0 %v3536
    %v4186 = vpop.f32.mrb[0].mxu0
    %v4187 = vadd.f32 0.0, %v4186
    %v4188 = vpop.f32.mrb[0].mxu0
    %v4189 = vpop.f32.mrb[0].mxu0
    %v4190 = vadd.f32 0.0, %v4189
    %v4191 = vpop.f32.mrb[0].mxu0
    %4192 = vmatprep.mubr.bf16.mxu0 0
    %4193 = vmatmul.mubr.bf16.gmra.mrb[0].mxu0 %v3539
    %v4194 = vpop.f32.mrb[0].mxu0
    %v4195 = vadd.f32 0.0, %v4194
    %v4196 = vpop.f32.mrb[0].mxu0
    %v4197 = vpop.f32.mrb[0].mxu0
    %v4198 = vadd.f32 0.0, %v4197
    %v4199 = vpop.f32.mrb[0].mxu0
    %4200 = vmatprep.mubr.bf16.mxu0 0
    %4201 = vmatmul.mubr.bf16.gmra.mrb[0].mxu0 %v3542
    %v4202 = vpop.f32.mrb[0].mxu0
    %v4203 = vadd.f32 0.0, %v4202
    %v4204 = vpop.f32.mrb[0].mxu0
    %v4205 = vpop.f32.mrb[0].mxu0
    %v4206 = vadd.f32 0.0, %v4205
    %v4207 = vpop.f32.mrb[0].mxu0
    %4208 = vmatprep.mubr.bf16.mxu0 0
    %4209 = vmatmul.mubr.bf16.gmra.mrb[0].mxu0 %v3545
    %v4210 = vpop.f32.mrb[0].mxu0
    %v4211 = vadd.f32 0.0, %v4210
    %v4212 = vpop.f32.mrb[0].mxu0
    %v4213 = vpop.f32.mrb[0].mxu0
    %v4214 = vadd.f32 0.0, %v4213
    %v4215 = vpop.f32.mrb[0].mxu0
    %4216 = vmatprep.mubr.bf16.mxu0 0
    %4217 = vmatmul.mubr.bf16.gmra.mrb[0].mxu0 %v3548
    %v4218 = vpop.f32.mrb[0].mxu0
    %v4219 = vadd.f32 0.0, %v4218
    %v4220 = vpop.f32.mrb[0].mxu0
    %v4221 = vpop.f32.mrb[0].mxu0
    %v4222 = vadd.f32 0.0, %v4221
    %v4223 = vpop.f32.mrb[0].mxu0
    %4224 = vdwg.mxu0
    %v4225 = vrot.slane %v3971, 7
    %v4226 = vrot.slane %v3974, 7
    %v4227 = vrot.slane %v3979, 7
    %v4228 = vrot.slane %v3982, 7
    %v4229 = vrot.slane %v3987, 7
    %v4230 = vrot.slane %v3990, 7
    %v4231 = vrot.slane %v3995, 7
    %v4232 = vrot.slane %v3998, 7
    %v4233 = vrot.slane %v4003, 7
    %v4234 = vrot.slane %v4006, 7
    %v4235 = vrot.slane %v4011, 7
    %v4236 = vrot.slane %v4014, 7
    %v4237 = vrot.slane %v4019, 7
    %v4238 = vrot.slane %v4022, 7
    %v4239 = vrot.slane %v4027, 7
    %v4240 = vrot.slane %v4030, 7
    %v4241 = vrot.slane %v4035, 7
    %v4242 = vrot.slane %v4038, 7
    %v4243 = vrot.slane %v4043, 7
    %v4244 = vrot.slane %v4046, 7
    %v4245 = vrot.slane %v4051, 7
    %v4246 = vrot.slane %v4054, 7
    %v4247 = vrot.slane %v4059, 7
    %v4248 = vrot.slane %v4062, 7
    %v4249 = vrot.slane %v4067, 7
    %v4250 = vrot.slane %v4070, 7
    %v4251 = vrot.slane %v4075, 7
    %v4252 = vrot.slane %v4078, 7
    %v4253 = vrot.slane %v4083, 7
    %v4254 = vrot.slane %v4086, 7
    %v4255 = vrot.slane %v4091, 7
    %v4256 = vrot.slane %v4094, 7
    %v4257 = vrot.slane %v4099, 7
    %v4258 = vrot.slane %v4102, 7
    %v4259 = vrot.slane %v4107, 7
    %v4260 = vrot.slane %v4110, 7
    %v4261 = vrot.slane %v4115, 7
    %v4262 = vrot.slane %v4118, 7
    %v4263 = vrot.slane %v4123, 7
    %v4264 = vrot.slane %v4126, 7
    %v4265 = vrot.slane %v4131, 7
    %v4266 = vrot.slane %v4134, 7
    %v4267 = vrot.slane %v4139, 7
    %v4268 = vrot.slane %v4142, 7
    %v4269 = vrot.slane %v4147, 7
    %v4270 = vrot.slane %v4150, 7
    %v4271 = vrot.slane %v4155, 7
    %v4272 = vrot.slane %v4158, 7
    %v4273 = vrot.slane %v4163, 7
    %v4274 = vrot.slane %v4166, 7
    %v4275 = vrot.slane %v4171, 7
    %v4276 = vrot.slane %v4174, 7
    %v4277 = vrot.slane %v4179, 7
    %v4278 = vrot.slane %v4182, 7
    %v4279 = vrot.slane %v4187, 7
    %v4280 = vrot.slane %v4190, 7
    %v4281 = vrot.slane %v4195, 7
    %v4282 = vrot.slane %v4198, 7
    %v4283 = vrot.slane %v4203, 7
    %v4284 = vrot.slane %v4206, 7
    %v4285 = vrot.slane %v4211, 7
    %v4286 = vrot.slane %v4214, 7
    %v4287 = vrot.slane %v4219, 7
    %v4288 = vrot.slane %v4222, 7
    %v4289 = vsel %vm697, %v4287, %v4288
    %v4290 = vsel %vm697, %v4286, %v4287
    %v4291 = vsel %vm697, %v4285, %v4286
    %v4292 = vsel %vm697, %v4284, %v4285
    %v4293 = vsel %vm697, %v4283, %v4284
    %v4294 = vsel %vm697, %v4282, %v4283
    %v4295 = vsel %vm697, %v4281, %v4282
    %v4296 = vsel %vm697, %v4280, %v4281
    %v4297 = vsel %vm697, %v4279, %v4280
    %v4298 = vsel %vm697, %v4278, %v4279
    %v4299 = vsel %vm697, %v4277, %v4278
    %v4300 = vsel %vm697, %v4276, %v4277
    %v4301 = vsel %vm697, %v4275, %v4276
    %v4302 = vsel %vm697, %v4274, %v4275
    %v4303 = vsel %vm697, %v4273, %v4274
    %v4304 = vsel %vm697, %v4272, %v4273
    %v4305 = vsel %vm697, %v4271, %v4272
    %v4306 = vsel %vm697, %v4270, %v4271
    %v4307 = vsel %vm697, %v4269, %v4270
    %v4308 = vsel %vm697, %v4268, %v4269
    %v4309 = vsel %vm697, %v4267, %v4268
    %v4310 = vsel %vm697, %v4266, %v4267
    %v4311 = vsel %vm697, %v4265, %v4266
    %v4312 = vsel %vm697, %v4264, %v4265
    %v4313 = vsel %vm697, %v4263, %v4264
    %v4314 = vsel %vm697, %v4262, %v4263
    %v4315 = vsel %vm697, %v4261, %v4262
    %v4316 = vsel %vm697, %v4260, %v4261
    %v4317 = vsel %vm697, %v4259, %v4260
    %v4318 = vsel %vm697, %v4258, %v4259
    %v4319 = vsel %vm697, %v4257, %v4258
    %v4320 = vsel %vm697, %v4256, %v4257
    %v4321 = vsel %vm697, %v4255, %v4256
    %v4322 = vsel %vm697, %v4254, %v4255
    %v4323 = vsel %vm697, %v4253, %v4254
    %v4324 = vsel %vm697, %v4252, %v4253
    %v4325 = vsel %vm697, %v4251, %v4252
    %v4326 = vsel %vm697, %v4250, %v4251
    %v4327 = vsel %vm697, %v4249, %v4250
    %v4328 = vsel %vm697, %v4248, %v4249
    %v4329 = vsel %vm697, %v4247, %v4248
    %v4330 = vsel %vm697, %v4246, %v4247
    %v4331 = vsel %vm697, %v4245, %v4246
    %v4332 = vsel %vm697, %v4244, %v4245
    %v4333 = vsel %vm697, %v4243, %v4244
    %v4334 = vsel %vm697, %v4242, %v4243
    %v4335 = vsel %vm697, %v4241, %v4242
    %v4336 = vsel %vm697, %v4240, %v4241
    %v4337 = vsel %vm697, %v4239, %v4240
    %v4338 = vsel %vm697, %v4238, %v4239
    %v4339 = vsel %vm697, %v4237, %v4238
    %v4340 = vsel %vm697, %v4236, %v4237
    %v4341 = vsel %vm697, %v4235, %v4236
    %v4342 = vsel %vm697, %v4234, %v4235
    %v4343 = vsel %vm697, %v4233, %v4234
    %v4344 = vsel %vm697, %v4232, %v4233
    %v4345 = vsel %vm697, %v4231, %v4232
    %v4346 = vsel %vm697, %v4230, %v4231
    %v4347 = vsel %vm697, %v4229, %v4230
    %v4348 = vsel %vm697, %v4228, %v4229
    %v4349 = vsel %vm697, %v4227, %v4228
    %v4350 = vsel %vm697, %v4226, %v4227
    %v4351 = vsel %vm697, %v4225, %v4226
    %v4352 = vsel %vm697, %v4288, %v4225
    %v4353 = vsel %vm36, %v4352, 0.0
    %v4354 = vsel %vm37, %v4351, 0.0
    %v4355 = vsel %vm36, %v4350, 0.0
    %v4356 = vsel %vm37, %v4349, 0.0
    %v4357 = vsel %vm36, %v4348, 0.0
    %v4358 = vsel %vm37, %v4347, 0.0
    %v4359 = vsel %vm36, %v4346, 0.0
    %v4360 = vsel %vm37, %v4345, 0.0
    %v4361 = vsel %vm36, %v4344, 0.0
    %v4362 = vsel %vm37, %v4343, 0.0
    %v4363 = vsel %vm36, %v4342, 0.0
    %v4364 = vsel %vm37, %v4341, 0.0
    %v4365 = vsel %vm36, %v4340, 0.0
    %v4366 = vsel %vm37, %v4339, 0.0
    %v4367 = vsel %vm36, %v4338, 0.0
    %v4368 = vsel %vm37, %v4337, 0.0
    %v4369 = vsel %vm36, %v4336, 0.0
    %v4370 = vsel %vm37, %v4335, 0.0
    %v4371 = vsel %vm36, %v4334, 0.0
    %v4372 = vsel %vm37, %v4333, 0.0
    %v4373 = vsel %vm36, %v4332, 0.0
    %v4374 = vsel %vm37, %v4331, 0.0
    %v4375 = vsel %vm36, %v4330, 0.0
    %v4376 = vsel %vm37, %v4329, 0.0
    %v4377 = vsel %vm36, %v4328, 0.0
    %v4378 = vsel %vm37, %v4327, 0.0
    %v4379 = vsel %vm36, %v4326, 0.0
    %v4380 = vsel %vm37, %v4325, 0.0
    %v4381 = vsel %vm36, %v4324, 0.0
    %v4382 = vsel %vm37, %v4323, 0.0
    %v4383 = vsel %vm36, %v4322, 0.0
    %v4384 = vsel %vm37, %v4321, 0.0
    %v4385 = vsel %vm36, %v4320, 0.0
    %v4386 = vsel %vm37, %v4319, 0.0
    %v4387 = vsel %vm36, %v4318, 0.0
    %v4388 = vsel %vm37, %v4317, 0.0
    %v4389 = vsel %vm36, %v4316, 0.0
    %v4390 = vsel %vm37, %v4315, 0.0
    %v4391 = vsel %vm36, %v4314, 0.0
    %v4392 = vsel %vm37, %v4313, 0.0
    %v4393 = vsel %vm36, %v4312, 0.0
    %v4394 = vsel %vm37, %v4311, 0.0
    %v4395 = vsel %vm36, %v4310, 0.0
    %v4396 = vsel %vm37, %v4309, 0.0
    %v4397 = vsel %vm36, %v4308, 0.0
    %v4398 = vsel %vm37, %v4307, 0.0
    %v4399 = vsel %vm36, %v4306, 0.0
    %v4400 = vsel %vm37, %v4305, 0.0
    %v4401 = vsel %vm36, %v4304, 0.0
    %v4402 = vsel %vm37, %v4303, 0.0
    %v4403 = vsel %vm36, %v4302, 0.0
    %v4404 = vsel %vm37, %v4301, 0.0
    %v4405 = vsel %vm36, %v4300, 0.0
    %v4406 = vsel %vm37, %v4299, 0.0
    %v4407 = vsel %vm36, %v4298, 0.0
    %v4408 = vsel %vm37, %v4297, 0.0
    %v4409 = vsel %vm36, %v4296, 0.0
    %v4410 = vsel %vm37, %v4295, 0.0
    %v4411 = vsel %vm36, %v4294, 0.0
    %v4412 = vsel %vm37, %v4293, 0.0
    %v4413 = vsel %vm36, %v4292, 0.0
    %v4414 = vsel %vm37, %v4291, 0.0
    %v4415 = vsel %vm36, %v4290, 0.0
    %v4416 = vsel %vm37, %v4289, 0.0
    %v4417 = vadd.f32 %v3839, %v4353
    %v4418 = vadd.f32 %v3840, %v4354
    %v4419 = vadd.f32 %v3841, %v4355
    %v4420 = vadd.f32 %v3842, %v4356
    %v4421 = vadd.f32 %v3843, %v4357
    %v4422 = vadd.f32 %v3844, %v4358
    %v4423 = vadd.f32 %v3845, %v4359
    %v4424 = vadd.f32 %v3846, %v4360
    %v4425 = vadd.f32 %v3847, %v4361
    %v4426 = vadd.f32 %v3848, %v4362
    %v4427 = vadd.f32 %v3849, %v4363
    %v4428 = vadd.f32 %v3850, %v4364
    %v4429 = vadd.f32 %v3851, %v4365
    %v4430 = vadd.f32 %v3852, %v4366
    %v4431 = vadd.f32 %v3853, %v4367
    %v4432 = vadd.f32 %v3854, %v4368
    %v4433 = vadd.f32 %v3855, %v4369
    %v4434 = vadd.f32 %v3856, %v4370
    %v4435 = vadd.f32 %v3857, %v4371
    %v4436 = vadd.f32 %v3858, %v4372
    %v4437 = vadd.f32 %v3859, %v4373
    %v4438 = vadd.f32 %v3860, %v4374
    %v4439 = vadd.f32 %v3861, %v4375
    %v4440 = vadd.f32 %v3862, %v4376
    %v4441 = vadd.f32 %v3863, %v4377
    %v4442 = vadd.f32 %v3864, %v4378
    %v4443 = vadd.f32 %v3865, %v4379
    %v4444 = vadd.f32 %v3866, %v4380
    %v4445 = vadd.f32 %v3867, %v4381
    %v4446 = vadd.f32 %v3868, %v4382
    %v4447 = vadd.f32 %v3869, %v4383
    %v4448 = vadd.f32 %v3870, %v4384
    %v4449 = vadd.f32 %v3871, %v4385
    %v4450 = vadd.f32 %v3872, %v4386
    %v4451 = vadd.f32 %v3873, %v4387
    %v4452 = vadd.f32 %v3874, %v4388
    %v4453 = vadd.f32 %v3875, %v4389
    %v4454 = vadd.f32 %v3876, %v4390
    %v4455 = vadd.f32 %v3877, %v4391
    %v4456 = vadd.f32 %v3878, %v4392
    %v4457 = vadd.f32 %v3879, %v4393
    %v4458 = vadd.f32 %v3880, %v4394
    %v4459 = vadd.f32 %v3881, %v4395
    %v4460 = vadd.f32 %v3882, %v4396
    %v4461 = vadd.f32 %v3883, %v4397
    %v4462 = vadd.f32 %v3884, %v4398
    %v4463 = vadd.f32 %v3885, %v4399
    %v4464 = vadd.f32 %v3886, %v4400
    %v4465 = vadd.f32 %v3887, %v4401
    %v4466 = vadd.f32 %v3888, %v4402
    %v4467 = vadd.f32 %v3889, %v4403
    %v4468 = vadd.f32 %v3890, %v4404
    %v4469 = vadd.f32 %v3891, %v4405
    %v4470 = vadd.f32 %v3892, %v4406
    %v4471 = vadd.f32 %v3893, %v4407
    %v4472 = vadd.f32 %v3894, %v4408
    %v4473 = vadd.f32 %v3895, %v4409
    %v4474 = vadd.f32 %v3896, %v4410
    %v4475 = vadd.f32 %v3897, %v4411
    %v4476 = vadd.f32 %v3898, %v4412
    %v4477 = vadd.f32 %v3899, %v4413
    %v4478 = vadd.f32 %v3900, %v4414
    %v4479 = vadd.f32 %v3901, %v4415
    %v4480 = vadd.f32 %v3902, %v4416
    %s4481 = scalar_lea.vmem %s1, 256
    %v4482 = vld [vmem:[%s4481] sm:$0xf]
    %v4483 = vld [vmem:[%s4481 + $0x4] sm:$0xf]
    %v4484 = vld [vmem:[%s4481 + $0x8] sm:$0xf]
    %v4485 = vld [vmem:[%s4481 + $0xc] sm:$0xf]
    %v4486 = vld [vmem:[%s4481 + $0x10] sm:$0xf]
    %v4487 = vld [vmem:[%s4481 + $0x14] sm:$0xf]
    %v4488 = vld [vmem:[%s4481 + $0x18] sm:$0xf]
    %v4489 = vld [vmem:[%s4481 + $0x1c] sm:$0xf]
    %v4498 = vunpack.c.l.b16 %v4482
    %v4499 = vunpack.c.l.b16 %v4483
    %v4500 = vunpack.c.l.b16 %v4484
    %v4501 = vunpack.c.l.b16 %v4485
    %v4502 = vunpack.c.l.b16 %v4486
    %v4503 = vunpack.c.l.b16 %v4487
    %v4504 = vunpack.c.l.b16 %v4488
    %v4505 = vunpack.c.l.b16 %v4489
    %v4506 = vpack.c.b16 %v4499, %v4498
    %v4507 = vpack.c.b16 %v4501, %v4500
    %v4508 = vpack.c.b16 %v4503, %v4502
    %v4509 = vpack.c.b16 %v4505, %v4504
    %4514 = vmatprep.subr.bf16.mxu0 0
    %4515 = vmatpush1.bf16.msra.mxu0 %v4506
    %4516 = vmatprep.subr.bf16.mxu0 0
    %4517 = vmatpush1.bf16.msra.mxu0 %v4507
    %4518 = vmatprep.subr.bf16.mxu0 0
    %4519 = vmatpush1.bf16.msra.mxu0 %v4508
    %4520 = vmatprep.subr.bf16.mxu0 0
    %4521 = vmatpush1.bf16.msra.mxu0 %v4509
    %4522 = vmatprep.subr.bf16.mxu0 0
    %4523 = vmatpush1.bf16.msra.mxu0 0
    %4524 = vmatprep.subr.bf16.mxu0 0
    %4525 = vmatpush1.bf16.msra.mxu0 0
    %4526 = vmatprep.subr.bf16.mxu0 0
    %4527 = vmatpush1.bf16.msra.mxu0 0
    %4528 = vmatprep.subr.bf16.mxu0 0
    %4529 = vmatpush1.bf16.msra.mxu0 0
    %4530 = vmatprep.subr.bf16.mxu0 0
    %4531 = vmatpush1.bf16.msra.mxu0 0
    %4532 = vmatprep.subr.bf16.mxu0 0
    %4533 = vmatpush1.bf16.msra.mxu0 0
    %4534 = vmatprep.subr.bf16.mxu0 0
    %4535 = vmatpush1.bf16.msra.mxu0 0
    %4536 = vmatprep.subr.bf16.mxu0 0
    %4537 = vmatpush1.bf16.msra.mxu0 0
    %4538 = vmatprep.subr.bf16.mxu0 0
    %4539 = vmatpush1.bf16.msra.mxu0 0
    %4540 = vmatprep.subr.bf16.mxu0 0
    %4541 = vmatpush1.bf16.msra.mxu0 0
    %4542 = vmatprep.subr.bf16.mxu0 0
    %4543 = vmatpush1.bf16.msra.mxu0 0
    %4544 = vmatprep.subr.bf16.mxu0 0
    %4545 = vmatpush1.bf16.msra.mxu0 0
    %4546 = vmatprep.mubr.bf16.mxu0 0
    %4547 = vmatmul.mubr.bf16.gmra.mrb[0].mxu0 %v3455
    %v4548 = vpop.f32.mrb[0].mxu0
    %v4549 = vadd.f32 0.0, %v4548
    %v4550 = vpop.f32.mrb[0].mxu0
    %v4551 = vpop.f32.mrb[0].mxu0
    %v4552 = vadd.f32 0.0, %v4551
    %v4553 = vpop.f32.mrb[0].mxu0
    %4554 = vmatprep.mubr.bf16.mxu0 0
    %4555 = vmatmul.mubr.bf16.gmra.mrb[0].mxu0 %v3458
    %v4556 = vpop.f32.mrb[0].mxu0
    %v4557 = vadd.f32 0.0, %v4556
    %v4558 = vpop.f32.mrb[0].mxu0
    %v4559 = vpop.f32.mrb[0].mxu0
    %v4560 = vadd.f32 0.0, %v4559
    %v4561 = vpop.f32.mrb[0].mxu0
    %4562 = vmatprep.mubr.bf16.mxu0 0
    %4563 = vmatmul.mubr.bf16.gmra.mrb[0].mxu0 %v3461
    %v4564 = vpop.f32.mrb[0].mxu0
    %v4565 = vadd.f32 0.0, %v4564
    %v4566 = vpop.f32.mrb[0].mxu0
    %v4567 = vpop.f32.mrb[0].mxu0
    %v4568 = vadd.f32 0.0, %v4567
    %v4569 = vpop.f32.mrb[0].mxu0
    %4570 = vmatprep.mubr.bf16.mxu0 0
    %4571 = vmatmul.mubr.bf16.gmra.mrb[0].mxu0 %v3464
    %v4572 = vpop.f32.mrb[0].mxu0
    %v4573 = vadd.f32 0.0, %v4572
    %v4574 = vpop.f32.mrb[0].mxu0
    %v4575 = vpop.f32.mrb[0].mxu0
    %v4576 = vadd.f32 0.0, %v4575
    %v4577 = vpop.f32.mrb[0].mxu0
    %4578 = vmatprep.mubr.bf16.mxu0 0
    %4579 = vmatmul.mubr.bf16.gmra.mrb[0].mxu0 %v3467
    %v4580 = vpop.f32.mrb[0].mxu0
    %v4581 = vadd.f32 0.0, %v4580
    %v4582 = vpop.f32.mrb[0].mxu0
    %v4583 = vpop.f32.mrb[0].mxu0
    %v4584 = vadd.f32 0.0, %v4583
    %v4585 = vpop.f32.mrb[0].mxu0
    %4586 = vmatprep.mubr.bf16.mxu0 0
    %4587 = vmatmul.mubr.bf16.gmra.mrb[0].mxu0 %v3470
    %v4588 = vpop.f32.mrb[0].mxu0
    %v4589 = vadd.f32 0.0, %v4588
    %v4590 = vpop.f32.mrb[0].mxu0
    %v4591 = vpop.f32.mrb[0].mxu0
    %v4592 = vadd.f32 0.0, %v4591
    %v4593 = vpop.f32.mrb[0].mxu0
    %4594 = vmatprep.mubr.bf16.mxu0 0
    %4595 = vmatmul.mubr.bf16.gmra.mrb[0].mxu0 %v3473
    %v4596 = vpop.f32.mrb[0].mxu0
    %v4597 = vadd.f32 0.0, %v4596
    %v4598 = vpop.f32.mrb[0].mxu0
    %v4599 = vpop.f32.mrb[0].mxu0
    %v4600 = vadd.f32 0.0, %v4599
    %v4601 = vpop.f32.mrb[0].mxu0
    %4602 = vmatprep.mubr.bf16.mxu0 0
    %4603 = vmatmul.mubr.bf16.gmra.mrb[0].mxu0 %v3476
    %v4604 = vpop.f32.mrb[0].mxu0
    %v4605 = vadd.f32 0.0, %v4604
    %v4606 = vpop.f32.mrb[0].mxu0
    %v4607 = vpop.f32.mrb[0].mxu0
    %v4608 = vadd.f32 0.0, %v4607
    %v4609 = vpop.f32.mrb[0].mxu0
    %4610 = vmatprep.mubr.bf16.mxu0 0
    %4611 = vmatmul.mubr.bf16.gmra.mrb[0].mxu0 %v3479
    %v4612 = vpop.f32.mrb[0].mxu0
    %v4613 = vadd.f32 0.0, %v4612
    %v4614 = vpop.f32.mrb[0].mxu0
    %v4615 = vpop.f32.mrb[0].mxu0
    %v4616 = vadd.f32 0.0, %v4615
    %v4617 = vpop.f32.mrb[0].mxu0
    %4618 = vmatprep.mubr.bf16.mxu0 0
    %4619 = vmatmul.mubr.bf16.gmra.mrb[0].mxu0 %v3482
    %v4620 = vpop.f32.mrb[0].mxu0
    %v4621 = vadd.f32 0.0, %v4620
    %v4622 = vpop.f32.mrb[0].mxu0
    %v4623 = vpop.f32.mrb[0].mxu0
    %v4624 = vadd.f32 0.0, %v4623
    %v4625 = vpop.f32.mrb[0].mxu0
    %4626 = vmatprep.mubr.bf16.mxu0 0
    %4627 = vmatmul.mubr.bf16.gmra.mrb[0].mxu0 %v3485
    %v4628 = vpop.f32.mrb[0].mxu0
    %v4629 = vadd.f32 0.0, %v4628
    %v4630 = vpop.f32.mrb[0].mxu0
    %v4631 = vpop.f32.mrb[0].mxu0
    %v4632 = vadd.f32 0.0, %v4631
    %v4633 = vpop.f32.mrb[0].mxu0
    %4634 = vmatprep.mubr.bf16.mxu0 0
    %4635 = vmatmul.mubr.bf16.gmra.mrb[0].mxu0 %v3488
    %v4636 = vpop.f32.mrb[0].mxu0
    %v4637 = vadd.f32 0.0, %v4636
    %v4638 = vpop.f32.mrb[0].mxu0
    %v4639 = vpop.f32.mrb[0].mxu0
    %v4640 = vadd.f32 0.0, %v4639
    %v4641 = vpop.f32.mrb[0].mxu0
    %4642 = vmatprep.mubr.bf16.mxu0 0
    %4643 = vmatmul.mubr.bf16.gmra.mrb[0].mxu0 %v3491
    %v4644 = vpop.f32.mrb[0].mxu0
    %v4645 = vadd.f32 0.0, %v4644
    %v4646 = vpop.f32.mrb[0].mxu0
    %v4647 = vpop.f32.mrb[0].mxu0
    %v4648 = vadd.f32 0.0, %v4647
    %v4649 = vpop.f32.mrb[0].mxu0
    %4650 = vmatprep.mubr.bf16.mxu0 0
    %4651 = vmatmul.mubr.bf16.gmra.mrb[0].mxu0 %v3494
    %v4652 = vpop.f32.mrb[0].mxu0
    %v4653 = vadd.f32 0.0, %v4652
    %v4654 = vpop.f32.mrb[0].mxu0
    %v4655 = vpop.f32.mrb[0].mxu0
    %v4656 = vadd.f32 0.0, %v4655
    %v4657 = vpop.f32.mrb[0].mxu0
    %4658 = vmatprep.mubr.bf16.mxu0 0
    %4659 = vmatmul.mubr.bf16.gmra.mrb[0].mxu0 %v3497
    %v4660 = vpop.f32.mrb[0].mxu0
    %v4661 = vadd.f32 0.0, %v4660
    %v4662 = vpop.f32.mrb[0].mxu0
    %v4663 = vpop.f32.mrb[0].mxu0
    %v4664 = vadd.f32 0.0, %v4663
    %v4665 = vpop.f32.mrb[0].mxu0
    %4666 = vmatprep.mubr.bf16.mxu0 0
    %4667 = vmatmul.mubr.bf16.gmra.mrb[0].mxu0 %v3500
    %v4668 = vpop.f32.mrb[0].mxu0
    %v4669 = vadd.f32 0.0, %v4668
    %v4670 = vpop.f32.mrb[0].mxu0
    %v4671 = vpop.f32.mrb[0].mxu0
    %v4672 = vadd.f32 0.0, %v4671
    %v4673 = vpop.f32.mrb[0].mxu0
    %4674 = vmatprep.mubr.bf16.mxu0 0
    %4675 = vmatmul.mubr.bf16.gmra.mrb[0].mxu0 %v3503
    %v4676 = vpop.f32.mrb[0].mxu0
    %v4677 = vadd.f32 0.0, %v4676
    %v4678 = vpop.f32.mrb[0].mxu0
    %v4679 = vpop.f32.mrb[0].mxu0
    %v4680 = vadd.f32 0.0, %v4679
    %v4681 = vpop.f32.mrb[0].mxu0
    %4682 = vmatprep.mubr.bf16.mxu0 0
    %4683 = vmatmul.mubr.bf16.gmra.mrb[0].mxu0 %v3506
    %v4684 = vpop.f32.mrb[0].mxu0
    %v4685 = vadd.f32 0.0, %v4684
    %v4686 = vpop.f32.mrb[0].mxu0
    %v4687 = vpop.f32.mrb[0].mxu0
    %v4688 = vadd.f32 0.0, %v4687
    %v4689 = vpop.f32.mrb[0].mxu0
    %4690 = vmatprep.mubr.bf16.mxu0 0
    %4691 = vmatmul.mubr.bf16.gmra.mrb[0].mxu0 %v3509
    %v4692 = vpop.f32.mrb[0].mxu0
    %v4693 = vadd.f32 0.0, %v4692
    %v4694 = vpop.f32.mrb[0].mxu0
    %v4695 = vpop.f32.mrb[0].mxu0
    %v4696 = vadd.f32 0.0, %v4695
    %v4697 = vpop.f32.mrb[0].mxu0
    %4698 = vmatprep.mubr.bf16.mxu0 0
    %4699 = vmatmul.mubr.bf16.gmra.mrb[0].mxu0 %v3512
    %v4700 = vpop.f32.mrb[0].mxu0
    %v4701 = vadd.f32 0.0, %v4700
    %v4702 = vpop.f32.mrb[0].mxu0
    %v4703 = vpop.f32.mrb[0].mxu0
    %v4704 = vadd.f32 0.0, %v4703
    %v4705 = vpop.f32.mrb[0].mxu0
    %4706 = vmatprep.mubr.bf16.mxu0 0
    %4707 = vmatmul.mubr.bf16.gmra.mrb[0].mxu0 %v3515
    %v4708 = vpop.f32.mrb[0].mxu0
    %v4709 = vadd.f32 0.0, %v4708
    %v4710 = vpop.f32.mrb[0].mxu0
    %v4711 = vpop.f32.mrb[0].mxu0
    %v4712 = vadd.f32 0.0, %v4711
    %v4713 = vpop.f32.mrb[0].mxu0
    %4714 = vmatprep.mubr.bf16.mxu0 0
    %4715 = vmatmul.mubr.bf16.gmra.mrb[0].mxu0 %v3518
    %v4716 = vpop.f32.mrb[0].mxu0
    %v4717 = vadd.f32 0.0, %v4716
    %v4718 = vpop.f32.mrb[0].mxu0
    %v4719 = vpop.f32.mrb[0].mxu0
    %v4720 = vadd.f32 0.0, %v4719
    %v4721 = vpop.f32.mrb[0].mxu0
    %4722 = vmatprep.mubr.bf16.mxu0 0
    %4723 = vmatmul.mubr.bf16.gmra.mrb[0].mxu0 %v3521
    %v4724 = vpop.f32.mrb[0].mxu0
    %v4725 = vadd.f32 0.0, %v4724
    %v4726 = vpop.f32.mrb[0].mxu0
    %v4727 = vpop.f32.mrb[0].mxu0
    %v4728 = vadd.f32 0.0, %v4727
    %v4729 = vpop.f32.mrb[0].mxu0
    %4730 = vmatprep.mubr.bf16.mxu0 0
    %4731 = vmatmul.mubr.bf16.gmra.mrb[0].mxu0 %v3524
    %v4732 = vpop.f32.mrb[0].mxu0
    %v4733 = vadd.f32 0.0, %v4732
    %v4734 = vpop.f32.mrb[0].mxu0
    %v4735 = vpop.f32.mrb[0].mxu0
    %v4736 = vadd.f32 0.0, %v4735
    %v4737 = vpop.f32.mrb[0].mxu0
    %4738 = vmatprep.mubr.bf16.mxu0 0
    %4739 = vmatmul.mubr.bf16.gmra.mrb[0].mxu0 %v3527
    %v4740 = vpop.f32.mrb[0].mxu0
    %v4741 = vadd.f32 0.0, %v4740
    %v4742 = vpop.f32.mrb[0].mxu0
    %v4743 = vpop.f32.mrb[0].mxu0
    %v4744 = vadd.f32 0.0, %v4743
    %v4745 = vpop.f32.mrb[0].mxu0
    %4746 = vmatprep.mubr.bf16.mxu0 0
    %4747 = vmatmul.mubr.bf16.gmra.mrb[0].mxu0 %v3530
    %v4748 = vpop.f32.mrb[0].mxu0
    %v4749 = vadd.f32 0.0, %v4748
    %v4750 = vpop.f32.mrb[0].mxu0
    %v4751 = vpop.f32.mrb[0].mxu0
    %v4752 = vadd.f32 0.0, %v4751
    %v4753 = vpop.f32.mrb[0].mxu0
    %4754 = vmatprep.mubr.bf16.mxu0 0
    %4755 = vmatmul.mubr.bf16.gmra.mrb[0].mxu0 %v3533
    %v4756 = vpop.f32.mrb[0].mxu0
    %v4757 = vadd.f32 0.0, %v4756
    %v4758 = vpop.f32.mrb[0].mxu0
    %v4759 = vpop.f32.mrb[0].mxu0
    %v4760 = vadd.f32 0.0, %v4759
    %v4761 = vpop.f32.mrb[0].mxu0
    %4762 = vmatprep.mubr.bf16.mxu0 0
    %4763 = vmatmul.mubr.bf16.gmra.mrb[0].mxu0 %v3536
    %v4764 = vpop.f32.mrb[0].mxu0
    %v4765 = vadd.f32 0.0, %v4764
    %v4766 = vpop.f32.mrb[0].mxu0
    %v4767 = vpop.f32.mrb[0].mxu0
    %v4768 = vadd.f32 0.0, %v4767
    %v4769 = vpop.f32.mrb[0].mxu0
    %4770 = vmatprep.mubr.bf16.mxu0 0
    %4771 = vmatmul.mubr.bf16.gmra.mrb[0].mxu0 %v3539
    %v4772 = vpop.f32.mrb[0].mxu0
    %v4773 = vadd.f32 0.0, %v4772
    %v4774 = vpop.f32.mrb[0].mxu0
    %v4775 = vpop.f32.mrb[0].mxu0
    %v4776 = vadd.f32 0.0, %v4775
    %v4777 = vpop.f32.mrb[0].mxu0
    %4778 = vmatprep.mubr.bf16.mxu0 0
    %4779 = vmatmul.mubr.bf16.gmra.mrb[0].mxu0 %v3542
    %v4780 = vpop.f32.mrb[0].mxu0
    %v4781 = vadd.f32 0.0, %v4780
    %v4782 = vpop.f32.mrb[0].mxu0
    %v4783 = vpop.f32.mrb[0].mxu0
    %v4784 = vadd.f32 0.0, %v4783
    %v4785 = vpop.f32.mrb[0].mxu0
    %4786 = vmatprep.mubr.bf16.mxu0 0
    %4787 = vmatmul.mubr.bf16.gmra.mrb[0].mxu0 %v3545
    %v4788 = vpop.f32.mrb[0].mxu0
    %v4789 = vadd.f32 0.0, %v4788
    %v4790 = vpop.f32.mrb[0].mxu0
    %v4791 = vpop.f32.mrb[0].mxu0
    %v4792 = vadd.f32 0.0, %v4791
    %v4793 = vpop.f32.mrb[0].mxu0
    %4794 = vmatprep.mubr.bf16.mxu0 0
    %4795 = vmatmul.mubr.bf16.gmra.mrb[0].mxu0 %v3548
    %v4796 = vpop.f32.mrb[0].mxu0
    %v4797 = vadd.f32 0.0, %v4796
    %v4798 = vpop.f32.mrb[0].mxu0
    %v4799 = vpop.f32.mrb[0].mxu0
    %v4800 = vadd.f32 0.0, %v4799
    %v4801 = vpop.f32.mrb[0].mxu0
    %4802 = vdwg.mxu0
    %v4803 = vrot.slane %v4549, 1
    %v4804 = vrot.slane %v4552, 1
    %v4805 = vrot.slane %v4557, 1
    %v4806 = vrot.slane %v4560, 1
    %v4807 = vrot.slane %v4565, 1
    %v4808 = vrot.slane %v4568, 1
    %v4809 = vrot.slane %v4573, 1
    %v4810 = vrot.slane %v4576, 1
    %v4811 = vrot.slane %v4581, 1
    %v4812 = vrot.slane %v4584, 1
    %v4813 = vrot.slane %v4589, 1
    %v4814 = vrot.slane %v4592, 1
    %v4815 = vrot.slane %v4597, 1
    %v4816 = vrot.slane %v4600, 1
    %v4817 = vrot.slane %v4605, 1
    %v4818 = vrot.slane %v4608, 1
    %v4819 = vrot.slane %v4613, 1
    %v4820 = vrot.slane %v4616, 1
    %v4821 = vrot.slane %v4621, 1
    %v4822 = vrot.slane %v4624, 1
    %v4823 = vrot.slane %v4629, 1
    %v4824 = vrot.slane %v4632, 1
    %v4825 = vrot.slane %v4637, 1
    %v4826 = vrot.slane %v4640, 1
    %v4827 = vrot.slane %v4645, 1
    %v4828 = vrot.slane %v4648, 1
    %v4829 = vrot.slane %v4653, 1
    %v4830 = vrot.slane %v4656, 1
    %v4831 = vrot.slane %v4661, 1
    %v4832 = vrot.slane %v4664, 1
    %v4833 = vrot.slane %v4669, 1
    %v4834 = vrot.slane %v4672, 1
    %v4835 = vrot.slane %v4677, 1
    %v4836 = vrot.slane %v4680, 1
    %v4837 = vrot.slane %v4685, 1
    %v4838 = vrot.slane %v4688, 1
    %v4839 = vrot.slane %v4693, 1
    %v4840 = vrot.slane %v4696, 1
    %v4841 = vrot.slane %v4701, 1
    %v4842 = vrot.slane %v4704, 1
    %v4843 = vrot.slane %v4709, 1
    %v4844 = vrot.slane %v4712, 1
    %v4845 = vrot.slane %v4717, 1
    %v4846 = vrot.slane %v4720, 1
    %v4847 = vrot.slane %v4725, 1
    %v4848 = vrot.slane %v4728, 1
    %v4849 = vrot.slane %v4733, 1
    %v4850 = vrot.slane %v4736, 1
    %v4851 = vrot.slane %v4741, 1
    %v4852 = vrot.slane %v4744, 1
    %v4853 = vrot.slane %v4749, 1
    %v4854 = vrot.slane %v4752, 1
    %v4855 = vrot.slane %v4757, 1
    %v4856 = vrot.slane %v4760, 1
    %v4857 = vrot.slane %v4765, 1
    %v4858 = vrot.slane %v4768, 1
    %v4859 = vrot.slane %v4773, 1
    %v4860 = vrot.slane %v4776, 1
    %v4861 = vrot.slane %v4781, 1
    %v4862 = vrot.slane %v4784, 1
    %v4863 = vrot.slane %v4789, 1
    %v4864 = vrot.slane %v4792, 1
    %v4865 = vrot.slane %v4797, 1
    %v4866 = vrot.slane %v4800, 1
    %v4867 = vsel %vm1525, %v4865, %v4866
    %v4868 = vsel %vm1525, %v4864, %v4865
    %v4869 = vsel %vm1525, %v4863, %v4864
    %v4870 = vsel %vm1525, %v4862, %v4863
    %v4871 = vsel %vm1525, %v4861, %v4862
    %v4872 = vsel %vm1525, %v4860, %v4861
    %v4873 = vsel %vm1525, %v4859, %v4860
    %v4874 = vsel %vm1525, %v4858, %v4859
    %v4875 = vsel %vm1525, %v4857, %v4858
    %v4876 = vsel %vm1525, %v4856, %v4857
    %v4877 = vsel %vm1525, %v4855, %v4856
    %v4878 = vsel %vm1525, %v4854, %v4855
    %v4879 = vsel %vm1525, %v4853, %v4854
    %v4880 = vsel %vm1525, %v4852, %v4853
    %v4881 = vsel %vm1525, %v4851, %v4852
    %v4882 = vsel %vm1525, %v4850, %v4851
    %v4883 = vsel %vm1525, %v4849, %v4850
    %v4884 = vsel %vm1525, %v4848, %v4849
    %v4885 = vsel %vm1525, %v4847, %v4848
    %v4886 = vsel %vm1525, %v4846, %v4847
    %v4887 = vsel %vm1525, %v4845, %v4846
    %v4888 = vsel %vm1525, %v4844, %v4845
    %v4889 = vsel %vm1525, %v4843, %v4844
    %v4890 = vsel %vm1525, %v4842, %v4843
    %v4891 = vsel %vm1525, %v4841, %v4842
    %v4892 = vsel %vm1525, %v4840, %v4841
    %v4893 = vsel %vm1525, %v4839, %v4840
    %v4894 = vsel %vm1525, %v4838, %v4839
    %v4895 = vsel %vm1525, %v4837, %v4838
    %v4896 = vsel %vm1525, %v4836, %v4837
    %v4897 = vsel %vm1525, %v4835, %v4836
    %v4898 = vsel %vm1525, %v4834, %v4835
    %v4899 = vsel %vm1525, %v4833, %v4834
    %v4900 = vsel %vm1525, %v4832, %v4833
    %v4901 = vsel %vm1525, %v4831, %v4832
    %v4902 = vsel %vm1525, %v4830, %v4831
    %v4903 = vsel %vm1525, %v4829, %v4830
    %v4904 = vsel %vm1525, %v4828, %v4829
    %v4905 = vsel %vm1525, %v4827, %v4828
    %v4906 = vsel %vm1525, %v4826, %v4827
    %v4907 = vsel %vm1525, %v4825, %v4826
    %v4908 = vsel %vm1525, %v4824, %v4825
    %v4909 = vsel %vm1525, %v4823, %v4824
    %v4910 = vsel %vm1525, %v4822, %v4823
    %v4911 = vsel %vm1525, %v4821, %v4822
    %v4912 = vsel %vm1525, %v4820, %v4821
    %v4913 = vsel %vm1525, %v4819, %v4820
    %v4914 = vsel %vm1525, %v4818, %v4819
    %v4915 = vsel %vm1525, %v4817, %v4818
    %v4916 = vsel %vm1525, %v4816, %v4817
    %v4917 = vsel %vm1525, %v4815, %v4816
    %v4918 = vsel %vm1525, %v4814, %v4815
    %v4919 = vsel %vm1525, %v4813, %v4814
    %v4920 = vsel %vm1525, %v4812, %v4813
    %v4921 = vsel %vm1525, %v4811, %v4812
    %v4922 = vsel %vm1525, %v4810, %v4811
    %v4923 = vsel %vm1525, %v4809, %v4810
    %v4924 = vsel %vm1525, %v4808, %v4809
    %v4925 = vsel %vm1525, %v4807, %v4808
    %v4926 = vsel %vm1525, %v4806, %v4807
    %v4927 = vsel %vm1525, %v4805, %v4806
    %v4928 = vsel %vm1525, %v4804, %v4805
    %v4929 = vsel %vm1525, %v4803, %v4804
    %v4930 = vsel %vm1525, %v4866, %v4803
    %v4931 = vsel %vm38, %v4929, 0.0
    %v4932 = vsel %vm39, %v4928, 0.0
    %v4933 = vsel %vm38, %v4927, 0.0
    %v4934 = vsel %vm39, %v4926, 0.0
    %v4935 = vsel %vm38, %v4925, 0.0
    %v4936 = vsel %vm39, %v4924, 0.0
    %v4937 = vsel %vm38, %v4923, 0.0
    %v4938 = vsel %vm39, %v4922, 0.0
    %v4939 = vsel %vm38, %v4921, 0.0
    %v4940 = vsel %vm39, %v4920, 0.0
    %v4941 = vsel %vm38, %v4919, 0.0
    %v4942 = vsel %vm39, %v4918, 0.0
    %v4943 = vsel %vm38, %v4917, 0.0
    %v4944 = vsel %vm39, %v4916, 0.0
    %v4945 = vsel %vm38, %v4915, 0.0
    %v4946 = vsel %vm39, %v4914, 0.0
    %v4947 = vsel %vm38, %v4913, 0.0
    %v4948 = vsel %vm39, %v4912, 0.0
    %v4949 = vsel %vm38, %v4911, 0.0
    %v4950 = vsel %vm39, %v4910, 0.0
    %v4951 = vsel %vm38, %v4909, 0.0
    %v4952 = vsel %vm39, %v4908, 0.0
    %v4953 = vsel %vm38, %v4907, 0.0
    %v4954 = vsel %vm39, %v4906, 0.0
    %v4955 = vsel %vm38, %v4905, 0.0
    %v4956 = vsel %vm39, %v4904, 0.0
    %v4957 = vsel %vm38, %v4903, 0.0
    %v4958 = vsel %vm39, %v4902, 0.0
    %v4959 = vsel %vm38, %v4901, 0.0
    %v4960 = vsel %vm39, %v4900, 0.0
    %v4961 = vsel %vm38, %v4899, 0.0
    %v4962 = vsel %vm39, %v4898, 0.0
    %v4963 = vsel %vm38, %v4897, 0.0
    %v4964 = vsel %vm39, %v4896, 0.0
    %v4965 = vsel %vm38, %v4895, 0.0
    %v4966 = vsel %vm39, %v4894, 0.0
    %v4967 = vsel %vm38, %v4893, 0.0
    %v4968 = vsel %vm39, %v4892, 0.0
    %v4969 = vsel %vm38, %v4891, 0.0
    %v4970 = vsel %vm39, %v4890, 0.0
    %v4971 = vsel %vm38, %v4889, 0.0
    %v4972 = vsel %vm39, %v4888, 0.0
    %v4973 = vsel %vm38, %v4887, 0.0
    %v4974 = vsel %vm39, %v4886, 0.0
    %v4975 = vsel %vm38, %v4885, 0.0
    %v4976 = vsel %vm39, %v4884, 0.0
    %v4977 = vsel %vm38, %v4883, 0.0
    %v4978 = vsel %vm39, %v4882, 0.0
    %v4979 = vsel %vm38, %v4881, 0.0
    %v4980 = vsel %vm39, %v4880, 0.0
    %v4981 = vsel %vm38, %v4879, 0.0
    %v4982 = vsel %vm39, %v4878, 0.0
    %v4983 = vsel %vm38, %v4877, 0.0
    %v4984 = vsel %vm39, %v4876, 0.0
    %v4985 = vsel %vm38, %v4875, 0.0
    %v4986 = vsel %vm39, %v4874, 0.0
    %v4987 = vsel %vm38, %v4873, 0.0
    %v4988 = vsel %vm39, %v4872, 0.0
    %v4989 = vsel %vm38, %v4871, 0.0
    %v4990 = vsel %vm39, %v4870, 0.0
    %v4991 = vsel %vm38, %v4869, 0.0
    %v4992 = vsel %vm39, %v4868, 0.0
    %v4993 = vsel %vm38, %v4867, 0.0
    %v4994 = vsel %vm39, %v4930, 0.0
    %v4995 = vadd.f32 %v4417, %v4931
    %v4996 = vadd.f32 %v4418, %v4932
    %v4997 = vadd.f32 %v4419, %v4933
    %v4998 = vadd.f32 %v4420, %v4934
    %v4999 = vadd.f32 %v4421, %v4935
    %v5000 = vadd.f32 %v4422, %v4936
    %v5001 = vadd.f32 %v4423, %v4937
    %v5002 = vadd.f32 %v4424, %v4938
    %v5003 = vadd.f32 %v4425, %v4939
    %v5004 = vadd.f32 %v4426, %v4940
    %v5005 = vadd.f32 %v4427, %v4941
    %v5006 = vadd.f32 %v4428, %v4942
    %v5007 = vadd.f32 %v4429, %v4943
    %v5008 = vadd.f32 %v4430, %v4944
    %v5009 = vadd.f32 %v4431, %v4945
    %v5010 = vadd.f32 %v4432, %v4946
    %v5011 = vadd.f32 %v4433, %v4947
    %v5012 = vadd.f32 %v4434, %v4948
    %v5013 = vadd.f32 %v4435, %v4949
    %v5014 = vadd.f32 %v4436, %v4950
    %v5015 = vadd.f32 %v4437, %v4951
    %v5016 = vadd.f32 %v4438, %v4952
    %v5017 = vadd.f32 %v4439, %v4953
    %v5018 = vadd.f32 %v4440, %v4954
    %v5019 = vadd.f32 %v4441, %v4955
    %v5020 = vadd.f32 %v4442, %v4956
    %v5021 = vadd.f32 %v4443, %v4957
    %v5022 = vadd.f32 %v4444, %v4958
    %v5023 = vadd.f32 %v4445, %v4959
    %v5024 = vadd.f32 %v4446, %v4960
    %v5025 = vadd.f32 %v4447, %v4961
    %v5026 = vadd.f32 %v4448, %v4962
    %v5027 = vadd.f32 %v4449, %v4963
    %v5028 = vadd.f32 %v4450, %v4964
    %v5029 = vadd.f32 %v4451, %v4965
    %v5030 = vadd.f32 %v4452, %v4966
    %v5031 = vadd.f32 %v4453, %v4967
    %v5032 = vadd.f32 %v4454, %v4968
    %v5033 = vadd.f32 %v4455, %v4969
    %v5034 = vadd.f32 %v4456, %v4970
    %v5035 = vadd.f32 %v4457, %v4971
    %v5036 = vadd.f32 %v4458, %v4972
    %v5037 = vadd.f32 %v4459, %v4973
    %v5038 = vadd.f32 %v4460, %v4974
    %v5039 = vadd.f32 %v4461, %v4975
    %v5040 = vadd.f32 %v4462, %v4976
    %v5041 = vadd.f32 %v4463, %v4977
    %v5042 = vadd.f32 %v4464, %v4978
    %v5043 = vadd.f32 %v4465, %v4979
    %v5044 = vadd.f32 %v4466, %v4980
    %v5045 = vadd.f32 %v4467, %v4981
    %v5046 = vadd.f32 %v4468, %v4982
    %v5047 = vadd.f32 %v4469, %v4983
    %v5048 = vadd.f32 %v4470, %v4984
    %v5049 = vadd.f32 %v4471, %v4985
    %v5050 = vadd.f32 %v4472, %v4986
    %v5051 = vadd.f32 %v4473, %v4987
    %v5052 = vadd.f32 %v4474, %v4988
    %v5053 = vadd.f32 %v4475, %v4989
    %v5054 = vadd.f32 %v4476, %v4990
    %v5055 = vadd.f32 %v4477, %v4991
    %v5056 = vadd.f32 %v4478, %v4992
    %v5057 = vadd.f32 %v4479, %v4993
    %v5058 = vadd.f32 %v4480, %v4994
    %v5059 = vsel %vm40, %v4995, 0.0
    %v5060 = vsel %vm40, %v4996, 0.0
    %v5061 = vadd.f32 %v5059, %v5060
    %v5062 = vsel %vm40, %v4997, 0.0
    %v5063 = vadd.f32 %v5061, %v5062
    %v5064 = vsel %vm40, %v4998, 0.0
    %v5065 = vadd.f32 %v5063, %v5064
    %v5066 = vsel %vm40, %v4999, 0.0
    %v5067 = vadd.f32 %v5065, %v5066
    %v5068 = vsel %vm40, %v5000, 0.0
    %v5069 = vadd.f32 %v5067, %v5068
    %v5070 = vsel %vm40, %v5001, 0.0
    %v5071 = vadd.f32 %v5069, %v5070
    %v5072 = vsel %vm40, %v5002, 0.0
    %v5073 = vadd.f32 %v5071, %v5072
    %v5074 = vsel %vm40, %v5003, 0.0
    %v5075 = vadd.f32 %v5073, %v5074
    %v5076 = vsel %vm40, %v5004, 0.0
    %v5077 = vadd.f32 %v5075, %v5076
    %v5078 = vsel %vm40, %v5005, 0.0
    %v5079 = vadd.f32 %v5077, %v5078
    %v5080 = vsel %vm40, %v5006, 0.0
    %v5081 = vadd.f32 %v5079, %v5080
    %v5082 = vsel %vm40, %v5007, 0.0
    %v5083 = vadd.f32 %v5081, %v5082
    %v5084 = vsel %vm40, %v5008, 0.0
    %v5085 = vadd.f32 %v5083, %v5084
    %v5086 = vsel %vm40, %v5009, 0.0
    %v5087 = vadd.f32 %v5085, %v5086
    %v5088 = vsel %vm40, %v5010, 0.0
    %v5089 = vadd.f32 %v5087, %v5088
    %v5090 = vsel %vm40, %v5011, 0.0
    %v5091 = vadd.f32 %v5089, %v5090
    %v5092 = vsel %vm40, %v5012, 0.0
    %v5093 = vadd.f32 %v5091, %v5092
    %v5094 = vsel %vm40, %v5013, 0.0
    %v5095 = vadd.f32 %v5093, %v5094
    %v5096 = vsel %vm40, %v5014, 0.0
    %v5097 = vadd.f32 %v5095, %v5096
    %v5098 = vsel %vm40, %v5015, 0.0
    %v5099 = vadd.f32 %v5097, %v5098
    %v5100 = vsel %vm40, %v5016, 0.0
    %v5101 = vadd.f32 %v5099, %v5100
    %v5102 = vsel %vm40, %v5017, 0.0
    %v5103 = vadd.f32 %v5101, %v5102
    %v5104 = vsel %vm40, %v5018, 0.0
    %v5105 = vadd.f32 %v5103, %v5104
    %v5106 = vsel %vm40, %v5019, 0.0
    %v5107 = vadd.f32 %v5105, %v5106
    %v5108 = vsel %vm40, %v5020, 0.0
    %v5109 = vadd.f32 %v5107, %v5108
    %v5110 = vsel %vm40, %v5021, 0.0
    %v5111 = vadd.f32 %v5109, %v5110
    %v5112 = vsel %vm40, %v5022, 0.0
    %v5113 = vadd.f32 %v5111, %v5112
    %v5114 = vsel %vm40, %v5023, 0.0
    %v5115 = vadd.f32 %v5113, %v5114
    %v5116 = vsel %vm40, %v5024, 0.0
    %v5117 = vadd.f32 %v5115, %v5116
    %v5118 = vsel %vm40, %v5025, 0.0
    %v5119 = vadd.f32 %v5117, %v5118
    %v5120 = vsel %vm40, %v5026, 0.0
    %v5121 = vadd.f32 %v5119, %v5120
    %v5122 = vsel %vm40, %v5027, 0.0
    %v5123 = vadd.f32 %v5121, %v5122
    %v5124 = vsel %vm40, %v5028, 0.0
    %v5125 = vadd.f32 %v5123, %v5124
    %v5126 = vsel %vm40, %v5029, 0.0
    %v5127 = vadd.f32 %v5125, %v5126
    %v5128 = vsel %vm40, %v5030, 0.0
    %v5129 = vadd.f32 %v5127, %v5128
    %v5130 = vsel %vm40, %v5031, 0.0
    %v5131 = vadd.f32 %v5129, %v5130
    %v5132 = vsel %vm40, %v5032, 0.0
    %v5133 = vadd.f32 %v5131, %v5132
    %v5134 = vsel %vm40, %v5033, 0.0
    %v5135 = vadd.f32 %v5133, %v5134
    %v5136 = vsel %vm40, %v5034, 0.0
    %v5137 = vadd.f32 %v5135, %v5136
    %v5138 = vsel %vm40, %v5035, 0.0
    %v5139 = vadd.f32 %v5137, %v5138
    %v5140 = vsel %vm40, %v5036, 0.0
    %v5141 = vadd.f32 %v5139, %v5140
    %v5142 = vsel %vm40, %v5037, 0.0
    %v5143 = vadd.f32 %v5141, %v5142
    %v5144 = vsel %vm40, %v5038, 0.0
    %v5145 = vadd.f32 %v5143, %v5144
    %v5146 = vsel %vm40, %v5039, 0.0
    %v5147 = vadd.f32 %v5145, %v5146
    %v5148 = vsel %vm40, %v5040, 0.0
    %v5149 = vadd.f32 %v5147, %v5148
    %v5150 = vsel %vm40, %v5041, 0.0
    %v5151 = vadd.f32 %v5149, %v5150
    %v5152 = vsel %vm40, %v5042, 0.0
    %v5153 = vadd.f32 %v5151, %v5152
    %v5154 = vsel %vm40, %v5043, 0.0
    %v5155 = vadd.f32 %v5153, %v5154
    %v5156 = vsel %vm40, %v5044, 0.0
    %v5157 = vadd.f32 %v5155, %v5156
    %v5158 = vsel %vm40, %v5045, 0.0
    %v5159 = vadd.f32 %v5157, %v5158
    %v5160 = vsel %vm40, %v5046, 0.0
    %v5161 = vadd.f32 %v5159, %v5160
    %v5162 = vsel %vm40, %v5047, 0.0
    %v5163 = vadd.f32 %v5161, %v5162
    %v5164 = vsel %vm40, %v5048, 0.0
    %v5165 = vadd.f32 %v5163, %v5164
    %v5166 = vsel %vm40, %v5049, 0.0
    %v5167 = vadd.f32 %v5165, %v5166
    %v5168 = vsel %vm40, %v5050, 0.0
    %v5169 = vadd.f32 %v5167, %v5168
    %v5170 = vsel %vm40, %v5051, 0.0
    %v5171 = vadd.f32 %v5169, %v5170
    %v5172 = vsel %vm40, %v5052, 0.0
    %v5173 = vadd.f32 %v5171, %v5172
    %v5174 = vsel %vm40, %v5053, 0.0
    %v5175 = vadd.f32 %v5173, %v5174
    %v5176 = vsel %vm40, %v5054, 0.0
    %v5177 = vadd.f32 %v5175, %v5176
    %v5178 = vsel %vm40, %v5055, 0.0
    %v5179 = vadd.f32 %v5177, %v5178
    %v5180 = vsel %vm40, %v5056, 0.0
    %v5181 = vadd.f32 %v5179, %v5180
    %v5182 = vsel %vm40, %v5057, 0.0
    %v5183 = vadd.f32 %v5181, %v5182
    %v5184 = vsel %vm40, %v5058, 0.0
    %v5185 = vadd.f32 %v5183, %v5184
    %v5186 = vrot.slane %v5185, 4
    %v5187 = vadd.f32 %v5185, %v5186
    %v5188 = vrot.slane %v5187, 2
    %v5189 = vadd.f32 %v5187, %v5188
    %v5190 = vrot.slane %v5189, 1
    %v5191 = vadd.f32 %v5189, %v5190
    %v5192 = vmul.f32 %v5191, 0.001953125
    %v5193 = vsub.f32 %v4995, %v5192
    %v5194 = vsub.f32 %v4996, %v5192
    %v5195 = vsub.f32 %v4997, %v5192
    %v5196 = vsub.f32 %v4998, %v5192
    %v5197 = vsub.f32 %v4999, %v5192
    %v5198 = vsub.f32 %v5000, %v5192
    %v5199 = vsub.f32 %v5001, %v5192
    %v5200 = vsub.f32 %v5002, %v5192
    %v5201 = vsub.f32 %v5003, %v5192
    %v5202 = vsub.f32 %v5004, %v5192
    %v5203 = vsub.f32 %v5005, %v5192
    %v5204 = vsub.f32 %v5006, %v5192
    %v5205 = vsub.f32 %v5007, %v5192
    %v5206 = vsub.f32 %v5008, %v5192
    %v5207 = vsub.f32 %v5009, %v5192
    %v5208 = vsub.f32 %v5010, %v5192
    %v5209 = vsub.f32 %v5011, %v5192
    %v5210 = vsub.f32 %v5012, %v5192
    %v5211 = vsub.f32 %v5013, %v5192
    %v5212 = vsub.f32 %v5014, %v5192
    %v5213 = vsub.f32 %v5015, %v5192
    %v5214 = vsub.f32 %v5016, %v5192
    %v5215 = vsub.f32 %v5017, %v5192
    %v5216 = vsub.f32 %v5018, %v5192
    %v5217 = vsub.f32 %v5019, %v5192
    %v5218 = vsub.f32 %v5020, %v5192
    %v5219 = vsub.f32 %v5021, %v5192
    %v5220 = vsub.f32 %v5022, %v5192
    %v5221 = vsub.f32 %v5023, %v5192
    %v5222 = vsub.f32 %v5024, %v5192
    %v5223 = vsub.f32 %v5025, %v5192
    %v5224 = vsub.f32 %v5026, %v5192
    %v5225 = vsub.f32 %v5027, %v5192
    %v5226 = vsub.f32 %v5028, %v5192
    %v5227 = vsub.f32 %v5029, %v5192
    %v5228 = vsub.f32 %v5030, %v5192
    %v5229 = vsub.f32 %v5031, %v5192
    %v5230 = vsub.f32 %v5032, %v5192
    %v5231 = vsub.f32 %v5033, %v5192
    %v5232 = vsub.f32 %v5034, %v5192
    %v5233 = vsub.f32 %v5035, %v5192
    %v5234 = vsub.f32 %v5036, %v5192
    %v5235 = vsub.f32 %v5037, %v5192
    %v5236 = vsub.f32 %v5038, %v5192
    %v5237 = vsub.f32 %v5039, %v5192
    %v5238 = vsub.f32 %v5040, %v5192
    %v5239 = vsub.f32 %v5041, %v5192
    %v5240 = vsub.f32 %v5042, %v5192
    %v5241 = vsub.f32 %v5043, %v5192
    %v5242 = vsub.f32 %v5044, %v5192
    %v5243 = vsub.f32 %v5045, %v5192
    %v5244 = vsub.f32 %v5046, %v5192
    %v5245 = vsub.f32 %v5047, %v5192
    %v5246 = vsub.f32 %v5048, %v5192
    %v5247 = vsub.f32 %v5049, %v5192
    %v5248 = vsub.f32 %v5050, %v5192
    %v5249 = vsub.f32 %v5051, %v5192
    %v5250 = vsub.f32 %v5052, %v5192
    %v5251 = vsub.f32 %v5053, %v5192
    %v5252 = vsub.f32 %v5054, %v5192
    %v5253 = vsub.f32 %v5055, %v5192
    %v5254 = vsub.f32 %v5056, %v5192
    %v5255 = vsub.f32 %v5057, %v5192
    %v5256 = vsub.f32 %v5058, %v5192
    %v5257 = vmul.f32 %v5193, %v5193
    %v5258 = vmul.f32 %v5194, %v5194
    %v5259 = vmul.f32 %v5195, %v5195
    %v5260 = vmul.f32 %v5196, %v5196
    %v5261 = vmul.f32 %v5197, %v5197
    %v5262 = vmul.f32 %v5198, %v5198
    %v5263 = vmul.f32 %v5199, %v5199
    %v5264 = vmul.f32 %v5200, %v5200
    %v5265 = vmul.f32 %v5201, %v5201
    %v5266 = vmul.f32 %v5202, %v5202
    %v5267 = vmul.f32 %v5203, %v5203
    %v5268 = vmul.f32 %v5204, %v5204
    %v5269 = vmul.f32 %v5205, %v5205
    %v5270 = vmul.f32 %v5206, %v5206
    %v5271 = vmul.f32 %v5207, %v5207
    %v5272 = vmul.f32 %v5208, %v5208
    %v5273 = vmul.f32 %v5209, %v5209
    %v5274 = vmul.f32 %v5210, %v5210
    %v5275 = vmul.f32 %v5211, %v5211
    %v5276 = vmul.f32 %v5212, %v5212
    %v5277 = vmul.f32 %v5213, %v5213
    %v5278 = vmul.f32 %v5214, %v5214
    %v5279 = vmul.f32 %v5215, %v5215
    %v5280 = vmul.f32 %v5216, %v5216
    %v5281 = vmul.f32 %v5217, %v5217
    %v5282 = vmul.f32 %v5218, %v5218
    %v5283 = vmul.f32 %v5219, %v5219
    %v5284 = vmul.f32 %v5220, %v5220
    %v5285 = vmul.f32 %v5221, %v5221
    %v5286 = vmul.f32 %v5222, %v5222
    %v5287 = vmul.f32 %v5223, %v5223
    %v5288 = vmul.f32 %v5224, %v5224
    %v5289 = vmul.f32 %v5225, %v5225
    %v5290 = vmul.f32 %v5226, %v5226
    %v5291 = vmul.f32 %v5227, %v5227
    %v5292 = vmul.f32 %v5228, %v5228
    %v5293 = vmul.f32 %v5229, %v5229
    %v5294 = vmul.f32 %v5230, %v5230
    %v5295 = vmul.f32 %v5231, %v5231
    %v5296 = vmul.f32 %v5232, %v5232
    %v5297 = vmul.f32 %v5233, %v5233
    %v5298 = vmul.f32 %v5234, %v5234
    %v5299 = vmul.f32 %v5235, %v5235
    %v5300 = vmul.f32 %v5236, %v5236
    %v5301 = vmul.f32 %v5237, %v5237
    %v5302 = vmul.f32 %v5238, %v5238
    %v5303 = vmul.f32 %v5239, %v5239
    %v5304 = vmul.f32 %v5240, %v5240
    %v5305 = vmul.f32 %v5241, %v5241
    %v5306 = vmul.f32 %v5242, %v5242
    %v5307 = vmul.f32 %v5243, %v5243
    %v5308 = vmul.f32 %v5244, %v5244
    %v5309 = vmul.f32 %v5245, %v5245
    %v5310 = vmul.f32 %v5246, %v5246
    %v5311 = vmul.f32 %v5247, %v5247
    %v5312 = vmul.f32 %v5248, %v5248
    %v5313 = vmul.f32 %v5249, %v5249
    %v5314 = vmul.f32 %v5250, %v5250
    %v5315 = vmul.f32 %v5251, %v5251
    %v5316 = vmul.f32 %v5252, %v5252
    %v5317 = vmul.f32 %v5253, %v5253
    %v5318 = vmul.f32 %v5254, %v5254
    %v5319 = vmul.f32 %v5255, %v5255
    %v5320 = vmul.f32 %v5256, %v5256
    %v5321 = vsel %vm40, %v5257, 0.0
    %v5322 = vsel %vm40, %v5258, 0.0
    %v5323 = vadd.f32 %v5321, %v5322
    %v5324 = vsel %vm40, %v5259, 0.0
    %v5325 = vadd.f32 %v5323, %v5324
    %v5326 = vsel %vm40, %v5260, 0.0
    %v5327 = vadd.f32 %v5325, %v5326
    %v5328 = vsel %vm40, %v5261, 0.0
    %v5329 = vadd.f32 %v5327, %v5328
    %v5330 = vsel %vm40, %v5262, 0.0
    %v5331 = vadd.f32 %v5329, %v5330
    %v5332 = vsel %vm40, %v5263, 0.0
    %v5333 = vadd.f32 %v5331, %v5332
    %v5334 = vsel %vm40, %v5264, 0.0
    %v5335 = vadd.f32 %v5333, %v5334
    %v5336 = vsel %vm40, %v5265, 0.0
    %v5337 = vadd.f32 %v5335, %v5336
    %v5338 = vsel %vm40, %v5266, 0.0
    %v5339 = vadd.f32 %v5337, %v5338
    %v5340 = vsel %vm40, %v5267, 0.0
    %v5341 = vadd.f32 %v5339, %v5340
    %v5342 = vsel %vm40, %v5268, 0.0
    %v5343 = vadd.f32 %v5341, %v5342
    %v5344 = vsel %vm40, %v5269, 0.0
    %v5345 = vadd.f32 %v5343, %v5344
    %v5346 = vsel %vm40, %v5270, 0.0
    %v5347 = vadd.f32 %v5345, %v5346
    %v5348 = vsel %vm40, %v5271, 0.0
    %v5349 = vadd.f32 %v5347, %v5348
    %v5350 = vsel %vm40, %v5272, 0.0
    %v5351 = vadd.f32 %v5349, %v5350
    %v5352 = vsel %vm40, %v5273, 0.0
    %v5353 = vadd.f32 %v5351, %v5352
    %v5354 = vsel %vm40, %v5274, 0.0
    %v5355 = vadd.f32 %v5353, %v5354
    %v5356 = vsel %vm40, %v5275, 0.0
    %v5357 = vadd.f32 %v5355, %v5356
    %v5358 = vsel %vm40, %v5276, 0.0
    %v5359 = vadd.f32 %v5357, %v5358
    %v5360 = vsel %vm40, %v5277, 0.0
    %v5361 = vadd.f32 %v5359, %v5360
    %v5362 = vsel %vm40, %v5278, 0.0
    %v5363 = vadd.f32 %v5361, %v5362
    %v5364 = vsel %vm40, %v5279, 0.0
    %v5365 = vadd.f32 %v5363, %v5364
    %v5366 = vsel %vm40, %v5280, 0.0
    %v5367 = vadd.f32 %v5365, %v5366
    %v5368 = vsel %vm40, %v5281, 0.0
    %v5369 = vadd.f32 %v5367, %v5368
    %v5370 = vsel %vm40, %v5282, 0.0
    %v5371 = vadd.f32 %v5369, %v5370
    %v5372 = vsel %vm40, %v5283, 0.0
    %v5373 = vadd.f32 %v5371, %v5372
    %v5374 = vsel %vm40, %v5284, 0.0
    %v5375 = vadd.f32 %v5373, %v5374
    %v5376 = vsel %vm40, %v5285, 0.0
    %v5377 = vadd.f32 %v5375, %v5376
    %v5378 = vsel %vm40, %v5286, 0.0
    %v5379 = vadd.f32 %v5377, %v5378
    %v5380 = vsel %vm40, %v5287, 0.0
    %v5381 = vadd.f32 %v5379, %v5380
    %v5382 = vsel %vm40, %v5288, 0.0
    %v5383 = vadd.f32 %v5381, %v5382
    %v5384 = vsel %vm40, %v5289, 0.0
    %v5385 = vadd.f32 %v5383, %v5384
    %v5386 = vsel %vm40, %v5290, 0.0
    %v5387 = vadd.f32 %v5385, %v5386
    %v5388 = vsel %vm40, %v5291, 0.0
    %v5389 = vadd.f32 %v5387, %v5388
    %v5390 = vsel %vm40, %v5292, 0.0
    %v5391 = vadd.f32 %v5389, %v5390
    %v5392 = vsel %vm40, %v5293, 0.0
    %v5393 = vadd.f32 %v5391, %v5392
    %v5394 = vsel %vm40, %v5294, 0.0
    %v5395 = vadd.f32 %v5393, %v5394
    %v5396 = vsel %vm40, %v5295, 0.0
    %v5397 = vadd.f32 %v5395, %v5396
    %v5398 = vsel %vm40, %v5296, 0.0
    %v5399 = vadd.f32 %v5397, %v5398
    %v5400 = vsel %vm40, %v5297, 0.0
    %v5401 = vadd.f32 %v5399, %v5400
    %v5402 = vsel %vm40, %v5298, 0.0
    %v5403 = vadd.f32 %v5401, %v5402
    %v5404 = vsel %vm40, %v5299, 0.0
    %v5405 = vadd.f32 %v5403, %v5404
    %v5406 = vsel %vm40, %v5300, 0.0
    %v5407 = vadd.f32 %v5405, %v5406
    %v5408 = vsel %vm40, %v5301, 0.0
    %v5409 = vadd.f32 %v5407, %v5408
    %v5410 = vsel %vm40, %v5302, 0.0
    %v5411 = vadd.f32 %v5409, %v5410
    %v5412 = vsel %vm40, %v5303, 0.0
    %v5413 = vadd.f32 %v5411, %v5412
    %v5414 = vsel %vm40, %v5304, 0.0
    %v5415 = vadd.f32 %v5413, %v5414
    %v5416 = vsel %vm40, %v5305, 0.0
    %v5417 = vadd.f32 %v5415, %v5416
    %v5418 = vsel %vm40, %v5306, 0.0
    %v5419 = vadd.f32 %v5417, %v5418
    %v5420 = vsel %vm40, %v5307, 0.0
    %v5421 = vadd.f32 %v5419, %v5420
    %v5422 = vsel %vm40, %v5308, 0.0
    %v5423 = vadd.f32 %v5421, %v5422
    %v5424 = vsel %vm40, %v5309, 0.0
    %v5425 = vadd.f32 %v5423, %v5424
    %v5426 = vsel %vm40, %v5310, 0.0
    %v5427 = vadd.f32 %v5425, %v5426
    %v5428 = vsel %vm40, %v5311, 0.0
    %v5429 = vadd.f32 %v5427, %v5428
    %v5430 = vsel %vm40, %v5312, 0.0
    %v5431 = vadd.f32 %v5429, %v5430
    %v5432 = vsel %vm40, %v5313, 0.0
    %v5433 = vadd.f32 %v5431, %v5432
    %v5434 = vsel %vm40, %v5314, 0.0
    %v5435 = vadd.f32 %v5433, %v5434
    %v5436 = vsel %vm40, %v5315, 0.0
    %v5437 = vadd.f32 %v5435, %v5436
    %v5438 = vsel %vm40, %v5316, 0.0
    %v5439 = vadd.f32 %v5437, %v5438
    %v5440 = vsel %vm40, %v5317, 0.0
    %v5441 = vadd.f32 %v5439, %v5440
    %v5442 = vsel %vm40, %v5318, 0.0
    %v5443 = vadd.f32 %v5441, %v5442
    %v5444 = vsel %vm40, %v5319, 0.0
    %v5445 = vadd.f32 %v5443, %v5444
    %v5446 = vsel %vm40, %v5320, 0.0
    %v5447 = vadd.f32 %v5445, %v5446
    %v5448 = vrot.slane %v5447, 4
    %v5449 = vadd.f32 %v5447, %v5448
    %v5450 = vrot.slane %v5449, 2
    %v5451 = vadd.f32 %v5449, %v5450
    %v5452 = vrot.slane %v5451, 1
    %v5453 = vadd.f32 %v5451, %v5452
    %v5454 = vmul.f32 %v5453, 0.001953125
    %v5455 = vld [vmem:[%s3] sm:$0x1]
    %v5456 = vadd.f32 %v5454, 1e-05
    %v5457 = vrsqrt.pop %v5456
    %v5458 = vmul.f32 %v5455, %v5457
    %v5460 = vlaneseq
    %v5461 = vshrl.u32 %v5460, 7
    %v5462 = vsub.s32 0, %v5461
    %v5463 = vrot.slane %v5458, %v5462
    %v5465 = vmul.f32 %v5193, %v5463
    %v5466 = vmul.f32 %v5194, %v5463
    %v5467 = vmul.f32 %v5195, %v5463
    %v5468 = vmul.f32 %v5196, %v5463
    %v5469 = vmul.f32 %v5197, %v5463
    %v5470 = vmul.f32 %v5198, %v5463
    %v5471 = vmul.f32 %v5199, %v5463
    %v5472 = vmul.f32 %v5200, %v5463
    %v5473 = vmul.f32 %v5201, %v5463
    %v5474 = vmul.f32 %v5202, %v5463
    %v5475 = vmul.f32 %v5203, %v5463
    %v5476 = vmul.f32 %v5204, %v5463
    %v5477 = vmul.f32 %v5205, %v5463
    %v5478 = vmul.f32 %v5206, %v5463
    %v5479 = vmul.f32 %v5207, %v5463
    %v5480 = vmul.f32 %v5208, %v5463
    %v5481 = vmul.f32 %v5209, %v5463
    %v5482 = vmul.f32 %v5210, %v5463
    %v5483 = vmul.f32 %v5211, %v5463
    %v5484 = vmul.f32 %v5212, %v5463
    %v5485 = vmul.f32 %v5213, %v5463
    %v5486 = vmul.f32 %v5214, %v5463
    %v5487 = vmul.f32 %v5215, %v5463
    %v5488 = vmul.f32 %v5216, %v5463
    %v5489 = vmul.f32 %v5217, %v5463
    %v5490 = vmul.f32 %v5218, %v5463
    %v5491 = vmul.f32 %v5219, %v5463
    %v5492 = vmul.f32 %v5220, %v5463
    %v5493 = vmul.f32 %v5221, %v5463
    %v5494 = vmul.f32 %v5222, %v5463
    %v5495 = vmul.f32 %v5223, %v5463
    %v5496 = vmul.f32 %v5224, %v5463
    %v5497 = vmul.f32 %v5225, %v5463
    %v5498 = vmul.f32 %v5226, %v5463
    %v5499 = vmul.f32 %v5227, %v5463
    %v5500 = vmul.f32 %v5228, %v5463
    %v5501 = vmul.f32 %v5229, %v5463
    %v5502 = vmul.f32 %v5230, %v5463
    %v5503 = vmul.f32 %v5231, %v5463
    %v5504 = vmul.f32 %v5232, %v5463
    %v5505 = vmul.f32 %v5233, %v5463
    %v5506 = vmul.f32 %v5234, %v5463
    %v5507 = vmul.f32 %v5235, %v5463
    %v5508 = vmul.f32 %v5236, %v5463
    %v5509 = vmul.f32 %v5237, %v5463
    %v5510 = vmul.f32 %v5238, %v5463
    %v5511 = vmul.f32 %v5239, %v5463
    %v5512 = vmul.f32 %v5240, %v5463
    %v5513 = vmul.f32 %v5241, %v5463
    %v5514 = vmul.f32 %v5242, %v5463
    %v5515 = vmul.f32 %v5243, %v5463
    %v5516 = vmul.f32 %v5244, %v5463
    %v5517 = vmul.f32 %v5245, %v5463
    %v5518 = vmul.f32 %v5246, %v5463
    %v5519 = vmul.f32 %v5247, %v5463
    %v5520 = vmul.f32 %v5248, %v5463
    %v5521 = vmul.f32 %v5249, %v5463
    %v5522 = vmul.f32 %v5250, %v5463
    %v5523 = vmul.f32 %v5251, %v5463
    %v5524 = vmul.f32 %v5252, %v5463
    %v5525 = vmul.f32 %v5253, %v5463
    %v5526 = vmul.f32 %v5254, %v5463
    %v5527 = vmul.f32 %v5255, %v5463
    %v5528 = vmul.f32 %v5256, %v5463
    %v5529 = vld [vmem:[%s4] sm:$0x1]
    %v5531 = vlaneseq
    %v5532 = vshrl.u32 %v5531, 7
    %v5533 = vsub.s32 0, %v5532
    %v5534 = vrot.slane %v5529, %v5533
    %v5536 = vadd.f32 %v5465, %v5534
    %v5537 = vadd.f32 %v5466, %v5534
    %v5538 = vadd.f32 %v5467, %v5534
    %v5539 = vadd.f32 %v5468, %v5534
    %v5540 = vadd.f32 %v5469, %v5534
    %v5541 = vadd.f32 %v5470, %v5534
    %v5542 = vadd.f32 %v5471, %v5534
    %v5543 = vadd.f32 %v5472, %v5534
    %v5544 = vadd.f32 %v5473, %v5534
    %v5545 = vadd.f32 %v5474, %v5534
    %v5546 = vadd.f32 %v5475, %v5534
    %v5547 = vadd.f32 %v5476, %v5534
    %v5548 = vadd.f32 %v5477, %v5534
    %v5549 = vadd.f32 %v5478, %v5534
    %v5550 = vadd.f32 %v5479, %v5534
    %v5551 = vadd.f32 %v5480, %v5534
    %v5552 = vadd.f32 %v5481, %v5534
    %v5553 = vadd.f32 %v5482, %v5534
    %v5554 = vadd.f32 %v5483, %v5534
    %v5555 = vadd.f32 %v5484, %v5534
    %v5556 = vadd.f32 %v5485, %v5534
    %v5557 = vadd.f32 %v5486, %v5534
    %v5558 = vadd.f32 %v5487, %v5534
    %v5559 = vadd.f32 %v5488, %v5534
    %v5560 = vadd.f32 %v5489, %v5534
    %v5561 = vadd.f32 %v5490, %v5534
    %v5562 = vadd.f32 %v5491, %v5534
    %v5563 = vadd.f32 %v5492, %v5534
    %v5564 = vadd.f32 %v5493, %v5534
    %v5565 = vadd.f32 %v5494, %v5534
    %v5566 = vadd.f32 %v5495, %v5534
    %v5567 = vadd.f32 %v5496, %v5534
    %v5568 = vadd.f32 %v5497, %v5534
    %v5569 = vadd.f32 %v5498, %v5534
    %v5570 = vadd.f32 %v5499, %v5534
    %v5571 = vadd.f32 %v5500, %v5534
    %v5572 = vadd.f32 %v5501, %v5534
    %v5573 = vadd.f32 %v5502, %v5534
    %v5574 = vadd.f32 %v5503, %v5534
    %v5575 = vadd.f32 %v5504, %v5534
    %v5576 = vadd.f32 %v5505, %v5534
    %v5577 = vadd.f32 %v5506, %v5534
    %v5578 = vadd.f32 %v5507, %v5534
    %v5579 = vadd.f32 %v5508, %v5534
    %v5580 = vadd.f32 %v5509, %v5534
    %v5581 = vadd.f32 %v5510, %v5534
    %v5582 = vadd.f32 %v5511, %v5534
    %v5583 = vadd.f32 %v5512, %v5534
    %v5584 = vadd.f32 %v5513, %v5534
    %v5585 = vadd.f32 %v5514, %v5534
    %v5586 = vadd.f32 %v5515, %v5534
    %v5587 = vadd.f32 %v5516, %v5534
    %v5588 = vadd.f32 %v5517, %v5534
    %v5589 = vadd.f32 %v5518, %v5534
    %v5590 = vadd.f32 %v5519, %v5534
    %v5591 = vadd.f32 %v5520, %v5534
    %v5592 = vadd.f32 %v5521, %v5534
    %v5593 = vadd.f32 %v5522, %v5534
    %v5594 = vadd.f32 %v5523, %v5534
    %v5595 = vadd.f32 %v5524, %v5534
    %v5596 = vadd.f32 %v5525, %v5534
    %v5597 = vadd.f32 %v5526, %v5534
    %v5598 = vadd.f32 %v5527, %v5534
    %v5599 = vadd.f32 %v5528, %v5534
    %vm5600 = vcmp.ge.f32.partialorder %v5536, 0.0
    %vm5601 = vcmp.ge.f32.partialorder %v5537, 0.0
    %vm5602 = vcmp.ge.f32.partialorder %v5538, 0.0
    %vm5603 = vcmp.ge.f32.partialorder %v5539, 0.0
    %vm5604 = vcmp.ge.f32.partialorder %v5540, 0.0
    %vm5605 = vcmp.ge.f32.partialorder %v5541, 0.0
    %vm5606 = vcmp.ge.f32.partialorder %v5542, 0.0
    %vm5607 = vcmp.ge.f32.partialorder %v5543, 0.0
    %vm5608 = vcmp.ge.f32.partialorder %v5544, 0.0
    %vm5609 = vcmp.ge.f32.partialorder %v5545, 0.0
    %vm5610 = vcmp.ge.f32.partialorder %v5546, 0.0
    %vm5611 = vcmp.ge.f32.partialorder %v5547, 0.0
    %vm5612 = vcmp.ge.f32.partialorder %v5548, 0.0
    %vm5613 = vcmp.ge.f32.partialorder %v5549, 0.0
    %vm5614 = vcmp.ge.f32.partialorder %v5550, 0.0
    %vm5615 = vcmp.ge.f32.partialorder %v5551, 0.0
    %vm5616 = vcmp.ge.f32.partialorder %v5552, 0.0
    %vm5617 = vcmp.ge.f32.partialorder %v5553, 0.0
    %vm5618 = vcmp.ge.f32.partialorder %v5554, 0.0
    %vm5619 = vcmp.ge.f32.partialorder %v5555, 0.0
    %vm5620 = vcmp.ge.f32.partialorder %v5556, 0.0
    %vm5621 = vcmp.ge.f32.partialorder %v5557, 0.0
    %vm5622 = vcmp.ge.f32.partialorder %v5558, 0.0
    %vm5623 = vcmp.ge.f32.partialorder %v5559, 0.0
    %vm5624 = vcmp.ge.f32.partialorder %v5560, 0.0
    %vm5625 = vcmp.ge.f32.partialorder %v5561, 0.0
    %vm5626 = vcmp.ge.f32.partialorder %v5562, 0.0
    %vm5627 = vcmp.ge.f32.partialorder %v5563, 0.0
    %vm5628 = vcmp.ge.f32.partialorder %v5564, 0.0
    %vm5629 = vcmp.ge.f32.partialorder %v5565, 0.0
    %vm5630 = vcmp.ge.f32.partialorder %v5566, 0.0
    %vm5631 = vcmp.ge.f32.partialorder %v5567, 0.0
    %vm5632 = vcmp.ge.f32.partialorder %v5568, 0.0
    %vm5633 = vcmp.ge.f32.partialorder %v5569, 0.0
    %vm5634 = vcmp.ge.f32.partialorder %v5570, 0.0
    %vm5635 = vcmp.ge.f32.partialorder %v5571, 0.0
    %vm5636 = vcmp.ge.f32.partialorder %v5572, 0.0
    %vm5637 = vcmp.ge.f32.partialorder %v5573, 0.0
    %vm5638 = vcmp.ge.f32.partialorder %v5574, 0.0
    %vm5639 = vcmp.ge.f32.partialorder %v5575, 0.0
    %vm5640 = vcmp.ge.f32.partialorder %v5576, 0.0
    %vm5641 = vcmp.ge.f32.partialorder %v5577, 0.0
    %vm5642 = vcmp.ge.f32.partialorder %v5578, 0.0
    %vm5643 = vcmp.ge.f32.partialorder %v5579, 0.0
    %vm5644 = vcmp.ge.f32.partialorder %v5580, 0.0
    %vm5645 = vcmp.ge.f32.partialorder %v5581, 0.0
    %vm5646 = vcmp.ge.f32.partialorder %v5582, 0.0
    %vm5647 = vcmp.ge.f32.partialorder %v5583, 0.0
    %vm5648 = vcmp.ge.f32.partialorder %v5584, 0.0
    %vm5649 = vcmp.ge.f32.partialorder %v5585, 0.0
    %vm5650 = vcmp.ge.f32.partialorder %v5586, 0.0
    %vm5651 = vcmp.ge.f32.partialorder %v5587, 0.0
    %vm5652 = vcmp.ge.f32.partialorder %v5588, 0.0
    %vm5653 = vcmp.ge.f32.partialorder %v5589, 0.0
    %vm5654 = vcmp.ge.f32.partialorder %v5590, 0.0
    %vm5655 = vcmp.ge.f32.partialorder %v5591, 0.0
    %vm5656 = vcmp.ge.f32.partialorder %v5592, 0.0
    %vm5657 = vcmp.ge.f32.partialorder %v5593, 0.0
    %vm5658 = vcmp.ge.f32.partialorder %v5594, 0.0
    %vm5659 = vcmp.ge.f32.partialorder %v5595, 0.0
    %vm5660 = vcmp.ge.f32.partialorder %v5596, 0.0
    %vm5661 = vcmp.ge.f32.partialorder %v5597, 0.0
    %vm5662 = vcmp.ge.f32.partialorder %v5598, 0.0
    %vm5663 = vcmp.ge.f32.partialorder %v5599, 0.0
    %v5664 = vstv %s32
    %v5665 = vmul.f32 %v5664, %v5536
    %v5666 = vmul.f32 %v5664, %v5537
    %v5667 = vmul.f32 %v5664, %v5538
    %v5668 = vmul.f32 %v5664, %v5539
    %v5669 = vmul.f32 %v5664, %v5540
    %v5670 = vmul.f32 %v5664, %v5541
    %v5671 = vmul.f32 %v5664, %v5542
    %v5672 = vmul.f32 %v5664, %v5543
    %v5673 = vmul.f32 %v5664, %v5544
    %v5674 = vmul.f32 %v5664, %v5545
    %v5675 = vmul.f32 %v5664, %v5546
    %v5676 = vmul.f32 %v5664, %v5547
    %v5677 = vmul.f32 %v5664, %v5548
    %v5678 = vmul.f32 %v5664, %v5549
    %v5679 = vmul.f32 %v5664, %v5550
    %v5680 = vmul.f32 %v5664, %v5551
    %v5681 = vmul.f32 %v5664, %v5552
    %v5682 = vmul.f32 %v5664, %v5553
    %v5683 = vmul.f32 %v5664, %v5554
    %v5684 = vmul.f32 %v5664, %v5555
    %v5685 = vmul.f32 %v5664, %v5556
    %v5686 = vmul.f32 %v5664, %v5557
    %v5687 = vmul.f32 %v5664, %v5558
    %v5688 = vmul.f32 %v5664, %v5559
    %v5689 = vmul.f32 %v5664, %v5560
    %v5690 = vmul.f32 %v5664, %v5561
    %v5691 = vmul.f32 %v5664, %v5562
    %v5692 = vmul.f32 %v5664, %v5563
    %v5693 = vmul.f32 %v5664, %v5564
    %v5694 = vmul.f32 %v5664, %v5565
    %v5695 = vmul.f32 %v5664, %v5566
    %v5696 = vmul.f32 %v5664, %v5567
    %v5697 = vmul.f32 %v5664, %v5568
    %v5698 = vmul.f32 %v5664, %v5569
    %v5699 = vmul.f32 %v5664, %v5570
    %v5700 = vmul.f32 %v5664, %v5571
    %v5701 = vmul.f32 %v5664, %v5572
    %v5702 = vmul.f32 %v5664, %v5573
    %v5703 = vmul.f32 %v5664, %v5574
    %v5704 = vmul.f32 %v5664, %v5575
    %v5705 = vmul.f32 %v5664, %v5576
    %v5706 = vmul.f32 %v5664, %v5577
    %v5707 = vmul.f32 %v5664, %v5578
    %v5708 = vmul.f32 %v5664, %v5579
    %v5709 = vmul.f32 %v5664, %v5580
    %v5710 = vmul.f32 %v5664, %v5581
    %v5711 = vmul.f32 %v5664, %v5582
    %v5712 = vmul.f32 %v5664, %v5583
    %v5713 = vmul.f32 %v5664, %v5584
    %v5714 = vmul.f32 %v5664, %v5585
    %v5715 = vmul.f32 %v5664, %v5586
    %v5716 = vmul.f32 %v5664, %v5587
    %v5717 = vmul.f32 %v5664, %v5588
    %v5718 = vmul.f32 %v5664, %v5589
    %v5719 = vmul.f32 %v5664, %v5590
    %v5720 = vmul.f32 %v5664, %v5591
    %v5721 = vmul.f32 %v5664, %v5592
    %v5722 = vmul.f32 %v5664, %v5593
    %v5723 = vmul.f32 %v5664, %v5594
    %v5724 = vmul.f32 %v5664, %v5595
    %v5725 = vmul.f32 %v5664, %v5596
    %v5726 = vmul.f32 %v5664, %v5597
    %v5727 = vmul.f32 %v5664, %v5598
    %v5728 = vmul.f32 %v5664, %v5599
    %v5729 = vsel %vm5600, %v5536, %v5665
    %v5730 = vsel %vm5601, %v5537, %v5666
    %v5731 = vsel %vm5602, %v5538, %v5667
    %v5732 = vsel %vm5603, %v5539, %v5668
    %v5733 = vsel %vm5604, %v5540, %v5669
    %v5734 = vsel %vm5605, %v5541, %v5670
    %v5735 = vsel %vm5606, %v5542, %v5671
    %v5736 = vsel %vm5607, %v5543, %v5672
    %v5737 = vsel %vm5608, %v5544, %v5673
    %v5738 = vsel %vm5609, %v5545, %v5674
    %v5739 = vsel %vm5610, %v5546, %v5675
    %v5740 = vsel %vm5611, %v5547, %v5676
    %v5741 = vsel %vm5612, %v5548, %v5677
    %v5742 = vsel %vm5613, %v5549, %v5678
    %v5743 = vsel %vm5614, %v5550, %v5679
    %v5744 = vsel %vm5615, %v5551, %v5680
    %v5745 = vsel %vm5616, %v5552, %v5681
    %v5746 = vsel %vm5617, %v5553, %v5682
    %v5747 = vsel %vm5618, %v5554, %v5683
    %v5748 = vsel %vm5619, %v5555, %v5684
    %v5749 = vsel %vm5620, %v5556, %v5685
    %v5750 = vsel %vm5621, %v5557, %v5686
    %v5751 = vsel %vm5622, %v5558, %v5687
    %v5752 = vsel %vm5623, %v5559, %v5688
    %v5753 = vsel %vm5624, %v5560, %v5689
    %v5754 = vsel %vm5625, %v5561, %v5690
    %v5755 = vsel %vm5626, %v5562, %v5691
    %v5756 = vsel %vm5627, %v5563, %v5692
    %v5757 = vsel %vm5628, %v5564, %v5693
    %v5758 = vsel %vm5629, %v5565, %v5694
    %v5759 = vsel %vm5630, %v5566, %v5695
    %v5760 = vsel %vm5631, %v5567, %v5696
    %v5761 = vsel %vm5632, %v5568, %v5697
    %v5762 = vsel %vm5633, %v5569, %v5698
    %v5763 = vsel %vm5634, %v5570, %v5699
    %v5764 = vsel %vm5635, %v5571, %v5700
    %v5765 = vsel %vm5636, %v5572, %v5701
    %v5766 = vsel %vm5637, %v5573, %v5702
    %v5767 = vsel %vm5638, %v5574, %v5703
    %v5768 = vsel %vm5639, %v5575, %v5704
    %v5769 = vsel %vm5640, %v5576, %v5705
    %v5770 = vsel %vm5641, %v5577, %v5706
    %v5771 = vsel %vm5642, %v5578, %v5707
    %v5772 = vsel %vm5643, %v5579, %v5708
    %v5773 = vsel %vm5644, %v5580, %v5709
    %v5774 = vsel %vm5645, %v5581, %v5710
    %v5775 = vsel %vm5646, %v5582, %v5711
    %v5776 = vsel %vm5647, %v5583, %v5712
    %v5777 = vsel %vm5648, %v5584, %v5713
    %v5778 = vsel %vm5649, %v5585, %v5714
    %v5779 = vsel %vm5650, %v5586, %v5715
    %v5780 = vsel %vm5651, %v5587, %v5716
    %v5781 = vsel %vm5652, %v5588, %v5717
    %v5782 = vsel %vm5653, %v5589, %v5718
    %v5783 = vsel %vm5654, %v5590, %v5719
    %v5784 = vsel %vm5655, %v5591, %v5720
    %v5785 = vsel %vm5656, %v5592, %v5721
    %v5786 = vsel %vm5657, %v5593, %v5722
    %v5787 = vsel %vm5658, %v5594, %v5723
    %v5788 = vsel %vm5659, %v5595, %v5724
    %v5789 = vsel %vm5660, %v5596, %v5725
    %v5790 = vsel %vm5661, %v5597, %v5726
    %v5791 = vsel %vm5662, %v5598, %v5727
    %v5792 = vsel %vm5663, %v5599, %v5728
    %v5793 = vpack.c.bf16 %v5730, %v5729
    %v5794 = vpack.c.bf16 %v5732, %v5731
    %v5795 = vpack.c.bf16 %v5734, %v5733
    %v5796 = vpack.c.bf16 %v5736, %v5735
    %v5797 = vpack.c.bf16 %v5738, %v5737
    %v5798 = vpack.c.bf16 %v5740, %v5739
    %v5799 = vpack.c.bf16 %v5742, %v5741
    %v5800 = vpack.c.bf16 %v5744, %v5743
    %v5801 = vpack.c.bf16 %v5746, %v5745
    %v5802 = vpack.c.bf16 %v5748, %v5747
    %v5803 = vpack.c.bf16 %v5750, %v5749
    %v5804 = vpack.c.bf16 %v5752, %v5751
    %v5805 = vpack.c.bf16 %v5754, %v5753
    %v5806 = vpack.c.bf16 %v5756, %v5755
    %v5807 = vpack.c.bf16 %v5758, %v5757
    %v5808 = vpack.c.bf16 %v5760, %v5759
    %v5809 = vpack.c.bf16 %v5762, %v5761
    %v5810 = vpack.c.bf16 %v5764, %v5763
    %v5811 = vpack.c.bf16 %v5766, %v5765
    %v5812 = vpack.c.bf16 %v5768, %v5767
    %v5813 = vpack.c.bf16 %v5770, %v5769
    %v5814 = vpack.c.bf16 %v5772, %v5771
    %v5815 = vpack.c.bf16 %v5774, %v5773
    %v5816 = vpack.c.bf16 %v5776, %v5775
    %v5817 = vpack.c.bf16 %v5778, %v5777
    %v5818 = vpack.c.bf16 %v5780, %v5779
    %v5819 = vpack.c.bf16 %v5782, %v5781
    %v5820 = vpack.c.bf16 %v5784, %v5783
    %v5821 = vpack.c.bf16 %v5786, %v5785
    %v5822 = vpack.c.bf16 %v5788, %v5787
    %v5823 = vpack.c.bf16 %v5790, %v5789
    %v5824 = vpack.c.bf16 %v5792, %v5791
    %5825 = vst.msk [vmem:[%s142] sm:$0xff] %vm40, %v5793
    %5826 = vst.msk [vmem:[%s142 + $0x8] sm:$0xff] %vm40, %v5794
    %5827 = vst.msk [vmem:[%s142 + $0x10] sm:$0xff] %vm40, %v5795
    %5828 = vst.msk [vmem:[%s142 + $0x18] sm:$0xff] %vm40, %v5796
    %5829 = vst.msk [vmem:[%s142 + $0x20] sm:$0xff] %vm40, %v5797
    %5830 = vst.msk [vmem:[%s142 + $0x28] sm:$0xff] %vm40, %v5798
    %5831 = vst.msk [vmem:[%s142 + $0x30] sm:$0xff] %vm40, %v5799
    %5832 = vst.msk [vmem:[%s142 + $0x38] sm:$0xff] %vm40, %v5800
    %5833 = vst.msk [vmem:[%s142 + $0x40] sm:$0xff] %vm40, %v5801
    %5834 = vst.msk [vmem:[%s142 + $0x48] sm:$0xff] %vm40, %v5802
    %5835 = vst.msk [vmem:[%s142 + $0x50] sm:$0xff] %vm40, %v5803
    %5836 = vst.msk [vmem:[%s142 + $0x58] sm:$0xff] %vm40, %v5804
    %5837 = vst.msk [vmem:[%s142 + $0x60] sm:$0xff] %vm40, %v5805
    %5838 = vst.msk [vmem:[%s142 + $0x68] sm:$0xff] %vm40, %v5806
    %5839 = vst.msk [vmem:[%s142 + $0x70] sm:$0xff] %vm40, %v5807
    %5840 = vst.msk [vmem:[%s142 + $0x78] sm:$0xff] %vm40, %v5808
    %5841 = vst.msk [vmem:[%s142 + $0x90] sm:$0xff] %vm40, %v5809
    %5842 = vst.msk [vmem:[%s142 + $0x98] sm:$0xff] %vm40, %v5810
    %5843 = vst.msk [vmem:[%s142 + $0xa0] sm:$0xff] %vm40, %v5811
    %5844 = vst.msk [vmem:[%s142 + $0xa8] sm:$0xff] %vm40, %v5812
    %5845 = vst.msk [vmem:[%s142 + $0xb0] sm:$0xff] %vm40, %v5813
    %5846 = vst.msk [vmem:[%s142 + $0xb8] sm:$0xff] %vm40, %v5814
    %5847 = vst.msk [vmem:[%s142 + $0xc0] sm:$0xff] %vm40, %v5815
    %5848 = vst.msk [vmem:[%s142 + $0xc8] sm:$0xff] %vm40, %v5816
    %5849 = vst.msk [vmem:[%s142 + $0xd0] sm:$0xff] %vm40, %v5817
    %5850 = vst.msk [vmem:[%s142 + $0xd8] sm:$0xff] %vm40, %v5818
    %5851 = vst.msk [vmem:[%s142 + $0xe0] sm:$0xff] %vm40, %v5819
    %5852 = vst.msk [vmem:[%s142 + $0xe8] sm:$0xff] %vm40, %v5820
    %5853 = vst.msk [vmem:[%s142 + $0xf0] sm:$0xff] %vm40, %v5821
    %5854 = vst.msk [vmem:[%s142 + $0xf8] sm:$0xff] %vm40, %v5822
    %5855 = vst.msk [vmem:[%s142 + $0x100] sm:$0xff] %vm40, %v5823
    %5856 = vst.msk [vmem:[%s142 + $0x108] sm:$0xff] %vm40, %v5824
    %v5857 = vld [vmem:[#allocation2] sm:$0xff]
    %v5858 = vld [vmem:[#allocation2 + $0x8] sm:$0xff]
    %v5859 = vld [vmem:[#allocation2 + $0x10] sm:$0xff]
    %v5860 = vld [vmem:[#allocation2 + $0x18] sm:$0xff]
    %v5861 = vld [vmem:[#allocation2 + $0x20] sm:$0xff]
    %v5862 = vld [vmem:[#allocation2 + $0x28] sm:$0xff]
    %v5863 = vld [vmem:[#allocation2 + $0x30] sm:$0xff]
    %v5864 = vld [vmem:[#allocation2 + $0x38] sm:$0xff]
    %v5865 = vld [vmem:[#allocation2 + $0x40] sm:$0xff]
    %v5866 = vld [vmem:[#allocation2 + $0x48] sm:$0xff]
    %v5867 = vld [vmem:[#allocation2 + $0x50] sm:$0xff]
    %v5868 = vld [vmem:[#allocation2 + $0x58] sm:$0xff]
    %v5869 = vld [vmem:[#allocation2 + $0x60] sm:$0xff]
    %v5870 = vld [vmem:[#allocation2 + $0x68] sm:$0xff]
    %v5871 = vld [vmem:[#allocation2 + $0x70] sm:$0xff]
    %v5872 = vld [vmem:[#allocation2 + $0x78] sm:$0xff]
    %v5873 = vld [vmem:[#allocation2 + $0x90] sm:$0xff]
    %v5874 = vld [vmem:[#allocation2 + $0x98] sm:$0xff]
    %v5875 = vld [vmem:[#allocation2 + $0xa0] sm:$0xff]
    %v5876 = vld [vmem:[#allocation2 + $0xa8] sm:$0xff]
    %v5877 = vld [vmem:[#allocation2 + $0xb0] sm:$0xff]
    %v5878 = vld [vmem:[#allocation2 + $0xb8] sm:$0xff]
    %v5879 = vld [vmem:[#allocation2 + $0xc0] sm:$0xff]
    %v5880 = vld [vmem:[#allocation2 + $0xc8] sm:$0xff]
    %v5881 = vld [vmem:[#allocation2 + $0xd0] sm:$0xff]
    %v5882 = vld [vmem:[#allocation2 + $0xd8] sm:$0xff]
    %v5883 = vld [vmem:[#allocation2 + $0xe0] sm:$0xff]
    %v5884 = vld [vmem:[#allocation2 + $0xe8] sm:$0xff]
    %v5885 = vld [vmem:[#allocation2 + $0xf0] sm:$0xff]
    %v5886 = vld [vmem:[#allocation2 + $0xf8] sm:$0xff]
    %v5887 = vld [vmem:[#allocation2 + $0x100] sm:$0xff]
    %v5888 = vld [vmem:[#allocation2 + $0x108] sm:$0xff]
    %s5889 = scalar_lea.vmem %s2, 32
    %v5890 = vld [vmem:[%s5889] sm:$0xf]
    %v5891 = vld [vmem:[%s5889 + $0x4] sm:$0xf]
    %v5892 = vld [vmem:[%s5889 + $0x8] sm:$0xf]
    %v5893 = vld [vmem:[%s5889 + $0xc] sm:$0xf]
    %v5894 = vld [vmem:[%s5889 + $0x10] sm:$0xf]
    %v5895 = vld [vmem:[%s5889 + $0x14] sm:$0xf]
    %v5896 = vld [vmem:[%s5889 + $0x18] sm:$0xf]
    %v5897 = vld [vmem:[%s5889 + $0x1c] sm:$0xf]
    %v5898 = vld [vmem:[%s2] sm:$0xf]
    %v5899 = vld [vmem:[%s2 + $0x4] sm:$0xf]
    %v5900 = vld [vmem:[%s2 + $0x8] sm:$0xf]
    %v5901 = vld [vmem:[%s2 + $0xc] sm:$0xf]
    %v5902 = vld [vmem:[%s2 + $0x10] sm:$0xf]
    %v5903 = vld [vmem:[%s2 + $0x14] sm:$0xf]
    %v5904 = vld [vmem:[%s2 + $0x18] sm:$0xf]
    %v5905 = vld [vmem:[%s2 + $0x1c] sm:$0xf]
    %v5914 = vunpack.c.l.b16 %v5898
    %v5915 = vunpack.c.l.b16 %v5899
    %v5916 = vunpack.c.l.b16 %v5900
    %v5917 = vunpack.c.l.b16 %v5901
    %v5918 = vunpack.c.l.b16 %v5902
    %v5919 = vunpack.c.l.b16 %v5903
    %v5920 = vunpack.c.l.b16 %v5904
    %v5921 = vunpack.c.l.b16 %v5905
    %v5922 = vpack.c.b16 %v5915, %v5914
    %v5923 = vpack.c.b16 %v5917, %v5916
    %v5924 = vpack.c.b16 %v5919, %v5918
    %v5925 = vpack.c.b16 %v5921, %v5920
    %v5931 = vsel %vm40, %v5857, 0
    %v5934 = vsel %vm40, %v5858, 0
    %v5937 = vsel %vm40, %v5859, 0
    %v5940 = vsel %vm40, %v5860, 0
    %v5943 = vsel %vm40, %v5861, 0
    %v5946 = vsel %vm40, %v5862, 0
    %v5949 = vsel %vm40, %v5863, 0
    %v5952 = vsel %vm40, %v5864, 0
    %v5955 = vsel %vm40, %v5865, 0
    %v5958 = vsel %vm40, %v5866, 0
    %v5961 = vsel %vm40, %v5867, 0
    %v5964 = vsel %vm40, %v5868, 0
    %v5967 = vsel %vm40, %v5869, 0
    %v5970 = vsel %vm40, %v5870, 0
    %v5973 = vsel %vm40, %v5871, 0
    %v5976 = vsel %vm40, %v5872, 0
    %v5979 = vsel %vm40, %v5873, 0
    %v5982 = vsel %vm40, %v5874, 0
    %v5985 = vsel %vm40, %v5875, 0
    %v5988 = vsel %vm40, %v5876, 0
    %v5991 = vsel %vm40, %v5877, 0
    %v5994 = vsel %vm40, %v5878, 0
    %v5997 = vsel %vm40, %v5879, 0
    %v6000 = vsel %vm40, %v5880, 0
    %v6003 = vsel %vm40, %v5881, 0
    %v6006 = vsel %vm40, %v5882, 0
    %v6009 = vsel %vm40, %v5883, 0
    %v6012 = vsel %vm40, %v5884, 0
    %v6015 = vsel %vm40, %v5885, 0
    %v6018 = vsel %vm40, %v5886, 0
    %v6021 = vsel %vm40, %v5887, 0
    %v6024 = vsel %vm40, %v5888, 0
    %6026 = vmatprep.subr.bf16.mxu0 0
    %6027 = vmatpush1.bf16.msra.mxu0 %v5922
    %6028 = vmatprep.subr.bf16.mxu0 0
    %6029 = vmatpush1.bf16.msra.mxu0 %v5923
    %6030 = vmatprep.subr.bf16.mxu0 0
    %6031 = vmatpush1.bf16.msra.mxu0 %v5924
    %6032 = vmatprep.subr.bf16.mxu0 0
    %6033 = vmatpush1.bf16.msra.mxu0 %v5925
    %6034 = vmatprep.subr.bf16.mxu0 0
    %6035 = vmatpush1.bf16.msra.mxu0 0
    %6036 = vmatprep.subr.bf16.mxu0 0
    %6037 = vmatpush1.bf16.msra.mxu0 0
    %6038 = vmatprep.subr.bf16.mxu0 0
    %6039 = vmatpush1.bf16.msra.mxu0 0
    %6040 = vmatprep.subr.bf16.mxu0 0
    %6041 = vmatpush1.bf16.msra.mxu0 0
    %6042 = vmatprep.subr.bf16.mxu0 0
    %6043 = vmatpush1.bf16.msra.mxu0 0
    %6044 = vmatprep.subr.bf16.mxu0 0
    %6045 = vmatpush1.bf16.msra.mxu0 0
    %6046 = vmatprep.subr.bf16.mxu0 0
    %6047 = vmatpush1.bf16.msra.mxu0 0
    %6048 = vmatprep.subr.bf16.mxu0 0
    %6049 = vmatpush1.bf16.msra.mxu0 0
    %6050 = vmatprep.subr.bf16.mxu0 0
    %6051 = vmatpush1.bf16.msra.mxu0 0
    %6052 = vmatprep.subr.bf16.mxu0 0
    %6053 = vmatpush1.bf16.msra.mxu0 0
    %6054 = vmatprep.subr.bf16.mxu0 0
    %6055 = vmatpush1.bf16.msra.mxu0 0
    %6056 = vmatprep.subr.bf16.mxu0 0
    %6057 = vmatpush1.bf16.msra.mxu0 0
    %6058 = vmatprep.mubr.bf16.mxu0 0
    %6059 = vmatmul.mubr.bf16.gmra.mrb[0].mxu0 %v5931
    %v6060 = vpop.f32.mrb[0].mxu0
    %v6061 = vadd.f32 0.0, %v6060
    %v6062 = vpop.f32.mrb[0].mxu0
    %v6063 = vpop.f32.mrb[0].mxu0
    %v6064 = vadd.f32 0.0, %v6063
    %v6065 = vpop.f32.mrb[0].mxu0
    %6066 = vmatprep.mubr.bf16.mxu0 0
    %6067 = vmatmul.mubr.bf16.gmra.mrb[0].mxu0 %v5934
    %v6068 = vpop.f32.mrb[0].mxu0
    %v6069 = vadd.f32 0.0, %v6068
    %v6070 = vpop.f32.mrb[0].mxu0
    %v6071 = vpop.f32.mrb[0].mxu0
    %v6072 = vadd.f32 0.0, %v6071
    %v6073 = vpop.f32.mrb[0].mxu0
    %6074 = vmatprep.mubr.bf16.mxu0 0
    %6075 = vmatmul.mubr.bf16.gmra.mrb[0].mxu0 %v5937
    %v6076 = vpop.f32.mrb[0].mxu0
    %v6077 = vadd.f32 0.0, %v6076
    %v6078 = vpop.f32.mrb[0].mxu0
    %v6079 = vpop.f32.mrb[0].mxu0
    %v6080 = vadd.f32 0.0, %v6079
    %v6081 = vpop.f32.mrb[0].mxu0
    %6082 = vmatprep.mubr.bf16.mxu0 0
    %6083 = vmatmul.mubr.bf16.gmra.mrb[0].mxu0 %v5940
    %v6084 = vpop.f32.mrb[0].mxu0
    %v6085 = vadd.f32 0.0, %v6084
    %v6086 = vpop.f32.mrb[0].mxu0
    %v6087 = vpop.f32.mrb[0].mxu0
    %v6088 = vadd.f32 0.0, %v6087
    %v6089 = vpop.f32.mrb[0].mxu0
    %6090 = vmatprep.mubr.bf16.mxu0 0
    %6091 = vmatmul.mubr.bf16.gmra.mrb[0].mxu0 %v5943
    %v6092 = vpop.f32.mrb[0].mxu0
    %v6093 = vadd.f32 0.0, %v6092
    %v6094 = vpop.f32.mrb[0].mxu0
    %v6095 = vpop.f32.mrb[0].mxu0
    %v6096 = vadd.f32 0.0, %v6095
    %v6097 = vpop.f32.mrb[0].mxu0
    %6098 = vmatprep.mubr.bf16.mxu0 0
    %6099 = vmatmul.mubr.bf16.gmra.mrb[0].mxu0 %v5946
    %v6100 = vpop.f32.mrb[0].mxu0
    %v6101 = vadd.f32 0.0, %v6100
    %v6102 = vpop.f32.mrb[0].mxu0
    %v6103 = vpop.f32.mrb[0].mxu0
    %v6104 = vadd.f32 0.0, %v6103
    %v6105 = vpop.f32.mrb[0].mxu0
    %6106 = vmatprep.mubr.bf16.mxu0 0
    %6107 = vmatmul.mubr.bf16.gmra.mrb[0].mxu0 %v5949
    %v6108 = vpop.f32.mrb[0].mxu0
    %v6109 = vadd.f32 0.0, %v6108
    %v6110 = vpop.f32.mrb[0].mxu0
    %v6111 = vpop.f32.mrb[0].mxu0
    %v6112 = vadd.f32 0.0, %v6111
    %v6113 = vpop.f32.mrb[0].mxu0
    %6114 = vmatprep.mubr.bf16.mxu0 0
    %6115 = vmatmul.mubr.bf16.gmra.mrb[0].mxu0 %v5952
    %v6116 = vpop.f32.mrb[0].mxu0
    %v6117 = vadd.f32 0.0, %v6116
    %v6118 = vpop.f32.mrb[0].mxu0
    %v6119 = vpop.f32.mrb[0].mxu0
    %v6120 = vadd.f32 0.0, %v6119
    %v6121 = vpop.f32.mrb[0].mxu0
    %6122 = vmatprep.mubr.bf16.mxu0 0
    %6123 = vmatmul.mubr.bf16.gmra.mrb[0].mxu0 %v5955
    %v6124 = vpop.f32.mrb[0].mxu0
    %v6125 = vadd.f32 0.0, %v6124
    %v6126 = vpop.f32.mrb[0].mxu0
    %v6127 = vpop.f32.mrb[0].mxu0
    %v6128 = vadd.f32 0.0, %v6127
    %v6129 = vpop.f32.mrb[0].mxu0
    %6130 = vmatprep.mubr.bf16.mxu0 0
    %6131 = vmatmul.mubr.bf16.gmra.mrb[0].mxu0 %v5958
    %v6132 = vpop.f32.mrb[0].mxu0
    %v6133 = vadd.f32 0.0, %v6132
    %v6134 = vpop.f32.mrb[0].mxu0
    %v6135 = vpop.f32.mrb[0].mxu0
    %v6136 = vadd.f32 0.0, %v6135
    %v6137 = vpop.f32.mrb[0].mxu0
    %6138 = vmatprep.mubr.bf16.mxu0 0
    %6139 = vmatmul.mubr.bf16.gmra.mrb[0].mxu0 %v5961
    %v6140 = vpop.f32.mrb[0].mxu0
    %v6141 = vadd.f32 0.0, %v6140
    %v6142 = vpop.f32.mrb[0].mxu0
    %v6143 = vpop.f32.mrb[0].mxu0
    %v6144 = vadd.f32 0.0, %v6143
    %v6145 = vpop.f32.mrb[0].mxu0
    %6146 = vmatprep.mubr.bf16.mxu0 0
    %6147 = vmatmul.mubr.bf16.gmra.mrb[0].mxu0 %v5964
    %v6148 = vpop.f32.mrb[0].mxu0
    %v6149 = vadd.f32 0.0, %v6148
    %v6150 = vpop.f32.mrb[0].mxu0
    %v6151 = vpop.f32.mrb[0].mxu0
    %v6152 = vadd.f32 0.0, %v6151
    %v6153 = vpop.f32.mrb[0].mxu0
    %6154 = vmatprep.mubr.bf16.mxu0 0
    %6155 = vmatmul.mubr.bf16.gmra.mrb[0].mxu0 %v5967
    %v6156 = vpop.f32.mrb[0].mxu0
    %v6157 = vadd.f32 0.0, %v6156
    %v6158 = vpop.f32.mrb[0].mxu0
    %v6159 = vpop.f32.mrb[0].mxu0
    %v6160 = vadd.f32 0.0, %v6159
    %v6161 = vpop.f32.mrb[0].mxu0
    %6162 = vmatprep.mubr.bf16.mxu0 0
    %6163 = vmatmul.mubr.bf16.gmra.mrb[0].mxu0 %v5970
    %v6164 = vpop.f32.mrb[0].mxu0
    %v6165 = vadd.f32 0.0, %v6164
    %v6166 = vpop.f32.mrb[0].mxu0
    %v6167 = vpop.f32.mrb[0].mxu0
    %v6168 = vadd.f32 0.0, %v6167
    %v6169 = vpop.f32.mrb[0].mxu0
    %6170 = vmatprep.mubr.bf16.mxu0 0
    %6171 = vmatmul.mubr.bf16.gmra.mrb[0].mxu0 %v5973
    %v6172 = vpop.f32.mrb[0].mxu0
    %v6173 = vadd.f32 0.0, %v6172
    %v6174 = vpop.f32.mrb[0].mxu0
    %v6175 = vpop.f32.mrb[0].mxu0
    %v6176 = vadd.f32 0.0, %v6175
    %v6177 = vpop.f32.mrb[0].mxu0
    %6178 = vmatprep.mubr.bf16.mxu0 0
    %6179 = vmatmul.mubr.bf16.gmra.mrb[0].mxu0 %v5976
    %v6180 = vpop.f32.mrb[0].mxu0
    %v6181 = vadd.f32 0.0, %v6180
    %v6182 = vpop.f32.mrb[0].mxu0
    %v6183 = vpop.f32.mrb[0].mxu0
    %v6184 = vadd.f32 0.0, %v6183
    %v6185 = vpop.f32.mrb[0].mxu0
    %6186 = vmatprep.mubr.bf16.mxu0 0
    %6187 = vmatmul.mubr.bf16.gmra.mrb[0].mxu0 %v5979
    %v6188 = vpop.f32.mrb[0].mxu0
    %v6189 = vadd.f32 0.0, %v6188
    %v6190 = vpop.f32.mrb[0].mxu0
    %v6191 = vpop.f32.mrb[0].mxu0
    %v6192 = vadd.f32 0.0, %v6191
    %v6193 = vpop.f32.mrb[0].mxu0
    %6194 = vmatprep.mubr.bf16.mxu0 0
    %6195 = vmatmul.mubr.bf16.gmra.mrb[0].mxu0 %v5982
    %v6196 = vpop.f32.mrb[0].mxu0
    %v6197 = vadd.f32 0.0, %v6196
    %v6198 = vpop.f32.mrb[0].mxu0
    %v6199 = vpop.f32.mrb[0].mxu0
    %v6200 = vadd.f32 0.0, %v6199
    %v6201 = vpop.f32.mrb[0].mxu0
    %6202 = vmatprep.mubr.bf16.mxu0 0
    %6203 = vmatmul.mubr.bf16.gmra.mrb[0].mxu0 %v5985
    %v6204 = vpop.f32.mrb[0].mxu0
    %v6205 = vadd.f32 0.0, %v6204
    %v6206 = vpop.f32.mrb[0].mxu0
    %v6207 = vpop.f32.mrb[0].mxu0
    %v6208 = vadd.f32 0.0, %v6207
    %v6209 = vpop.f32.mrb[0].mxu0
    %6210 = vmatprep.mubr.bf16.mxu0 0
    %6211 = vmatmul.mubr.bf16.gmra.mrb[0].mxu0 %v5988
    %v6212 = vpop.f32.mrb[0].mxu0
    %v6213 = vadd.f32 0.0, %v6212
    %v6214 = vpop.f32.mrb[0].mxu0
    %v6215 = vpop.f32.mrb[0].mxu0
    %v6216 = vadd.f32 0.0, %v6215
    %v6217 = vpop.f32.mrb[0].mxu0
    %6218 = vmatprep.mubr.bf16.mxu0 0
    %6219 = vmatmul.mubr.bf16.gmra.mrb[0].mxu0 %v5991
    %v6220 = vpop.f32.mrb[0].mxu0
    %v6221 = vadd.f32 0.0, %v6220
    %v6222 = vpop.f32.mrb[0].mxu0
    %v6223 = vpop.f32.mrb[0].mxu0
    %v6224 = vadd.f32 0.0, %v6223
    %v6225 = vpop.f32.mrb[0].mxu0
    %6226 = vmatprep.mubr.bf16.mxu0 0
    %6227 = vmatmul.mubr.bf16.gmra.mrb[0].mxu0 %v5994
    %v6228 = vpop.f32.mrb[0].mxu0
    %v6229 = vadd.f32 0.0, %v6228
    %v6230 = vpop.f32.mrb[0].mxu0
    %v6231 = vpop.f32.mrb[0].mxu0
    %v6232 = vadd.f32 0.0, %v6231
    %v6233 = vpop.f32.mrb[0].mxu0
    %6234 = vmatprep.mubr.bf16.mxu0 0
    %6235 = vmatmul.mubr.bf16.gmra.mrb[0].mxu0 %v5997
    %v6236 = vpop.f32.mrb[0].mxu0
    %v6237 = vadd.f32 0.0, %v6236
    %v6238 = vpop.f32.mrb[0].mxu0
    %v6239 = vpop.f32.mrb[0].mxu0
    %v6240 = vadd.f32 0.0, %v6239
    %v6241 = vpop.f32.mrb[0].mxu0
    %6242 = vmatprep.mubr.bf16.mxu0 0
    %6243 = vmatmul.mubr.bf16.gmra.mrb[0].mxu0 %v6000
    %v6244 = vpop.f32.mrb[0].mxu0
    %v6245 = vadd.f32 0.0, %v6244
    %v6246 = vpop.f32.mrb[0].mxu0
    %v6247 = vpop.f32.mrb[0].mxu0
    %v6248 = vadd.f32 0.0, %v6247
    %v6249 = vpop.f32.mrb[0].mxu0
    %6250 = vmatprep.mubr.bf16.mxu0 0
    %6251 = vmatmul.mubr.bf16.gmra.mrb[0].mxu0 %v6003
    %v6252 = vpop.f32.mrb[0].mxu0
    %v6253 = vadd.f32 0.0, %v6252
    %v6254 = vpop.f32.mrb[0].mxu0
    %v6255 = vpop.f32.mrb[0].mxu0
    %v6256 = vadd.f32 0.0, %v6255
    %v6257 = vpop.f32.mrb[0].mxu0
    %6258 = vmatprep.mubr.bf16.mxu0 0
    %6259 = vmatmul.mubr.bf16.gmra.mrb[0].mxu0 %v6006
    %v6260 = vpop.f32.mrb[0].mxu0
    %v6261 = vadd.f32 0.0, %v6260
    %v6262 = vpop.f32.mrb[0].mxu0
    %v6263 = vpop.f32.mrb[0].mxu0
    %v6264 = vadd.f32 0.0, %v6263
    %v6265 = vpop.f32.mrb[0].mxu0
    %6266 = vmatprep.mubr.bf16.mxu0 0
    %6267 = vmatmul.mubr.bf16.gmra.mrb[0].mxu0 %v6009
    %v6268 = vpop.f32.mrb[0].mxu0
    %v6269 = vadd.f32 0.0, %v6268
    %v6270 = vpop.f32.mrb[0].mxu0
    %v6271 = vpop.f32.mrb[0].mxu0
    %v6272 = vadd.f32 0.0, %v6271
    %v6273 = vpop.f32.mrb[0].mxu0
    %6274 = vmatprep.mubr.bf16.mxu0 0
    %6275 = vmatmul.mubr.bf16.gmra.mrb[0].mxu0 %v6012
    %v6276 = vpop.f32.mrb[0].mxu0
    %v6277 = vadd.f32 0.0, %v6276
    %v6278 = vpop.f32.mrb[0].mxu0
    %v6279 = vpop.f32.mrb[0].mxu0
    %v6280 = vadd.f32 0.0, %v6279
    %v6281 = vpop.f32.mrb[0].mxu0
    %6282 = vmatprep.mubr.bf16.mxu0 0
    %6283 = vmatmul.mubr.bf16.gmra.mrb[0].mxu0 %v6015
    %v6284 = vpop.f32.mrb[0].mxu0
    %v6285 = vadd.f32 0.0, %v6284
    %v6286 = vpop.f32.mrb[0].mxu0
    %v6287 = vpop.f32.mrb[0].mxu0
    %v6288 = vadd.f32 0.0, %v6287
    %v6289 = vpop.f32.mrb[0].mxu0
    %6290 = vmatprep.mubr.bf16.mxu0 0
    %6291 = vmatmul.mubr.bf16.gmra.mrb[0].mxu0 %v6018
    %v6292 = vpop.f32.mrb[0].mxu0
    %v6293 = vadd.f32 0.0, %v6292
    %v6294 = vpop.f32.mrb[0].mxu0
    %v6295 = vpop.f32.mrb[0].mxu0
    %v6296 = vadd.f32 0.0, %v6295
    %v6297 = vpop.f32.mrb[0].mxu0
    %6298 = vmatprep.mubr.bf16.mxu0 0
    %6299 = vmatmul.mubr.bf16.gmra.mrb[0].mxu0 %v6021
    %v6300 = vpop.f32.mrb[0].mxu0
    %v6301 = vadd.f32 0.0, %v6300
    %v6302 = vpop.f32.mrb[0].mxu0
    %v6303 = vpop.f32.mrb[0].mxu0
    %v6304 = vadd.f32 0.0, %v6303
    %v6305 = vpop.f32.mrb[0].mxu0
    %6306 = vmatprep.mubr.bf16.mxu0 0
    %6307 = vmatmul.mubr.bf16.gmra.mrb[0].mxu0 %v6024
    %v6308 = vpop.f32.mrb[0].mxu0
    %v6309 = vadd.f32 0.0, %v6308
    %v6310 = vpop.f32.mrb[0].mxu0
    %v6311 = vpop.f32.mrb[0].mxu0
    %v6312 = vadd.f32 0.0, %v6311
    %v6313 = vpop.f32.mrb[0].mxu0
    %6314 = vdwg.mxu0
    %v6315 = vrot.slane %v6061, 7
    %v6316 = vrot.slane %v6064, 7
    %v6317 = vrot.slane %v6069, 7
    %v6318 = vrot.slane %v6072, 7
    %v6319 = vrot.slane %v6077, 7
    %v6320 = vrot.slane %v6080, 7
    %v6321 = vrot.slane %v6085, 7
    %v6322 = vrot.slane %v6088, 7
    %v6323 = vrot.slane %v6093, 7
    %v6324 = vrot.slane %v6096, 7
    %v6325 = vrot.slane %v6101, 7
    %v6326 = vrot.slane %v6104, 7
    %v6327 = vrot.slane %v6109, 7
    %v6328 = vrot.slane %v6112, 7
    %v6329 = vrot.slane %v6117, 7
    %v6330 = vrot.slane %v6120, 7
    %v6331 = vrot.slane %v6125, 7
    %v6332 = vrot.slane %v6128, 7
    %v6333 = vrot.slane %v6133, 7
    %v6334 = vrot.slane %v6136, 7
    %v6335 = vrot.slane %v6141, 7
    %v6336 = vrot.slane %v6144, 7
    %v6337 = vrot.slane %v6149, 7
    %v6338 = vrot.slane %v6152, 7
    %v6339 = vrot.slane %v6157, 7
    %v6340 = vrot.slane %v6160, 7
    %v6341 = vrot.slane %v6165, 7
    %v6342 = vrot.slane %v6168, 7
    %v6343 = vrot.slane %v6173, 7
    %v6344 = vrot.slane %v6176, 7
    %v6345 = vrot.slane %v6181, 7
    %v6346 = vrot.slane %v6184, 7
    %v6347 = vrot.slane %v6189, 7
    %v6348 = vrot.slane %v6192, 7
    %v6349 = vrot.slane %v6197, 7
    %v6350 = vrot.slane %v6200, 7
    %v6351 = vrot.slane %v6205, 7
    %v6352 = vrot.slane %v6208, 7
    %v6353 = vrot.slane %v6213, 7
    %v6354 = vrot.slane %v6216, 7
    %v6355 = vrot.slane %v6221, 7
    %v6356 = vrot.slane %v6224, 7
    %v6357 = vrot.slane %v6229, 7
    %v6358 = vrot.slane %v6232, 7
    %v6359 = vrot.slane %v6237, 7
    %v6360 = vrot.slane %v6240, 7
    %v6361 = vrot.slane %v6245, 7
    %v6362 = vrot.slane %v6248, 7
    %v6363 = vrot.slane %v6253, 7
    %v6364 = vrot.slane %v6256, 7
    %v6365 = vrot.slane %v6261, 7
    %v6366 = vrot.slane %v6264, 7
    %v6367 = vrot.slane %v6269, 7
    %v6368 = vrot.slane %v6272, 7
    %v6369 = vrot.slane %v6277, 7
    %v6370 = vrot.slane %v6280, 7
    %v6371 = vrot.slane %v6285, 7
    %v6372 = vrot.slane %v6288, 7
    %v6373 = vrot.slane %v6293, 7
    %v6374 = vrot.slane %v6296, 7
    %v6375 = vrot.slane %v6301, 7
    %v6376 = vrot.slane %v6304, 7
    %v6377 = vrot.slane %v6309, 7
    %v6378 = vrot.slane %v6312, 7
    %v6379 = vsel %vm697, %v6377, %v6378
    %v6380 = vsel %vm697, %v6376, %v6377
    %v6381 = vsel %vm697, %v6375, %v6376
    %v6382 = vsel %vm697, %v6374, %v6375
    %v6383 = vsel %vm697, %v6373, %v6374
    %v6384 = vsel %vm697, %v6372, %v6373
    %v6385 = vsel %vm697, %v6371, %v6372
    %v6386 = vsel %vm697, %v6370, %v6371
    %v6387 = vsel %vm697, %v6369, %v6370
    %v6388 = vsel %vm697, %v6368, %v6369
    %v6389 = vsel %vm697, %v6367, %v6368
    %v6390 = vsel %vm697, %v6366, %v6367
    %v6391 = vsel %vm697, %v6365, %v6366
    %v6392 = vsel %vm697, %v6364, %v6365
    %v6393 = vsel %vm697, %v6363, %v6364
    %v6394 = vsel %vm697, %v6362, %v6363
    %v6395 = vsel %vm697, %v6361, %v6362
    %v6396 = vsel %vm697, %v6360, %v6361
    %v6397 = vsel %vm697, %v6359, %v6360
    %v6398 = vsel %vm697, %v6358, %v6359
    %v6399 = vsel %vm697, %v6357, %v6358
    %v6400 = vsel %vm697, %v6356, %v6357
    %v6401 = vsel %vm697, %v6355, %v6356
    %v6402 = vsel %vm697, %v6354, %v6355
    %v6403 = vsel %vm697, %v6353, %v6354
    %v6404 = vsel %vm697, %v6352, %v6353
    %v6405 = vsel %vm697, %v6351, %v6352
    %v6406 = vsel %vm697, %v6350, %v6351
    %v6407 = vsel %vm697, %v6349, %v6350
    %v6408 = vsel %vm697, %v6348, %v6349
    %v6409 = vsel %vm697, %v6347, %v6348
    %v6410 = vsel %vm697, %v6346, %v6347
    %v6411 = vsel %vm697, %v6345, %v6346
    %v6412 = vsel %vm697, %v6344, %v6345
    %v6413 = vsel %vm697, %v6343, %v6344
    %v6414 = vsel %vm697, %v6342, %v6343
    %v6415 = vsel %vm697, %v6341, %v6342
    %v6416 = vsel %vm697, %v6340, %v6341
    %v6417 = vsel %vm697, %v6339, %v6340
    %v6418 = vsel %vm697, %v6338, %v6339
    %v6419 = vsel %vm697, %v6337, %v6338
    %v6420 = vsel %vm697, %v6336, %v6337
    %v6421 = vsel %vm697, %v6335, %v6336
    %v6422 = vsel %vm697, %v6334, %v6335
    %v6423 = vsel %vm697, %v6333, %v6334
    %v6424 = vsel %vm697, %v6332, %v6333
    %v6425 = vsel %vm697, %v6331, %v6332
    %v6426 = vsel %vm697, %v6330, %v6331
    %v6427 = vsel %vm697, %v6329, %v6330
    %v6428 = vsel %vm697, %v6328, %v6329
    %v6429 = vsel %vm697, %v6327, %v6328
    %v6430 = vsel %vm697, %v6326, %v6327
    %v6431 = vsel %vm697, %v6325, %v6326
    %v6432 = vsel %vm697, %v6324, %v6325
    %v6433 = vsel %vm697, %v6323, %v6324
    %v6434 = vsel %vm697, %v6322, %v6323
    %v6435 = vsel %vm697, %v6321, %v6322
    %v6436 = vsel %vm697, %v6320, %v6321
    %v6437 = vsel %vm697, %v6319, %v6320
    %v6438 = vsel %vm697, %v6318, %v6319
    %v6439 = vsel %vm697, %v6317, %v6318
    %v6440 = vsel %vm697, %v6316, %v6317
    %v6441 = vsel %vm697, %v6315, %v6316
    %v6442 = vsel %vm697, %v6378, %v6315
    %v6443 = vsel %vm36, %v6442, 0.0
    %v6444 = vsel %vm37, %v6441, 0.0
    %v6445 = vsel %vm36, %v6440, 0.0
    %v6446 = vsel %vm37, %v6439, 0.0
    %v6447 = vsel %vm36, %v6438, 0.0
    %v6448 = vsel %vm37, %v6437, 0.0
    %v6449 = vsel %vm36, %v6436, 0.0
    %v6450 = vsel %vm37, %v6435, 0.0
    %v6451 = vsel %vm36, %v6434, 0.0
    %v6452 = vsel %vm37, %v6433, 0.0
    %v6453 = vsel %vm36, %v6432, 0.0
    %v6454 = vsel %vm37, %v6431, 0.0
    %v6455 = vsel %vm36, %v6430, 0.0
    %v6456 = vsel %vm37, %v6429, 0.0
    %v6457 = vsel %vm36, %v6428, 0.0
    %v6458 = vsel %vm37, %v6427, 0.0
    %v6459 = vsel %vm36, %v6426, 0.0
    %v6460 = vsel %vm37, %v6425, 0.0
    %v6461 = vsel %vm36, %v6424, 0.0
    %v6462 = vsel %vm37, %v6423, 0.0
    %v6463 = vsel %vm36, %v6422, 0.0
    %v6464 = vsel %vm37, %v6421, 0.0
    %v6465 = vsel %vm36, %v6420, 0.0
    %v6466 = vsel %vm37, %v6419, 0.0
    %v6467 = vsel %vm36, %v6418, 0.0
    %v6468 = vsel %vm37, %v6417, 0.0
    %v6469 = vsel %vm36, %v6416, 0.0
    %v6470 = vsel %vm37, %v6415, 0.0
    %v6471 = vsel %vm36, %v6414, 0.0
    %v6472 = vsel %vm37, %v6413, 0.0
    %v6473 = vsel %vm36, %v6412, 0.0
    %v6474 = vsel %vm37, %v6411, 0.0
    %v6475 = vsel %vm36, %v6410, 0.0
    %v6476 = vsel %vm37, %v6409, 0.0
    %v6477 = vsel %vm36, %v6408, 0.0
    %v6478 = vsel %vm37, %v6407, 0.0
    %v6479 = vsel %vm36, %v6406, 0.0
    %v6480 = vsel %vm37, %v6405, 0.0
    %v6481 = vsel %vm36, %v6404, 0.0
    %v6482 = vsel %vm37, %v6403, 0.0
    %v6483 = vsel %vm36, %v6402, 0.0
    %v6484 = vsel %vm37, %v6401, 0.0
    %v6485 = vsel %vm36, %v6400, 0.0
    %v6486 = vsel %vm37, %v6399, 0.0
    %v6487 = vsel %vm36, %v6398, 0.0
    %v6488 = vsel %vm37, %v6397, 0.0
    %v6489 = vsel %vm36, %v6396, 0.0
    %v6490 = vsel %vm37, %v6395, 0.0
    %v6491 = vsel %vm36, %v6394, 0.0
    %v6492 = vsel %vm37, %v6393, 0.0
    %v6493 = vsel %vm36, %v6392, 0.0
    %v6494 = vsel %vm37, %v6391, 0.0
    %v6495 = vsel %vm36, %v6390, 0.0
    %v6496 = vsel %vm37, %v6389, 0.0
    %v6497 = vsel %vm36, %v6388, 0.0
    %v6498 = vsel %vm37, %v6387, 0.0
    %v6499 = vsel %vm36, %v6386, 0.0
    %v6500 = vsel %vm37, %v6385, 0.0
    %v6501 = vsel %vm36, %v6384, 0.0
    %v6502 = vsel %vm37, %v6383, 0.0
    %v6503 = vsel %vm36, %v6382, 0.0
    %v6504 = vsel %vm37, %v6381, 0.0
    %v6505 = vsel %vm36, %v6380, 0.0
    %v6506 = vsel %vm37, %v6379, 0.0
    %v6515 = vunpack.c.l.b16 %v5890
    %v6516 = vunpack.c.l.b16 %v5891
    %v6517 = vunpack.c.l.b16 %v5892
    %v6518 = vunpack.c.l.b16 %v5893
    %v6519 = vunpack.c.l.b16 %v5894
    %v6520 = vunpack.c.l.b16 %v5895
    %v6521 = vunpack.c.l.b16 %v5896
    %v6522 = vunpack.c.l.b16 %v5897
    %v6523 = vpack.c.b16 %v6516, %v6515
    %v6524 = vpack.c.b16 %v6518, %v6517
    %v6525 = vpack.c.b16 %v6520, %v6519
    %v6526 = vpack.c.b16 %v6522, %v6521
    %6531 = vmatprep.subr.bf16.mxu0 0
    %6532 = vmatpush1.bf16.msra.mxu0 %v6523
    %6533 = vmatprep.subr.bf16.mxu0 0
    %6534 = vmatpush1.bf16.msra.mxu0 %v6524
    %6535 = vmatprep.subr.bf16.mxu0 0
    %6536 = vmatpush1.bf16.msra.mxu0 %v6525
    %6537 = vmatprep.subr.bf16.mxu0 0
    %6538 = vmatpush1.bf16.msra.mxu0 %v6526
    %6539 = vmatprep.subr.bf16.mxu0 0
    %6540 = vmatpush1.bf16.msra.mxu0 0
    %6541 = vmatprep.subr.bf16.mxu0 0
    %6542 = vmatpush1.bf16.msra.mxu0 0
    %6543 = vmatprep.subr.bf16.mxu0 0
    %6544 = vmatpush1.bf16.msra.mxu0 0
    %6545 = vmatprep.subr.bf16.mxu0 0
    %6546 = vmatpush1.bf16.msra.mxu0 0
    %6547 = vmatprep.subr.bf16.mxu0 0
    %6548 = vmatpush1.bf16.msra.mxu0 0
    %6549 = vmatprep.subr.bf16.mxu0 0
    %6550 = vmatpush1.bf16.msra.mxu0 0
    %6551 = vmatprep.subr.bf16.mxu0 0
    %6552 = vmatpush1.bf16.msra.mxu0 0
    %6553 = vmatprep.subr.bf16.mxu0 0
    %6554 = vmatpush1.bf16.msra.mxu0 0
    %6555 = vmatprep.subr.bf16.mxu0 0
    %6556 = vmatpush1.bf16.msra.mxu0 0
    %6557 = vmatprep.subr.bf16.mxu0 0
    %6558 = vmatpush1.bf16.msra.mxu0 0
    %6559 = vmatprep.subr.bf16.mxu0 0
    %6560 = vmatpush1.bf16.msra.mxu0 0
    %6561 = vmatprep.subr.bf16.mxu0 0
    %6562 = vmatpush1.bf16.msra.mxu0 0
    %6563 = vmatprep.mubr.bf16.mxu0 0
    %6564 = vmatmul.mubr.bf16.gmra.mrb[0].mxu0 %v5931
    %v6565 = vpop.f32.mrb[0].mxu0
    %v6566 = vadd.f32 %v6443, %v6565
    %v6567 = vpop.f32.mrb[0].mxu0
    %v6568 = vpop.f32.mrb[0].mxu0
    %v6569 = vadd.f32 %v6444, %v6568
    %v6570 = vpop.f32.mrb[0].mxu0
    %6571 = vmatprep.mubr.bf16.mxu0 0
    %6572 = vmatmul.mubr.bf16.gmra.mrb[0].mxu0 %v5934
    %v6573 = vpop.f32.mrb[0].mxu0
    %v6574 = vadd.f32 %v6445, %v6573
    %v6575 = vpop.f32.mrb[0].mxu0
    %v6576 = vpop.f32.mrb[0].mxu0
    %v6577 = vadd.f32 %v6446, %v6576
    %v6578 = vpop.f32.mrb[0].mxu0
    %6579 = vmatprep.mubr.bf16.mxu0 0
    %6580 = vmatmul.mubr.bf16.gmra.mrb[0].mxu0 %v5937
    %v6581 = vpop.f32.mrb[0].mxu0
    %v6582 = vadd.f32 %v6447, %v6581
    %v6583 = vpop.f32.mrb[0].mxu0
    %v6584 = vpop.f32.mrb[0].mxu0
    %v6585 = vadd.f32 %v6448, %v6584
    %v6586 = vpop.f32.mrb[0].mxu0
    %6587 = vmatprep.mubr.bf16.mxu0 0
    %6588 = vmatmul.mubr.bf16.gmra.mrb[0].mxu0 %v5940
    %v6589 = vpop.f32.mrb[0].mxu0
    %v6590 = vadd.f32 %v6449, %v6589
    %v6591 = vpop.f32.mrb[0].mxu0
    %v6592 = vpop.f32.mrb[0].mxu0
    %v6593 = vadd.f32 %v6450, %v6592
    %v6594 = vpop.f32.mrb[0].mxu0
    %6595 = vmatprep.mubr.bf16.mxu0 0
    %6596 = vmatmul.mubr.bf16.gmra.mrb[0].mxu0 %v5943
    %v6597 = vpop.f32.mrb[0].mxu0
    %v6598 = vadd.f32 %v6451, %v6597
    %v6599 = vpop.f32.mrb[0].mxu0
    %v6600 = vpop.f32.mrb[0].mxu0
    %v6601 = vadd.f32 %v6452, %v6600
    %v6602 = vpop.f32.mrb[0].mxu0
    %6603 = vmatprep.mubr.bf16.mxu0 0
    %6604 = vmatmul.mubr.bf16.gmra.mrb[0].mxu0 %v5946
    %v6605 = vpop.f32.mrb[0].mxu0
    %v6606 = vadd.f32 %v6453, %v6605
    %v6607 = vpop.f32.mrb[0].mxu0
    %v6608 = vpop.f32.mrb[0].mxu0
    %v6609 = vadd.f32 %v6454, %v6608
    %v6610 = vpop.f32.mrb[0].mxu0
    %6611 = vmatprep.mubr.bf16.mxu0 0
    %6612 = vmatmul.mubr.bf16.gmra.mrb[0].mxu0 %v5949
    %v6613 = vpop.f32.mrb[0].mxu0
    %v6614 = vadd.f32 %v6455, %v6613
    %v6615 = vpop.f32.mrb[0].mxu0
    %v6616 = vpop.f32.mrb[0].mxu0
    %v6617 = vadd.f32 %v6456, %v6616
    %v6618 = vpop.f32.mrb[0].mxu0
    %6619 = vmatprep.mubr.bf16.mxu0 0
    %6620 = vmatmul.mubr.bf16.gmra.mrb[0].mxu0 %v5952
    %v6621 = vpop.f32.mrb[0].mxu0
    %v6622 = vadd.f32 %v6457, %v6621
    %v6623 = vpop.f32.mrb[0].mxu0
    %v6624 = vpop.f32.mrb[0].mxu0
    %v6625 = vadd.f32 %v6458, %v6624
    %v6626 = vpop.f32.mrb[0].mxu0
    %6627 = vmatprep.mubr.bf16.mxu0 0
    %6628 = vmatmul.mubr.bf16.gmra.mrb[0].mxu0 %v5955
    %v6629 = vpop.f32.mrb[0].mxu0
    %v6630 = vadd.f32 %v6459, %v6629
    %v6631 = vpop.f32.mrb[0].mxu0
    %v6632 = vpop.f32.mrb[0].mxu0
    %v6633 = vadd.f32 %v6460, %v6632
    %v6634 = vpop.f32.mrb[0].mxu0
    %6635 = vmatprep.mubr.bf16.mxu0 0
    %6636 = vmatmul.mubr.bf16.gmra.mrb[0].mxu0 %v5958
    %v6637 = vpop.f32.mrb[0].mxu0
    %v6638 = vadd.f32 %v6461, %v6637
    %v6639 = vpop.f32.mrb[0].mxu0
    %v6640 = vpop.f32.mrb[0].mxu0
    %v6641 = vadd.f32 %v6462, %v6640
    %v6642 = vpop.f32.mrb[0].mxu0
    %6643 = vmatprep.mubr.bf16.mxu0 0
    %6644 = vmatmul.mubr.bf16.gmra.mrb[0].mxu0 %v5961
    %v6645 = vpop.f32.mrb[0].mxu0
    %v6646 = vadd.f32 %v6463, %v6645
    %v6647 = vpop.f32.mrb[0].mxu0
    %v6648 = vpop.f32.mrb[0].mxu0
    %v6649 = vadd.f32 %v6464, %v6648
    %v6650 = vpop.f32.mrb[0].mxu0
    %6651 = vmatprep.mubr.bf16.mxu0 0
    %6652 = vmatmul.mubr.bf16.gmra.mrb[0].mxu0 %v5964
    %v6653 = vpop.f32.mrb[0].mxu0
    %v6654 = vadd.f32 %v6465, %v6653
    %v6655 = vpop.f32.mrb[0].mxu0
    %v6656 = vpop.f32.mrb[0].mxu0
    %v6657 = vadd.f32 %v6466, %v6656
    %v6658 = vpop.f32.mrb[0].mxu0
    %6659 = vmatprep.mubr.bf16.mxu0 0
    %6660 = vmatmul.mubr.bf16.gmra.mrb[0].mxu0 %v5967
    %v6661 = vpop.f32.mrb[0].mxu0
    %v6662 = vadd.f32 %v6467, %v6661
    %v6663 = vpop.f32.mrb[0].mxu0
    %v6664 = vpop.f32.mrb[0].mxu0
    %v6665 = vadd.f32 %v6468, %v6664
    %v6666 = vpop.f32.mrb[0].mxu0
    %6667 = vmatprep.mubr.bf16.mxu0 0
    %6668 = vmatmul.mubr.bf16.gmra.mrb[0].mxu0 %v5970
    %v6669 = vpop.f32.mrb[0].mxu0
    %v6670 = vadd.f32 %v6469, %v6669
    %v6671 = vpop.f32.mrb[0].mxu0
    %v6672 = vpop.f32.mrb[0].mxu0
    %v6673 = vadd.f32 %v6470, %v6672
    %v6674 = vpop.f32.mrb[0].mxu0
    %6675 = vmatprep.mubr.bf16.mxu0 0
    %6676 = vmatmul.mubr.bf16.gmra.mrb[0].mxu0 %v5973
    %v6677 = vpop.f32.mrb[0].mxu0
    %v6678 = vadd.f32 %v6471, %v6677
    %v6679 = vpop.f32.mrb[0].mxu0
    %v6680 = vpop.f32.mrb[0].mxu0
    %v6681 = vadd.f32 %v6472, %v6680
    %v6682 = vpop.f32.mrb[0].mxu0
    %6683 = vmatprep.mubr.bf16.mxu0 0
    %6684 = vmatmul.mubr.bf16.gmra.mrb[0].mxu0 %v5976
    %v6685 = vpop.f32.mrb[0].mxu0
    %v6686 = vadd.f32 %v6473, %v6685
    %v6687 = vpop.f32.mrb[0].mxu0
    %v6688 = vpop.f32.mrb[0].mxu0
    %v6689 = vadd.f32 %v6474, %v6688
    %v6690 = vpop.f32.mrb[0].mxu0
    %6691 = vmatprep.mubr.bf16.mxu0 0
    %6692 = vmatmul.mubr.bf16.gmra.mrb[0].mxu0 %v5979
    %v6693 = vpop.f32.mrb[0].mxu0
    %v6694 = vadd.f32 %v6475, %v6693
    %v6695 = vpop.f32.mrb[0].mxu0
    %v6696 = vpop.f32.mrb[0].mxu0
    %v6697 = vadd.f32 %v6476, %v6696
    %v6698 = vpop.f32.mrb[0].mxu0
    %6699 = vmatprep.mubr.bf16.mxu0 0
    %6700 = vmatmul.mubr.bf16.gmra.mrb[0].mxu0 %v5982
    %v6701 = vpop.f32.mrb[0].mxu0
    %v6702 = vadd.f32 %v6477, %v6701
    %v6703 = vpop.f32.mrb[0].mxu0
    %v6704 = vpop.f32.mrb[0].mxu0
    %v6705 = vadd.f32 %v6478, %v6704
    %v6706 = vpop.f32.mrb[0].mxu0
    %6707 = vmatprep.mubr.bf16.mxu0 0
    %6708 = vmatmul.mubr.bf16.gmra.mrb[0].mxu0 %v5985
    %v6709 = vpop.f32.mrb[0].mxu0
    %v6710 = vadd.f32 %v6479, %v6709
    %v6711 = vpop.f32.mrb[0].mxu0
    %v6712 = vpop.f32.mrb[0].mxu0
    %v6713 = vadd.f32 %v6480, %v6712
    %v6714 = vpop.f32.mrb[0].mxu0
    %6715 = vmatprep.mubr.bf16.mxu0 0
    %6716 = vmatmul.mubr.bf16.gmra.mrb[0].mxu0 %v5988
    %v6717 = vpop.f32.mrb[0].mxu0
    %v6718 = vadd.f32 %v6481, %v6717
    %v6719 = vpop.f32.mrb[0].mxu0
    %v6720 = vpop.f32.mrb[0].mxu0
    %v6721 = vadd.f32 %v6482, %v6720
    %v6722 = vpop.f32.mrb[0].mxu0
    %6723 = vmatprep.mubr.bf16.mxu0 0
    %6724 = vmatmul.mubr.bf16.gmra.mrb[0].mxu0 %v5991
    %v6725 = vpop.f32.mrb[0].mxu0
    %v6726 = vadd.f32 %v6483, %v6725
    %v6727 = vpop.f32.mrb[0].mxu0
    %v6728 = vpop.f32.mrb[0].mxu0
    %v6729 = vadd.f32 %v6484, %v6728
    %v6730 = vpop.f32.mrb[0].mxu0
    %6731 = vmatprep.mubr.bf16.mxu0 0
    %6732 = vmatmul.mubr.bf16.gmra.mrb[0].mxu0 %v5994
    %v6733 = vpop.f32.mrb[0].mxu0
    %v6734 = vadd.f32 %v6485, %v6733
    %v6735 = vpop.f32.mrb[0].mxu0
    %v6736 = vpop.f32.mrb[0].mxu0
    %v6737 = vadd.f32 %v6486, %v6736
    %v6738 = vpop.f32.mrb[0].mxu0
    %6739 = vmatprep.mubr.bf16.mxu0 0
    %6740 = vmatmul.mubr.bf16.gmra.mrb[0].mxu0 %v5997
    %v6741 = vpop.f32.mrb[0].mxu0
    %v6742 = vadd.f32 %v6487, %v6741
    %v6743 = vpop.f32.mrb[0].mxu0
    %v6744 = vpop.f32.mrb[0].mxu0
    %v6745 = vadd.f32 %v6488, %v6744
    %v6746 = vpop.f32.mrb[0].mxu0
    %6747 = vmatprep.mubr.bf16.mxu0 0
    %6748 = vmatmul.mubr.bf16.gmra.mrb[0].mxu0 %v6000
    %v6749 = vpop.f32.mrb[0].mxu0
    %v6750 = vadd.f32 %v6489, %v6749
    %v6751 = vpop.f32.mrb[0].mxu0
    %v6752 = vpop.f32.mrb[0].mxu0
    %v6753 = vadd.f32 %v6490, %v6752
    %v6754 = vpop.f32.mrb[0].mxu0
    %6755 = vmatprep.mubr.bf16.mxu0 0
    %6756 = vmatmul.mubr.bf16.gmra.mrb[0].mxu0 %v6003
    %v6757 = vpop.f32.mrb[0].mxu0
    %v6758 = vadd.f32 %v6491, %v6757
    %v6759 = vpop.f32.mrb[0].mxu0
    %v6760 = vpop.f32.mrb[0].mxu0
    %v6761 = vadd.f32 %v6492, %v6760
    %v6762 = vpop.f32.mrb[0].mxu0
    %6763 = vmatprep.mubr.bf16.mxu0 0
    %6764 = vmatmul.mubr.bf16.gmra.mrb[0].mxu0 %v6006
    %v6765 = vpop.f32.mrb[0].mxu0
    %v6766 = vadd.f32 %v6493, %v6765
    %v6767 = vpop.f32.mrb[0].mxu0
    %v6768 = vpop.f32.mrb[0].mxu0
    %v6769 = vadd.f32 %v6494, %v6768
    %v6770 = vpop.f32.mrb[0].mxu0
    %6771 = vmatprep.mubr.bf16.mxu0 0
    %6772 = vmatmul.mubr.bf16.gmra.mrb[0].mxu0 %v6009
    %v6773 = vpop.f32.mrb[0].mxu0
    %v6774 = vadd.f32 %v6495, %v6773
    %v6775 = vpop.f32.mrb[0].mxu0
    %v6776 = vpop.f32.mrb[0].mxu0
    %v6777 = vadd.f32 %v6496, %v6776
    %v6778 = vpop.f32.mrb[0].mxu0
    %6779 = vmatprep.mubr.bf16.mxu0 0
    %6780 = vmatmul.mubr.bf16.gmra.mrb[0].mxu0 %v6012
    %v6781 = vpop.f32.mrb[0].mxu0
    %v6782 = vadd.f32 %v6497, %v6781
    %v6783 = vpop.f32.mrb[0].mxu0
    %v6784 = vpop.f32.mrb[0].mxu0
    %v6785 = vadd.f32 %v6498, %v6784
    %v6786 = vpop.f32.mrb[0].mxu0
    %6787 = vmatprep.mubr.bf16.mxu0 0
    %6788 = vmatmul.mubr.bf16.gmra.mrb[0].mxu0 %v6015
    %v6789 = vpop.f32.mrb[0].mxu0
    %v6790 = vadd.f32 %v6499, %v6789
    %v6791 = vpop.f32.mrb[0].mxu0
    %v6792 = vpop.f32.mrb[0].mxu0
    %v6793 = vadd.f32 %v6500, %v6792
    %v6794 = vpop.f32.mrb[0].mxu0
    %6795 = vmatprep.mubr.bf16.mxu0 0
    %6796 = vmatmul.mubr.bf16.gmra.mrb[0].mxu0 %v6018
    %v6797 = vpop.f32.mrb[0].mxu0
    %v6798 = vadd.f32 %v6501, %v6797
    %v6799 = vpop.f32.mrb[0].mxu0
    %v6800 = vpop.f32.mrb[0].mxu0
    %v6801 = vadd.f32 %v6502, %v6800
    %v6802 = vpop.f32.mrb[0].mxu0
    %6803 = vmatprep.mubr.bf16.mxu0 0
    %6804 = vmatmul.mubr.bf16.gmra.mrb[0].mxu0 %v6021
    %v6805 = vpop.f32.mrb[0].mxu0
    %v6806 = vadd.f32 %v6503, %v6805
    %v6807 = vpop.f32.mrb[0].mxu0
    %v6808 = vpop.f32.mrb[0].mxu0
    %v6809 = vadd.f32 %v6504, %v6808
    %v6810 = vpop.f32.mrb[0].mxu0
    %6811 = vmatprep.mubr.bf16.mxu0 0
    %6812 = vmatmul.mubr.bf16.gmra.mrb[0].mxu0 %v6024
    %v6813 = vpop.f32.mrb[0].mxu0
    %v6814 = vadd.f32 %v6505, %v6813
    %v6815 = vpop.f32.mrb[0].mxu0
    %v6816 = vpop.f32.mrb[0].mxu0
    %v6817 = vadd.f32 %v6506, %v6816
    %v6818 = vpop.f32.mrb[0].mxu0
    %6819 = vdwg.mxu0
    %s6820 = scalar_lea.vmem %s2, 64
    %v6821 = vld [vmem:[%s6820] sm:$0xf]
    %v6822 = vld [vmem:[%s6820 + $0x4] sm:$0xf]
    %v6823 = vld [vmem:[%s6820 + $0x8] sm:$0xf]
    %v6824 = vld [vmem:[%s6820 + $0xc] sm:$0xf]
    %v6825 = vld [vmem:[%s6820 + $0x10] sm:$0xf]
    %v6826 = vld [vmem:[%s6820 + $0x14] sm:$0xf]
    %v6827 = vld [vmem:[%s6820 + $0x18] sm:$0xf]
    %v6828 = vld [vmem:[%s6820 + $0x1c] sm:$0xf]
    %v6837 = vunpack.c.l.b16 %v6821
    %v6838 = vunpack.c.l.b16 %v6822
    %v6839 = vunpack.c.l.b16 %v6823
    %v6840 = vunpack.c.l.b16 %v6824
    %v6841 = vunpack.c.l.b16 %v6825
    %v6842 = vunpack.c.l.b16 %v6826
    %v6843 = vunpack.c.l.b16 %v6827
    %v6844 = vunpack.c.l.b16 %v6828
    %v6845 = vpack.c.b16 %v6838, %v6837
    %v6846 = vpack.c.b16 %v6840, %v6839
    %v6847 = vpack.c.b16 %v6842, %v6841
    %v6848 = vpack.c.b16 %v6844, %v6843
    %6853 = vmatprep.subr.bf16.mxu0 0
    %6854 = vmatpush1.bf16.msra.mxu0 %v6845
    %6855 = vmatprep.subr.bf16.mxu0 0
    %6856 = vmatpush1.bf16.msra.mxu0 %v6846
    %6857 = vmatprep.subr.bf16.mxu0 0
    %6858 = vmatpush1.bf16.msra.mxu0 %v6847
    %6859 = vmatprep.subr.bf16.mxu0 0
    %6860 = vmatpush1.bf16.msra.mxu0 %v6848
    %6861 = vmatprep.subr.bf16.mxu0 0
    %6862 = vmatpush1.bf16.msra.mxu0 0
    %6863 = vmatprep.subr.bf16.mxu0 0
    %6864 = vmatpush1.bf16.msra.mxu0 0
    %6865 = vmatprep.subr.bf16.mxu0 0
    %6866 = vmatpush1.bf16.msra.mxu0 0
    %6867 = vmatprep.subr.bf16.mxu0 0
    %6868 = vmatpush1.bf16.msra.mxu0 0
    %6869 = vmatprep.subr.bf16.mxu0 0
    %6870 = vmatpush1.bf16.msra.mxu0 0
    %6871 = vmatprep.subr.bf16.mxu0 0
    %6872 = vmatpush1.bf16.msra.mxu0 0
    %6873 = vmatprep.subr.bf16.mxu0 0
    %6874 = vmatpush1.bf16.msra.mxu0 0
    %6875 = vmatprep.subr.bf16.mxu0 0
    %6876 = vmatpush1.bf16.msra.mxu0 0
    %6877 = vmatprep.subr.bf16.mxu0 0
    %6878 = vmatpush1.bf16.msra.mxu0 0
    %6879 = vmatprep.subr.bf16.mxu0 0
    %6880 = vmatpush1.bf16.msra.mxu0 0
    %6881 = vmatprep.subr.bf16.mxu0 0
    %6882 = vmatpush1.bf16.msra.mxu0 0
    %6883 = vmatprep.subr.bf16.mxu0 0
    %6884 = vmatpush1.bf16.msra.mxu0 0
    %6885 = vmatprep.mubr.bf16.mxu0 0
    %6886 = vmatmul.mubr.bf16.gmra.mrb[0].mxu0 %v5931
    %v6887 = vpop.f32.mrb[0].mxu0
    %v6888 = vadd.f32 0.0, %v6887
    %v6889 = vpop.f32.mrb[0].mxu0
    %v6890 = vpop.f32.mrb[0].mxu0
    %v6891 = vadd.f32 0.0, %v6890
    %v6892 = vpop.f32.mrb[0].mxu0
    %6893 = vmatprep.mubr.bf16.mxu0 0
    %6894 = vmatmul.mubr.bf16.gmra.mrb[0].mxu0 %v5934
    %v6895 = vpop.f32.mrb[0].mxu0
    %v6896 = vadd.f32 0.0, %v6895
    %v6897 = vpop.f32.mrb[0].mxu0
    %v6898 = vpop.f32.mrb[0].mxu0
    %v6899 = vadd.f32 0.0, %v6898
    %v6900 = vpop.f32.mrb[0].mxu0
    %6901 = vmatprep.mubr.bf16.mxu0 0
    %6902 = vmatmul.mubr.bf16.gmra.mrb[0].mxu0 %v5937
    %v6903 = vpop.f32.mrb[0].mxu0
    %v6904 = vadd.f32 0.0, %v6903
    %v6905 = vpop.f32.mrb[0].mxu0
    %v6906 = vpop.f32.mrb[0].mxu0
    %v6907 = vadd.f32 0.0, %v6906
    %v6908 = vpop.f32.mrb[0].mxu0
    %6909 = vmatprep.mubr.bf16.mxu0 0
    %6910 = vmatmul.mubr.bf16.gmra.mrb[0].mxu0 %v5940
    %v6911 = vpop.f32.mrb[0].mxu0
    %v6912 = vadd.f32 0.0, %v6911
    %v6913 = vpop.f32.mrb[0].mxu0
    %v6914 = vpop.f32.mrb[0].mxu0
    %v6915 = vadd.f32 0.0, %v6914
    %v6916 = vpop.f32.mrb[0].mxu0
    %6917 = vmatprep.mubr.bf16.mxu0 0
    %6918 = vmatmul.mubr.bf16.gmra.mrb[0].mxu0 %v5943
    %v6919 = vpop.f32.mrb[0].mxu0
    %v6920 = vadd.f32 0.0, %v6919
    %v6921 = vpop.f32.mrb[0].mxu0
    %v6922 = vpop.f32.mrb[0].mxu0
    %v6923 = vadd.f32 0.0, %v6922
    %v6924 = vpop.f32.mrb[0].mxu0
    %6925 = vmatprep.mubr.bf16.mxu0 0
    %6926 = vmatmul.mubr.bf16.gmra.mrb[0].mxu0 %v5946
    %v6927 = vpop.f32.mrb[0].mxu0
    %v6928 = vadd.f32 0.0, %v6927
    %v6929 = vpop.f32.mrb[0].mxu0
    %v6930 = vpop.f32.mrb[0].mxu0
    %v6931 = vadd.f32 0.0, %v6930
    %v6932 = vpop.f32.mrb[0].mxu0
    %6933 = vmatprep.mubr.bf16.mxu0 0
    %6934 = vmatmul.mubr.bf16.gmra.mrb[0].mxu0 %v5949
    %v6935 = vpop.f32.mrb[0].mxu0
    %v6936 = vadd.f32 0.0, %v6935
    %v6937 = vpop.f32.mrb[0].mxu0
    %v6938 = vpop.f32.mrb[0].mxu0
    %v6939 = vadd.f32 0.0, %v6938
    %v6940 = vpop.f32.mrb[0].mxu0
    %6941 = vmatprep.mubr.bf16.mxu0 0
    %6942 = vmatmul.mubr.bf16.gmra.mrb[0].mxu0 %v5952
    %v6943 = vpop.f32.mrb[0].mxu0
    %v6944 = vadd.f32 0.0, %v6943
    %v6945 = vpop.f32.mrb[0].mxu0
    %v6946 = vpop.f32.mrb[0].mxu0
    %v6947 = vadd.f32 0.0, %v6946
    %v6948 = vpop.f32.mrb[0].mxu0
    %6949 = vmatprep.mubr.bf16.mxu0 0
    %6950 = vmatmul.mubr.bf16.gmra.mrb[0].mxu0 %v5955
    %v6951 = vpop.f32.mrb[0].mxu0
    %v6952 = vadd.f32 0.0, %v6951
    %v6953 = vpop.f32.mrb[0].mxu0
    %v6954 = vpop.f32.mrb[0].mxu0
    %v6955 = vadd.f32 0.0, %v6954
    %v6956 = vpop.f32.mrb[0].mxu0
    %6957 = vmatprep.mubr.bf16.mxu0 0
    %6958 = vmatmul.mubr.bf16.gmra.mrb[0].mxu0 %v5958
    %v6959 = vpop.f32.mrb[0].mxu0
    %v6960 = vadd.f32 0.0, %v6959
    %v6961 = vpop.f32.mrb[0].mxu0
    %v6962 = vpop.f32.mrb[0].mxu0
    %v6963 = vadd.f32 0.0, %v6962
    %v6964 = vpop.f32.mrb[0].mxu0
    %6965 = vmatprep.mubr.bf16.mxu0 0
    %6966 = vmatmul.mubr.bf16.gmra.mrb[0].mxu0 %v5961
    %v6967 = vpop.f32.mrb[0].mxu0
    %v6968 = vadd.f32 0.0, %v6967
    %v6969 = vpop.f32.mrb[0].mxu0
    %v6970 = vpop.f32.mrb[0].mxu0
    %v6971 = vadd.f32 0.0, %v6970
    %v6972 = vpop.f32.mrb[0].mxu0
    %6973 = vmatprep.mubr.bf16.mxu0 0
    %6974 = vmatmul.mubr.bf16.gmra.mrb[0].mxu0 %v5964
    %v6975 = vpop.f32.mrb[0].mxu0
    %v6976 = vadd.f32 0.0, %v6975
    %v6977 = vpop.f32.mrb[0].mxu0
    %v6978 = vpop.f32.mrb[0].mxu0
    %v6979 = vadd.f32 0.0, %v6978
    %v6980 = vpop.f32.mrb[0].mxu0
    %6981 = vmatprep.mubr.bf16.mxu0 0
    %6982 = vmatmul.mubr.bf16.gmra.mrb[0].mxu0 %v5967
    %v6983 = vpop.f32.mrb[0].mxu0
    %v6984 = vadd.f32 0.0, %v6983
    %v6985 = vpop.f32.mrb[0].mxu0
    %v6986 = vpop.f32.mrb[0].mxu0
    %v6987 = vadd.f32 0.0, %v6986
    %v6988 = vpop.f32.mrb[0].mxu0
    %6989 = vmatprep.mubr.bf16.mxu0 0
    %6990 = vmatmul.mubr.bf16.gmra.mrb[0].mxu0 %v5970
    %v6991 = vpop.f32.mrb[0].mxu0
    %v6992 = vadd.f32 0.0, %v6991
    %v6993 = vpop.f32.mrb[0].mxu0
    %v6994 = vpop.f32.mrb[0].mxu0
    %v6995 = vadd.f32 0.0, %v6994
    %v6996 = vpop.f32.mrb[0].mxu0
    %6997 = vmatprep.mubr.bf16.mxu0 0
    %6998 = vmatmul.mubr.bf16.gmra.mrb[0].mxu0 %v5973
    %v6999 = vpop.f32.mrb[0].mxu0
    %v7000 = vadd.f32 0.0, %v6999
    %v7001 = vpop.f32.mrb[0].mxu0
    %v7002 = vpop.f32.mrb[0].mxu0
    %v7003 = vadd.f32 0.0, %v7002
    %v7004 = vpop.f32.mrb[0].mxu0
    %7005 = vmatprep.mubr.bf16.mxu0 0
    %7006 = vmatmul.mubr.bf16.gmra.mrb[0].mxu0 %v5976
    %v7007 = vpop.f32.mrb[0].mxu0
    %v7008 = vadd.f32 0.0, %v7007
    %v7009 = vpop.f32.mrb[0].mxu0
    %v7010 = vpop.f32.mrb[0].mxu0
    %v7011 = vadd.f32 0.0, %v7010
    %v7012 = vpop.f32.mrb[0].mxu0
    %7013 = vmatprep.mubr.bf16.mxu0 0
    %7014 = vmatmul.mubr.bf16.gmra.mrb[0].mxu0 %v5979
    %v7015 = vpop.f32.mrb[0].mxu0
    %v7016 = vadd.f32 0.0, %v7015
    %v7017 = vpop.f32.mrb[0].mxu0
    %v7018 = vpop.f32.mrb[0].mxu0
    %v7019 = vadd.f32 0.0, %v7018
    %v7020 = vpop.f32.mrb[0].mxu0
    %7021 = vmatprep.mubr.bf16.mxu0 0
    %7022 = vmatmul.mubr.bf16.gmra.mrb[0].mxu0 %v5982
    %v7023 = vpop.f32.mrb[0].mxu0
    %v7024 = vadd.f32 0.0, %v7023
    %v7025 = vpop.f32.mrb[0].mxu0
    %v7026 = vpop.f32.mrb[0].mxu0
    %v7027 = vadd.f32 0.0, %v7026
    %v7028 = vpop.f32.mrb[0].mxu0
    %7029 = vmatprep.mubr.bf16.mxu0 0
    %7030 = vmatmul.mubr.bf16.gmra.mrb[0].mxu0 %v5985
    %v7031 = vpop.f32.mrb[0].mxu0
    %v7032 = vadd.f32 0.0, %v7031
    %v7033 = vpop.f32.mrb[0].mxu0
    %v7034 = vpop.f32.mrb[0].mxu0
    %v7035 = vadd.f32 0.0, %v7034
    %v7036 = vpop.f32.mrb[0].mxu0
    %7037 = vmatprep.mubr.bf16.mxu0 0
    %7038 = vmatmul.mubr.bf16.gmra.mrb[0].mxu0 %v5988
    %v7039 = vpop.f32.mrb[0].mxu0
    %v7040 = vadd.f32 0.0, %v7039
    %v7041 = vpop.f32.mrb[0].mxu0
    %v7042 = vpop.f32.mrb[0].mxu0
    %v7043 = vadd.f32 0.0, %v7042
    %v7044 = vpop.f32.mrb[0].mxu0
    %7045 = vmatprep.mubr.bf16.mxu0 0
    %7046 = vmatmul.mubr.bf16.gmra.mrb[0].mxu0 %v5991
    %v7047 = vpop.f32.mrb[0].mxu0
    %v7048 = vadd.f32 0.0, %v7047
    %v7049 = vpop.f32.mrb[0].mxu0
    %v7050 = vpop.f32.mrb[0].mxu0
    %v7051 = vadd.f32 0.0, %v7050
    %v7052 = vpop.f32.mrb[0].mxu0
    %7053 = vmatprep.mubr.bf16.mxu0 0
    %7054 = vmatmul.mubr.bf16.gmra.mrb[0].mxu0 %v5994
    %v7055 = vpop.f32.mrb[0].mxu0
    %v7056 = vadd.f32 0.0, %v7055
    %v7057 = vpop.f32.mrb[0].mxu0
    %v7058 = vpop.f32.mrb[0].mxu0
    %v7059 = vadd.f32 0.0, %v7058
    %v7060 = vpop.f32.mrb[0].mxu0
    %7061 = vmatprep.mubr.bf16.mxu0 0
    %7062 = vmatmul.mubr.bf16.gmra.mrb[0].mxu0 %v5997
    %v7063 = vpop.f32.mrb[0].mxu0
    %v7064 = vadd.f32 0.0, %v7063
    %v7065 = vpop.f32.mrb[0].mxu0
    %v7066 = vpop.f32.mrb[0].mxu0
    %v7067 = vadd.f32 0.0, %v7066
    %v7068 = vpop.f32.mrb[0].mxu0
    %7069 = vmatprep.mubr.bf16.mxu0 0
    %7070 = vmatmul.mubr.bf16.gmra.mrb[0].mxu0 %v6000
    %v7071 = vpop.f32.mrb[0].mxu0
    %v7072 = vadd.f32 0.0, %v7071
    %v7073 = vpop.f32.mrb[0].mxu0
    %v7074 = vpop.f32.mrb[0].mxu0
    %v7075 = vadd.f32 0.0, %v7074
    %v7076 = vpop.f32.mrb[0].mxu0
    %7077 = vmatprep.mubr.bf16.mxu0 0
    %7078 = vmatmul.mubr.bf16.gmra.mrb[0].mxu0 %v6003
    %v7079 = vpop.f32.mrb[0].mxu0
    %v7080 = vadd.f32 0.0, %v7079
    %v7081 = vpop.f32.mrb[0].mxu0
    %v7082 = vpop.f32.mrb[0].mxu0
    %v7083 = vadd.f32 0.0, %v7082
    %v7084 = vpop.f32.mrb[0].mxu0
    %7085 = vmatprep.mubr.bf16.mxu0 0
    %7086 = vmatmul.mubr.bf16.gmra.mrb[0].mxu0 %v6006
    %v7087 = vpop.f32.mrb[0].mxu0
    %v7088 = vadd.f32 0.0, %v7087
    %v7089 = vpop.f32.mrb[0].mxu0
    %v7090 = vpop.f32.mrb[0].mxu0
    %v7091 = vadd.f32 0.0, %v7090
    %v7092 = vpop.f32.mrb[0].mxu0
    %7093 = vmatprep.mubr.bf16.mxu0 0
    %7094 = vmatmul.mubr.bf16.gmra.mrb[0].mxu0 %v6009
    %v7095 = vpop.f32.mrb[0].mxu0
    %v7096 = vadd.f32 0.0, %v7095
    %v7097 = vpop.f32.mrb[0].mxu0
    %v7098 = vpop.f32.mrb[0].mxu0
    %v7099 = vadd.f32 0.0, %v7098
    %v7100 = vpop.f32.mrb[0].mxu0
    %7101 = vmatprep.mubr.bf16.mxu0 0
    %7102 = vmatmul.mubr.bf16.gmra.mrb[0].mxu0 %v6012
    %v7103 = vpop.f32.mrb[0].mxu0
    %v7104 = vadd.f32 0.0, %v7103
    %v7105 = vpop.f32.mrb[0].mxu0
    %v7106 = vpop.f32.mrb[0].mxu0
    %v7107 = vadd.f32 0.0, %v7106
    %v7108 = vpop.f32.mrb[0].mxu0
    %7109 = vmatprep.mubr.bf16.mxu0 0
    %7110 = vmatmul.mubr.bf16.gmra.mrb[0].mxu0 %v6015
    %v7111 = vpop.f32.mrb[0].mxu0
    %v7112 = vadd.f32 0.0, %v7111
    %v7113 = vpop.f32.mrb[0].mxu0
    %v7114 = vpop.f32.mrb[0].mxu0
    %v7115 = vadd.f32 0.0, %v7114
    %v7116 = vpop.f32.mrb[0].mxu0
    %7117 = vmatprep.mubr.bf16.mxu0 0
    %7118 = vmatmul.mubr.bf16.gmra.mrb[0].mxu0 %v6018
    %v7119 = vpop.f32.mrb[0].mxu0
    %v7120 = vadd.f32 0.0, %v7119
    %v7121 = vpop.f32.mrb[0].mxu0
    %v7122 = vpop.f32.mrb[0].mxu0
    %v7123 = vadd.f32 0.0, %v7122
    %v7124 = vpop.f32.mrb[0].mxu0
    %7125 = vmatprep.mubr.bf16.mxu0 0
    %7126 = vmatmul.mubr.bf16.gmra.mrb[0].mxu0 %v6021
    %v7127 = vpop.f32.mrb[0].mxu0
    %v7128 = vadd.f32 0.0, %v7127
    %v7129 = vpop.f32.mrb[0].mxu0
    %v7130 = vpop.f32.mrb[0].mxu0
    %v7131 = vadd.f32 0.0, %v7130
    %v7132 = vpop.f32.mrb[0].mxu0
    %7133 = vmatprep.mubr.bf16.mxu0 0
    %7134 = vmatmul.mubr.bf16.gmra.mrb[0].mxu0 %v6024
    %v7135 = vpop.f32.mrb[0].mxu0
    %v7136 = vadd.f32 0.0, %v7135
    %v7137 = vpop.f32.mrb[0].mxu0
    %v7138 = vpop.f32.mrb[0].mxu0
    %v7139 = vadd.f32 0.0, %v7138
    %v7140 = vpop.f32.mrb[0].mxu0
    %7141 = vdwg.mxu0
    %v7142 = vrot.slane %v6888, 1
    %v7143 = vrot.slane %v6891, 1
    %v7144 = vrot.slane %v6896, 1
    %v7145 = vrot.slane %v6899, 1
    %v7146 = vrot.slane %v6904, 1
    %v7147 = vrot.slane %v6907, 1
    %v7148 = vrot.slane %v6912, 1
    %v7149 = vrot.slane %v6915, 1
    %v7150 = vrot.slane %v6920, 1
    %v7151 = vrot.slane %v6923, 1
    %v7152 = vrot.slane %v6928, 1
    %v7153 = vrot.slane %v6931, 1
    %v7154 = vrot.slane %v6936, 1
    %v7155 = vrot.slane %v6939, 1
    %v7156 = vrot.slane %v6944, 1
    %v7157 = vrot.slane %v6947, 1
    %v7158 = vrot.slane %v6952, 1
    %v7159 = vrot.slane %v6955, 1
    %v7160 = vrot.slane %v6960, 1
    %v7161 = vrot.slane %v6963, 1
    %v7162 = vrot.slane %v6968, 1
    %v7163 = vrot.slane %v6971, 1
    %v7164 = vrot.slane %v6976, 1
    %v7165 = vrot.slane %v6979, 1
    %v7166 = vrot.slane %v6984, 1
    %v7167 = vrot.slane %v6987, 1
    %v7168 = vrot.slane %v6992, 1
    %v7169 = vrot.slane %v6995, 1
    %v7170 = vrot.slane %v7000, 1
    %v7171 = vrot.slane %v7003, 1
    %v7172 = vrot.slane %v7008, 1
    %v7173 = vrot.slane %v7011, 1
    %v7174 = vrot.slane %v7016, 1
    %v7175 = vrot.slane %v7019, 1
    %v7176 = vrot.slane %v7024, 1
    %v7177 = vrot.slane %v7027, 1
    %v7178 = vrot.slane %v7032, 1
    %v7179 = vrot.slane %v7035, 1
    %v7180 = vrot.slane %v7040, 1
    %v7181 = vrot.slane %v7043, 1
    %v7182 = vrot.slane %v7048, 1
    %v7183 = vrot.slane %v7051, 1
    %v7184 = vrot.slane %v7056, 1
    %v7185 = vrot.slane %v7059, 1
    %v7186 = vrot.slane %v7064, 1
    %v7187 = vrot.slane %v7067, 1
    %v7188 = vrot.slane %v7072, 1
    %v7189 = vrot.slane %v7075, 1
    %v7190 = vrot.slane %v7080, 1
    %v7191 = vrot.slane %v7083, 1
    %v7192 = vrot.slane %v7088, 1
    %v7193 = vrot.slane %v7091, 1
    %v7194 = vrot.slane %v7096, 1
    %v7195 = vrot.slane %v7099, 1
    %v7196 = vrot.slane %v7104, 1
    %v7197 = vrot.slane %v7107, 1
    %v7198 = vrot.slane %v7112, 1
    %v7199 = vrot.slane %v7115, 1
    %v7200 = vrot.slane %v7120, 1
    %v7201 = vrot.slane %v7123, 1
    %v7202 = vrot.slane %v7128, 1
    %v7203 = vrot.slane %v7131, 1
    %v7204 = vrot.slane %v7136, 1
    %v7205 = vrot.slane %v7139, 1
    %v7206 = vsel %vm1525, %v7204, %v7205
    %v7207 = vsel %vm1525, %v7203, %v7204
    %v7208 = vsel %vm1525, %v7202, %v7203
    %v7209 = vsel %vm1525, %v7201, %v7202
    %v7210 = vsel %vm1525, %v7200, %v7201
    %v7211 = vsel %vm1525, %v7199, %v7200
    %v7212 = vsel %vm1525, %v7198, %v7199
    %v7213 = vsel %vm1525, %v7197, %v7198
    %v7214 = vsel %vm1525, %v7196, %v7197
    %v7215 = vsel %vm1525, %v7195, %v7196
    %v7216 = vsel %vm1525, %v7194, %v7195
    %v7217 = vsel %vm1525, %v7193, %v7194
    %v7218 = vsel %vm1525, %v7192, %v7193
    %v7219 = vsel %vm1525, %v7191, %v7192
    %v7220 = vsel %vm1525, %v7190, %v7191
    %v7221 = vsel %vm1525, %v7189, %v7190
    %v7222 = vsel %vm1525, %v7188, %v7189
    %v7223 = vsel %vm1525, %v7187, %v7188
    %v7224 = vsel %vm1525, %v7186, %v7187
    %v7225 = vsel %vm1525, %v7185, %v7186
    %v7226 = vsel %vm1525, %v7184, %v7185
    %v7227 = vsel %vm1525, %v7183, %v7184
    %v7228 = vsel %vm1525, %v7182, %v7183
    %v7229 = vsel %vm1525, %v7181, %v7182
    %v7230 = vsel %vm1525, %v7180, %v7181
    %v7231 = vsel %vm1525, %v7179, %v7180
    %v7232 = vsel %vm1525, %v7178, %v7179
    %v7233 = vsel %vm1525, %v7177, %v7178
    %v7234 = vsel %vm1525, %v7176, %v7177
    %v7235 = vsel %vm1525, %v7175, %v7176
    %v7236 = vsel %vm1525, %v7174, %v7175
    %v7237 = vsel %vm1525, %v7173, %v7174
    %v7238 = vsel %vm1525, %v7172, %v7173
    %v7239 = vsel %vm1525, %v7171, %v7172
    %v7240 = vsel %vm1525, %v7170, %v7171
    %v7241 = vsel %vm1525, %v7169, %v7170
    %v7242 = vsel %vm1525, %v7168, %v7169
    %v7243 = vsel %vm1525, %v7167, %v7168
    %v7244 = vsel %vm1525, %v7166, %v7167
    %v7245 = vsel %vm1525, %v7165, %v7166
    %v7246 = vsel %vm1525, %v7164, %v7165
    %v7247 = vsel %vm1525, %v7163, %v7164
    %v7248 = vsel %vm1525, %v7162, %v7163
    %v7249 = vsel %vm1525, %v7161, %v7162
    %v7250 = vsel %vm1525, %v7160, %v7161
    %v7251 = vsel %vm1525, %v7159, %v7160
    %v7252 = vsel %vm1525, %v7158, %v7159
    %v7253 = vsel %vm1525, %v7157, %v7158
    %v7254 = vsel %vm1525, %v7156, %v7157
    %v7255 = vsel %vm1525, %v7155, %v7156
    %v7256 = vsel %vm1525, %v7154, %v7155
    %v7257 = vsel %vm1525, %v7153, %v7154
    %v7258 = vsel %vm1525, %v7152, %v7153
    %v7259 = vsel %vm1525, %v7151, %v7152
    %v7260 = vsel %vm1525, %v7150, %v7151
    %v7261 = vsel %vm1525, %v7149, %v7150
    %v7262 = vsel %vm1525, %v7148, %v7149
    %v7263 = vsel %vm1525, %v7147, %v7148
    %v7264 = vsel %vm1525, %v7146, %v7147
    %v7265 = vsel %vm1525, %v7145, %v7146
    %v7266 = vsel %vm1525, %v7144, %v7145
    %v7267 = vsel %vm1525, %v7143, %v7144
    %v7268 = vsel %vm1525, %v7142, %v7143
    %v7269 = vsel %vm1525, %v7205, %v7142
    %v7270 = vsel %vm38, %v7268, 0.0
    %v7271 = vsel %vm39, %v7267, 0.0
    %v7272 = vsel %vm38, %v7266, 0.0
    %v7273 = vsel %vm39, %v7265, 0.0
    %v7274 = vsel %vm38, %v7264, 0.0
    %v7275 = vsel %vm39, %v7263, 0.0
    %v7276 = vsel %vm38, %v7262, 0.0
    %v7277 = vsel %vm39, %v7261, 0.0
    %v7278 = vsel %vm38, %v7260, 0.0
    %v7279 = vsel %vm39, %v7259, 0.0
    %v7280 = vsel %vm38, %v7258, 0.0
    %v7281 = vsel %vm39, %v7257, 0.0
    %v7282 = vsel %vm38, %v7256, 0.0
    %v7283 = vsel %vm39, %v7255, 0.0
    %v7284 = vsel %vm38, %v7254, 0.0
    %v7285 = vsel %vm39, %v7253, 0.0
    %v7286 = vsel %vm38, %v7252, 0.0
    %v7287 = vsel %vm39, %v7251, 0.0
    %v7288 = vsel %vm38, %v7250, 0.0
    %v7289 = vsel %vm39, %v7249, 0.0
    %v7290 = vsel %vm38, %v7248, 0.0
    %v7291 = vsel %vm39, %v7247, 0.0
    %v7292 = vsel %vm38, %v7246, 0.0
    %v7293 = vsel %vm39, %v7245, 0.0
    %v7294 = vsel %vm38, %v7244, 0.0
    %v7295 = vsel %vm39, %v7243, 0.0
    %v7296 = vsel %vm38, %v7242, 0.0
    %v7297 = vsel %vm39, %v7241, 0.0
    %v7298 = vsel %vm38, %v7240, 0.0
    %v7299 = vsel %vm39, %v7239, 0.0
    %v7300 = vsel %vm38, %v7238, 0.0
    %v7301 = vsel %vm39, %v7237, 0.0
    %v7302 = vsel %vm38, %v7236, 0.0
    %v7303 = vsel %vm39, %v7235, 0.0
    %v7304 = vsel %vm38, %v7234, 0.0
    %v7305 = vsel %vm39, %v7233, 0.0
    %v7306 = vsel %vm38, %v7232, 0.0
    %v7307 = vsel %vm39, %v7231, 0.0
    %v7308 = vsel %vm38, %v7230, 0.0
    %v7309 = vsel %vm39, %v7229, 0.0
    %v7310 = vsel %vm38, %v7228, 0.0
    %v7311 = vsel %vm39, %v7227, 0.0
    %v7312 = vsel %vm38, %v7226, 0.0
    %v7313 = vsel %vm39, %v7225, 0.0
    %v7314 = vsel %vm38, %v7224, 0.0
    %v7315 = vsel %vm39, %v7223, 0.0
    %v7316 = vsel %vm38, %v7222, 0.0
    %v7317 = vsel %vm39, %v7221, 0.0
    %v7318 = vsel %vm38, %v7220, 0.0
    %v7319 = vsel %vm39, %v7219, 0.0
    %v7320 = vsel %vm38, %v7218, 0.0
    %v7321 = vsel %vm39, %v7217, 0.0
    %v7322 = vsel %vm38, %v7216, 0.0
    %v7323 = vsel %vm39, %v7215, 0.0
    %v7324 = vsel %vm38, %v7214, 0.0
    %v7325 = vsel %vm39, %v7213, 0.0
    %v7326 = vsel %vm38, %v7212, 0.0
    %v7327 = vsel %vm39, %v7211, 0.0
    %v7328 = vsel %vm38, %v7210, 0.0
    %v7329 = vsel %vm39, %v7209, 0.0
    %v7330 = vsel %vm38, %v7208, 0.0
    %v7331 = vsel %vm39, %v7207, 0.0
    %v7332 = vsel %vm38, %v7206, 0.0
    %v7333 = vsel %vm39, %v7269, 0.0
    %v7334 = vadd.f32 %v6566, %v7270
    %v7335 = vadd.f32 %v6569, %v7271
    %v7336 = vadd.f32 %v6574, %v7272
    %v7337 = vadd.f32 %v6577, %v7273
    %v7338 = vadd.f32 %v6582, %v7274
    %v7339 = vadd.f32 %v6585, %v7275
    %v7340 = vadd.f32 %v6590, %v7276
    %v7341 = vadd.f32 %v6593, %v7277
    %v7342 = vadd.f32 %v6598, %v7278
    %v7343 = vadd.f32 %v6601, %v7279
    %v7344 = vadd.f32 %v6606, %v7280
    %v7345 = vadd.f32 %v6609, %v7281
    %v7346 = vadd.f32 %v6614, %v7282
    %v7347 = vadd.f32 %v6617, %v7283
    %v7348 = vadd.f32 %v6622, %v7284
    %v7349 = vadd.f32 %v6625, %v7285
    %v7350 = vadd.f32 %v6630, %v7286
    %v7351 = vadd.f32 %v6633, %v7287
    %v7352 = vadd.f32 %v6638, %v7288
    %v7353 = vadd.f32 %v6641, %v7289
    %v7354 = vadd.f32 %v6646, %v7290
    %v7355 = vadd.f32 %v6649, %v7291
    %v7356 = vadd.f32 %v6654, %v7292
    %v7357 = vadd.f32 %v6657, %v7293
    %v7358 = vadd.f32 %v6662, %v7294
    %v7359 = vadd.f32 %v6665, %v7295
    %v7360 = vadd.f32 %v6670, %v7296
    %v7361 = vadd.f32 %v6673, %v7297
    %v7362 = vadd.f32 %v6678, %v7298
    %v7363 = vadd.f32 %v6681, %v7299
    %v7364 = vadd.f32 %v6686, %v7300
    %v7365 = vadd.f32 %v6689, %v7301
    %v7366 = vadd.f32 %v6694, %v7302
    %v7367 = vadd.f32 %v6697, %v7303
    %v7368 = vadd.f32 %v6702, %v7304
    %v7369 = vadd.f32 %v6705, %v7305
    %v7370 = vadd.f32 %v6710, %v7306
    %v7371 = vadd.f32 %v6713, %v7307
    %v7372 = vadd.f32 %v6718, %v7308
    %v7373 = vadd.f32 %v6721, %v7309
    %v7374 = vadd.f32 %v6726, %v7310
    %v7375 = vadd.f32 %v6729, %v7311
    %v7376 = vadd.f32 %v6734, %v7312
    %v7377 = vadd.f32 %v6737, %v7313
    %v7378 = vadd.f32 %v6742, %v7314
    %v7379 = vadd.f32 %v6745, %v7315
    %v7380 = vadd.f32 %v6750, %v7316
    %v7381 = vadd.f32 %v6753, %v7317
    %v7382 = vadd.f32 %v6758, %v7318
    %v7383 = vadd.f32 %v6761, %v7319
    %v7384 = vadd.f32 %v6766, %v7320
    %v7385 = vadd.f32 %v6769, %v7321
    %v7386 = vadd.f32 %v6774, %v7322
    %v7387 = vadd.f32 %v6777, %v7323
    %v7388 = vadd.f32 %v6782, %v7324
    %v7389 = vadd.f32 %v6785, %v7325
    %v7390 = vadd.f32 %v6790, %v7326
    %v7391 = vadd.f32 %v6793, %v7327
    %v7392 = vadd.f32 %v6798, %v7328
    %v7393 = vadd.f32 %v6801, %v7329
    %v7394 = vadd.f32 %v6806, %v7330
    %v7395 = vadd.f32 %v6809, %v7331
    %v7396 = vadd.f32 %v6814, %v7332
    %v7397 = vadd.f32 %v6817, %v7333
    %v7398 = vld [vmem:[%s142] sm:$0xff]
    %v7399 = vld [vmem:[%s142 + $0x8] sm:$0xff]
    %v7400 = vld [vmem:[%s142 + $0x10] sm:$0xff]
    %v7401 = vld [vmem:[%s142 + $0x18] sm:$0xff]
    %v7402 = vld [vmem:[%s142 + $0x20] sm:$0xff]
    %v7403 = vld [vmem:[%s142 + $0x28] sm:$0xff]
    %v7404 = vld [vmem:[%s142 + $0x30] sm:$0xff]
    %v7405 = vld [vmem:[%s142 + $0x38] sm:$0xff]
    %v7406 = vld [vmem:[%s142 + $0x40] sm:$0xff]
    %v7407 = vld [vmem:[%s142 + $0x48] sm:$0xff]
    %v7408 = vld [vmem:[%s142 + $0x50] sm:$0xff]
    %v7409 = vld [vmem:[%s142 + $0x58] sm:$0xff]
    %v7410 = vld [vmem:[%s142 + $0x60] sm:$0xff]
    %v7411 = vld [vmem:[%s142 + $0x68] sm:$0xff]
    %v7412 = vld [vmem:[%s142 + $0x70] sm:$0xff]
    %v7413 = vld [vmem:[%s142 + $0x78] sm:$0xff]
    %v7414 = vld [vmem:[%s142 + $0x90] sm:$0xff]
    %v7415 = vld [vmem:[%s142 + $0x98] sm:$0xff]
    %v7416 = vld [vmem:[%s142 + $0xa0] sm:$0xff]
    %v7417 = vld [vmem:[%s142 + $0xa8] sm:$0xff]
    %v7418 = vld [vmem:[%s142 + $0xb0] sm:$0xff]
    %v7419 = vld [vmem:[%s142 + $0xb8] sm:$0xff]
    %v7420 = vld [vmem:[%s142 + $0xc0] sm:$0xff]
    %v7421 = vld [vmem:[%s142 + $0xc8] sm:$0xff]
    %v7422 = vld [vmem:[%s142 + $0xd0] sm:$0xff]
    %v7423 = vld [vmem:[%s142 + $0xd8] sm:$0xff]
    %v7424 = vld [vmem:[%s142 + $0xe0] sm:$0xff]
    %v7425 = vld [vmem:[%s142 + $0xe8] sm:$0xff]
    %v7426 = vld [vmem:[%s142 + $0xf0] sm:$0xff]
    %v7427 = vld [vmem:[%s142 + $0xf8] sm:$0xff]
    %v7428 = vld [vmem:[%s142 + $0x100] sm:$0xff]
    %v7429 = vld [vmem:[%s142 + $0x108] sm:$0xff]
    %s7430 = scalar_lea.vmem %s2, 128
    %v7431 = vld [vmem:[%s7430] sm:$0xf]
    %v7432 = vld [vmem:[%s7430 + $0x4] sm:$0xf]
    %v7433 = vld [vmem:[%s7430 + $0x8] sm:$0xf]
    %v7434 = vld [vmem:[%s7430 + $0xc] sm:$0xf]
    %v7435 = vld [vmem:[%s7430 + $0x10] sm:$0xf]
    %v7436 = vld [vmem:[%s7430 + $0x14] sm:$0xf]
    %v7437 = vld [vmem:[%s7430 + $0x18] sm:$0xf]
    %v7438 = vld [vmem:[%s7430 + $0x1c] sm:$0xf]
    %v7447 = vunpack.c.l.b16 %v7431
    %v7448 = vunpack.c.l.b16 %v7432
    %v7449 = vunpack.c.l.b16 %v7433
    %v7450 = vunpack.c.l.b16 %v7434
    %v7451 = vunpack.c.l.b16 %v7435
    %v7452 = vunpack.c.l.b16 %v7436
    %v7453 = vunpack.c.l.b16 %v7437
    %v7454 = vunpack.c.l.b16 %v7438
    %v7455 = vpack.c.b16 %v7448, %v7447
    %v7456 = vpack.c.b16 %v7450, %v7449
    %v7457 = vpack.c.b16 %v7452, %v7451
    %v7458 = vpack.c.b16 %v7454, %v7453
    %v7464 = vsel %vm40, %v7398, 0
    %v7467 = vsel %vm40, %v7399, 0
    %v7470 = vsel %vm40, %v7400, 0
    %v7473 = vsel %vm40, %v7401, 0
    %v7476 = vsel %vm40, %v7402, 0
    %v7479 = vsel %vm40, %v7403, 0
    %v7482 = vsel %vm40, %v7404, 0
    %v7485 = vsel %vm40, %v7405, 0
    %v7488 = vsel %vm40, %v7406, 0
    %v7491 = vsel %vm40, %v7407, 0
    %v7494 = vsel %vm40, %v7408, 0
    %v7497 = vsel %vm40, %v7409, 0
    %v7500 = vsel %vm40, %v7410, 0
    %v7503 = vsel %vm40, %v7411, 0
    %v7506 = vsel %vm40, %v7412, 0
    %v7509 = vsel %vm40, %v7413, 0
    %v7512 = vsel %vm40, %v7414, 0
    %v7515 = vsel %vm40, %v7415, 0
    %v7518 = vsel %vm40, %v7416, 0
    %v7521 = vsel %vm40, %v7417, 0
    %v7524 = vsel %vm40, %v7418, 0
    %v7527 = vsel %vm40, %v7419, 0
    %v7530 = vsel %vm40, %v7420, 0
    %v7533 = vsel %vm40, %v7421, 0
    %v7536 = vsel %vm40, %v7422, 0
    %v7539 = vsel %vm40, %v7423, 0
    %v7542 = vsel %vm40, %v7424, 0
    %v7545 = vsel %vm40, %v7425, 0
    %v7548 = vsel %vm40, %v7426, 0
    %v7551 = vsel %vm40, %v7427, 0
    %v7554 = vsel %vm40, %v7428, 0
    %v7557 = vsel %vm40, %v7429, 0
    %7559 = vmatprep.subr.bf16.mxu0 0
    %7560 = vmatpush1.bf16.msra.mxu0 %v7455
    %7561 = vmatprep.subr.bf16.mxu0 0
    %7562 = vmatpush1.bf16.msra.mxu0 %v7456
    %7563 = vmatprep.subr.bf16.mxu0 0
    %7564 = vmatpush1.bf16.msra.mxu0 %v7457
    %7565 = vmatprep.subr.bf16.mxu0 0
    %7566 = vmatpush1.bf16.msra.mxu0 %v7458
    %7567 = vmatprep.subr.bf16.mxu0 0
    %7568 = vmatpush1.bf16.msra.mxu0 0
    %7569 = vmatprep.subr.bf16.mxu0 0
    %7570 = vmatpush1.bf16.msra.mxu0 0
    %7571 = vmatprep.subr.bf16.mxu0 0
    %7572 = vmatpush1.bf16.msra.mxu0 0
    %7573 = vmatprep.subr.bf16.mxu0 0
    %7574 = vmatpush1.bf16.msra.mxu0 0
    %7575 = vmatprep.subr.bf16.mxu0 0
    %7576 = vmatpush1.bf16.msra.mxu0 0
    %7577 = vmatprep.subr.bf16.mxu0 0
    %7578 = vmatpush1.bf16.msra.mxu0 0
    %7579 = vmatprep.subr.bf16.mxu0 0
    %7580 = vmatpush1.bf16.msra.mxu0 0
    %7581 = vmatprep.subr.bf16.mxu0 0
    %7582 = vmatpush1.bf16.msra.mxu0 0
    %7583 = vmatprep.subr.bf16.mxu0 0
    %7584 = vmatpush1.bf16.msra.mxu0 0
    %7585 = vmatprep.subr.bf16.mxu0 0
    %7586 = vmatpush1.bf16.msra.mxu0 0
    %7587 = vmatprep.subr.bf16.mxu0 0
    %7588 = vmatpush1.bf16.msra.mxu0 0
    %7589 = vmatprep.subr.bf16.mxu0 0
    %7590 = vmatpush1.bf16.msra.mxu0 0
    %7591 = vmatprep.mubr.bf16.mxu0 0
    %7592 = vmatmul.mubr.bf16.gmra.mrb[0].mxu0 %v7464
    %v7593 = vpop.f32.mrb[0].mxu0
    %v7594 = vadd.f32 0.0, %v7593
    %v7595 = vpop.f32.mrb[0].mxu0
    %v7596 = vpop.f32.mrb[0].mxu0
    %v7597 = vadd.f32 0.0, %v7596
    %v7598 = vpop.f32.mrb[0].mxu0
    %7599 = vmatprep.mubr.bf16.mxu0 0
    %7600 = vmatmul.mubr.bf16.gmra.mrb[0].mxu0 %v7467
    %v7601 = vpop.f32.mrb[0].mxu0
    %v7602 = vadd.f32 0.0, %v7601
    %v7603 = vpop.f32.mrb[0].mxu0
    %v7604 = vpop.f32.mrb[0].mxu0
    %v7605 = vadd.f32 0.0, %v7604
    %v7606 = vpop.f32.mrb[0].mxu0
    %7607 = vmatprep.mubr.bf16.mxu0 0
    %7608 = vmatmul.mubr.bf16.gmra.mrb[0].mxu0 %v7470
    %v7609 = vpop.f32.mrb[0].mxu0
    %v7610 = vadd.f32 0.0, %v7609
    %v7611 = vpop.f32.mrb[0].mxu0
    %v7612 = vpop.f32.mrb[0].mxu0
    %v7613 = vadd.f32 0.0, %v7612
    %v7614 = vpop.f32.mrb[0].mxu0
    %7615 = vmatprep.mubr.bf16.mxu0 0
    %7616 = vmatmul.mubr.bf16.gmra.mrb[0].mxu0 %v7473
    %v7617 = vpop.f32.mrb[0].mxu0
    %v7618 = vadd.f32 0.0, %v7617
    %v7619 = vpop.f32.mrb[0].mxu0
    %v7620 = vpop.f32.mrb[0].mxu0
    %v7621 = vadd.f32 0.0, %v7620
    %v7622 = vpop.f32.mrb[0].mxu0
    %7623 = vmatprep.mubr.bf16.mxu0 0
    %7624 = vmatmul.mubr.bf16.gmra.mrb[0].mxu0 %v7476
    %v7625 = vpop.f32.mrb[0].mxu0
    %v7626 = vadd.f32 0.0, %v7625
    %v7627 = vpop.f32.mrb[0].mxu0
    %v7628 = vpop.f32.mrb[0].mxu0
    %v7629 = vadd.f32 0.0, %v7628
    %v7630 = vpop.f32.mrb[0].mxu0
    %7631 = vmatprep.mubr.bf16.mxu0 0
    %7632 = vmatmul.mubr.bf16.gmra.mrb[0].mxu0 %v7479
    %v7633 = vpop.f32.mrb[0].mxu0
    %v7634 = vadd.f32 0.0, %v7633
    %v7635 = vpop.f32.mrb[0].mxu0
    %v7636 = vpop.f32.mrb[0].mxu0
    %v7637 = vadd.f32 0.0, %v7636
    %v7638 = vpop.f32.mrb[0].mxu0
    %7639 = vmatprep.mubr.bf16.mxu0 0
    %7640 = vmatmul.mubr.bf16.gmra.mrb[0].mxu0 %v7482
    %v7641 = vpop.f32.mrb[0].mxu0
    %v7642 = vadd.f32 0.0, %v7641
    %v7643 = vpop.f32.mrb[0].mxu0
    %v7644 = vpop.f32.mrb[0].mxu0
    %v7645 = vadd.f32 0.0, %v7644
    %v7646 = vpop.f32.mrb[0].mxu0
    %7647 = vmatprep.mubr.bf16.mxu0 0
    %7648 = vmatmul.mubr.bf16.gmra.mrb[0].mxu0 %v7485
    %v7649 = vpop.f32.mrb[0].mxu0
    %v7650 = vadd.f32 0.0, %v7649
    %v7651 = vpop.f32.mrb[0].mxu0
    %v7652 = vpop.f32.mrb[0].mxu0
    %v7653 = vadd.f32 0.0, %v7652
    %v7654 = vpop.f32.mrb[0].mxu0
    %7655 = vmatprep.mubr.bf16.mxu0 0
    %7656 = vmatmul.mubr.bf16.gmra.mrb[0].mxu0 %v7488
    %v7657 = vpop.f32.mrb[0].mxu0
    %v7658 = vadd.f32 0.0, %v7657
    %v7659 = vpop.f32.mrb[0].mxu0
    %v7660 = vpop.f32.mrb[0].mxu0
    %v7661 = vadd.f32 0.0, %v7660
    %v7662 = vpop.f32.mrb[0].mxu0
    %7663 = vmatprep.mubr.bf16.mxu0 0
    %7664 = vmatmul.mubr.bf16.gmra.mrb[0].mxu0 %v7491
    %v7665 = vpop.f32.mrb[0].mxu0
    %v7666 = vadd.f32 0.0, %v7665
    %v7667 = vpop.f32.mrb[0].mxu0
    %v7668 = vpop.f32.mrb[0].mxu0
    %v7669 = vadd.f32 0.0, %v7668
    %v7670 = vpop.f32.mrb[0].mxu0
    %7671 = vmatprep.mubr.bf16.mxu0 0
    %7672 = vmatmul.mubr.bf16.gmra.mrb[0].mxu0 %v7494
    %v7673 = vpop.f32.mrb[0].mxu0
    %v7674 = vadd.f32 0.0, %v7673
    %v7675 = vpop.f32.mrb[0].mxu0
    %v7676 = vpop.f32.mrb[0].mxu0
    %v7677 = vadd.f32 0.0, %v7676
    %v7678 = vpop.f32.mrb[0].mxu0
    %7679 = vmatprep.mubr.bf16.mxu0 0
    %7680 = vmatmul.mubr.bf16.gmra.mrb[0].mxu0 %v7497
    %v7681 = vpop.f32.mrb[0].mxu0
    %v7682 = vadd.f32 0.0, %v7681
    %v7683 = vpop.f32.mrb[0].mxu0
    %v7684 = vpop.f32.mrb[0].mxu0
    %v7685 = vadd.f32 0.0, %v7684
    %v7686 = vpop.f32.mrb[0].mxu0
    %7687 = vmatprep.mubr.bf16.mxu0 0
    %7688 = vmatmul.mubr.bf16.gmra.mrb[0].mxu0 %v7500
    %v7689 = vpop.f32.mrb[0].mxu0
    %v7690 = vadd.f32 0.0, %v7689
    %v7691 = vpop.f32.mrb[0].mxu0
    %v7692 = vpop.f32.mrb[0].mxu0
    %v7693 = vadd.f32 0.0, %v7692
    %v7694 = vpop.f32.mrb[0].mxu0
    %7695 = vmatprep.mubr.bf16.mxu0 0
    %7696 = vmatmul.mubr.bf16.gmra.mrb[0].mxu0 %v7503
    %v7697 = vpop.f32.mrb[0].mxu0
    %v7698 = vadd.f32 0.0, %v7697
    %v7699 = vpop.f32.mrb[0].mxu0
    %v7700 = vpop.f32.mrb[0].mxu0
    %v7701 = vadd.f32 0.0, %v7700
    %v7702 = vpop.f32.mrb[0].mxu0
    %7703 = vmatprep.mubr.bf16.mxu0 0
    %7704 = vmatmul.mubr.bf16.gmra.mrb[0].mxu0 %v7506
    %v7705 = vpop.f32.mrb[0].mxu0
    %v7706 = vadd.f32 0.0, %v7705
    %v7707 = vpop.f32.mrb[0].mxu0
    %v7708 = vpop.f32.mrb[0].mxu0
    %v7709 = vadd.f32 0.0, %v7708
    %v7710 = vpop.f32.mrb[0].mxu0
    %7711 = vmatprep.mubr.bf16.mxu0 0
    %7712 = vmatmul.mubr.bf16.gmra.mrb[0].mxu0 %v7509
    %v7713 = vpop.f32.mrb[0].mxu0
    %v7714 = vadd.f32 0.0, %v7713
    %v7715 = vpop.f32.mrb[0].mxu0
    %v7716 = vpop.f32.mrb[0].mxu0
    %v7717 = vadd.f32 0.0, %v7716
    %v7718 = vpop.f32.mrb[0].mxu0
    %7719 = vmatprep.mubr.bf16.mxu0 0
    %7720 = vmatmul.mubr.bf16.gmra.mrb[0].mxu0 %v7512
    %v7721 = vpop.f32.mrb[0].mxu0
    %v7722 = vadd.f32 0.0, %v7721
    %v7723 = vpop.f32.mrb[0].mxu0
    %v7724 = vpop.f32.mrb[0].mxu0
    %v7725 = vadd.f32 0.0, %v7724
    %v7726 = vpop.f32.mrb[0].mxu0
    %7727 = vmatprep.mubr.bf16.mxu0 0
    %7728 = vmatmul.mubr.bf16.gmra.mrb[0].mxu0 %v7515
    %v7729 = vpop.f32.mrb[0].mxu0
    %v7730 = vadd.f32 0.0, %v7729
    %v7731 = vpop.f32.mrb[0].mxu0
    %v7732 = vpop.f32.mrb[0].mxu0
    %v7733 = vadd.f32 0.0, %v7732
    %v7734 = vpop.f32.mrb[0].mxu0
    %7735 = vmatprep.mubr.bf16.mxu0 0
    %7736 = vmatmul.mubr.bf16.gmra.mrb[0].mxu0 %v7518
    %v7737 = vpop.f32.mrb[0].mxu0
    %v7738 = vadd.f32 0.0, %v7737
    %v7739 = vpop.f32.mrb[0].mxu0
    %v7740 = vpop.f32.mrb[0].mxu0
    %v7741 = vadd.f32 0.0, %v7740
    %v7742 = vpop.f32.mrb[0].mxu0
    %7743 = vmatprep.mubr.bf16.mxu0 0
    %7744 = vmatmul.mubr.bf16.gmra.mrb[0].mxu0 %v7521
    %v7745 = vpop.f32.mrb[0].mxu0
    %v7746 = vadd.f32 0.0, %v7745
    %v7747 = vpop.f32.mrb[0].mxu0
    %v7748 = vpop.f32.mrb[0].mxu0
    %v7749 = vadd.f32 0.0, %v7748
    %v7750 = vpop.f32.mrb[0].mxu0
    %7751 = vmatprep.mubr.bf16.mxu0 0
    %7752 = vmatmul.mubr.bf16.gmra.mrb[0].mxu0 %v7524
    %v7753 = vpop.f32.mrb[0].mxu0
    %v7754 = vadd.f32 0.0, %v7753
    %v7755 = vpop.f32.mrb[0].mxu0
    %v7756 = vpop.f32.mrb[0].mxu0
    %v7757 = vadd.f32 0.0, %v7756
    %v7758 = vpop.f32.mrb[0].mxu0
    %7759 = vmatprep.mubr.bf16.mxu0 0
    %7760 = vmatmul.mubr.bf16.gmra.mrb[0].mxu0 %v7527
    %v7761 = vpop.f32.mrb[0].mxu0
    %v7762 = vadd.f32 0.0, %v7761
    %v7763 = vpop.f32.mrb[0].mxu0
    %v7764 = vpop.f32.mrb[0].mxu0
    %v7765 = vadd.f32 0.0, %v7764
    %v7766 = vpop.f32.mrb[0].mxu0
    %7767 = vmatprep.mubr.bf16.mxu0 0
    %7768 = vmatmul.mubr.bf16.gmra.mrb[0].mxu0 %v7530
    %v7769 = vpop.f32.mrb[0].mxu0
    %v7770 = vadd.f32 0.0, %v7769
    %v7771 = vpop.f32.mrb[0].mxu0
    %v7772 = vpop.f32.mrb[0].mxu0
    %v7773 = vadd.f32 0.0, %v7772
    %v7774 = vpop.f32.mrb[0].mxu0
    %7775 = vmatprep.mubr.bf16.mxu0 0
    %7776 = vmatmul.mubr.bf16.gmra.mrb[0].mxu0 %v7533
    %v7777 = vpop.f32.mrb[0].mxu0
    %v7778 = vadd.f32 0.0, %v7777
    %v7779 = vpop.f32.mrb[0].mxu0
    %v7780 = vpop.f32.mrb[0].mxu0
    %v7781 = vadd.f32 0.0, %v7780
    %v7782 = vpop.f32.mrb[0].mxu0
    %7783 = vmatprep.mubr.bf16.mxu0 0
    %7784 = vmatmul.mubr.bf16.gmra.mrb[0].mxu0 %v7536
    %v7785 = vpop.f32.mrb[0].mxu0
    %v7786 = vadd.f32 0.0, %v7785
    %v7787 = vpop.f32.mrb[0].mxu0
    %v7788 = vpop.f32.mrb[0].mxu0
    %v7789 = vadd.f32 0.0, %v7788
    %v7790 = vpop.f32.mrb[0].mxu0
    %7791 = vmatprep.mubr.bf16.mxu0 0
    %7792 = vmatmul.mubr.bf16.gmra.mrb[0].mxu0 %v7539
    %v7793 = vpop.f32.mrb[0].mxu0
    %v7794 = vadd.f32 0.0, %v7793
    %v7795 = vpop.f32.mrb[0].mxu0
    %v7796 = vpop.f32.mrb[0].mxu0
    %v7797 = vadd.f32 0.0, %v7796
    %v7798 = vpop.f32.mrb[0].mxu0
    %7799 = vmatprep.mubr.bf16.mxu0 0
    %7800 = vmatmul.mubr.bf16.gmra.mrb[0].mxu0 %v7542
    %v7801 = vpop.f32.mrb[0].mxu0
    %v7802 = vadd.f32 0.0, %v7801
    %v7803 = vpop.f32.mrb[0].mxu0
    %v7804 = vpop.f32.mrb[0].mxu0
    %v7805 = vadd.f32 0.0, %v7804
    %v7806 = vpop.f32.mrb[0].mxu0
    %7807 = vmatprep.mubr.bf16.mxu0 0
    %7808 = vmatmul.mubr.bf16.gmra.mrb[0].mxu0 %v7545
    %v7809 = vpop.f32.mrb[0].mxu0
    %v7810 = vadd.f32 0.0, %v7809
    %v7811 = vpop.f32.mrb[0].mxu0
    %v7812 = vpop.f32.mrb[0].mxu0
    %v7813 = vadd.f32 0.0, %v7812
    %v7814 = vpop.f32.mrb[0].mxu0
    %7815 = vmatprep.mubr.bf16.mxu0 0
    %7816 = vmatmul.mubr.bf16.gmra.mrb[0].mxu0 %v7548
    %v7817 = vpop.f32.mrb[0].mxu0
    %v7818 = vadd.f32 0.0, %v7817
    %v7819 = vpop.f32.mrb[0].mxu0
    %v7820 = vpop.f32.mrb[0].mxu0
    %v7821 = vadd.f32 0.0, %v7820
    %v7822 = vpop.f32.mrb[0].mxu0
    %7823 = vmatprep.mubr.bf16.mxu0 0
    %7824 = vmatmul.mubr.bf16.gmra.mrb[0].mxu0 %v7551
    %v7825 = vpop.f32.mrb[0].mxu0
    %v7826 = vadd.f32 0.0, %v7825
    %v7827 = vpop.f32.mrb[0].mxu0
    %v7828 = vpop.f32.mrb[0].mxu0
    %v7829 = vadd.f32 0.0, %v7828
    %v7830 = vpop.f32.mrb[0].mxu0
    %7831 = vmatprep.mubr.bf16.mxu0 0
    %7832 = vmatmul.mubr.bf16.gmra.mrb[0].mxu0 %v7554
    %v7833 = vpop.f32.mrb[0].mxu0
    %v7834 = vadd.f32 0.0, %v7833
    %v7835 = vpop.f32.mrb[0].mxu0
    %v7836 = vpop.f32.mrb[0].mxu0
    %v7837 = vadd.f32 0.0, %v7836
    %v7838 = vpop.f32.mrb[0].mxu0
    %7839 = vmatprep.mubr.bf16.mxu0 0
    %7840 = vmatmul.mubr.bf16.gmra.mrb[0].mxu0 %v7557
    %v7841 = vpop.f32.mrb[0].mxu0
    %v7842 = vadd.f32 0.0, %v7841
    %v7843 = vpop.f32.mrb[0].mxu0
    %v7844 = vpop.f32.mrb[0].mxu0
    %v7845 = vadd.f32 0.0, %v7844
    %v7846 = vpop.f32.mrb[0].mxu0
    %7847 = vdwg.mxu0
    %v7848 = vadd.f32 %v7334, %v7594
    %v7849 = vadd.f32 %v7335, %v7597
    %v7850 = vadd.f32 %v7336, %v7602
    %v7851 = vadd.f32 %v7337, %v7605
    %v7852 = vadd.f32 %v7338, %v7610
    %v7853 = vadd.f32 %v7339, %v7613
    %v7854 = vadd.f32 %v7340, %v7618
    %v7855 = vadd.f32 %v7341, %v7621
    %v7856 = vadd.f32 %v7342, %v7626
    %v7857 = vadd.f32 %v7343, %v7629
    %v7858 = vadd.f32 %v7344, %v7634
    %v7859 = vadd.f32 %v7345, %v7637
    %v7860 = vadd.f32 %v7346, %v7642
    %v7861 = vadd.f32 %v7347, %v7645
    %v7862 = vadd.f32 %v7348, %v7650
    %v7863 = vadd.f32 %v7349, %v7653
    %v7864 = vadd.f32 %v7350, %v7658
    %v7865 = vadd.f32 %v7351, %v7661
    %v7866 = vadd.f32 %v7352, %v7666
    %v7867 = vadd.f32 %v7353, %v7669
    %v7868 = vadd.f32 %v7354, %v7674
    %v7869 = vadd.f32 %v7355, %v7677
    %v7870 = vadd.f32 %v7356, %v7682
    %v7871 = vadd.f32 %v7357, %v7685
    %v7872 = vadd.f32 %v7358, %v7690
    %v7873 = vadd.f32 %v7359, %v7693
    %v7874 = vadd.f32 %v7360, %v7698
    %v7875 = vadd.f32 %v7361, %v7701
    %v7876 = vadd.f32 %v7362, %v7706
    %v7877 = vadd.f32 %v7363, %v7709
    %v7878 = vadd.f32 %v7364, %v7714
    %v7879 = vadd.f32 %v7365, %v7717
    %v7880 = vadd.f32 %v7366, %v7722
    %v7881 = vadd.f32 %v7367, %v7725
    %v7882 = vadd.f32 %v7368, %v7730
    %v7883 = vadd.f32 %v7369, %v7733
    %v7884 = vadd.f32 %v7370, %v7738
    %v7885 = vadd.f32 %v7371, %v7741
    %v7886 = vadd.f32 %v7372, %v7746
    %v7887 = vadd.f32 %v7373, %v7749
    %v7888 = vadd.f32 %v7374, %v7754
    %v7889 = vadd.f32 %v7375, %v7757
    %v7890 = vadd.f32 %v7376, %v7762
    %v7891 = vadd.f32 %v7377, %v7765
    %v7892 = vadd.f32 %v7378, %v7770
    %v7893 = vadd.f32 %v7379, %v7773
    %v7894 = vadd.f32 %v7380, %v7778
    %v7895 = vadd.f32 %v7381, %v7781
    %v7896 = vadd.f32 %v7382, %v7786
    %v7897 = vadd.f32 %v7383, %v7789
    %v7898 = vadd.f32 %v7384, %v7794
    %v7899 = vadd.f32 %v7385, %v7797
    %v7900 = vadd.f32 %v7386, %v7802
    %v7901 = vadd.f32 %v7387, %v7805
    %v7902 = vadd.f32 %v7388, %v7810
    %v7903 = vadd.f32 %v7389, %v7813
    %v7904 = vadd.f32 %v7390, %v7818
    %v7905 = vadd.f32 %v7391, %v7821
    %v7906 = vadd.f32 %v7392, %v7826
    %v7907 = vadd.f32 %v7393, %v7829
    %v7908 = vadd.f32 %v7394, %v7834
    %v7909 = vadd.f32 %v7395, %v7837
    %v7910 = vadd.f32 %v7396, %v7842
    %v7911 = vadd.f32 %v7397, %v7845
    %s7912 = scalar_lea.vmem %s2, 96
    %v7913 = vld [vmem:[%s7912] sm:$0xf]
    %v7914 = vld [vmem:[%s7912 + $0x4] sm:$0xf]
    %v7915 = vld [vmem:[%s7912 + $0x8] sm:$0xf]
    %v7916 = vld [vmem:[%s7912 + $0xc] sm:$0xf]
    %v7917 = vld [vmem:[%s7912 + $0x10] sm:$0xf]
    %v7918 = vld [vmem:[%s7912 + $0x14] sm:$0xf]
    %v7919 = vld [vmem:[%s7912 + $0x18] sm:$0xf]
    %v7920 = vld [vmem:[%s7912 + $0x1c] sm:$0xf]
    %v7929 = vunpack.c.l.b16 %v7913
    %v7930 = vunpack.c.l.b16 %v7914
    %v7931 = vunpack.c.l.b16 %v7915
    %v7932 = vunpack.c.l.b16 %v7916
    %v7933 = vunpack.c.l.b16 %v7917
    %v7934 = vunpack.c.l.b16 %v7918
    %v7935 = vunpack.c.l.b16 %v7919
    %v7936 = vunpack.c.l.b16 %v7920
    %v7937 = vpack.c.b16 %v7930, %v7929
    %v7938 = vpack.c.b16 %v7932, %v7931
    %v7939 = vpack.c.b16 %v7934, %v7933
    %v7940 = vpack.c.b16 %v7936, %v7935
    %7945 = vmatprep.subr.bf16.mxu0 0
    %7946 = vmatpush1.bf16.msra.mxu0 %v7937
    %7947 = vmatprep.subr.bf16.mxu0 0
    %7948 = vmatpush1.bf16.msra.mxu0 %v7938
    %7949 = vmatprep.subr.bf16.mxu0 0
    %7950 = vmatpush1.bf16.msra.mxu0 %v7939
    %7951 = vmatprep.subr.bf16.mxu0 0
    %7952 = vmatpush1.bf16.msra.mxu0 %v7940
    %7953 = vmatprep.subr.bf16.mxu0 0
    %7954 = vmatpush1.bf16.msra.mxu0 0
    %7955 = vmatprep.subr.bf16.mxu0 0
    %7956 = vmatpush1.bf16.msra.mxu0 0
    %7957 = vmatprep.subr.bf16.mxu0 0
    %7958 = vmatpush1.bf16.msra.mxu0 0
    %7959 = vmatprep.subr.bf16.mxu0 0
    %7960 = vmatpush1.bf16.msra.mxu0 0
    %7961 = vmatprep.subr.bf16.mxu0 0
    %7962 = vmatpush1.bf16.msra.mxu0 0
    %7963 = vmatprep.subr.bf16.mxu0 0
    %7964 = vmatpush1.bf16.msra.mxu0 0
    %7965 = vmatprep.subr.bf16.mxu0 0
    %7966 = vmatpush1.bf16.msra.mxu0 0
    %7967 = vmatprep.subr.bf16.mxu0 0
    %7968 = vmatpush1.bf16.msra.mxu0 0
    %7969 = vmatprep.subr.bf16.mxu0 0
    %7970 = vmatpush1.bf16.msra.mxu0 0
    %7971 = vmatprep.subr.bf16.mxu0 0
    %7972 = vmatpush1.bf16.msra.mxu0 0
    %7973 = vmatprep.subr.bf16.mxu0 0
    %7974 = vmatpush1.bf16.msra.mxu0 0
    %7975 = vmatprep.subr.bf16.mxu0 0
    %7976 = vmatpush1.bf16.msra.mxu0 0
    %7977 = vmatprep.mubr.bf16.mxu0 0
    %7978 = vmatmul.mubr.bf16.gmra.mrb[0].mxu0 %v7464
    %v7979 = vpop.f32.mrb[0].mxu0
    %v7980 = vadd.f32 0.0, %v7979
    %v7981 = vpop.f32.mrb[0].mxu0
    %v7982 = vpop.f32.mrb[0].mxu0
    %v7983 = vadd.f32 0.0, %v7982
    %v7984 = vpop.f32.mrb[0].mxu0
    %7985 = vmatprep.mubr.bf16.mxu0 0
    %7986 = vmatmul.mubr.bf16.gmra.mrb[0].mxu0 %v7467
    %v7987 = vpop.f32.mrb[0].mxu0
    %v7988 = vadd.f32 0.0, %v7987
    %v7989 = vpop.f32.mrb[0].mxu0
    %v7990 = vpop.f32.mrb[0].mxu0
    %v7991 = vadd.f32 0.0, %v7990
    %v7992 = vpop.f32.mrb[0].mxu0
    %7993 = vmatprep.mubr.bf16.mxu0 0
    %7994 = vmatmul.mubr.bf16.gmra.mrb[0].mxu0 %v7470
    %v7995 = vpop.f32.mrb[0].mxu0
    %v7996 = vadd.f32 0.0, %v7995
    %v7997 = vpop.f32.mrb[0].mxu0
    %v7998 = vpop.f32.mrb[0].mxu0
    %v7999 = vadd.f32 0.0, %v7998
    %v8000 = vpop.f32.mrb[0].mxu0
    %8001 = vmatprep.mubr.bf16.mxu0 0
    %8002 = vmatmul.mubr.bf16.gmra.mrb[0].mxu0 %v7473
    %v8003 = vpop.f32.mrb[0].mxu0
    %v8004 = vadd.f32 0.0, %v8003
    %v8005 = vpop.f32.mrb[0].mxu0
    %v8006 = vpop.f32.mrb[0].mxu0
    %v8007 = vadd.f32 0.0, %v8006
    %v8008 = vpop.f32.mrb[0].mxu0
    %8009 = vmatprep.mubr.bf16.mxu0 0
    %8010 = vmatmul.mubr.bf16.gmra.mrb[0].mxu0 %v7476
    %v8011 = vpop.f32.mrb[0].mxu0
    %v8012 = vadd.f32 0.0, %v8011
    %v8013 = vpop.f32.mrb[0].mxu0
    %v8014 = vpop.f32.mrb[0].mxu0
    %v8015 = vadd.f32 0.0, %v8014
    %v8016 = vpop.f32.mrb[0].mxu0
    %8017 = vmatprep.mubr.bf16.mxu0 0
    %8018 = vmatmul.mubr.bf16.gmra.mrb[0].mxu0 %v7479
    %v8019 = vpop.f32.mrb[0].mxu0
    %v8020 = vadd.f32 0.0, %v8019
    %v8021 = vpop.f32.mrb[0].mxu0
    %v8022 = vpop.f32.mrb[0].mxu0
    %v8023 = vadd.f32 0.0, %v8022
    %v8024 = vpop.f32.mrb[0].mxu0
    %8025 = vmatprep.mubr.bf16.mxu0 0
    %8026 = vmatmul.mubr.bf16.gmra.mrb[0].mxu0 %v7482
    %v8027 = vpop.f32.mrb[0].mxu0
    %v8028 = vadd.f32 0.0, %v8027
    %v8029 = vpop.f32.mrb[0].mxu0
    %v8030 = vpop.f32.mrb[0].mxu0
    %v8031 = vadd.f32 0.0, %v8030
    %v8032 = vpop.f32.mrb[0].mxu0
    %8033 = vmatprep.mubr.bf16.mxu0 0
    %8034 = vmatmul.mubr.bf16.gmra.mrb[0].mxu0 %v7485
    %v8035 = vpop.f32.mrb[0].mxu0
    %v8036 = vadd.f32 0.0, %v8035
    %v8037 = vpop.f32.mrb[0].mxu0
    %v8038 = vpop.f32.mrb[0].mxu0
    %v8039 = vadd.f32 0.0, %v8038
    %v8040 = vpop.f32.mrb[0].mxu0
    %8041 = vmatprep.mubr.bf16.mxu0 0
    %8042 = vmatmul.mubr.bf16.gmra.mrb[0].mxu0 %v7488
    %v8043 = vpop.f32.mrb[0].mxu0
    %v8044 = vadd.f32 0.0, %v8043
    %v8045 = vpop.f32.mrb[0].mxu0
    %v8046 = vpop.f32.mrb[0].mxu0
    %v8047 = vadd.f32 0.0, %v8046
    %v8048 = vpop.f32.mrb[0].mxu0
    %8049 = vmatprep.mubr.bf16.mxu0 0
    %8050 = vmatmul.mubr.bf16.gmra.mrb[0].mxu0 %v7491
    %v8051 = vpop.f32.mrb[0].mxu0
    %v8052 = vadd.f32 0.0, %v8051
    %v8053 = vpop.f32.mrb[0].mxu0
    %v8054 = vpop.f32.mrb[0].mxu0
    %v8055 = vadd.f32 0.0, %v8054
    %v8056 = vpop.f32.mrb[0].mxu0
    %8057 = vmatprep.mubr.bf16.mxu0 0
    %8058 = vmatmul.mubr.bf16.gmra.mrb[0].mxu0 %v7494
    %v8059 = vpop.f32.mrb[0].mxu0
    %v8060 = vadd.f32 0.0, %v8059
    %v8061 = vpop.f32.mrb[0].mxu0
    %v8062 = vpop.f32.mrb[0].mxu0
    %v8063 = vadd.f32 0.0, %v8062
    %v8064 = vpop.f32.mrb[0].mxu0
    %8065 = vmatprep.mubr.bf16.mxu0 0
    %8066 = vmatmul.mubr.bf16.gmra.mrb[0].mxu0 %v7497
    %v8067 = vpop.f32.mrb[0].mxu0
    %v8068 = vadd.f32 0.0, %v8067
    %v8069 = vpop.f32.mrb[0].mxu0
    %v8070 = vpop.f32.mrb[0].mxu0
    %v8071 = vadd.f32 0.0, %v8070
    %v8072 = vpop.f32.mrb[0].mxu0
    %8073 = vmatprep.mubr.bf16.mxu0 0
    %8074 = vmatmul.mubr.bf16.gmra.mrb[0].mxu0 %v7500
    %v8075 = vpop.f32.mrb[0].mxu0
    %v8076 = vadd.f32 0.0, %v8075
    %v8077 = vpop.f32.mrb[0].mxu0
    %v8078 = vpop.f32.mrb[0].mxu0
    %v8079 = vadd.f32 0.0, %v8078
    %v8080 = vpop.f32.mrb[0].mxu0
    %8081 = vmatprep.mubr.bf16.mxu0 0
    %8082 = vmatmul.mubr.bf16.gmra.mrb[0].mxu0 %v7503
    %v8083 = vpop.f32.mrb[0].mxu0
    %v8084 = vadd.f32 0.0, %v8083
    %v8085 = vpop.f32.mrb[0].mxu0
    %v8086 = vpop.f32.mrb[0].mxu0
    %v8087 = vadd.f32 0.0, %v8086
    %v8088 = vpop.f32.mrb[0].mxu0
    %8089 = vmatprep.mubr.bf16.mxu0 0
    %8090 = vmatmul.mubr.bf16.gmra.mrb[0].mxu0 %v7506
    %v8091 = vpop.f32.mrb[0].mxu0
    %v8092 = vadd.f32 0.0, %v8091
    %v8093 = vpop.f32.mrb[0].mxu0
    %v8094 = vpop.f32.mrb[0].mxu0
    %v8095 = vadd.f32 0.0, %v8094
    %v8096 = vpop.f32.mrb[0].mxu0
    %8097 = vmatprep.mubr.bf16.mxu0 0
    %8098 = vmatmul.mubr.bf16.gmra.mrb[0].mxu0 %v7509
    %v8099 = vpop.f32.mrb[0].mxu0
    %v8100 = vadd.f32 0.0, %v8099
    %v8101 = vpop.f32.mrb[0].mxu0
    %v8102 = vpop.f32.mrb[0].mxu0
    %v8103 = vadd.f32 0.0, %v8102
    %v8104 = vpop.f32.mrb[0].mxu0
    %8105 = vmatprep.mubr.bf16.mxu0 0
    %8106 = vmatmul.mubr.bf16.gmra.mrb[0].mxu0 %v7512
    %v8107 = vpop.f32.mrb[0].mxu0
    %v8108 = vadd.f32 0.0, %v8107
    %v8109 = vpop.f32.mrb[0].mxu0
    %v8110 = vpop.f32.mrb[0].mxu0
    %v8111 = vadd.f32 0.0, %v8110
    %v8112 = vpop.f32.mrb[0].mxu0
    %8113 = vmatprep.mubr.bf16.mxu0 0
    %8114 = vmatmul.mubr.bf16.gmra.mrb[0].mxu0 %v7515
    %v8115 = vpop.f32.mrb[0].mxu0
    %v8116 = vadd.f32 0.0, %v8115
    %v8117 = vpop.f32.mrb[0].mxu0
    %v8118 = vpop.f32.mrb[0].mxu0
    %v8119 = vadd.f32 0.0, %v8118
    %v8120 = vpop.f32.mrb[0].mxu0
    %8121 = vmatprep.mubr.bf16.mxu0 0
    %8122 = vmatmul.mubr.bf16.gmra.mrb[0].mxu0 %v7518
    %v8123 = vpop.f32.mrb[0].mxu0
    %v8124 = vadd.f32 0.0, %v8123
    %v8125 = vpop.f32.mrb[0].mxu0
    %v8126 = vpop.f32.mrb[0].mxu0
    %v8127 = vadd.f32 0.0, %v8126
    %v8128 = vpop.f32.mrb[0].mxu0
    %8129 = vmatprep.mubr.bf16.mxu0 0
    %8130 = vmatmul.mubr.bf16.gmra.mrb[0].mxu0 %v7521
    %v8131 = vpop.f32.mrb[0].mxu0
    %v8132 = vadd.f32 0.0, %v8131
    %v8133 = vpop.f32.mrb[0].mxu0
    %v8134 = vpop.f32.mrb[0].mxu0
    %v8135 = vadd.f32 0.0, %v8134
    %v8136 = vpop.f32.mrb[0].mxu0
    %8137 = vmatprep.mubr.bf16.mxu0 0
    %8138 = vmatmul.mubr.bf16.gmra.mrb[0].mxu0 %v7524
    %v8139 = vpop.f32.mrb[0].mxu0
    %v8140 = vadd.f32 0.0, %v8139
    %v8141 = vpop.f32.mrb[0].mxu0
    %v8142 = vpop.f32.mrb[0].mxu0
    %v8143 = vadd.f32 0.0, %v8142
    %v8144 = vpop.f32.mrb[0].mxu0
    %8145 = vmatprep.mubr.bf16.mxu0 0
    %8146 = vmatmul.mubr.bf16.gmra.mrb[0].mxu0 %v7527
    %v8147 = vpop.f32.mrb[0].mxu0
    %v8148 = vadd.f32 0.0, %v8147
    %v8149 = vpop.f32.mrb[0].mxu0
    %v8150 = vpop.f32.mrb[0].mxu0
    %v8151 = vadd.f32 0.0, %v8150
    %v8152 = vpop.f32.mrb[0].mxu0
    %8153 = vmatprep.mubr.bf16.mxu0 0
    %8154 = vmatmul.mubr.bf16.gmra.mrb[0].mxu0 %v7530
    %v8155 = vpop.f32.mrb[0].mxu0
    %v8156 = vadd.f32 0.0, %v8155
    %v8157 = vpop.f32.mrb[0].mxu0
    %v8158 = vpop.f32.mrb[0].mxu0
    %v8159 = vadd.f32 0.0, %v8158
    %v8160 = vpop.f32.mrb[0].mxu0
    %8161 = vmatprep.mubr.bf16.mxu0 0
    %8162 = vmatmul.mubr.bf16.gmra.mrb[0].mxu0 %v7533
    %v8163 = vpop.f32.mrb[0].mxu0
    %v8164 = vadd.f32 0.0, %v8163
    %v8165 = vpop.f32.mrb[0].mxu0
    %v8166 = vpop.f32.mrb[0].mxu0
    %v8167 = vadd.f32 0.0, %v8166
    %v8168 = vpop.f32.mrb[0].mxu0
    %8169 = vmatprep.mubr.bf16.mxu0 0
    %8170 = vmatmul.mubr.bf16.gmra.mrb[0].mxu0 %v7536
    %v8171 = vpop.f32.mrb[0].mxu0
    %v8172 = vadd.f32 0.0, %v8171
    %v8173 = vpop.f32.mrb[0].mxu0
    %v8174 = vpop.f32.mrb[0].mxu0
    %v8175 = vadd.f32 0.0, %v8174
    %v8176 = vpop.f32.mrb[0].mxu0
    %8177 = vmatprep.mubr.bf16.mxu0 0
    %8178 = vmatmul.mubr.bf16.gmra.mrb[0].mxu0 %v7539
    %v8179 = vpop.f32.mrb[0].mxu0
    %v8180 = vadd.f32 0.0, %v8179
    %v8181 = vpop.f32.mrb[0].mxu0
    %v8182 = vpop.f32.mrb[0].mxu0
    %v8183 = vadd.f32 0.0, %v8182
    %v8184 = vpop.f32.mrb[0].mxu0
    %8185 = vmatprep.mubr.bf16.mxu0 0
    %8186 = vmatmul.mubr.bf16.gmra.mrb[0].mxu0 %v7542
    %v8187 = vpop.f32.mrb[0].mxu0
    %v8188 = vadd.f32 0.0, %v8187
    %v8189 = vpop.f32.mrb[0].mxu0
    %v8190 = vpop.f32.mrb[0].mxu0
    %v8191 = vadd.f32 0.0, %v8190
    %v8192 = vpop.f32.mrb[0].mxu0
    %8193 = vmatprep.mubr.bf16.mxu0 0
    %8194 = vmatmul.mubr.bf16.gmra.mrb[0].mxu0 %v7545
    %v8195 = vpop.f32.mrb[0].mxu0
    %v8196 = vadd.f32 0.0, %v8195
    %v8197 = vpop.f32.mrb[0].mxu0
    %v8198 = vpop.f32.mrb[0].mxu0
    %v8199 = vadd.f32 0.0, %v8198
    %v8200 = vpop.f32.mrb[0].mxu0
    %8201 = vmatprep.mubr.bf16.mxu0 0
    %8202 = vmatmul.mubr.bf16.gmra.mrb[0].mxu0 %v7548
    %v8203 = vpop.f32.mrb[0].mxu0
    %v8204 = vadd.f32 0.0, %v8203
    %v8205 = vpop.f32.mrb[0].mxu0
    %v8206 = vpop.f32.mrb[0].mxu0
    %v8207 = vadd.f32 0.0, %v8206
    %v8208 = vpop.f32.mrb[0].mxu0
    %8209 = vmatprep.mubr.bf16.mxu0 0
    %8210 = vmatmul.mubr.bf16.gmra.mrb[0].mxu0 %v7551
    %v8211 = vpop.f32.mrb[0].mxu0
    %v8212 = vadd.f32 0.0, %v8211
    %v8213 = vpop.f32.mrb[0].mxu0
    %v8214 = vpop.f32.mrb[0].mxu0
    %v8215 = vadd.f32 0.0, %v8214
    %v8216 = vpop.f32.mrb[0].mxu0
    %8217 = vmatprep.mubr.bf16.mxu0 0
    %8218 = vmatmul.mubr.bf16.gmra.mrb[0].mxu0 %v7554
    %v8219 = vpop.f32.mrb[0].mxu0
    %v8220 = vadd.f32 0.0, %v8219
    %v8221 = vpop.f32.mrb[0].mxu0
    %v8222 = vpop.f32.mrb[0].mxu0
    %v8223 = vadd.f32 0.0, %v8222
    %v8224 = vpop.f32.mrb[0].mxu0
    %8225 = vmatprep.mubr.bf16.mxu0 0
    %8226 = vmatmul.mubr.bf16.gmra.mrb[0].mxu0 %v7557
    %v8227 = vpop.f32.mrb[0].mxu0
    %v8228 = vadd.f32 0.0, %v8227
    %v8229 = vpop.f32.mrb[0].mxu0
    %v8230 = vpop.f32.mrb[0].mxu0
    %v8231 = vadd.f32 0.0, %v8230
    %v8232 = vpop.f32.mrb[0].mxu0
    %8233 = vdwg.mxu0
    %v8234 = vrot.slane %v7980, 7
    %v8235 = vrot.slane %v7983, 7
    %v8236 = vrot.slane %v7988, 7
    %v8237 = vrot.slane %v7991, 7
    %v8238 = vrot.slane %v7996, 7
    %v8239 = vrot.slane %v7999, 7
    %v8240 = vrot.slane %v8004, 7
    %v8241 = vrot.slane %v8007, 7
    %v8242 = vrot.slane %v8012, 7
    %v8243 = vrot.slane %v8015, 7
    %v8244 = vrot.slane %v8020, 7
    %v8245 = vrot.slane %v8023, 7
    %v8246 = vrot.slane %v8028, 7
    %v8247 = vrot.slane %v8031, 7
    %v8248 = vrot.slane %v8036, 7
    %v8249 = vrot.slane %v8039, 7
    %v8250 = vrot.slane %v8044, 7
    %v8251 = vrot.slane %v8047, 7
    %v8252 = vrot.slane %v8052, 7
    %v8253 = vrot.slane %v8055, 7
    %v8254 = vrot.slane %v8060, 7
    %v8255 = vrot.slane %v8063, 7
    %v8256 = vrot.slane %v8068, 7
    %v8257 = vrot.slane %v8071, 7
    %v8258 = vrot.slane %v8076, 7
    %v8259 = vrot.slane %v8079, 7
    %v8260 = vrot.slane %v8084, 7
    %v8261 = vrot.slane %v8087, 7
    %v8262 = vrot.slane %v8092, 7
    %v8263 = vrot.slane %v8095, 7
    %v8264 = vrot.slane %v8100, 7
    %v8265 = vrot.slane %v8103, 7
    %v8266 = vrot.slane %v8108, 7
    %v8267 = vrot.slane %v8111, 7
    %v8268 = vrot.slane %v8116, 7
    %v8269 = vrot.slane %v8119, 7
    %v8270 = vrot.slane %v8124, 7
    %v8271 = vrot.slane %v8127, 7
    %v8272 = vrot.slane %v8132, 7
    %v8273 = vrot.slane %v8135, 7
    %v8274 = vrot.slane %v8140, 7
    %v8275 = vrot.slane %v8143, 7
    %v8276 = vrot.slane %v8148, 7
    %v8277 = vrot.slane %v8151, 7
    %v8278 = vrot.slane %v8156, 7
    %v8279 = vrot.slane %v8159, 7
    %v8280 = vrot.slane %v8164, 7
    %v8281 = vrot.slane %v8167, 7
    %v8282 = vrot.slane %v8172, 7
    %v8283 = vrot.slane %v8175, 7
    %v8284 = vrot.slane %v8180, 7
    %v8285 = vrot.slane %v8183, 7
    %v8286 = vrot.slane %v8188, 7
    %v8287 = vrot.slane %v8191, 7
    %v8288 = vrot.slane %v8196, 7
    %v8289 = vrot.slane %v8199, 7
    %v8290 = vrot.slane %v8204, 7
    %v8291 = vrot.slane %v8207, 7
    %v8292 = vrot.slane %v8212, 7
    %v8293 = vrot.slane %v8215, 7
    %v8294 = vrot.slane %v8220, 7
    %v8295 = vrot.slane %v8223, 7
    %v8296 = vrot.slane %v8228, 7
    %v8297 = vrot.slane %v8231, 7
    %v8298 = vsel %vm697, %v8296, %v8297
    %v8299 = vsel %vm697, %v8295, %v8296
    %v8300 = vsel %vm697, %v8294, %v8295
    %v8301 = vsel %vm697, %v8293, %v8294
    %v8302 = vsel %vm697, %v8292, %v8293
    %v8303 = vsel %vm697, %v8291, %v8292
    %v8304 = vsel %vm697, %v8290, %v8291
    %v8305 = vsel %vm697, %v8289, %v8290
    %v8306 = vsel %vm697, %v8288, %v8289
    %v8307 = vsel %vm697, %v8287, %v8288
    %v8308 = vsel %vm697, %v8286, %v8287
    %v8309 = vsel %vm697, %v8285, %v8286
    %v8310 = vsel %vm697, %v8284, %v8285
    %v8311 = vsel %vm697, %v8283, %v8284
    %v8312 = vsel %vm697, %v8282, %v8283
    %v8313 = vsel %vm697, %v8281, %v8282
    %v8314 = vsel %vm697, %v8280, %v8281
    %v8315 = vsel %vm697, %v8279, %v8280
    %v8316 = vsel %vm697, %v8278, %v8279
    %v8317 = vsel %vm697, %v8277, %v8278
    %v8318 = vsel %vm697, %v8276, %v8277
    %v8319 = vsel %vm697, %v8275, %v8276
    %v8320 = vsel %vm697, %v8274, %v8275
    %v8321 = vsel %vm697, %v8273, %v8274
    %v8322 = vsel %vm697, %v8272, %v8273
    %v8323 = vsel %vm697, %v8271, %v8272
    %v8324 = vsel %vm697, %v8270, %v8271
    %v8325 = vsel %vm697, %v8269, %v8270
    %v8326 = vsel %vm697, %v8268, %v8269
    %v8327 = vsel %vm697, %v8267, %v8268
    %v8328 = vsel %vm697, %v8266, %v8267
    %v8329 = vsel %vm697, %v8265, %v8266
    %v8330 = vsel %vm697, %v8264, %v8265
    %v8331 = vsel %vm697, %v8263, %v8264
    %v8332 = vsel %vm697, %v8262, %v8263
    %v8333 = vsel %vm697, %v8261, %v8262
    %v8334 = vsel %vm697, %v8260, %v8261
    %v8335 = vsel %vm697, %v8259, %v8260
    %v8336 = vsel %vm697, %v8258, %v8259
    %v8337 = vsel %vm697, %v8257, %v8258
    %v8338 = vsel %vm697, %v8256, %v8257
    %v8339 = vsel %vm697, %v8255, %v8256
    %v8340 = vsel %vm697, %v8254, %v8255
    %v8341 = vsel %vm697, %v8253, %v8254
    %v8342 = vsel %vm697, %v8252, %v8253
    %v8343 = vsel %vm697, %v8251, %v8252
    %v8344 = vsel %vm697, %v8250, %v8251
    %v8345 = vsel %vm697, %v8249, %v8250
    %v8346 = vsel %vm697, %v8248, %v8249
    %v8347 = vsel %vm697, %v8247, %v8248
    %v8348 = vsel %vm697, %v8246, %v8247
    %v8349 = vsel %vm697, %v8245, %v8246
    %v8350 = vsel %vm697, %v8244, %v8245
    %v8351 = vsel %vm697, %v8243, %v8244
    %v8352 = vsel %vm697, %v8242, %v8243
    %v8353 = vsel %vm697, %v8241, %v8242
    %v8354 = vsel %vm697, %v8240, %v8241
    %v8355 = vsel %vm697, %v8239, %v8240
    %v8356 = vsel %vm697, %v8238, %v8239
    %v8357 = vsel %vm697, %v8237, %v8238
    %v8358 = vsel %vm697, %v8236, %v8237
    %v8359 = vsel %vm697, %v8235, %v8236
    %v8360 = vsel %vm697, %v8234, %v8235
    %v8361 = vsel %vm697, %v8297, %v8234
    %v8362 = vsel %vm36, %v8361, 0.0
    %v8363 = vsel %vm37, %v8360, 0.0
    %v8364 = vsel %vm36, %v8359, 0.0
    %v8365 = vsel %vm37, %v8358, 0.0
    %v8366 = vsel %vm36, %v8357, 0.0
    %v8367 = vsel %vm37, %v8356, 0.0
    %v8368 = vsel %vm36, %v8355, 0.0
    %v8369 = vsel %vm37, %v8354, 0.0
    %v8370 = vsel %vm36, %v8353, 0.0
    %v8371 = vsel %vm37, %v8352, 0.0
    %v8372 = vsel %vm36, %v8351, 0.0
    %v8373 = vsel %vm37, %v8350, 0.0
    %v8374 = vsel %vm36, %v8349, 0.0
    %v8375 = vsel %vm37, %v8348, 0.0
    %v8376 = vsel %vm36, %v8347, 0.0
    %v8377 = vsel %vm37, %v8346, 0.0
    %v8378 = vsel %vm36, %v8345, 0.0
    %v8379 = vsel %vm37, %v8344, 0.0
    %v8380 = vsel %vm36, %v8343, 0.0
    %v8381 = vsel %vm37, %v8342, 0.0
    %v8382 = vsel %vm36, %v8341, 0.0
    %v8383 = vsel %vm37, %v8340, 0.0
    %v8384 = vsel %vm36, %v8339, 0.0
    %v8385 = vsel %vm37, %v8338, 0.0
    %v8386 = vsel %vm36, %v8337, 0.0
    %v8387 = vsel %vm37, %v8336, 0.0
    %v8388 = vsel %vm36, %v8335, 0.0
    %v8389 = vsel %vm37, %v8334, 0.0
    %v8390 = vsel %vm36, %v8333, 0.0
    %v8391 = vsel %vm37, %v8332, 0.0
    %v8392 = vsel %vm36, %v8331, 0.0
    %v8393 = vsel %vm37, %v8330, 0.0
    %v8394 = vsel %vm36, %v8329, 0.0
    %v8395 = vsel %vm37, %v8328, 0.0
    %v8396 = vsel %vm36, %v8327, 0.0
    %v8397 = vsel %vm37, %v8326, 0.0
    %v8398 = vsel %vm36, %v8325, 0.0
    %v8399 = vsel %vm37, %v8324, 0.0
    %v8400 = vsel %vm36, %v8323, 0.0
    %v8401 = vsel %vm37, %v8322, 0.0
    %v8402 = vsel %vm36, %v8321, 0.0
    %v8403 = vsel %vm37, %v8320, 0.0
    %v8404 = vsel %vm36, %v8319, 0.0
    %v8405 = vsel %vm37, %v8318, 0.0
    %v8406 = vsel %vm36, %v8317, 0.0
    %v8407 = vsel %vm37, %v8316, 0.0
    %v8408 = vsel %vm36, %v8315, 0.0
    %v8409 = vsel %vm37, %v8314, 0.0
    %v8410 = vsel %vm36, %v8313, 0.0
    %v8411 = vsel %vm37, %v8312, 0.0
    %v8412 = vsel %vm36, %v8311, 0.0
    %v8413 = vsel %vm37, %v8310, 0.0
    %v8414 = vsel %vm36, %v8309, 0.0
    %v8415 = vsel %vm37, %v8308, 0.0
    %v8416 = vsel %vm36, %v8307, 0.0
    %v8417 = vsel %vm37, %v8306, 0.0
    %v8418 = vsel %vm36, %v8305, 0.0
    %v8419 = vsel %vm37, %v8304, 0.0
    %v8420 = vsel %vm36, %v8303, 0.0
    %v8421 = vsel %vm37, %v8302, 0.0
    %v8422 = vsel %vm36, %v8301, 0.0
    %v8423 = vsel %vm37, %v8300, 0.0
    %v8424 = vsel %vm36, %v8299, 0.0
    %v8425 = vsel %vm37, %v8298, 0.0
    %v8426 = vadd.f32 %v7848, %v8362
    %v8427 = vadd.f32 %v7849, %v8363
    %v8428 = vadd.f32 %v7850, %v8364
    %v8429 = vadd.f32 %v7851, %v8365
    %v8430 = vadd.f32 %v7852, %v8366
    %v8431 = vadd.f32 %v7853, %v8367
    %v8432 = vadd.f32 %v7854, %v8368
    %v8433 = vadd.f32 %v7855, %v8369
    %v8434 = vadd.f32 %v7856, %v8370
    %v8435 = vadd.f32 %v7857, %v8371
    %v8436 = vadd.f32 %v7858, %v8372
    %v8437 = vadd.f32 %v7859, %v8373
    %v8438 = vadd.f32 %v7860, %v8374
    %v8439 = vadd.f32 %v7861, %v8375
    %v8440 = vadd.f32 %v7862, %v8376
    %v8441 = vadd.f32 %v7863, %v8377
    %v8442 = vadd.f32 %v7864, %v8378
    %v8443 = vadd.f32 %v7865, %v8379
    %v8444 = vadd.f32 %v7866, %v8380
    %v8445 = vadd.f32 %v7867, %v8381
    %v8446 = vadd.f32 %v7868, %v8382
    %v8447 = vadd.f32 %v7869, %v8383
    %v8448 = vadd.f32 %v7870, %v8384
    %v8449 = vadd.f32 %v7871, %v8385
    %v8450 = vadd.f32 %v7872, %v8386
    %v8451 = vadd.f32 %v7873, %v8387
    %v8452 = vadd.f32 %v7874, %v8388
    %v8453 = vadd.f32 %v7875, %v8389
    %v8454 = vadd.f32 %v7876, %v8390
    %v8455 = vadd.f32 %v7877, %v8391
    %v8456 = vadd.f32 %v7878, %v8392
    %v8457 = vadd.f32 %v7879, %v8393
    %v8458 = vadd.f32 %v7880, %v8394
    %v8459 = vadd.f32 %v7881, %v8395
    %v8460 = vadd.f32 %v7882, %v8396
    %v8461 = vadd.f32 %v7883, %v8397
    %v8462 = vadd.f32 %v7884, %v8398
    %v8463 = vadd.f32 %v7885, %v8399
    %v8464 = vadd.f32 %v7886, %v8400
    %v8465 = vadd.f32 %v7887, %v8401
    %v8466 = vadd.f32 %v7888, %v8402
    %v8467 = vadd.f32 %v7889, %v8403
    %v8468 = vadd.f32 %v7890, %v8404
    %v8469 = vadd.f32 %v7891, %v8405
    %v8470 = vadd.f32 %v7892, %v8406
    %v8471 = vadd.f32 %v7893, %v8407
    %v8472 = vadd.f32 %v7894, %v8408
    %v8473 = vadd.f32 %v7895, %v8409
    %v8474 = vadd.f32 %v7896, %v8410
    %v8475 = vadd.f32 %v7897, %v8411
    %v8476 = vadd.f32 %v7898, %v8412
    %v8477 = vadd.f32 %v7899, %v8413
    %v8478 = vadd.f32 %v7900, %v8414
    %v8479 = vadd.f32 %v7901, %v8415
    %v8480 = vadd.f32 %v7902, %v8416
    %v8481 = vadd.f32 %v7903, %v8417
    %v8482 = vadd.f32 %v7904, %v8418
    %v8483 = vadd.f32 %v7905, %v8419
    %v8484 = vadd.f32 %v7906, %v8420
    %v8485 = vadd.f32 %v7907, %v8421
    %v8486 = vadd.f32 %v7908, %v8422
    %v8487 = vadd.f32 %v7909, %v8423
    %v8488 = vadd.f32 %v7910, %v8424
    %v8489 = vadd.f32 %v7911, %v8425
    %s8490 = scalar_lea.vmem %s2, 160
    %v8491 = vld [vmem:[%s8490] sm:$0xf]
    %v8492 = vld [vmem:[%s8490 + $0x4] sm:$0xf]
    %v8493 = vld [vmem:[%s8490 + $0x8] sm:$0xf]
    %v8494 = vld [vmem:[%s8490 + $0xc] sm:$0xf]
    %v8495 = vld [vmem:[%s8490 + $0x10] sm:$0xf]
    %v8496 = vld [vmem:[%s8490 + $0x14] sm:$0xf]
    %v8497 = vld [vmem:[%s8490 + $0x18] sm:$0xf]
    %v8498 = vld [vmem:[%s8490 + $0x1c] sm:$0xf]
    %v8507 = vunpack.c.l.b16 %v8491
    %v8508 = vunpack.c.l.b16 %v8492
    %v8509 = vunpack.c.l.b16 %v8493
    %v8510 = vunpack.c.l.b16 %v8494
    %v8511 = vunpack.c.l.b16 %v8495
    %v8512 = vunpack.c.l.b16 %v8496
    %v8513 = vunpack.c.l.b16 %v8497
    %v8514 = vunpack.c.l.b16 %v8498
    %v8515 = vpack.c.b16 %v8508, %v8507
    %v8516 = vpack.c.b16 %v8510, %v8509
    %v8517 = vpack.c.b16 %v8512, %v8511
    %v8518 = vpack.c.b16 %v8514, %v8513
    %8523 = vmatprep.subr.bf16.mxu0 0
    %8524 = vmatpush1.bf16.msra.mxu0 %v8515
    %8525 = vmatprep.subr.bf16.mxu0 0
    %8526 = vmatpush1.bf16.msra.mxu0 %v8516
    %8527 = vmatprep.subr.bf16.mxu0 0
    %8528 = vmatpush1.bf16.msra.mxu0 %v8517
    %8529 = vmatprep.subr.bf16.mxu0 0
    %8530 = vmatpush1.bf16.msra.mxu0 %v8518
    %8531 = vmatprep.subr.bf16.mxu0 0
    %8532 = vmatpush1.bf16.msra.mxu0 0
    %8533 = vmatprep.subr.bf16.mxu0 0
    %8534 = vmatpush1.bf16.msra.mxu0 0
    %8535 = vmatprep.subr.bf16.mxu0 0
    %8536 = vmatpush1.bf16.msra.mxu0 0
    %8537 = vmatprep.subr.bf16.mxu0 0
    %8538 = vmatpush1.bf16.msra.mxu0 0
    %8539 = vmatprep.subr.bf16.mxu0 0
    %8540 = vmatpush1.bf16.msra.mxu0 0
    %8541 = vmatprep.subr.bf16.mxu0 0
    %8542 = vmatpush1.bf16.msra.mxu0 0
    %8543 = vmatprep.subr.bf16.mxu0 0
    %8544 = vmatpush1.bf16.msra.mxu0 0
    %8545 = vmatprep.subr.bf16.mxu0 0
    %8546 = vmatpush1.bf16.msra.mxu0 0
    %8547 = vmatprep.subr.bf16.mxu0 0
    %8548 = vmatpush1.bf16.msra.mxu0 0
    %8549 = vmatprep.subr.bf16.mxu0 0
    %8550 = vmatpush1.bf16.msra.mxu0 0
    %8551 = vmatprep.subr.bf16.mxu0 0
    %8552 = vmatpush1.bf16.msra.mxu0 0
    %8553 = vmatprep.subr.bf16.mxu0 0
    %8554 = vmatpush1.bf16.msra.mxu0 0
    %8555 = vmatprep.mubr.bf16.mxu0 0
    %8556 = vmatmul.mubr.bf16.gmra.mrb[0].mxu0 %v7464
    %v8557 = vpop.f32.mrb[0].mxu0
    %v8558 = vadd.f32 0.0, %v8557
    %v8559 = vpop.f32.mrb[0].mxu0
    %v8560 = vpop.f32.mrb[0].mxu0
    %v8561 = vadd.f32 0.0, %v8560
    %v8562 = vpop.f32.mrb[0].mxu0
    %8563 = vmatprep.mubr.bf16.mxu0 0
    %8564 = vmatmul.mubr.bf16.gmra.mrb[0].mxu0 %v7467
    %v8565 = vpop.f32.mrb[0].mxu0
    %v8566 = vadd.f32 0.0, %v8565
    %v8567 = vpop.f32.mrb[0].mxu0
    %v8568 = vpop.f32.mrb[0].mxu0
    %v8569 = vadd.f32 0.0, %v8568
    %v8570 = vpop.f32.mrb[0].mxu0
    %8571 = vmatprep.mubr.bf16.mxu0 0
    %8572 = vmatmul.mubr.bf16.gmra.mrb[0].mxu0 %v7470
    %v8573 = vpop.f32.mrb[0].mxu0
    %v8574 = vadd.f32 0.0, %v8573
    %v8575 = vpop.f32.mrb[0].mxu0
    %v8576 = vpop.f32.mrb[0].mxu0
    %v8577 = vadd.f32 0.0, %v8576
    %v8578 = vpop.f32.mrb[0].mxu0
    %8579 = vmatprep.mubr.bf16.mxu0 0
    %8580 = vmatmul.mubr.bf16.gmra.mrb[0].mxu0 %v7473
    %v8581 = vpop.f32.mrb[0].mxu0
    %v8582 = vadd.f32 0.0, %v8581
    %v8583 = vpop.f32.mrb[0].mxu0
    %v8584 = vpop.f32.mrb[0].mxu0
    %v8585 = vadd.f32 0.0, %v8584
    %v8586 = vpop.f32.mrb[0].mxu0
    %8587 = vmatprep.mubr.bf16.mxu0 0
    %8588 = vmatmul.mubr.bf16.gmra.mrb[0].mxu0 %v7476
    %v8589 = vpop.f32.mrb[0].mxu0
    %v8590 = vadd.f32 0.0, %v8589
    %v8591 = vpop.f32.mrb[0].mxu0
    %v8592 = vpop.f32.mrb[0].mxu0
    %v8593 = vadd.f32 0.0, %v8592
    %v8594 = vpop.f32.mrb[0].mxu0
    %8595 = vmatprep.mubr.bf16.mxu0 0
    %8596 = vmatmul.mubr.bf16.gmra.mrb[0].mxu0 %v7479
    %v8597 = vpop.f32.mrb[0].mxu0
    %v8598 = vadd.f32 0.0, %v8597
    %v8599 = vpop.f32.mrb[0].mxu0
    %v8600 = vpop.f32.mrb[0].mxu0
    %v8601 = vadd.f32 0.0, %v8600
    %v8602 = vpop.f32.mrb[0].mxu0
    %8603 = vmatprep.mubr.bf16.mxu0 0
    %8604 = vmatmul.mubr.bf16.gmra.mrb[0].mxu0 %v7482
    %v8605 = vpop.f32.mrb[0].mxu0
    %v8606 = vadd.f32 0.0, %v8605
    %v8607 = vpop.f32.mrb[0].mxu0
    %v8608 = vpop.f32.mrb[0].mxu0
    %v8609 = vadd.f32 0.0, %v8608
    %v8610 = vpop.f32.mrb[0].mxu0
    %8611 = vmatprep.mubr.bf16.mxu0 0
    %8612 = vmatmul.mubr.bf16.gmra.mrb[0].mxu0 %v7485
    %v8613 = vpop.f32.mrb[0].mxu0
    %v8614 = vadd.f32 0.0, %v8613
    %v8615 = vpop.f32.mrb[0].mxu0
    %v8616 = vpop.f32.mrb[0].mxu0
    %v8617 = vadd.f32 0.0, %v8616
    %v8618 = vpop.f32.mrb[0].mxu0
    %8619 = vmatprep.mubr.bf16.mxu0 0
    %8620 = vmatmul.mubr.bf16.gmra.mrb[0].mxu0 %v7488
    %v8621 = vpop.f32.mrb[0].mxu0
    %v8622 = vadd.f32 0.0, %v8621
    %v8623 = vpop.f32.mrb[0].mxu0
    %v8624 = vpop.f32.mrb[0].mxu0
    %v8625 = vadd.f32 0.0, %v8624
    %v8626 = vpop.f32.mrb[0].mxu0
    %8627 = vmatprep.mubr.bf16.mxu0 0
    %8628 = vmatmul.mubr.bf16.gmra.mrb[0].mxu0 %v7491
    %v8629 = vpop.f32.mrb[0].mxu0
    %v8630 = vadd.f32 0.0, %v8629
    %v8631 = vpop.f32.mrb[0].mxu0
    %v8632 = vpop.f32.mrb[0].mxu0
    %v8633 = vadd.f32 0.0, %v8632
    %v8634 = vpop.f32.mrb[0].mxu0
    %8635 = vmatprep.mubr.bf16.mxu0 0
    %8636 = vmatmul.mubr.bf16.gmra.mrb[0].mxu0 %v7494
    %v8637 = vpop.f32.mrb[0].mxu0
    %v8638 = vadd.f32 0.0, %v8637
    %v8639 = vpop.f32.mrb[0].mxu0
    %v8640 = vpop.f32.mrb[0].mxu0
    %v8641 = vadd.f32 0.0, %v8640
    %v8642 = vpop.f32.mrb[0].mxu0
    %8643 = vmatprep.mubr.bf16.mxu0 0
    %8644 = vmatmul.mubr.bf16.gmra.mrb[0].mxu0 %v7497
    %v8645 = vpop.f32.mrb[0].mxu0
    %v8646 = vadd.f32 0.0, %v8645
    %v8647 = vpop.f32.mrb[0].mxu0
    %v8648 = vpop.f32.mrb[0].mxu0
    %v8649 = vadd.f32 0.0, %v8648
    %v8650 = vpop.f32.mrb[0].mxu0
    %8651 = vmatprep.mubr.bf16.mxu0 0
    %8652 = vmatmul.mubr.bf16.gmra.mrb[0].mxu0 %v7500
    %v8653 = vpop.f32.mrb[0].mxu0
    %v8654 = vadd.f32 0.0, %v8653
    %v8655 = vpop.f32.mrb[0].mxu0
    %v8656 = vpop.f32.mrb[0].mxu0
    %v8657 = vadd.f32 0.0, %v8656
    %v8658 = vpop.f32.mrb[0].mxu0
    %8659 = vmatprep.mubr.bf16.mxu0 0
    %8660 = vmatmul.mubr.bf16.gmra.mrb[0].mxu0 %v7503
    %v8661 = vpop.f32.mrb[0].mxu0
    %v8662 = vadd.f32 0.0, %v8661
    %v8663 = vpop.f32.mrb[0].mxu0
    %v8664 = vpop.f32.mrb[0].mxu0
    %v8665 = vadd.f32 0.0, %v8664
    %v8666 = vpop.f32.mrb[0].mxu0
    %8667 = vmatprep.mubr.bf16.mxu0 0
    %8668 = vmatmul.mubr.bf16.gmra.mrb[0].mxu0 %v7506
    %v8669 = vpop.f32.mrb[0].mxu0
    %v8670 = vadd.f32 0.0, %v8669
    %v8671 = vpop.f32.mrb[0].mxu0
    %v8672 = vpop.f32.mrb[0].mxu0
    %v8673 = vadd.f32 0.0, %v8672
    %v8674 = vpop.f32.mrb[0].mxu0
    %8675 = vmatprep.mubr.bf16.mxu0 0
    %8676 = vmatmul.mubr.bf16.gmra.mrb[0].mxu0 %v7509
    %v8677 = vpop.f32.mrb[0].mxu0
    %v8678 = vadd.f32 0.0, %v8677
    %v8679 = vpop.f32.mrb[0].mxu0
    %v8680 = vpop.f32.mrb[0].mxu0
    %v8681 = vadd.f32 0.0, %v8680
    %v8682 = vpop.f32.mrb[0].mxu0
    %8683 = vmatprep.mubr.bf16.mxu0 0
    %8684 = vmatmul.mubr.bf16.gmra.mrb[0].mxu0 %v7512
    %v8685 = vpop.f32.mrb[0].mxu0
    %v8686 = vadd.f32 0.0, %v8685
    %v8687 = vpop.f32.mrb[0].mxu0
    %v8688 = vpop.f32.mrb[0].mxu0
    %v8689 = vadd.f32 0.0, %v8688
    %v8690 = vpop.f32.mrb[0].mxu0
    %8691 = vmatprep.mubr.bf16.mxu0 0
    %8692 = vmatmul.mubr.bf16.gmra.mrb[0].mxu0 %v7515
    %v8693 = vpop.f32.mrb[0].mxu0
    %v8694 = vadd.f32 0.0, %v8693
    %v8695 = vpop.f32.mrb[0].mxu0
    %v8696 = vpop.f32.mrb[0].mxu0
    %v8697 = vadd.f32 0.0, %v8696
    %v8698 = vpop.f32.mrb[0].mxu0
    %8699 = vmatprep.mubr.bf16.mxu0 0
    %8700 = vmatmul.mubr.bf16.gmra.mrb[0].mxu0 %v7518
    %v8701 = vpop.f32.mrb[0].mxu0
    %v8702 = vadd.f32 0.0, %v8701
    %v8703 = vpop.f32.mrb[0].mxu0
    %v8704 = vpop.f32.mrb[0].mxu0
    %v8705 = vadd.f32 0.0, %v8704
    %v8706 = vpop.f32.mrb[0].mxu0
    %8707 = vmatprep.mubr.bf16.mxu0 0
    %8708 = vmatmul.mubr.bf16.gmra.mrb[0].mxu0 %v7521
    %v8709 = vpop.f32.mrb[0].mxu0
    %v8710 = vadd.f32 0.0, %v8709
    %v8711 = vpop.f32.mrb[0].mxu0
    %v8712 = vpop.f32.mrb[0].mxu0
    %v8713 = vadd.f32 0.0, %v8712
    %v8714 = vpop.f32.mrb[0].mxu0
    %8715 = vmatprep.mubr.bf16.mxu0 0
    %8716 = vmatmul.mubr.bf16.gmra.mrb[0].mxu0 %v7524
    %v8717 = vpop.f32.mrb[0].mxu0
    %v8718 = vadd.f32 0.0, %v8717
    %v8719 = vpop.f32.mrb[0].mxu0
    %v8720 = vpop.f32.mrb[0].mxu0
    %v8721 = vadd.f32 0.0, %v8720
    %v8722 = vpop.f32.mrb[0].mxu0
    %8723 = vmatprep.mubr.bf16.mxu0 0
    %8724 = vmatmul.mubr.bf16.gmra.mrb[0].mxu0 %v7527
    %v8725 = vpop.f32.mrb[0].mxu0
    %v8726 = vadd.f32 0.0, %v8725
    %v8727 = vpop.f32.mrb[0].mxu0
    %v8728 = vpop.f32.mrb[0].mxu0
    %v8729 = vadd.f32 0.0, %v8728
    %v8730 = vpop.f32.mrb[0].mxu0
    %8731 = vmatprep.mubr.bf16.mxu0 0
    %8732 = vmatmul.mubr.bf16.gmra.mrb[0].mxu0 %v7530
    %v8733 = vpop.f32.mrb[0].mxu0
    %v8734 = vadd.f32 0.0, %v8733
    %v8735 = vpop.f32.mrb[0].mxu0
    %v8736 = vpop.f32.mrb[0].mxu0
    %v8737 = vadd.f32 0.0, %v8736
    %v8738 = vpop.f32.mrb[0].mxu0
    %8739 = vmatprep.mubr.bf16.mxu0 0
    %8740 = vmatmul.mubr.bf16.gmra.mrb[0].mxu0 %v7533
    %v8741 = vpop.f32.mrb[0].mxu0
    %v8742 = vadd.f32 0.0, %v8741
    %v8743 = vpop.f32.mrb[0].mxu0
    %v8744 = vpop.f32.mrb[0].mxu0
    %v8745 = vadd.f32 0.0, %v8744
    %v8746 = vpop.f32.mrb[0].mxu0
    %8747 = vmatprep.mubr.bf16.mxu0 0
    %8748 = vmatmul.mubr.bf16.gmra.mrb[0].mxu0 %v7536
    %v8749 = vpop.f32.mrb[0].mxu0
    %v8750 = vadd.f32 0.0, %v8749
    %v8751 = vpop.f32.mrb[0].mxu0
    %v8752 = vpop.f32.mrb[0].mxu0
    %v8753 = vadd.f32 0.0, %v8752
    %v8754 = vpop.f32.mrb[0].mxu0
    %8755 = vmatprep.mubr.bf16.mxu0 0
    %8756 = vmatmul.mubr.bf16.gmra.mrb[0].mxu0 %v7539
    %v8757 = vpop.f32.mrb[0].mxu0
    %v8758 = vadd.f32 0.0, %v8757
    %v8759 = vpop.f32.mrb[0].mxu0
    %v8760 = vpop.f32.mrb[0].mxu0
    %v8761 = vadd.f32 0.0, %v8760
    %v8762 = vpop.f32.mrb[0].mxu0
    %8763 = vmatprep.mubr.bf16.mxu0 0
    %8764 = vmatmul.mubr.bf16.gmra.mrb[0].mxu0 %v7542
    %v8765 = vpop.f32.mrb[0].mxu0
    %v8766 = vadd.f32 0.0, %v8765
    %v8767 = vpop.f32.mrb[0].mxu0
    %v8768 = vpop.f32.mrb[0].mxu0
    %v8769 = vadd.f32 0.0, %v8768
    %v8770 = vpop.f32.mrb[0].mxu0
    %8771 = vmatprep.mubr.bf16.mxu0 0
    %8772 = vmatmul.mubr.bf16.gmra.mrb[0].mxu0 %v7545
    %v8773 = vpop.f32.mrb[0].mxu0
    %v8774 = vadd.f32 0.0, %v8773
    %v8775 = vpop.f32.mrb[0].mxu0
    %v8776 = vpop.f32.mrb[0].mxu0
    %v8777 = vadd.f32 0.0, %v8776
    %v8778 = vpop.f32.mrb[0].mxu0
    %8779 = vmatprep.mubr.bf16.mxu0 0
    %8780 = vmatmul.mubr.bf16.gmra.mrb[0].mxu0 %v7548
    %v8781 = vpop.f32.mrb[0].mxu0
    %v8782 = vadd.f32 0.0, %v8781
    %v8783 = vpop.f32.mrb[0].mxu0
    %v8784 = vpop.f32.mrb[0].mxu0
    %v8785 = vadd.f32 0.0, %v8784
    %v8786 = vpop.f32.mrb[0].mxu0
    %8787 = vmatprep.mubr.bf16.mxu0 0
    %8788 = vmatmul.mubr.bf16.gmra.mrb[0].mxu0 %v7551
    %v8789 = vpop.f32.mrb[0].mxu0
    %v8790 = vadd.f32 0.0, %v8789
    %v8791 = vpop.f32.mrb[0].mxu0
    %v8792 = vpop.f32.mrb[0].mxu0
    %v8793 = vadd.f32 0.0, %v8792
    %v8794 = vpop.f32.mrb[0].mxu0
    %8795 = vmatprep.mubr.bf16.mxu0 0
    %8796 = vmatmul.mubr.bf16.gmra.mrb[0].mxu0 %v7554
    %v8797 = vpop.f32.mrb[0].mxu0
    %v8798 = vadd.f32 0.0, %v8797
    %v8799 = vpop.f32.mrb[0].mxu0
    %v8800 = vpop.f32.mrb[0].mxu0
    %v8801 = vadd.f32 0.0, %v8800
    %v8802 = vpop.f32.mrb[0].mxu0
    %8803 = vmatprep.mubr.bf16.mxu0 0
    %8804 = vmatmul.mubr.bf16.gmra.mrb[0].mxu0 %v7557
    %v8805 = vpop.f32.mrb[0].mxu0
    %v8806 = vadd.f32 0.0, %v8805
    %v8807 = vpop.f32.mrb[0].mxu0
    %v8808 = vpop.f32.mrb[0].mxu0
    %v8809 = vadd.f32 0.0, %v8808
    %v8810 = vpop.f32.mrb[0].mxu0
    %8811 = vdwg.mxu0
    %v8812 = vrot.slane %v8558, 1
    %v8813 = vrot.slane %v8561, 1
    %v8814 = vrot.slane %v8566, 1
    %v8815 = vrot.slane %v8569, 1
    %v8816 = vrot.slane %v8574, 1
    %v8817 = vrot.slane %v8577, 1
    %v8818 = vrot.slane %v8582, 1
    %v8819 = vrot.slane %v8585, 1
    %v8820 = vrot.slane %v8590, 1
    %v8821 = vrot.slane %v8593, 1
    %v8822 = vrot.slane %v8598, 1
    %v8823 = vrot.slane %v8601, 1
    %v8824 = vrot.slane %v8606, 1
    %v8825 = vrot.slane %v8609, 1
    %v8826 = vrot.slane %v8614, 1
    %v8827 = vrot.slane %v8617, 1
    %v8828 = vrot.slane %v8622, 1
    %v8829 = vrot.slane %v8625, 1
    %v8830 = vrot.slane %v8630, 1
    %v8831 = vrot.slane %v8633, 1
    %v8832 = vrot.slane %v8638, 1
    %v8833 = vrot.slane %v8641, 1
    %v8834 = vrot.slane %v8646, 1
    %v8835 = vrot.slane %v8649, 1
    %v8836 = vrot.slane %v8654, 1
    %v8837 = vrot.slane %v8657, 1
    %v8838 = vrot.slane %v8662, 1
    %v8839 = vrot.slane %v8665, 1
    %v8840 = vrot.slane %v8670, 1
    %v8841 = vrot.slane %v8673, 1
    %v8842 = vrot.slane %v8678, 1
    %v8843 = vrot.slane %v8681, 1
    %v8844 = vrot.slane %v8686, 1
    %v8845 = vrot.slane %v8689, 1
    %v8846 = vrot.slane %v8694, 1
    %v8847 = vrot.slane %v8697, 1
    %v8848 = vrot.slane %v8702, 1
    %v8849 = vrot.slane %v8705, 1
    %v8850 = vrot.slane %v8710, 1
    %v8851 = vrot.slane %v8713, 1
    %v8852 = vrot.slane %v8718, 1
    %v8853 = vrot.slane %v8721, 1
    %v8854 = vrot.slane %v8726, 1
    %v8855 = vrot.slane %v8729, 1
    %v8856 = vrot.slane %v8734, 1
    %v8857 = vrot.slane %v8737, 1
    %v8858 = vrot.slane %v8742, 1
    %v8859 = vrot.slane %v8745, 1
    %v8860 = vrot.slane %v8750, 1
    %v8861 = vrot.slane %v8753, 1
    %v8862 = vrot.slane %v8758, 1
    %v8863 = vrot.slane %v8761, 1
    %v8864 = vrot.slane %v8766, 1
    %v8865 = vrot.slane %v8769, 1
    %v8866 = vrot.slane %v8774, 1
    %v8867 = vrot.slane %v8777, 1
    %v8868 = vrot.slane %v8782, 1
    %v8869 = vrot.slane %v8785, 1
    %v8870 = vrot.slane %v8790, 1
    %v8871 = vrot.slane %v8793, 1
    %v8872 = vrot.slane %v8798, 1
    %v8873 = vrot.slane %v8801, 1
    %v8874 = vrot.slane %v8806, 1
    %v8875 = vrot.slane %v8809, 1
    %v8876 = vsel %vm1525, %v8874, %v8875
    %v8877 = vsel %vm1525, %v8873, %v8874
    %v8878 = vsel %vm1525, %v8872, %v8873
    %v8879 = vsel %vm1525, %v8871, %v8872
    %v8880 = vsel %vm1525, %v8870, %v8871
    %v8881 = vsel %vm1525, %v8869, %v8870
    %v8882 = vsel %vm1525, %v8868, %v8869
    %v8883 = vsel %vm1525, %v8867, %v8868
    %v8884 = vsel %vm1525, %v8866, %v8867
    %v8885 = vsel %vm1525, %v8865, %v8866
    %v8886 = vsel %vm1525, %v8864, %v8865
    %v8887 = vsel %vm1525, %v8863, %v8864
    %v8888 = vsel %vm1525, %v8862, %v8863
    %v8889 = vsel %vm1525, %v8861, %v8862
    %v8890 = vsel %vm1525, %v8860, %v8861
    %v8891 = vsel %vm1525, %v8859, %v8860
    %v8892 = vsel %vm1525, %v8858, %v8859
    %v8893 = vsel %vm1525, %v8857, %v8858
    %v8894 = vsel %vm1525, %v8856, %v8857
    %v8895 = vsel %vm1525, %v8855, %v8856
    %v8896 = vsel %vm1525, %v8854, %v8855
    %v8897 = vsel %vm1525, %v8853, %v8854
    %v8898 = vsel %vm1525, %v8852, %v8853
    %v8899 = vsel %vm1525, %v8851, %v8852
    %v8900 = vsel %vm1525, %v8850, %v8851
    %v8901 = vsel %vm1525, %v8849, %v8850
    %v8902 = vsel %vm1525, %v8848, %v8849
    %v8903 = vsel %vm1525, %v8847, %v8848
    %v8904 = vsel %vm1525, %v8846, %v8847
    %v8905 = vsel %vm1525, %v8845, %v8846
    %v8906 = vsel %vm1525, %v8844, %v8845
    %v8907 = vsel %vm1525, %v8843, %v8844
    %v8908 = vsel %vm1525, %v8842, %v8843
    %v8909 = vsel %vm1525, %v8841, %v8842
    %v8910 = vsel %vm1525, %v8840, %v8841
    %v8911 = vsel %vm1525, %v8839, %v8840
    %v8912 = vsel %vm1525, %v8838, %v8839
    %v8913 = vsel %vm1525, %v8837, %v8838
    %v8914 = vsel %vm1525, %v8836, %v8837
    %v8915 = vsel %vm1525, %v8835, %v8836
    %v8916 = vsel %vm1525, %v8834, %v8835
    %v8917 = vsel %vm1525, %v8833, %v8834
    %v8918 = vsel %vm1525, %v8832, %v8833
    %v8919 = vsel %vm1525, %v8831, %v8832
    %v8920 = vsel %vm1525, %v8830, %v8831
    %v8921 = vsel %vm1525, %v8829, %v8830
    %v8922 = vsel %vm1525, %v8828, %v8829
    %v8923 = vsel %vm1525, %v8827, %v8828
    %v8924 = vsel %vm1525, %v8826, %v8827
    %v8925 = vsel %vm1525, %v8825, %v8826
    %v8926 = vsel %vm1525, %v8824, %v8825
    %v8927 = vsel %vm1525, %v8823, %v8824
    %v8928 = vsel %vm1525, %v8822, %v8823
    %v8929 = vsel %vm1525, %v8821, %v8822
    %v8930 = vsel %vm1525, %v8820, %v8821
    %v8931 = vsel %vm1525, %v8819, %v8820
    %v8932 = vsel %vm1525, %v8818, %v8819
    %v8933 = vsel %vm1525, %v8817, %v8818
    %v8934 = vsel %vm1525, %v8816, %v8817
    %v8935 = vsel %vm1525, %v8815, %v8816
    %v8936 = vsel %vm1525, %v8814, %v8815
    %v8937 = vsel %vm1525, %v8813, %v8814
    %v8938 = vsel %vm1525, %v8812, %v8813
    %v8939 = vsel %vm1525, %v8875, %v8812
    %v8940 = vsel %vm38, %v8938, 0.0
    %v8941 = vsel %vm39, %v8937, 0.0
    %v8942 = vsel %vm38, %v8936, 0.0
    %v8943 = vsel %vm39, %v8935, 0.0
    %v8944 = vsel %vm38, %v8934, 0.0
    %v8945 = vsel %vm39, %v8933, 0.0
    %v8946 = vsel %vm38, %v8932, 0.0
    %v8947 = vsel %vm39, %v8931, 0.0
    %v8948 = vsel %vm38, %v8930, 0.0
    %v8949 = vsel %vm39, %v8929, 0.0
    %v8950 = vsel %vm38, %v8928, 0.0
    %v8951 = vsel %vm39, %v8927, 0.0
    %v8952 = vsel %vm38, %v8926, 0.0
    %v8953 = vsel %vm39, %v8925, 0.0
    %v8954 = vsel %vm38, %v8924, 0.0
    %v8955 = vsel %vm39, %v8923, 0.0
    %v8956 = vsel %vm38, %v8922, 0.0
    %v8957 = vsel %vm39, %v8921, 0.0
    %v8958 = vsel %vm38, %v8920, 0.0
    %v8959 = vsel %vm39, %v8919, 0.0
    %v8960 = vsel %vm38, %v8918, 0.0
    %v8961 = vsel %vm39, %v8917, 0.0
    %v8962 = vsel %vm38, %v8916, 0.0
    %v8963 = vsel %vm39, %v8915, 0.0
    %v8964 = vsel %vm38, %v8914, 0.0
    %v8965 = vsel %vm39, %v8913, 0.0
    %v8966 = vsel %vm38, %v8912, 0.0
    %v8967 = vsel %vm39, %v8911, 0.0
    %v8968 = vsel %vm38, %v8910, 0.0
    %v8969 = vsel %vm39, %v8909, 0.0
    %v8970 = vsel %vm38, %v8908, 0.0
    %v8971 = vsel %vm39, %v8907, 0.0
    %v8972 = vsel %vm38, %v8906, 0.0
    %v8973 = vsel %vm39, %v8905, 0.0
    %v8974 = vsel %vm38, %v8904, 0.0
    %v8975 = vsel %vm39, %v8903, 0.0
    %v8976 = vsel %vm38, %v8902, 0.0
    %v8977 = vsel %vm39, %v8901, 0.0
    %v8978 = vsel %vm38, %v8900, 0.0
    %v8979 = vsel %vm39, %v8899, 0.0
    %v8980 = vsel %vm38, %v8898, 0.0
    %v8981 = vsel %vm39, %v8897, 0.0
    %v8982 = vsel %vm38, %v8896, 0.0
    %v8983 = vsel %vm39, %v8895, 0.0
    %v8984 = vsel %vm38, %v8894, 0.0
    %v8985 = vsel %vm39, %v8893, 0.0
    %v8986 = vsel %vm38, %v8892, 0.0
    %v8987 = vsel %vm39, %v8891, 0.0
    %v8988 = vsel %vm38, %v8890, 0.0
    %v8989 = vsel %vm39, %v8889, 0.0
    %v8990 = vsel %vm38, %v8888, 0.0
    %v8991 = vsel %vm39, %v8887, 0.0
    %v8992 = vsel %vm38, %v8886, 0.0
    %v8993 = vsel %vm39, %v8885, 0.0
    %v8994 = vsel %vm38, %v8884, 0.0
    %v8995 = vsel %vm39, %v8883, 0.0
    %v8996 = vsel %vm38, %v8882, 0.0
    %v8997 = vsel %vm39, %v8881, 0.0
    %v8998 = vsel %vm38, %v8880, 0.0
    %v8999 = vsel %vm39, %v8879, 0.0
    %v9000 = vsel %vm38, %v8878, 0.0
    %v9001 = vsel %vm39, %v8877, 0.0
    %v9002 = vsel %vm38, %v8876, 0.0
    %v9003 = vsel %vm39, %v8939, 0.0
    %v9004 = vadd.f32 %v8426, %v8940
    %v9005 = vadd.f32 %v8427, %v8941
    %v9006 = vadd.f32 %v8428, %v8942
    %v9007 = vadd.f32 %v8429, %v8943
    %v9008 = vadd.f32 %v8430, %v8944
    %v9009 = vadd.f32 %v8431, %v8945
    %v9010 = vadd.f32 %v8432, %v8946
    %v9011 = vadd.f32 %v8433, %v8947
    %v9012 = vadd.f32 %v8434, %v8948
    %v9013 = vadd.f32 %v8435, %v8949
    %v9014 = vadd.f32 %v8436, %v8950
    %v9015 = vadd.f32 %v8437, %v8951
    %v9016 = vadd.f32 %v8438, %v8952
    %v9017 = vadd.f32 %v8439, %v8953
    %v9018 = vadd.f32 %v8440, %v8954
    %v9019 = vadd.f32 %v8441, %v8955
    %v9020 = vadd.f32 %v8442, %v8956
    %v9021 = vadd.f32 %v8443, %v8957
    %v9022 = vadd.f32 %v8444, %v8958
    %v9023 = vadd.f32 %v8445, %v8959
    %v9024 = vadd.f32 %v8446, %v8960
    %v9025 = vadd.f32 %v8447, %v8961
    %v9026 = vadd.f32 %v8448, %v8962
    %v9027 = vadd.f32 %v8449, %v8963
    %v9028 = vadd.f32 %v8450, %v8964
    %v9029 = vadd.f32 %v8451, %v8965
    %v9030 = vadd.f32 %v8452, %v8966
    %v9031 = vadd.f32 %v8453, %v8967
    %v9032 = vadd.f32 %v8454, %v8968
    %v9033 = vadd.f32 %v8455, %v8969
    %v9034 = vadd.f32 %v8456, %v8970
    %v9035 = vadd.f32 %v8457, %v8971
    %v9036 = vadd.f32 %v8458, %v8972
    %v9037 = vadd.f32 %v8459, %v8973
    %v9038 = vadd.f32 %v8460, %v8974
    %v9039 = vadd.f32 %v8461, %v8975
    %v9040 = vadd.f32 %v8462, %v8976
    %v9041 = vadd.f32 %v8463, %v8977
    %v9042 = vadd.f32 %v8464, %v8978
    %v9043 = vadd.f32 %v8465, %v8979
    %v9044 = vadd.f32 %v8466, %v8980
    %v9045 = vadd.f32 %v8467, %v8981
    %v9046 = vadd.f32 %v8468, %v8982
    %v9047 = vadd.f32 %v8469, %v8983
    %v9048 = vadd.f32 %v8470, %v8984
    %v9049 = vadd.f32 %v8471, %v8985
    %v9050 = vadd.f32 %v8472, %v8986
    %v9051 = vadd.f32 %v8473, %v8987
    %v9052 = vadd.f32 %v8474, %v8988
    %v9053 = vadd.f32 %v8475, %v8989
    %v9054 = vadd.f32 %v8476, %v8990
    %v9055 = vadd.f32 %v8477, %v8991
    %v9056 = vadd.f32 %v8478, %v8992
    %v9057 = vadd.f32 %v8479, %v8993
    %v9058 = vadd.f32 %v8480, %v8994
    %v9059 = vadd.f32 %v8481, %v8995
    %v9060 = vadd.f32 %v8482, %v8996
    %v9061 = vadd.f32 %v8483, %v8997
    %v9062 = vadd.f32 %v8484, %v8998
    %v9063 = vadd.f32 %v8485, %v8999
    %v9064 = vadd.f32 %v8486, %v9000
    %v9065 = vadd.f32 %v8487, %v9001
    %v9066 = vadd.f32 %v8488, %v9002
    %v9067 = vadd.f32 %v8489, %v9003
    %v9068 = vld [vmem:[%s3388] sm:$0xff]
    %v9069 = vld [vmem:[%s3388 + $0x8] sm:$0xff]
    %v9070 = vld [vmem:[%s3388 + $0x10] sm:$0xff]
    %v9071 = vld [vmem:[%s3388 + $0x18] sm:$0xff]
    %v9072 = vld [vmem:[%s3388 + $0x20] sm:$0xff]
    %v9073 = vld [vmem:[%s3388 + $0x28] sm:$0xff]
    %v9074 = vld [vmem:[%s3388 + $0x30] sm:$0xff]
    %v9075 = vld [vmem:[%s3388 + $0x38] sm:$0xff]
    %v9076 = vld [vmem:[%s3388 + $0x40] sm:$0xff]
    %v9077 = vld [vmem:[%s3388 + $0x48] sm:$0xff]
    %v9078 = vld [vmem:[%s3388 + $0x50] sm:$0xff]
    %v9079 = vld [vmem:[%s3388 + $0x58] sm:$0xff]
    %v9080 = vld [vmem:[%s3388 + $0x60] sm:$0xff]
    %v9081 = vld [vmem:[%s3388 + $0x68] sm:$0xff]
    %v9082 = vld [vmem:[%s3388 + $0x70] sm:$0xff]
    %v9083 = vld [vmem:[%s3388 + $0x78] sm:$0xff]
    %v9084 = vld [vmem:[%s3388 + $0x90] sm:$0xff]
    %v9085 = vld [vmem:[%s3388 + $0x98] sm:$0xff]
    %v9086 = vld [vmem:[%s3388 + $0xa0] sm:$0xff]
    %v9087 = vld [vmem:[%s3388 + $0xa8] sm:$0xff]
    %v9088 = vld [vmem:[%s3388 + $0xb0] sm:$0xff]
    %v9089 = vld [vmem:[%s3388 + $0xb8] sm:$0xff]
    %v9090 = vld [vmem:[%s3388 + $0xc0] sm:$0xff]
    %v9091 = vld [vmem:[%s3388 + $0xc8] sm:$0xff]
    %v9092 = vld [vmem:[%s3388 + $0xd0] sm:$0xff]
    %v9093 = vld [vmem:[%s3388 + $0xd8] sm:$0xff]
    %v9094 = vld [vmem:[%s3388 + $0xe0] sm:$0xff]
    %v9095 = vld [vmem:[%s3388 + $0xe8] sm:$0xff]
    %v9096 = vld [vmem:[%s3388 + $0xf0] sm:$0xff]
    %v9097 = vld [vmem:[%s3388 + $0xf8] sm:$0xff]
    %v9098 = vld [vmem:[%s3388 + $0x100] sm:$0xff]
    %v9099 = vld [vmem:[%s3388 + $0x108] sm:$0xff]
    %s9100 = scalar_lea.vmem %s2, 224
    %v9101 = vld [vmem:[%s9100] sm:$0xf]
    %v9102 = vld [vmem:[%s9100 + $0x4] sm:$0xf]
    %v9103 = vld [vmem:[%s9100 + $0x8] sm:$0xf]
    %v9104 = vld [vmem:[%s9100 + $0xc] sm:$0xf]
    %v9105 = vld [vmem:[%s9100 + $0x10] sm:$0xf]
    %v9106 = vld [vmem:[%s9100 + $0x14] sm:$0xf]
    %v9107 = vld [vmem:[%s9100 + $0x18] sm:$0xf]
    %v9108 = vld [vmem:[%s9100 + $0x1c] sm:$0xf]
    %v9117 = vunpack.c.l.b16 %v9101
    %v9118 = vunpack.c.l.b16 %v9102
    %v9119 = vunpack.c.l.b16 %v9103
    %v9120 = vunpack.c.l.b16 %v9104
    %v9121 = vunpack.c.l.b16 %v9105
    %v9122 = vunpack.c.l.b16 %v9106
    %v9123 = vunpack.c.l.b16 %v9107
    %v9124 = vunpack.c.l.b16 %v9108
    %v9125 = vpack.c.b16 %v9118, %v9117
    %v9126 = vpack.c.b16 %v9120, %v9119
    %v9127 = vpack.c.b16 %v9122, %v9121
    %v9128 = vpack.c.b16 %v9124, %v9123
    %v9134 = vsel %vm40, %v9068, 0
    %v9137 = vsel %vm40, %v9069, 0
    %v9140 = vsel %vm40, %v9070, 0
    %v9143 = vsel %vm40, %v9071, 0
    %v9146 = vsel %vm40, %v9072, 0
    %v9149 = vsel %vm40, %v9073, 0
    %v9152 = vsel %vm40, %v9074, 0
    %v9155 = vsel %vm40, %v9075, 0
    %v9158 = vsel %vm40, %v9076, 0
    %v9161 = vsel %vm40, %v9077, 0
    %v9164 = vsel %vm40, %v9078, 0
    %v9167 = vsel %vm40, %v9079, 0
    %v9170 = vsel %vm40, %v9080, 0
    %v9173 = vsel %vm40, %v9081, 0
    %v9176 = vsel %vm40, %v9082, 0
    %v9179 = vsel %vm40, %v9083, 0
    %v9182 = vsel %vm40, %v9084, 0
    %v9185 = vsel %vm40, %v9085, 0
    %v9188 = vsel %vm40, %v9086, 0
    %v9191 = vsel %vm40, %v9087, 0
    %v9194 = vsel %vm40, %v9088, 0
    %v9197 = vsel %vm40, %v9089, 0
    %v9200 = vsel %vm40, %v9090, 0
    %v9203 = vsel %vm40, %v9091, 0
    %v9206 = vsel %vm40, %v9092, 0
    %v9209 = vsel %vm40, %v9093, 0
    %v9212 = vsel %vm40, %v9094, 0
    %v9215 = vsel %vm40, %v9095, 0
    %v9218 = vsel %vm40, %v9096, 0
    %v9221 = vsel %vm40, %v9097, 0
    %v9224 = vsel %vm40, %v9098, 0
    %v9227 = vsel %vm40, %v9099, 0
    %9229 = vmatprep.subr.bf16.mxu0 0
    %9230 = vmatpush1.bf16.msra.mxu0 %v9125
    %9231 = vmatprep.subr.bf16.mxu0 0
    %9232 = vmatpush1.bf16.msra.mxu0 %v9126
    %9233 = vmatprep.subr.bf16.mxu0 0
    %9234 = vmatpush1.bf16.msra.mxu0 %v9127
    %9235 = vmatprep.subr.bf16.mxu0 0
    %9236 = vmatpush1.bf16.msra.mxu0 %v9128
    %9237 = vmatprep.subr.bf16.mxu0 0
    %9238 = vmatpush1.bf16.msra.mxu0 0
    %9239 = vmatprep.subr.bf16.mxu0 0
    %9240 = vmatpush1.bf16.msra.mxu0 0
    %9241 = vmatprep.subr.bf16.mxu0 0
    %9242 = vmatpush1.bf16.msra.mxu0 0
    %9243 = vmatprep.subr.bf16.mxu0 0
    %9244 = vmatpush1.bf16.msra.mxu0 0
    %9245 = vmatprep.subr.bf16.mxu0 0
    %9246 = vmatpush1.bf16.msra.mxu0 0
    %9247 = vmatprep.subr.bf16.mxu0 0
    %9248 = vmatpush1.bf16.msra.mxu0 0
    %9249 = vmatprep.subr.bf16.mxu0 0
    %9250 = vmatpush1.bf16.msra.mxu0 0
    %9251 = vmatprep.subr.bf16.mxu0 0
    %9252 = vmatpush1.bf16.msra.mxu0 0
    %9253 = vmatprep.subr.bf16.mxu0 0
    %9254 = vmatpush1.bf16.msra.mxu0 0
    %9255 = vmatprep.subr.bf16.mxu0 0
    %9256 = vmatpush1.bf16.msra.mxu0 0
    %9257 = vmatprep.subr.bf16.mxu0 0
    %9258 = vmatpush1.bf16.msra.mxu0 0
    %9259 = vmatprep.subr.bf16.mxu0 0
    %9260 = vmatpush1.bf16.msra.mxu0 0
    %9261 = vmatprep.mubr.bf16.mxu0 0
    %9262 = vmatmul.mubr.bf16.gmra.mrb[0].mxu0 %v9134
    %v9263 = vpop.f32.mrb[0].mxu0
    %v9264 = vadd.f32 0.0, %v9263
    %v9265 = vpop.f32.mrb[0].mxu0
    %v9266 = vpop.f32.mrb[0].mxu0
    %v9267 = vadd.f32 0.0, %v9266
    %v9268 = vpop.f32.mrb[0].mxu0
    %9269 = vmatprep.mubr.bf16.mxu0 0
    %9270 = vmatmul.mubr.bf16.gmra.mrb[0].mxu0 %v9137
    %v9271 = vpop.f32.mrb[0].mxu0
    %v9272 = vadd.f32 0.0, %v9271
    %v9273 = vpop.f32.mrb[0].mxu0
    %v9274 = vpop.f32.mrb[0].mxu0
    %v9275 = vadd.f32 0.0, %v9274
    %v9276 = vpop.f32.mrb[0].mxu0
    %9277 = vmatprep.mubr.bf16.mxu0 0
    %9278 = vmatmul.mubr.bf16.gmra.mrb[0].mxu0 %v9140
    %v9279 = vpop.f32.mrb[0].mxu0
    %v9280 = vadd.f32 0.0, %v9279
    %v9281 = vpop.f32.mrb[0].mxu0
    %v9282 = vpop.f32.mrb[0].mxu0
    %v9283 = vadd.f32 0.0, %v9282
    %v9284 = vpop.f32.mrb[0].mxu0
    %9285 = vmatprep.mubr.bf16.mxu0 0
    %9286 = vmatmul.mubr.bf16.gmra.mrb[0].mxu0 %v9143
    %v9287 = vpop.f32.mrb[0].mxu0
    %v9288 = vadd.f32 0.0, %v9287
    %v9289 = vpop.f32.mrb[0].mxu0
    %v9290 = vpop.f32.mrb[0].mxu0
    %v9291 = vadd.f32 0.0, %v9290
    %v9292 = vpop.f32.mrb[0].mxu0
    %9293 = vmatprep.mubr.bf16.mxu0 0
    %9294 = vmatmul.mubr.bf16.gmra.mrb[0].mxu0 %v9146
    %v9295 = vpop.f32.mrb[0].mxu0
    %v9296 = vadd.f32 0.0, %v9295
    %v9297 = vpop.f32.mrb[0].mxu0
    %v9298 = vpop.f32.mrb[0].mxu0
    %v9299 = vadd.f32 0.0, %v9298
    %v9300 = vpop.f32.mrb[0].mxu0
    %9301 = vmatprep.mubr.bf16.mxu0 0
    %9302 = vmatmul.mubr.bf16.gmra.mrb[0].mxu0 %v9149
    %v9303 = vpop.f32.mrb[0].mxu0
    %v9304 = vadd.f32 0.0, %v9303
    %v9305 = vpop.f32.mrb[0].mxu0
    %v9306 = vpop.f32.mrb[0].mxu0
    %v9307 = vadd.f32 0.0, %v9306
    %v9308 = vpop.f32.mrb[0].mxu0
    %9309 = vmatprep.mubr.bf16.mxu0 0
    %9310 = vmatmul.mubr.bf16.gmra.mrb[0].mxu0 %v9152
    %v9311 = vpop.f32.mrb[0].mxu0
    %v9312 = vadd.f32 0.0, %v9311
    %v9313 = vpop.f32.mrb[0].mxu0
    %v9314 = vpop.f32.mrb[0].mxu0
    %v9315 = vadd.f32 0.0, %v9314
    %v9316 = vpop.f32.mrb[0].mxu0
    %9317 = vmatprep.mubr.bf16.mxu0 0
    %9318 = vmatmul.mubr.bf16.gmra.mrb[0].mxu0 %v9155
    %v9319 = vpop.f32.mrb[0].mxu0
    %v9320 = vadd.f32 0.0, %v9319
    %v9321 = vpop.f32.mrb[0].mxu0
    %v9322 = vpop.f32.mrb[0].mxu0
    %v9323 = vadd.f32 0.0, %v9322
    %v9324 = vpop.f32.mrb[0].mxu0
    %9325 = vmatprep.mubr.bf16.mxu0 0
    %9326 = vmatmul.mubr.bf16.gmra.mrb[0].mxu0 %v9158
    %v9327 = vpop.f32.mrb[0].mxu0
    %v9328 = vadd.f32 0.0, %v9327
    %v9329 = vpop.f32.mrb[0].mxu0
    %v9330 = vpop.f32.mrb[0].mxu0
    %v9331 = vadd.f32 0.0, %v9330
    %v9332 = vpop.f32.mrb[0].mxu0
    %9333 = vmatprep.mubr.bf16.mxu0 0
    %9334 = vmatmul.mubr.bf16.gmra.mrb[0].mxu0 %v9161
    %v9335 = vpop.f32.mrb[0].mxu0
    %v9336 = vadd.f32 0.0, %v9335
    %v9337 = vpop.f32.mrb[0].mxu0
    %v9338 = vpop.f32.mrb[0].mxu0
    %v9339 = vadd.f32 0.0, %v9338
    %v9340 = vpop.f32.mrb[0].mxu0
    %9341 = vmatprep.mubr.bf16.mxu0 0
    %9342 = vmatmul.mubr.bf16.gmra.mrb[0].mxu0 %v9164
    %v9343 = vpop.f32.mrb[0].mxu0
    %v9344 = vadd.f32 0.0, %v9343
    %v9345 = vpop.f32.mrb[0].mxu0
    %v9346 = vpop.f32.mrb[0].mxu0
    %v9347 = vadd.f32 0.0, %v9346
    %v9348 = vpop.f32.mrb[0].mxu0
    %9349 = vmatprep.mubr.bf16.mxu0 0
    %9350 = vmatmul.mubr.bf16.gmra.mrb[0].mxu0 %v9167
    %v9351 = vpop.f32.mrb[0].mxu0
    %v9352 = vadd.f32 0.0, %v9351
    %v9353 = vpop.f32.mrb[0].mxu0
    %v9354 = vpop.f32.mrb[0].mxu0
    %v9355 = vadd.f32 0.0, %v9354
    %v9356 = vpop.f32.mrb[0].mxu0
    %9357 = vmatprep.mubr.bf16.mxu0 0
    %9358 = vmatmul.mubr.bf16.gmra.mrb[0].mxu0 %v9170
    %v9359 = vpop.f32.mrb[0].mxu0
    %v9360 = vadd.f32 0.0, %v9359
    %v9361 = vpop.f32.mrb[0].mxu0
    %v9362 = vpop.f32.mrb[0].mxu0
    %v9363 = vadd.f32 0.0, %v9362
    %v9364 = vpop.f32.mrb[0].mxu0
    %9365 = vmatprep.mubr.bf16.mxu0 0
    %9366 = vmatmul.mubr.bf16.gmra.mrb[0].mxu0 %v9173
    %v9367 = vpop.f32.mrb[0].mxu0
    %v9368 = vadd.f32 0.0, %v9367
    %v9369 = vpop.f32.mrb[0].mxu0
    %v9370 = vpop.f32.mrb[0].mxu0
    %v9371 = vadd.f32 0.0, %v9370
    %v9372 = vpop.f32.mrb[0].mxu0
    %9373 = vmatprep.mubr.bf16.mxu0 0
    %9374 = vmatmul.mubr.bf16.gmra.mrb[0].mxu0 %v9176
    %v9375 = vpop.f32.mrb[0].mxu0
    %v9376 = vadd.f32 0.0, %v9375
    %v9377 = vpop.f32.mrb[0].mxu0
    %v9378 = vpop.f32.mrb[0].mxu0
    %v9379 = vadd.f32 0.0, %v9378
    %v9380 = vpop.f32.mrb[0].mxu0
    %9381 = vmatprep.mubr.bf16.mxu0 0
    %9382 = vmatmul.mubr.bf16.gmra.mrb[0].mxu0 %v9179
    %v9383 = vpop.f32.mrb[0].mxu0
    %v9384 = vadd.f32 0.0, %v9383
    %v9385 = vpop.f32.mrb[0].mxu0
    %v9386 = vpop.f32.mrb[0].mxu0
    %v9387 = vadd.f32 0.0, %v9386
    %v9388 = vpop.f32.mrb[0].mxu0
    %9389 = vmatprep.mubr.bf16.mxu0 0
    %9390 = vmatmul.mubr.bf16.gmra.mrb[0].mxu0 %v9182
    %v9391 = vpop.f32.mrb[0].mxu0
    %v9392 = vadd.f32 0.0, %v9391
    %v9393 = vpop.f32.mrb[0].mxu0
    %v9394 = vpop.f32.mrb[0].mxu0
    %v9395 = vadd.f32 0.0, %v9394
    %v9396 = vpop.f32.mrb[0].mxu0
    %9397 = vmatprep.mubr.bf16.mxu0 0
    %9398 = vmatmul.mubr.bf16.gmra.mrb[0].mxu0 %v9185
    %v9399 = vpop.f32.mrb[0].mxu0
    %v9400 = vadd.f32 0.0, %v9399
    %v9401 = vpop.f32.mrb[0].mxu0
    %v9402 = vpop.f32.mrb[0].mxu0
    %v9403 = vadd.f32 0.0, %v9402
    %v9404 = vpop.f32.mrb[0].mxu0
    %9405 = vmatprep.mubr.bf16.mxu0 0
    %9406 = vmatmul.mubr.bf16.gmra.mrb[0].mxu0 %v9188
    %v9407 = vpop.f32.mrb[0].mxu0
    %v9408 = vadd.f32 0.0, %v9407
    %v9409 = vpop.f32.mrb[0].mxu0
    %v9410 = vpop.f32.mrb[0].mxu0
    %v9411 = vadd.f32 0.0, %v9410
    %v9412 = vpop.f32.mrb[0].mxu0
    %9413 = vmatprep.mubr.bf16.mxu0 0
    %9414 = vmatmul.mubr.bf16.gmra.mrb[0].mxu0 %v9191
    %v9415 = vpop.f32.mrb[0].mxu0
    %v9416 = vadd.f32 0.0, %v9415
    %v9417 = vpop.f32.mrb[0].mxu0
    %v9418 = vpop.f32.mrb[0].mxu0
    %v9419 = vadd.f32 0.0, %v9418
    %v9420 = vpop.f32.mrb[0].mxu0
    %9421 = vmatprep.mubr.bf16.mxu0 0
    %9422 = vmatmul.mubr.bf16.gmra.mrb[0].mxu0 %v9194
    %v9423 = vpop.f32.mrb[0].mxu0
    %v9424 = vadd.f32 0.0, %v9423
    %v9425 = vpop.f32.mrb[0].mxu0
    %v9426 = vpop.f32.mrb[0].mxu0
    %v9427 = vadd.f32 0.0, %v9426
    %v9428 = vpop.f32.mrb[0].mxu0
    %9429 = vmatprep.mubr.bf16.mxu0 0
    %9430 = vmatmul.mubr.bf16.gmra.mrb[0].mxu0 %v9197
    %v9431 = vpop.f32.mrb[0].mxu0
    %v9432 = vadd.f32 0.0, %v9431
    %v9433 = vpop.f32.mrb[0].mxu0
    %v9434 = vpop.f32.mrb[0].mxu0
    %v9435 = vadd.f32 0.0, %v9434
    %v9436 = vpop.f32.mrb[0].mxu0
    %9437 = vmatprep.mubr.bf16.mxu0 0
    %9438 = vmatmul.mubr.bf16.gmra.mrb[0].mxu0 %v9200
    %v9439 = vpop.f32.mrb[0].mxu0
    %v9440 = vadd.f32 0.0, %v9439
    %v9441 = vpop.f32.mrb[0].mxu0
    %v9442 = vpop.f32.mrb[0].mxu0
    %v9443 = vadd.f32 0.0, %v9442
    %v9444 = vpop.f32.mrb[0].mxu0
    %9445 = vmatprep.mubr.bf16.mxu0 0
    %9446 = vmatmul.mubr.bf16.gmra.mrb[0].mxu0 %v9203
    %v9447 = vpop.f32.mrb[0].mxu0
    %v9448 = vadd.f32 0.0, %v9447
    %v9449 = vpop.f32.mrb[0].mxu0
    %v9450 = vpop.f32.mrb[0].mxu0
    %v9451 = vadd.f32 0.0, %v9450
    %v9452 = vpop.f32.mrb[0].mxu0
    %9453 = vmatprep.mubr.bf16.mxu0 0
    %9454 = vmatmul.mubr.bf16.gmra.mrb[0].mxu0 %v9206
    %v9455 = vpop.f32.mrb[0].mxu0
    %v9456 = vadd.f32 0.0, %v9455
    %v9457 = vpop.f32.mrb[0].mxu0
    %v9458 = vpop.f32.mrb[0].mxu0
    %v9459 = vadd.f32 0.0, %v9458
    %v9460 = vpop.f32.mrb[0].mxu0
    %9461 = vmatprep.mubr.bf16.mxu0 0
    %9462 = vmatmul.mubr.bf16.gmra.mrb[0].mxu0 %v9209
    %v9463 = vpop.f32.mrb[0].mxu0
    %v9464 = vadd.f32 0.0, %v9463
    %v9465 = vpop.f32.mrb[0].mxu0
    %v9466 = vpop.f32.mrb[0].mxu0
    %v9467 = vadd.f32 0.0, %v9466
    %v9468 = vpop.f32.mrb[0].mxu0
    %9469 = vmatprep.mubr.bf16.mxu0 0
    %9470 = vmatmul.mubr.bf16.gmra.mrb[0].mxu0 %v9212
    %v9471 = vpop.f32.mrb[0].mxu0
    %v9472 = vadd.f32 0.0, %v9471
    %v9473 = vpop.f32.mrb[0].mxu0
    %v9474 = vpop.f32.mrb[0].mxu0
    %v9475 = vadd.f32 0.0, %v9474
    %v9476 = vpop.f32.mrb[0].mxu0
    %9477 = vmatprep.mubr.bf16.mxu0 0
    %9478 = vmatmul.mubr.bf16.gmra.mrb[0].mxu0 %v9215
    %v9479 = vpop.f32.mrb[0].mxu0
    %v9480 = vadd.f32 0.0, %v9479
    %v9481 = vpop.f32.mrb[0].mxu0
    %v9482 = vpop.f32.mrb[0].mxu0
    %v9483 = vadd.f32 0.0, %v9482
    %v9484 = vpop.f32.mrb[0].mxu0
    %9485 = vmatprep.mubr.bf16.mxu0 0
    %9486 = vmatmul.mubr.bf16.gmra.mrb[0].mxu0 %v9218
    %v9487 = vpop.f32.mrb[0].mxu0
    %v9488 = vadd.f32 0.0, %v9487
    %v9489 = vpop.f32.mrb[0].mxu0
    %v9490 = vpop.f32.mrb[0].mxu0
    %v9491 = vadd.f32 0.0, %v9490
    %v9492 = vpop.f32.mrb[0].mxu0
    %9493 = vmatprep.mubr.bf16.mxu0 0
    %9494 = vmatmul.mubr.bf16.gmra.mrb[0].mxu0 %v9221
    %v9495 = vpop.f32.mrb[0].mxu0
    %v9496 = vadd.f32 0.0, %v9495
    %v9497 = vpop.f32.mrb[0].mxu0
    %v9498 = vpop.f32.mrb[0].mxu0
    %v9499 = vadd.f32 0.0, %v9498
    %v9500 = vpop.f32.mrb[0].mxu0
    %9501 = vmatprep.mubr.bf16.mxu0 0
    %9502 = vmatmul.mubr.bf16.gmra.mrb[0].mxu0 %v9224
    %v9503 = vpop.f32.mrb[0].mxu0
    %v9504 = vadd.f32 0.0, %v9503
    %v9505 = vpop.f32.mrb[0].mxu0
    %v9506 = vpop.f32.mrb[0].mxu0
    %v9507 = vadd.f32 0.0, %v9506
    %v9508 = vpop.f32.mrb[0].mxu0
    %9509 = vmatprep.mubr.bf16.mxu0 0
    %9510 = vmatmul.mubr.bf16.gmra.mrb[0].mxu0 %v9227
    %v9511 = vpop.f32.mrb[0].mxu0
    %v9512 = vadd.f32 0.0, %v9511
    %v9513 = vpop.f32.mrb[0].mxu0
    %v9514 = vpop.f32.mrb[0].mxu0
    %v9515 = vadd.f32 0.0, %v9514
    %v9516 = vpop.f32.mrb[0].mxu0
    %9517 = vdwg.mxu0
    %v9518 = vadd.f32 %v9004, %v9264
    %v9519 = vadd.f32 %v9005, %v9267
    %v9520 = vadd.f32 %v9006, %v9272
    %v9521 = vadd.f32 %v9007, %v9275
    %v9522 = vadd.f32 %v9008, %v9280
    %v9523 = vadd.f32 %v9009, %v9283
    %v9524 = vadd.f32 %v9010, %v9288
    %v9525 = vadd.f32 %v9011, %v9291
    %v9526 = vadd.f32 %v9012, %v9296
    %v9527 = vadd.f32 %v9013, %v9299
    %v9528 = vadd.f32 %v9014, %v9304
    %v9529 = vadd.f32 %v9015, %v9307
    %v9530 = vadd.f32 %v9016, %v9312
    %v9531 = vadd.f32 %v9017, %v9315
    %v9532 = vadd.f32 %v9018, %v9320
    %v9533 = vadd.f32 %v9019, %v9323
    %v9534 = vadd.f32 %v9020, %v9328
    %v9535 = vadd.f32 %v9021, %v9331
    %v9536 = vadd.f32 %v9022, %v9336
    %v9537 = vadd.f32 %v9023, %v9339
    %v9538 = vadd.f32 %v9024, %v9344
    %v9539 = vadd.f32 %v9025, %v9347
    %v9540 = vadd.f32 %v9026, %v9352
    %v9541 = vadd.f32 %v9027, %v9355
    %v9542 = vadd.f32 %v9028, %v9360
    %v9543 = vadd.f32 %v9029, %v9363
    %v9544 = vadd.f32 %v9030, %v9368
    %v9545 = vadd.f32 %v9031, %v9371
    %v9546 = vadd.f32 %v9032, %v9376
    %v9547 = vadd.f32 %v9033, %v9379
    %v9548 = vadd.f32 %v9034, %v9384
    %v9549 = vadd.f32 %v9035, %v9387
    %v9550 = vadd.f32 %v9036, %v9392
    %v9551 = vadd.f32 %v9037, %v9395
    %v9552 = vadd.f32 %v9038, %v9400
    %v9553 = vadd.f32 %v9039, %v9403
    %v9554 = vadd.f32 %v9040, %v9408
    %v9555 = vadd.f32 %v9041, %v9411
    %v9556 = vadd.f32 %v9042, %v9416
    %v9557 = vadd.f32 %v9043, %v9419
    %v9558 = vadd.f32 %v9044, %v9424
    %v9559 = vadd.f32 %v9045, %v9427
    %v9560 = vadd.f32 %v9046, %v9432
    %v9561 = vadd.f32 %v9047, %v9435
    %v9562 = vadd.f32 %v9048, %v9440
    %v9563 = vadd.f32 %v9049, %v9443
    %v9564 = vadd.f32 %v9050, %v9448
    %v9565 = vadd.f32 %v9051, %v9451
    %v9566 = vadd.f32 %v9052, %v9456
    %v9567 = vadd.f32 %v9053, %v9459
    %v9568 = vadd.f32 %v9054, %v9464
    %v9569 = vadd.f32 %v9055, %v9467
    %v9570 = vadd.f32 %v9056, %v9472
    %v9571 = vadd.f32 %v9057, %v9475
    %v9572 = vadd.f32 %v9058, %v9480
    %v9573 = vadd.f32 %v9059, %v9483
    %v9574 = vadd.f32 %v9060, %v9488
    %v9575 = vadd.f32 %v9061, %v9491
    %v9576 = vadd.f32 %v9062, %v9496
    %v9577 = vadd.f32 %v9063, %v9499
    %v9578 = vadd.f32 %v9064, %v9504
    %v9579 = vadd.f32 %v9065, %v9507
    %v9580 = vadd.f32 %v9066, %v9512
    %v9581 = vadd.f32 %v9067, %v9515
    %s9582 = scalar_lea.vmem %s2, 192
    %v9583 = vld [vmem:[%s9582] sm:$0xf]
    %v9584 = vld [vmem:[%s9582 + $0x4] sm:$0xf]
    %v9585 = vld [vmem:[%s9582 + $0x8] sm:$0xf]
    %v9586 = vld [vmem:[%s9582 + $0xc] sm:$0xf]
    %v9587 = vld [vmem:[%s9582 + $0x10] sm:$0xf]
    %v9588 = vld [vmem:[%s9582 + $0x14] sm:$0xf]
    %v9589 = vld [vmem:[%s9582 + $0x18] sm:$0xf]
    %v9590 = vld [vmem:[%s9582 + $0x1c] sm:$0xf]
    %v9599 = vunpack.c.l.b16 %v9583
    %v9600 = vunpack.c.l.b16 %v9584
    %v9601 = vunpack.c.l.b16 %v9585
    %v9602 = vunpack.c.l.b16 %v9586
    %v9603 = vunpack.c.l.b16 %v9587
    %v9604 = vunpack.c.l.b16 %v9588
    %v9605 = vunpack.c.l.b16 %v9589
    %v9606 = vunpack.c.l.b16 %v9590
    %v9607 = vpack.c.b16 %v9600, %v9599
    %v9608 = vpack.c.b16 %v9602, %v9601
    %v9609 = vpack.c.b16 %v9604, %v9603
    %v9610 = vpack.c.b16 %v9606, %v9605
    %9615 = vmatprep.subr.bf16.mxu0 0
    %9616 = vmatpush1.bf16.msra.mxu0 %v9607
    %9617 = vmatprep.subr.bf16.mxu0 0
    %9618 = vmatpush1.bf16.msra.mxu0 %v9608
    %9619 = vmatprep.subr.bf16.mxu0 0
    %9620 = vmatpush1.bf16.msra.mxu0 %v9609
    %9621 = vmatprep.subr.bf16.mxu0 0
    %9622 = vmatpush1.bf16.msra.mxu0 %v9610
    %9623 = vmatprep.subr.bf16.mxu0 0
    %9624 = vmatpush1.bf16.msra.mxu0 0
    %9625 = vmatprep.subr.bf16.mxu0 0
    %9626 = vmatpush1.bf16.msra.mxu0 0
    %9627 = vmatprep.subr.bf16.mxu0 0
    %9628 = vmatpush1.bf16.msra.mxu0 0
    %9629 = vmatprep.subr.bf16.mxu0 0
    %9630 = vmatpush1.bf16.msra.mxu0 0
    %9631 = vmatprep.subr.bf16.mxu0 0
    %9632 = vmatpush1.bf16.msra.mxu0 0
    %9633 = vmatprep.subr.bf16.mxu0 0
    %9634 = vmatpush1.bf16.msra.mxu0 0
    %9635 = vmatprep.subr.bf16.mxu0 0
    %9636 = vmatpush1.bf16.msra.mxu0 0
    %9637 = vmatprep.subr.bf16.mxu0 0
    %9638 = vmatpush1.bf16.msra.mxu0 0
    %9639 = vmatprep.subr.bf16.mxu0 0
    %9640 = vmatpush1.bf16.msra.mxu0 0
    %9641 = vmatprep.subr.bf16.mxu0 0
    %9642 = vmatpush1.bf16.msra.mxu0 0
    %9643 = vmatprep.subr.bf16.mxu0 0
    %9644 = vmatpush1.bf16.msra.mxu0 0
    %9645 = vmatprep.subr.bf16.mxu0 0
    %9646 = vmatpush1.bf16.msra.mxu0 0
    %9647 = vmatprep.mubr.bf16.mxu0 0
    %9648 = vmatmul.mubr.bf16.gmra.mrb[0].mxu0 %v9134
    %v9649 = vpop.f32.mrb[0].mxu0
    %v9650 = vadd.f32 0.0, %v9649
    %v9651 = vpop.f32.mrb[0].mxu0
    %v9652 = vpop.f32.mrb[0].mxu0
    %v9653 = vadd.f32 0.0, %v9652
    %v9654 = vpop.f32.mrb[0].mxu0
    %9655 = vmatprep.mubr.bf16.mxu0 0
    %9656 = vmatmul.mubr.bf16.gmra.mrb[0].mxu0 %v9137
    %v9657 = vpop.f32.mrb[0].mxu0
    %v9658 = vadd.f32 0.0, %v9657
    %v9659 = vpop.f32.mrb[0].mxu0
    %v9660 = vpop.f32.mrb[0].mxu0
    %v9661 = vadd.f32 0.0, %v9660
    %v9662 = vpop.f32.mrb[0].mxu0
    %9663 = vmatprep.mubr.bf16.mxu0 0
    %9664 = vmatmul.mubr.bf16.gmra.mrb[0].mxu0 %v9140
    %v9665 = vpop.f32.mrb[0].mxu0
    %v9666 = vadd.f32 0.0, %v9665
    %v9667 = vpop.f32.mrb[0].mxu0
    %v9668 = vpop.f32.mrb[0].mxu0
    %v9669 = vadd.f32 0.0, %v9668
    %v9670 = vpop.f32.mrb[0].mxu0
    %9671 = vmatprep.mubr.bf16.mxu0 0
    %9672 = vmatmul.mubr.bf16.gmra.mrb[0].mxu0 %v9143
    %v9673 = vpop.f32.mrb[0].mxu0
    %v9674 = vadd.f32 0.0, %v9673
    %v9675 = vpop.f32.mrb[0].mxu0
    %v9676 = vpop.f32.mrb[0].mxu0
    %v9677 = vadd.f32 0.0, %v9676
    %v9678 = vpop.f32.mrb[0].mxu0
    %9679 = vmatprep.mubr.bf16.mxu0 0
    %9680 = vmatmul.mubr.bf16.gmra.mrb[0].mxu0 %v9146
    %v9681 = vpop.f32.mrb[0].mxu0
    %v9682 = vadd.f32 0.0, %v9681
    %v9683 = vpop.f32.mrb[0].mxu0
    %v9684 = vpop.f32.mrb[0].mxu0
    %v9685 = vadd.f32 0.0, %v9684
    %v9686 = vpop.f32.mrb[0].mxu0
    %9687 = vmatprep.mubr.bf16.mxu0 0
    %9688 = vmatmul.mubr.bf16.gmra.mrb[0].mxu0 %v9149
    %v9689 = vpop.f32.mrb[0].mxu0
    %v9690 = vadd.f32 0.0, %v9689
    %v9691 = vpop.f32.mrb[0].mxu0
    %v9692 = vpop.f32.mrb[0].mxu0
    %v9693 = vadd.f32 0.0, %v9692
    %v9694 = vpop.f32.mrb[0].mxu0
    %9695 = vmatprep.mubr.bf16.mxu0 0
    %9696 = vmatmul.mubr.bf16.gmra.mrb[0].mxu0 %v9152
    %v9697 = vpop.f32.mrb[0].mxu0
    %v9698 = vadd.f32 0.0, %v9697
    %v9699 = vpop.f32.mrb[0].mxu0
    %v9700 = vpop.f32.mrb[0].mxu0
    %v9701 = vadd.f32 0.0, %v9700
    %v9702 = vpop.f32.mrb[0].mxu0
    %9703 = vmatprep.mubr.bf16.mxu0 0
    %9704 = vmatmul.mubr.bf16.gmra.mrb[0].mxu0 %v9155
    %v9705 = vpop.f32.mrb[0].mxu0
    %v9706 = vadd.f32 0.0, %v9705
    %v9707 = vpop.f32.mrb[0].mxu0
    %v9708 = vpop.f32.mrb[0].mxu0
    %v9709 = vadd.f32 0.0, %v9708
    %v9710 = vpop.f32.mrb[0].mxu0
    %9711 = vmatprep.mubr.bf16.mxu0 0
    %9712 = vmatmul.mubr.bf16.gmra.mrb[0].mxu0 %v9158
    %v9713 = vpop.f32.mrb[0].mxu0
    %v9714 = vadd.f32 0.0, %v9713
    %v9715 = vpop.f32.mrb[0].mxu0
    %v9716 = vpop.f32.mrb[0].mxu0
    %v9717 = vadd.f32 0.0, %v9716
    %v9718 = vpop.f32.mrb[0].mxu0
    %9719 = vmatprep.mubr.bf16.mxu0 0
    %9720 = vmatmul.mubr.bf16.gmra.mrb[0].mxu0 %v9161
    %v9721 = vpop.f32.mrb[0].mxu0
    %v9722 = vadd.f32 0.0, %v9721
    %v9723 = vpop.f32.mrb[0].mxu0
    %v9724 = vpop.f32.mrb[0].mxu0
    %v9725 = vadd.f32 0.0, %v9724
    %v9726 = vpop.f32.mrb[0].mxu0
    %9727 = vmatprep.mubr.bf16.mxu0 0
    %9728 = vmatmul.mubr.bf16.gmra.mrb[0].mxu0 %v9164
    %v9729 = vpop.f32.mrb[0].mxu0
    %v9730 = vadd.f32 0.0, %v9729
    %v9731 = vpop.f32.mrb[0].mxu0
    %v9732 = vpop.f32.mrb[0].mxu0
    %v9733 = vadd.f32 0.0, %v9732
    %v9734 = vpop.f32.mrb[0].mxu0
    %9735 = vmatprep.mubr.bf16.mxu0 0
    %9736 = vmatmul.mubr.bf16.gmra.mrb[0].mxu0 %v9167
    %v9737 = vpop.f32.mrb[0].mxu0
    %v9738 = vadd.f32 0.0, %v9737
    %v9739 = vpop.f32.mrb[0].mxu0
    %v9740 = vpop.f32.mrb[0].mxu0
    %v9741 = vadd.f32 0.0, %v9740
    %v9742 = vpop.f32.mrb[0].mxu0
    %9743 = vmatprep.mubr.bf16.mxu0 0
    %9744 = vmatmul.mubr.bf16.gmra.mrb[0].mxu0 %v9170
    %v9745 = vpop.f32.mrb[0].mxu0
    %v9746 = vadd.f32 0.0, %v9745
    %v9747 = vpop.f32.mrb[0].mxu0
    %v9748 = vpop.f32.mrb[0].mxu0
    %v9749 = vadd.f32 0.0, %v9748
    %v9750 = vpop.f32.mrb[0].mxu0
    %9751 = vmatprep.mubr.bf16.mxu0 0
    %9752 = vmatmul.mubr.bf16.gmra.mrb[0].mxu0 %v9173
    %v9753 = vpop.f32.mrb[0].mxu0
    %v9754 = vadd.f32 0.0, %v9753
    %v9755 = vpop.f32.mrb[0].mxu0
    %v9756 = vpop.f32.mrb[0].mxu0
    %v9757 = vadd.f32 0.0, %v9756
    %v9758 = vpop.f32.mrb[0].mxu0
    %9759 = vmatprep.mubr.bf16.mxu0 0
    %9760 = vmatmul.mubr.bf16.gmra.mrb[0].mxu0 %v9176
    %v9761 = vpop.f32.mrb[0].mxu0
    %v9762 = vadd.f32 0.0, %v9761
    %v9763 = vpop.f32.mrb[0].mxu0
    %v9764 = vpop.f32.mrb[0].mxu0
    %v9765 = vadd.f32 0.0, %v9764
    %v9766 = vpop.f32.mrb[0].mxu0
    %9767 = vmatprep.mubr.bf16.mxu0 0
    %9768 = vmatmul.mubr.bf16.gmra.mrb[0].mxu0 %v9179
    %v9769 = vpop.f32.mrb[0].mxu0
    %v9770 = vadd.f32 0.0, %v9769
    %v9771 = vpop.f32.mrb[0].mxu0
    %v9772 = vpop.f32.mrb[0].mxu0
    %v9773 = vadd.f32 0.0, %v9772
    %v9774 = vpop.f32.mrb[0].mxu0
    %9775 = vmatprep.mubr.bf16.mxu0 0
    %9776 = vmatmul.mubr.bf16.gmra.mrb[0].mxu0 %v9182
    %v9777 = vpop.f32.mrb[0].mxu0
    %v9778 = vadd.f32 0.0, %v9777
    %v9779 = vpop.f32.mrb[0].mxu0
    %v9780 = vpop.f32.mrb[0].mxu0
    %v9781 = vadd.f32 0.0, %v9780
    %v9782 = vpop.f32.mrb[0].mxu0
    %9783 = vmatprep.mubr.bf16.mxu0 0
    %9784 = vmatmul.mubr.bf16.gmra.mrb[0].mxu0 %v9185
    %v9785 = vpop.f32.mrb[0].mxu0
    %v9786 = vadd.f32 0.0, %v9785
    %v9787 = vpop.f32.mrb[0].mxu0
    %v9788 = vpop.f32.mrb[0].mxu0
    %v9789 = vadd.f32 0.0, %v9788
    %v9790 = vpop.f32.mrb[0].mxu0
    %9791 = vmatprep.mubr.bf16.mxu0 0
    %9792 = vmatmul.mubr.bf16.gmra.mrb[0].mxu0 %v9188
    %v9793 = vpop.f32.mrb[0].mxu0
    %v9794 = vadd.f32 0.0, %v9793
    %v9795 = vpop.f32.mrb[0].mxu0
    %v9796 = vpop.f32.mrb[0].mxu0
    %v9797 = vadd.f32 0.0, %v9796
    %v9798 = vpop.f32.mrb[0].mxu0
    %9799 = vmatprep.mubr.bf16.mxu0 0
    %9800 = vmatmul.mubr.bf16.gmra.mrb[0].mxu0 %v9191
    %v9801 = vpop.f32.mrb[0].mxu0
    %v9802 = vadd.f32 0.0, %v9801
    %v9803 = vpop.f32.mrb[0].mxu0
    %v9804 = vpop.f32.mrb[0].mxu0
    %v9805 = vadd.f32 0.0, %v9804
    %v9806 = vpop.f32.mrb[0].mxu0
    %9807 = vmatprep.mubr.bf16.mxu0 0
    %9808 = vmatmul.mubr.bf16.gmra.mrb[0].mxu0 %v9194
    %v9809 = vpop.f32.mrb[0].mxu0
    %v9810 = vadd.f32 0.0, %v9809
    %v9811 = vpop.f32.mrb[0].mxu0
    %v9812 = vpop.f32.mrb[0].mxu0
    %v9813 = vadd.f32 0.0, %v9812
    %v9814 = vpop.f32.mrb[0].mxu0
    %9815 = vmatprep.mubr.bf16.mxu0 0
    %9816 = vmatmul.mubr.bf16.gmra.mrb[0].mxu0 %v9197
    %v9817 = vpop.f32.mrb[0].mxu0
    %v9818 = vadd.f32 0.0, %v9817
    %v9819 = vpop.f32.mrb[0].mxu0
    %v9820 = vpop.f32.mrb[0].mxu0
    %v9821 = vadd.f32 0.0, %v9820
    %v9822 = vpop.f32.mrb[0].mxu0
    %9823 = vmatprep.mubr.bf16.mxu0 0
    %9824 = vmatmul.mubr.bf16.gmra.mrb[0].mxu0 %v9200
    %v9825 = vpop.f32.mrb[0].mxu0
    %v9826 = vadd.f32 0.0, %v9825
    %v9827 = vpop.f32.mrb[0].mxu0
    %v9828 = vpop.f32.mrb[0].mxu0
    %v9829 = vadd.f32 0.0, %v9828
    %v9830 = vpop.f32.mrb[0].mxu0
    %9831 = vmatprep.mubr.bf16.mxu0 0
    %9832 = vmatmul.mubr.bf16.gmra.mrb[0].mxu0 %v9203
    %v9833 = vpop.f32.mrb[0].mxu0
    %v9834 = vadd.f32 0.0, %v9833
    %v9835 = vpop.f32.mrb[0].mxu0
    %v9836 = vpop.f32.mrb[0].mxu0
    %v9837 = vadd.f32 0.0, %v9836
    %v9838 = vpop.f32.mrb[0].mxu0
    %9839 = vmatprep.mubr.bf16.mxu0 0
    %9840 = vmatmul.mubr.bf16.gmra.mrb[0].mxu0 %v9206
    %v9841 = vpop.f32.mrb[0].mxu0
    %v9842 = vadd.f32 0.0, %v9841
    %v9843 = vpop.f32.mrb[0].mxu0
    %v9844 = vpop.f32.mrb[0].mxu0
    %v9845 = vadd.f32 0.0, %v9844
    %v9846 = vpop.f32.mrb[0].mxu0
    %9847 = vmatprep.mubr.bf16.mxu0 0
    %9848 = vmatmul.mubr.bf16.gmra.mrb[0].mxu0 %v9209
    %v9849 = vpop.f32.mrb[0].mxu0
    %v9850 = vadd.f32 0.0, %v9849
    %v9851 = vpop.f32.mrb[0].mxu0
    %v9852 = vpop.f32.mrb[0].mxu0
    %v9853 = vadd.f32 0.0, %v9852
    %v9854 = vpop.f32.mrb[0].mxu0
    %9855 = vmatprep.mubr.bf16.mxu0 0
    %9856 = vmatmul.mubr.bf16.gmra.mrb[0].mxu0 %v9212
    %v9857 = vpop.f32.mrb[0].mxu0
    %v9858 = vadd.f32 0.0, %v9857
    %v9859 = vpop.f32.mrb[0].mxu0
    %v9860 = vpop.f32.mrb[0].mxu0
    %v9861 = vadd.f32 0.0, %v9860
    %v9862 = vpop.f32.mrb[0].mxu0
    %9863 = vmatprep.mubr.bf16.mxu0 0
    %9864 = vmatmul.mubr.bf16.gmra.mrb[0].mxu0 %v9215
    %v9865 = vpop.f32.mrb[0].mxu0
    %v9866 = vadd.f32 0.0, %v9865
    %v9867 = vpop.f32.mrb[0].mxu0
    %v9868 = vpop.f32.mrb[0].mxu0
    %v9869 = vadd.f32 0.0, %v9868
    %v9870 = vpop.f32.mrb[0].mxu0
    %9871 = vmatprep.mubr.bf16.mxu0 0
    %9872 = vmatmul.mubr.bf16.gmra.mrb[0].mxu0 %v9218
    %v9873 = vpop.f32.mrb[0].mxu0
    %v9874 = vadd.f32 0.0, %v9873
    %v9875 = vpop.f32.mrb[0].mxu0
    %v9876 = vpop.f32.mrb[0].mxu0
    %v9877 = vadd.f32 0.0, %v9876
    %v9878 = vpop.f32.mrb[0].mxu0
    %9879 = vmatprep.mubr.bf16.mxu0 0
    %9880 = vmatmul.mubr.bf16.gmra.mrb[0].mxu0 %v9221
    %v9881 = vpop.f32.mrb[0].mxu0
    %v9882 = vadd.f32 0.0, %v9881
    %v9883 = vpop.f32.mrb[0].mxu0
    %v9884 = vpop.f32.mrb[0].mxu0
    %v9885 = vadd.f32 0.0, %v9884
    %v9886 = vpop.f32.mrb[0].mxu0
    %9887 = vmatprep.mubr.bf16.mxu0 0
    %9888 = vmatmul.mubr.bf16.gmra.mrb[0].mxu0 %v9224
    %v9889 = vpop.f32.mrb[0].mxu0
    %v9890 = vadd.f32 0.0, %v9889
    %v9891 = vpop.f32.mrb[0].mxu0
    %v9892 = vpop.f32.mrb[0].mxu0
    %v9893 = vadd.f32 0.0, %v9892
    %v9894 = vpop.f32.mrb[0].mxu0
    %9895 = vmatprep.mubr.bf16.mxu0 0
    %9896 = vmatmul.mubr.bf16.gmra.mrb[0].mxu0 %v9227
    %v9897 = vpop.f32.mrb[0].mxu0
    %v9898 = vadd.f32 0.0, %v9897
    %v9899 = vpop.f32.mrb[0].mxu0
    %v9900 = vpop.f32.mrb[0].mxu0
    %v9901 = vadd.f32 0.0, %v9900
    %v9902 = vpop.f32.mrb[0].mxu0
    %9903 = vdwg.mxu0
    %v9904 = vrot.slane %v9650, 7
    %v9905 = vrot.slane %v9653, 7
    %v9906 = vrot.slane %v9658, 7
    %v9907 = vrot.slane %v9661, 7
    %v9908 = vrot.slane %v9666, 7
    %v9909 = vrot.slane %v9669, 7
    %v9910 = vrot.slane %v9674, 7
    %v9911 = vrot.slane %v9677, 7
    %v9912 = vrot.slane %v9682, 7
    %v9913 = vrot.slane %v9685, 7
    %v9914 = vrot.slane %v9690, 7
    %v9915 = vrot.slane %v9693, 7
    %v9916 = vrot.slane %v9698, 7
    %v9917 = vrot.slane %v9701, 7
    %v9918 = vrot.slane %v9706, 7
    %v9919 = vrot.slane %v9709, 7
    %v9920 = vrot.slane %v9714, 7
    %v9921 = vrot.slane %v9717, 7
    %v9922 = vrot.slane %v9722, 7
    %v9923 = vrot.slane %v9725, 7
    %v9924 = vrot.slane %v9730, 7
    %v9925 = vrot.slane %v9733, 7
    %v9926 = vrot.slane %v9738, 7
    %v9927 = vrot.slane %v9741, 7
    %v9928 = vrot.slane %v9746, 7
    %v9929 = vrot.slane %v9749, 7
    %v9930 = vrot.slane %v9754, 7
    %v9931 = vrot.slane %v9757, 7
    %v9932 = vrot.slane %v9762, 7
    %v9933 = vrot.slane %v9765, 7
    %v9934 = vrot.slane %v9770, 7
    %v9935 = vrot.slane %v9773, 7
    %v9936 = vrot.slane %v9778, 7
    %v9937 = vrot.slane %v9781, 7
    %v9938 = vrot.slane %v9786, 7
    %v9939 = vrot.slane %v9789, 7
    %v9940 = vrot.slane %v9794, 7
    %v9941 = vrot.slane %v9797, 7
    %v9942 = vrot.slane %v9802, 7
    %v9943 = vrot.slane %v9805, 7
    %v9944 = vrot.slane %v9810, 7
    %v9945 = vrot.slane %v9813, 7
    %v9946 = vrot.slane %v9818, 7
    %v9947 = vrot.slane %v9821, 7
    %v9948 = vrot.slane %v9826, 7
    %v9949 = vrot.slane %v9829, 7
    %v9950 = vrot.slane %v9834, 7
    %v9951 = vrot.slane %v9837, 7
    %v9952 = vrot.slane %v9842, 7
    %v9953 = vrot.slane %v9845, 7
    %v9954 = vrot.slane %v9850, 7
    %v9955 = vrot.slane %v9853, 7
    %v9956 = vrot.slane %v9858, 7
    %v9957 = vrot.slane %v9861, 7
    %v9958 = vrot.slane %v9866, 7
    %v9959 = vrot.slane %v9869, 7
    %v9960 = vrot.slane %v9874, 7
    %v9961 = vrot.slane %v9877, 7
    %v9962 = vrot.slane %v9882, 7
    %v9963 = vrot.slane %v9885, 7
    %v9964 = vrot.slane %v9890, 7
    %v9965 = vrot.slane %v9893, 7
    %v9966 = vrot.slane %v9898, 7
    %v9967 = vrot.slane %v9901, 7
    %v9968 = vsel %vm697, %v9966, %v9967
    %v9969 = vsel %vm697, %v9965, %v9966
    %v9970 = vsel %vm697, %v9964, %v9965
    %v9971 = vsel %vm697, %v9963, %v9964
    %v9972 = vsel %vm697, %v9962, %v9963
    %v9973 = vsel %vm697, %v9961, %v9962
    %v9974 = vsel %vm697, %v9960, %v9961
    %v9975 = vsel %vm697, %v9959, %v9960
    %v9976 = vsel %vm697, %v9958, %v9959
    %v9977 = vsel %vm697, %v9957, %v9958
    %v9978 = vsel %vm697, %v9956, %v9957
    %v9979 = vsel %vm697, %v9955, %v9956
    %v9980 = vsel %vm697, %v9954, %v9955
    %v9981 = vsel %vm697, %v9953, %v9954
    %v9982 = vsel %vm697, %v9952, %v9953
    %v9983 = vsel %vm697, %v9951, %v9952
    %v9984 = vsel %vm697, %v9950, %v9951
    %v9985 = vsel %vm697, %v9949, %v9950
    %v9986 = vsel %vm697, %v9948, %v9949
    %v9987 = vsel %vm697, %v9947, %v9948
    %v9988 = vsel %vm697, %v9946, %v9947
    %v9989 = vsel %vm697, %v9945, %v9946
    %v9990 = vsel %vm697, %v9944, %v9945
    %v9991 = vsel %vm697, %v9943, %v9944
    %v9992 = vsel %vm697, %v9942, %v9943
    %v9993 = vsel %vm697, %v9941, %v9942
    %v9994 = vsel %vm697, %v9940, %v9941
    %v9995 = vsel %vm697, %v9939, %v9940
    %v9996 = vsel %vm697, %v9938, %v9939
    %v9997 = vsel %vm697, %v9937, %v9938
    %v9998 = vsel %vm697, %v9936, %v9937
    %v9999 = vsel %vm697, %v9935, %v9936
    %v10000 = vsel %vm697, %v9934, %v9935
    %v10001 = vsel %vm697, %v9933, %v9934
    %v10002 = vsel %vm697, %v9932, %v9933
    %v10003 = vsel %vm697, %v9931, %v9932
    %v10004 = vsel %vm697, %v9930, %v9931
    %v10005 = vsel %vm697, %v9929, %v9930
    %v10006 = vsel %vm697, %v9928, %v9929
    %v10007 = vsel %vm697, %v9927, %v9928
    %v10008 = vsel %vm697, %v9926, %v9927
    %v10009 = vsel %vm697, %v9925, %v9926
    %v10010 = vsel %vm697, %v9924, %v9925
    %v10011 = vsel %vm697, %v9923, %v9924
    %v10012 = vsel %vm697, %v9922, %v9923
    %v10013 = vsel %vm697, %v9921, %v9922
    %v10014 = vsel %vm697, %v9920, %v9921
    %v10015 = vsel %vm697, %v9919, %v9920
    %v10016 = vsel %vm697, %v9918, %v9919
    %v10017 = vsel %vm697, %v9917, %v9918
    %v10018 = vsel %vm697, %v9916, %v9917
    %v10019 = vsel %vm697, %v9915, %v9916
    %v10020 = vsel %vm697, %v9914, %v9915
    %v10021 = vsel %vm697, %v9913, %v9914
    %v10022 = vsel %vm697, %v9912, %v9913
    %v10023 = vsel %vm697, %v9911, %v9912
    %v10024 = vsel %vm697, %v9910, %v9911
    %v10025 = vsel %vm697, %v9909, %v9910
    %v10026 = vsel %vm697, %v9908, %v9909
    %v10027 = vsel %vm697, %v9907, %v9908
    %v10028 = vsel %vm697, %v9906, %v9907
    %v10029 = vsel %vm697, %v9905, %v9906
    %v10030 = vsel %vm697, %v9904, %v9905
    %v10031 = vsel %vm697, %v9967, %v9904
    %v10032 = vsel %vm36, %v10031, 0.0
    %v10033 = vsel %vm37, %v10030, 0.0
    %v10034 = vsel %vm36, %v10029, 0.0
    %v10035 = vsel %vm37, %v10028, 0.0
    %v10036 = vsel %vm36, %v10027, 0.0
    %v10037 = vsel %vm37, %v10026, 0.0
    %v10038 = vsel %vm36, %v10025, 0.0
    %v10039 = vsel %vm37, %v10024, 0.0
    %v10040 = vsel %vm36, %v10023, 0.0
    %v10041 = vsel %vm37, %v10022, 0.0
    %v10042 = vsel %vm36, %v10021, 0.0
    %v10043 = vsel %vm37, %v10020, 0.0
    %v10044 = vsel %vm36, %v10019, 0.0
    %v10045 = vsel %vm37, %v10018, 0.0
    %v10046 = vsel %vm36, %v10017, 0.0
    %v10047 = vsel %vm37, %v10016, 0.0
    %v10048 = vsel %vm36, %v10015, 0.0
    %v10049 = vsel %vm37, %v10014, 0.0
    %v10050 = vsel %vm36, %v10013, 0.0
    %v10051 = vsel %vm37, %v10012, 0.0
    %v10052 = vsel %vm36, %v10011, 0.0
    %v10053 = vsel %vm37, %v10010, 0.0
    %v10054 = vsel %vm36, %v10009, 0.0
    %v10055 = vsel %vm37, %v10008, 0.0
    %v10056 = vsel %vm36, %v10007, 0.0
    %v10057 = vsel %vm37, %v10006, 0.0
    %v10058 = vsel %vm36, %v10005, 0.0
    %v10059 = vsel %vm37, %v10004, 0.0
    %v10060 = vsel %vm36, %v10003, 0.0
    %v10061 = vsel %vm37, %v10002, 0.0
    %v10062 = vsel %vm36, %v10001, 0.0
    %v10063 = vsel %vm37, %v10000, 0.0
    %v10064 = vsel %vm36, %v9999, 0.0
    %v10065 = vsel %vm37, %v9998, 0.0
    %v10066 = vsel %vm36, %v9997, 0.0
    %v10067 = vsel %vm37, %v9996, 0.0
    %v10068 = vsel %vm36, %v9995, 0.0
    %v10069 = vsel %vm37, %v9994, 0.0
    %v10070 = vsel %vm36, %v9993, 0.0
    %v10071 = vsel %vm37, %v9992, 0.0
    %v10072 = vsel %vm36, %v9991, 0.0
    %v10073 = vsel %vm37, %v9990, 0.0
    %v10074 = vsel %vm36, %v9989, 0.0
    %v10075 = vsel %vm37, %v9988, 0.0
    %v10076 = vsel %vm36, %v9987, 0.0
    %v10077 = vsel %vm37, %v9986, 0.0
    %v10078 = vsel %vm36, %v9985, 0.0
    %v10079 = vsel %vm37, %v9984, 0.0
    %v10080 = vsel %vm36, %v9983, 0.0
    %v10081 = vsel %vm37, %v9982, 0.0
    %v10082 = vsel %vm36, %v9981, 0.0
    %v10083 = vsel %vm37, %v9980, 0.0
    %v10084 = vsel %vm36, %v9979, 0.0
    %v10085 = vsel %vm37, %v9978, 0.0
    %v10086 = vsel %vm36, %v9977, 0.0
    %v10087 = vsel %vm37, %v9976, 0.0
    %v10088 = vsel %vm36, %v9975, 0.0
    %v10089 = vsel %vm37, %v9974, 0.0
    %v10090 = vsel %vm36, %v9973, 0.0
    %v10091 = vsel %vm37, %v9972, 0.0
    %v10092 = vsel %vm36, %v9971, 0.0
    %v10093 = vsel %vm37, %v9970, 0.0
    %v10094 = vsel %vm36, %v9969, 0.0
    %v10095 = vsel %vm37, %v9968, 0.0
    %v10096 = vadd.f32 %v9518, %v10032
    %v10097 = vadd.f32 %v9519, %v10033
    %v10098 = vadd.f32 %v9520, %v10034
    %v10099 = vadd.f32 %v9521, %v10035
    %v10100 = vadd.f32 %v9522, %v10036
    %v10101 = vadd.f32 %v9523, %v10037
    %v10102 = vadd.f32 %v9524, %v10038
    %v10103 = vadd.f32 %v9525, %v10039
    %v10104 = vadd.f32 %v9526, %v10040
    %v10105 = vadd.f32 %v9527, %v10041
    %v10106 = vadd.f32 %v9528, %v10042
    %v10107 = vadd.f32 %v9529, %v10043
    %v10108 = vadd.f32 %v9530, %v10044
    %v10109 = vadd.f32 %v9531, %v10045
    %v10110 = vadd.f32 %v9532, %v10046
    %v10111 = vadd.f32 %v9533, %v10047
    %v10112 = vadd.f32 %v9534, %v10048
    %v10113 = vadd.f32 %v9535, %v10049
    %v10114 = vadd.f32 %v9536, %v10050
    %v10115 = vadd.f32 %v9537, %v10051
    %v10116 = vadd.f32 %v9538, %v10052
    %v10117 = vadd.f32 %v9539, %v10053
    %v10118 = vadd.f32 %v9540, %v10054
    %v10119 = vadd.f32 %v9541, %v10055
    %v10120 = vadd.f32 %v9542, %v10056
    %v10121 = vadd.f32 %v9543, %v10057
    %v10122 = vadd.f32 %v9544, %v10058
    %v10123 = vadd.f32 %v9545, %v10059
    %v10124 = vadd.f32 %v9546, %v10060
    %v10125 = vadd.f32 %v9547, %v10061
    %v10126 = vadd.f32 %v9548, %v10062
    %v10127 = vadd.f32 %v9549, %v10063
    %v10128 = vadd.f32 %v9550, %v10064
    %v10129 = vadd.f32 %v9551, %v10065
    %v10130 = vadd.f32 %v9552, %v10066
    %v10131 = vadd.f32 %v9553, %v10067
    %v10132 = vadd.f32 %v9554, %v10068
    %v10133 = vadd.f32 %v9555, %v10069
    %v10134 = vadd.f32 %v9556, %v10070
    %v10135 = vadd.f32 %v9557, %v10071
    %v10136 = vadd.f32 %v9558, %v10072
    %v10137 = vadd.f32 %v9559, %v10073
    %v10138 = vadd.f32 %v9560, %v10074
    %v10139 = vadd.f32 %v9561, %v10075
    %v10140 = vadd.f32 %v9562, %v10076
    %v10141 = vadd.f32 %v9563, %v10077
    %v10142 = vadd.f32 %v9564, %v10078
    %v10143 = vadd.f32 %v9565, %v10079
    %v10144 = vadd.f32 %v9566, %v10080
    %v10145 = vadd.f32 %v9567, %v10081
    %v10146 = vadd.f32 %v9568, %v10082
    %v10147 = vadd.f32 %v9569, %v10083
    %v10148 = vadd.f32 %v9570, %v10084
    %v10149 = vadd.f32 %v9571, %v10085
    %v10150 = vadd.f32 %v9572, %v10086
    %v10151 = vadd.f32 %v9573, %v10087
    %v10152 = vadd.f32 %v9574, %v10088
    %v10153 = vadd.f32 %v9575, %v10089
    %v10154 = vadd.f32 %v9576, %v10090
    %v10155 = vadd.f32 %v9577, %v10091
    %v10156 = vadd.f32 %v9578, %v10092
    %v10157 = vadd.f32 %v9579, %v10093
    %v10158 = vadd.f32 %v9580, %v10094
    %v10159 = vadd.f32 %v9581, %v10095
    %s10160 = scalar_lea.vmem %s2, 256
    %v10161 = vld [vmem:[%s10160] sm:$0xf]
    %v10162 = vld [vmem:[%s10160 + $0x4] sm:$0xf]
    %v10163 = vld [vmem:[%s10160 + $0x8] sm:$0xf]
    %v10164 = vld [vmem:[%s10160 + $0xc] sm:$0xf]
    %v10165 = vld [vmem:[%s10160 + $0x10] sm:$0xf]
    %v10166 = vld [vmem:[%s10160 + $0x14] sm:$0xf]
    %v10167 = vld [vmem:[%s10160 + $0x18] sm:$0xf]
    %v10168 = vld [vmem:[%s10160 + $0x1c] sm:$0xf]
    %v10177 = vunpack.c.l.b16 %v10161
    %v10178 = vunpack.c.l.b16 %v10162
    %v10179 = vunpack.c.l.b16 %v10163
    %v10180 = vunpack.c.l.b16 %v10164
    %v10181 = vunpack.c.l.b16 %v10165
    %v10182 = vunpack.c.l.b16 %v10166
    %v10183 = vunpack.c.l.b16 %v10167
    %v10184 = vunpack.c.l.b16 %v10168
    %v10185 = vpack.c.b16 %v10178, %v10177
    %v10186 = vpack.c.b16 %v10180, %v10179
    %v10187 = vpack.c.b16 %v10182, %v10181
    %v10188 = vpack.c.b16 %v10184, %v10183
    %10193 = vmatprep.subr.bf16.mxu0 0
    %10194 = vmatpush1.bf16.msra.mxu0 %v10185
    %10195 = vmatprep.subr.bf16.mxu0 0
    %10196 = vmatpush1.bf16.msra.mxu0 %v10186
    %10197 = vmatprep.subr.bf16.mxu0 0
    %10198 = vmatpush1.bf16.msra.mxu0 %v10187
    %10199 = vmatprep.subr.bf16.mxu0 0
    %10200 = vmatpush1.bf16.msra.mxu0 %v10188
    %10201 = vmatprep.subr.bf16.mxu0 0
    %10202 = vmatpush1.bf16.msra.mxu0 0
    %10203 = vmatprep.subr.bf16.mxu0 0
    %10204 = vmatpush1.bf16.msra.mxu0 0
    %10205 = vmatprep.subr.bf16.mxu0 0
    %10206 = vmatpush1.bf16.msra.mxu0 0
    %10207 = vmatprep.subr.bf16.mxu0 0
    %10208 = vmatpush1.bf16.msra.mxu0 0
    %10209 = vmatprep.subr.bf16.mxu0 0
    %10210 = vmatpush1.bf16.msra.mxu0 0
    %10211 = vmatprep.subr.bf16.mxu0 0
    %10212 = vmatpush1.bf16.msra.mxu0 0
    %10213 = vmatprep.subr.bf16.mxu0 0
    %10214 = vmatpush1.bf16.msra.mxu0 0
    %10215 = vmatprep.subr.bf16.mxu0 0
    %10216 = vmatpush1.bf16.msra.mxu0 0
    %10217 = vmatprep.subr.bf16.mxu0 0
    %10218 = vmatpush1.bf16.msra.mxu0 0
    %10219 = vmatprep.subr.bf16.mxu0 0
    %10220 = vmatpush1.bf16.msra.mxu0 0
    %10221 = vmatprep.subr.bf16.mxu0 0
    %10222 = vmatpush1.bf16.msra.mxu0 0
    %10223 = vmatprep.subr.bf16.mxu0 0
    %10224 = vmatpush1.bf16.msra.mxu0 0
    %10225 = vmatprep.mubr.bf16.mxu0 0
    %10226 = vmatmul.mubr.bf16.gmra.mrb[0].mxu0 %v9134
    %v10227 = vpop.f32.mrb[0].mxu0
    %v10228 = vadd.f32 0.0, %v10227
    %v10229 = vpop.f32.mrb[0].mxu0
    %v10230 = vpop.f32.mrb[0].mxu0
    %v10231 = vadd.f32 0.0, %v10230
    %v10232 = vpop.f32.mrb[0].mxu0
    %10233 = vmatprep.mubr.bf16.mxu0 0
    %10234 = vmatmul.mubr.bf16.gmra.mrb[0].mxu0 %v9137
    %v10235 = vpop.f32.mrb[0].mxu0
    %v10236 = vadd.f32 0.0, %v10235
    %v10237 = vpop.f32.mrb[0].mxu0
    %v10238 = vpop.f32.mrb[0].mxu0
    %v10239 = vadd.f32 0.0, %v10238
    %v10240 = vpop.f32.mrb[0].mxu0
    %10241 = vmatprep.mubr.bf16.mxu0 0
    %10242 = vmatmul.mubr.bf16.gmra.mrb[0].mxu0 %v9140
    %v10243 = vpop.f32.mrb[0].mxu0
    %v10244 = vadd.f32 0.0, %v10243
    %v10245 = vpop.f32.mrb[0].mxu0
    %v10246 = vpop.f32.mrb[0].mxu0
    %v10247 = vadd.f32 0.0, %v10246
    %v10248 = vpop.f32.mrb[0].mxu0
    %10249 = vmatprep.mubr.bf16.mxu0 0
    %10250 = vmatmul.mubr.bf16.gmra.mrb[0].mxu0 %v9143
    %v10251 = vpop.f32.mrb[0].mxu0
    %v10252 = vadd.f32 0.0, %v10251
    %v10253 = vpop.f32.mrb[0].mxu0
    %v10254 = vpop.f32.mrb[0].mxu0
    %v10255 = vadd.f32 0.0, %v10254
    %v10256 = vpop.f32.mrb[0].mxu0
    %10257 = vmatprep.mubr.bf16.mxu0 0
    %10258 = vmatmul.mubr.bf16.gmra.mrb[0].mxu0 %v9146
    %v10259 = vpop.f32.mrb[0].mxu0
    %v10260 = vadd.f32 0.0, %v10259
    %v10261 = vpop.f32.mrb[0].mxu0
    %v10262 = vpop.f32.mrb[0].mxu0
    %v10263 = vadd.f32 0.0, %v10262
    %v10264 = vpop.f32.mrb[0].mxu0
    %10265 = vmatprep.mubr.bf16.mxu0 0
    %10266 = vmatmul.mubr.bf16.gmra.mrb[0].mxu0 %v9149
    %v10267 = vpop.f32.mrb[0].mxu0
    %v10268 = vadd.f32 0.0, %v10267
    %v10269 = vpop.f32.mrb[0].mxu0
    %v10270 = vpop.f32.mrb[0].mxu0
    %v10271 = vadd.f32 0.0, %v10270
    %v10272 = vpop.f32.mrb[0].mxu0
    %10273 = vmatprep.mubr.bf16.mxu0 0
    %10274 = vmatmul.mubr.bf16.gmra.mrb[0].mxu0 %v9152
    %v10275 = vpop.f32.mrb[0].mxu0
    %v10276 = vadd.f32 0.0, %v10275
    %v10277 = vpop.f32.mrb[0].mxu0
    %v10278 = vpop.f32.mrb[0].mxu0
    %v10279 = vadd.f32 0.0, %v10278
    %v10280 = vpop.f32.mrb[0].mxu0
    %10281 = vmatprep.mubr.bf16.mxu0 0
    %10282 = vmatmul.mubr.bf16.gmra.mrb[0].mxu0 %v9155
    %v10283 = vpop.f32.mrb[0].mxu0
    %v10284 = vadd.f32 0.0, %v10283
    %v10285 = vpop.f32.mrb[0].mxu0
    %v10286 = vpop.f32.mrb[0].mxu0
    %v10287 = vadd.f32 0.0, %v10286
    %v10288 = vpop.f32.mrb[0].mxu0
    %10289 = vmatprep.mubr.bf16.mxu0 0
    %10290 = vmatmul.mubr.bf16.gmra.mrb[0].mxu0 %v9158
    %v10291 = vpop.f32.mrb[0].mxu0
    %v10292 = vadd.f32 0.0, %v10291
    %v10293 = vpop.f32.mrb[0].mxu0
    %v10294 = vpop.f32.mrb[0].mxu0
    %v10295 = vadd.f32 0.0, %v10294
    %v10296 = vpop.f32.mrb[0].mxu0
    %10297 = vmatprep.mubr.bf16.mxu0 0
    %10298 = vmatmul.mubr.bf16.gmra.mrb[0].mxu0 %v9161
    %v10299 = vpop.f32.mrb[0].mxu0
    %v10300 = vadd.f32 0.0, %v10299
    %v10301 = vpop.f32.mrb[0].mxu0
    %v10302 = vpop.f32.mrb[0].mxu0
    %v10303 = vadd.f32 0.0, %v10302
    %v10304 = vpop.f32.mrb[0].mxu0
    %10305 = vmatprep.mubr.bf16.mxu0 0
    %10306 = vmatmul.mubr.bf16.gmra.mrb[0].mxu0 %v9164
    %v10307 = vpop.f32.mrb[0].mxu0
    %v10308 = vadd.f32 0.0, %v10307
    %v10309 = vpop.f32.mrb[0].mxu0
    %v10310 = vpop.f32.mrb[0].mxu0
    %v10311 = vadd.f32 0.0, %v10310
    %v10312 = vpop.f32.mrb[0].mxu0
    %10313 = vmatprep.mubr.bf16.mxu0 0
    %10314 = vmatmul.mubr.bf16.gmra.mrb[0].mxu0 %v9167
    %v10315 = vpop.f32.mrb[0].mxu0
    %v10316 = vadd.f32 0.0, %v10315
    %v10317 = vpop.f32.mrb[0].mxu0
    %v10318 = vpop.f32.mrb[0].mxu0
    %v10319 = vadd.f32 0.0, %v10318
    %v10320 = vpop.f32.mrb[0].mxu0
    %10321 = vmatprep.mubr.bf16.mxu0 0
    %10322 = vmatmul.mubr.bf16.gmra.mrb[0].mxu0 %v9170
    %v10323 = vpop.f32.mrb[0].mxu0
    %v10324 = vadd.f32 0.0, %v10323
    %v10325 = vpop.f32.mrb[0].mxu0
    %v10326 = vpop.f32.mrb[0].mxu0
    %v10327 = vadd.f32 0.0, %v10326
    %v10328 = vpop.f32.mrb[0].mxu0
    %10329 = vmatprep.mubr.bf16.mxu0 0
    %10330 = vmatmul.mubr.bf16.gmra.mrb[0].mxu0 %v9173
    %v10331 = vpop.f32.mrb[0].mxu0
    %v10332 = vadd.f32 0.0, %v10331
    %v10333 = vpop.f32.mrb[0].mxu0
    %v10334 = vpop.f32.mrb[0].mxu0
    %v10335 = vadd.f32 0.0, %v10334
    %v10336 = vpop.f32.mrb[0].mxu0
    %10337 = vmatprep.mubr.bf16.mxu0 0
    %10338 = vmatmul.mubr.bf16.gmra.mrb[0].mxu0 %v9176
    %v10339 = vpop.f32.mrb[0].mxu0
    %v10340 = vadd.f32 0.0, %v10339
    %v10341 = vpop.f32.mrb[0].mxu0
    %v10342 = vpop.f32.mrb[0].mxu0
    %v10343 = vadd.f32 0.0, %v10342
    %v10344 = vpop.f32.mrb[0].mxu0
    %10345 = vmatprep.mubr.bf16.mxu0 0
    %10346 = vmatmul.mubr.bf16.gmra.mrb[0].mxu0 %v9179
    %v10347 = vpop.f32.mrb[0].mxu0
    %v10348 = vadd.f32 0.0, %v10347
    %v10349 = vpop.f32.mrb[0].mxu0
    %v10350 = vpop.f32.mrb[0].mxu0
    %v10351 = vadd.f32 0.0, %v10350
    %v10352 = vpop.f32.mrb[0].mxu0
    %10353 = vmatprep.mubr.bf16.mxu0 0
    %10354 = vmatmul.mubr.bf16.gmra.mrb[0].mxu0 %v9182
    %v10355 = vpop.f32.mrb[0].mxu0
    %v10356 = vadd.f32 0.0, %v10355
    %v10357 = vpop.f32.mrb[0].mxu0
    %v10358 = vpop.f32.mrb[0].mxu0
    %v10359 = vadd.f32 0.0, %v10358
    %v10360 = vpop.f32.mrb[0].mxu0
    %10361 = vmatprep.mubr.bf16.mxu0 0
    %10362 = vmatmul.mubr.bf16.gmra.mrb[0].mxu0 %v9185
    %v10363 = vpop.f32.mrb[0].mxu0
    %v10364 = vadd.f32 0.0, %v10363
    %v10365 = vpop.f32.mrb[0].mxu0
    %v10366 = vpop.f32.mrb[0].mxu0
    %v10367 = vadd.f32 0.0, %v10366
    %v10368 = vpop.f32.mrb[0].mxu0
    %10369 = vmatprep.mubr.bf16.mxu0 0
    %10370 = vmatmul.mubr.bf16.gmra.mrb[0].mxu0 %v9188
    %v10371 = vpop.f32.mrb[0].mxu0
    %v10372 = vadd.f32 0.0, %v10371
    %v10373 = vpop.f32.mrb[0].mxu0
    %v10374 = vpop.f32.mrb[0].mxu0
    %v10375 = vadd.f32 0.0, %v10374
    %v10376 = vpop.f32.mrb[0].mxu0
    %10377 = vmatprep.mubr.bf16.mxu0 0
    %10378 = vmatmul.mubr.bf16.gmra.mrb[0].mxu0 %v9191
    %v10379 = vpop.f32.mrb[0].mxu0
    %v10380 = vadd.f32 0.0, %v10379
    %v10381 = vpop.f32.mrb[0].mxu0
    %v10382 = vpop.f32.mrb[0].mxu0
    %v10383 = vadd.f32 0.0, %v10382
    %v10384 = vpop.f32.mrb[0].mxu0
    %10385 = vmatprep.mubr.bf16.mxu0 0
    %10386 = vmatmul.mubr.bf16.gmra.mrb[0].mxu0 %v9194
    %v10387 = vpop.f32.mrb[0].mxu0
    %v10388 = vadd.f32 0.0, %v10387
    %v10389 = vpop.f32.mrb[0].mxu0
    %v10390 = vpop.f32.mrb[0].mxu0
    %v10391 = vadd.f32 0.0, %v10390
    %v10392 = vpop.f32.mrb[0].mxu0
    %10393 = vmatprep.mubr.bf16.mxu0 0
    %10394 = vmatmul.mubr.bf16.gmra.mrb[0].mxu0 %v9197
    %v10395 = vpop.f32.mrb[0].mxu0
    %v10396 = vadd.f32 0.0, %v10395
    %v10397 = vpop.f32.mrb[0].mxu0
    %v10398 = vpop.f32.mrb[0].mxu0
    %v10399 = vadd.f32 0.0, %v10398
    %v10400 = vpop.f32.mrb[0].mxu0
    %10401 = vmatprep.mubr.bf16.mxu0 0
    %10402 = vmatmul.mubr.bf16.gmra.mrb[0].mxu0 %v9200
    %v10403 = vpop.f32.mrb[0].mxu0
    %v10404 = vadd.f32 0.0, %v10403
    %v10405 = vpop.f32.mrb[0].mxu0
    %v10406 = vpop.f32.mrb[0].mxu0
    %v10407 = vadd.f32 0.0, %v10406
    %v10408 = vpop.f32.mrb[0].mxu0
    %10409 = vmatprep.mubr.bf16.mxu0 0
    %10410 = vmatmul.mubr.bf16.gmra.mrb[0].mxu0 %v9203
    %v10411 = vpop.f32.mrb[0].mxu0
    %v10412 = vadd.f32 0.0, %v10411
    %v10413 = vpop.f32.mrb[0].mxu0
    %v10414 = vpop.f32.mrb[0].mxu0
    %v10415 = vadd.f32 0.0, %v10414
    %v10416 = vpop.f32.mrb[0].mxu0
    %10417 = vmatprep.mubr.bf16.mxu0 0
    %10418 = vmatmul.mubr.bf16.gmra.mrb[0].mxu0 %v9206
    %v10419 = vpop.f32.mrb[0].mxu0
    %v10420 = vadd.f32 0.0, %v10419
    %v10421 = vpop.f32.mrb[0].mxu0
    %v10422 = vpop.f32.mrb[0].mxu0
    %v10423 = vadd.f32 0.0, %v10422
    %v10424 = vpop.f32.mrb[0].mxu0
    %10425 = vmatprep.mubr.bf16.mxu0 0
    %10426 = vmatmul.mubr.bf16.gmra.mrb[0].mxu0 %v9209
    %v10427 = vpop.f32.mrb[0].mxu0
    %v10428 = vadd.f32 0.0, %v10427
    %v10429 = vpop.f32.mrb[0].mxu0
    %v10430 = vpop.f32.mrb[0].mxu0
    %v10431 = vadd.f32 0.0, %v10430
    %v10432 = vpop.f32.mrb[0].mxu0
    %10433 = vmatprep.mubr.bf16.mxu0 0
    %10434 = vmatmul.mubr.bf16.gmra.mrb[0].mxu0 %v9212
    %v10435 = vpop.f32.mrb[0].mxu0
    %v10436 = vadd.f32 0.0, %v10435
    %v10437 = vpop.f32.mrb[0].mxu0
    %v10438 = vpop.f32.mrb[0].mxu0
    %v10439 = vadd.f32 0.0, %v10438
    %v10440 = vpop.f32.mrb[0].mxu0
    %10441 = vmatprep.mubr.bf16.mxu0 0
    %10442 = vmatmul.mubr.bf16.gmra.mrb[0].mxu0 %v9215
    %v10443 = vpop.f32.mrb[0].mxu0
    %v10444 = vadd.f32 0.0, %v10443
    %v10445 = vpop.f32.mrb[0].mxu0
    %v10446 = vpop.f32.mrb[0].mxu0
    %v10447 = vadd.f32 0.0, %v10446
    %v10448 = vpop.f32.mrb[0].mxu0
    %10449 = vmatprep.mubr.bf16.mxu0 0
    %10450 = vmatmul.mubr.bf16.gmra.mrb[0].mxu0 %v9218
    %v10451 = vpop.f32.mrb[0].mxu0
    %v10452 = vadd.f32 0.0, %v10451
    %v10453 = vpop.f32.mrb[0].mxu0
    %v10454 = vpop.f32.mrb[0].mxu0
    %v10455 = vadd.f32 0.0, %v10454
    %v10456 = vpop.f32.mrb[0].mxu0
    %10457 = vmatprep.mubr.bf16.mxu0 0
    %10458 = vmatmul.mubr.bf16.gmra.mrb[0].mxu0 %v9221
    %v10459 = vpop.f32.mrb[0].mxu0
    %v10460 = vadd.f32 0.0, %v10459
    %v10461 = vpop.f32.mrb[0].mxu0
    %v10462 = vpop.f32.mrb[0].mxu0
    %v10463 = vadd.f32 0.0, %v10462
    %v10464 = vpop.f32.mrb[0].mxu0
    %10465 = vmatprep.mubr.bf16.mxu0 0
    %10466 = vmatmul.mubr.bf16.gmra.mrb[0].mxu0 %v9224
    %v10467 = vpop.f32.mrb[0].mxu0
    %v10468 = vadd.f32 0.0, %v10467
    %v10469 = vpop.f32.mrb[0].mxu0
    %v10470 = vpop.f32.mrb[0].mxu0
    %v10471 = vadd.f32 0.0, %v10470
    %v10472 = vpop.f32.mrb[0].mxu0
    %10473 = vmatprep.mubr.bf16.mxu0 0
    %10474 = vmatmul.mubr.bf16.gmra.mrb[0].mxu0 %v9227
    %v10475 = vpop.f32.mrb[0].mxu0
    %v10476 = vadd.f32 0.0, %v10475
    %v10477 = vpop.f32.mrb[0].mxu0
    %v10478 = vpop.f32.mrb[0].mxu0
    %v10479 = vadd.f32 0.0, %v10478
    %v10480 = vpop.f32.mrb[0].mxu0
    %10481 = vdwg.mxu0
    %v10482 = vrot.slane %v10228, 1
    %v10483 = vrot.slane %v10231, 1
    %v10484 = vrot.slane %v10236, 1
    %v10485 = vrot.slane %v10239, 1
    %v10486 = vrot.slane %v10244, 1
    %v10487 = vrot.slane %v10247, 1
    %v10488 = vrot.slane %v10252, 1
    %v10489 = vrot.slane %v10255, 1
    %v10490 = vrot.slane %v10260, 1
    %v10491 = vrot.slane %v10263, 1
    %v10492 = vrot.slane %v10268, 1
    %v10493 = vrot.slane %v10271, 1
    %v10494 = vrot.slane %v10276, 1
    %v10495 = vrot.slane %v10279, 1
    %v10496 = vrot.slane %v10284, 1
    %v10497 = vrot.slane %v10287, 1
    %v10498 = vrot.slane %v10292, 1
    %v10499 = vrot.slane %v10295, 1
    %v10500 = vrot.slane %v10300, 1
    %v10501 = vrot.slane %v10303, 1
    %v10502 = vrot.slane %v10308, 1
    %v10503 = vrot.slane %v10311, 1
    %v10504 = vrot.slane %v10316, 1
    %v10505 = vrot.slane %v10319, 1
    %v10506 = vrot.slane %v10324, 1
    %v10507 = vrot.slane %v10327, 1
    %v10508 = vrot.slane %v10332, 1
    %v10509 = vrot.slane %v10335, 1
    %v10510 = vrot.slane %v10340, 1
    %v10511 = vrot.slane %v10343, 1
    %v10512 = vrot.slane %v10348, 1
    %v10513 = vrot.slane %v10351, 1
    %v10514 = vrot.slane %v10356, 1
    %v10515 = vrot.slane %v10359, 1
    %v10516 = vrot.slane %v10364, 1
    %v10517 = vrot.slane %v10367, 1
    %v10518 = vrot.slane %v10372, 1
    %v10519 = vrot.slane %v10375, 1
    %v10520 = vrot.slane %v10380, 1
    %v10521 = vrot.slane %v10383, 1
    %v10522 = vrot.slane %v10388, 1
    %v10523 = vrot.slane %v10391, 1
    %v10524 = vrot.slane %v10396, 1
    %v10525 = vrot.slane %v10399, 1
    %v10526 = vrot.slane %v10404, 1
    %v10527 = vrot.slane %v10407, 1
    %v10528 = vrot.slane %v10412, 1
    %v10529 = vrot.slane %v10415, 1
    %v10530 = vrot.slane %v10420, 1
    %v10531 = vrot.slane %v10423, 1
    %v10532 = vrot.slane %v10428, 1
    %v10533 = vrot.slane %v10431, 1
    %v10534 = vrot.slane %v10436, 1
    %v10535 = vrot.slane %v10439, 1
    %v10536 = vrot.slane %v10444, 1
    %v10537 = vrot.slane %v10447, 1
    %v10538 = vrot.slane %v10452, 1
    %v10539 = vrot.slane %v10455, 1
    %v10540 = vrot.slane %v10460, 1
    %v10541 = vrot.slane %v10463, 1
    %v10542 = vrot.slane %v10468, 1
    %v10543 = vrot.slane %v10471, 1
    %v10544 = vrot.slane %v10476, 1
    %v10545 = vrot.slane %v10479, 1
    %v10546 = vsel %vm1525, %v10544, %v10545
    %v10547 = vsel %vm1525, %v10543, %v10544
    %v10548 = vsel %vm1525, %v10542, %v10543
    %v10549 = vsel %vm1525, %v10541, %v10542
    %v10550 = vsel %vm1525, %v10540, %v10541
    %v10551 = vsel %vm1525, %v10539, %v10540
    %v10552 = vsel %vm1525, %v10538, %v10539
    %v10553 = vsel %vm1525, %v10537, %v10538
    %v10554 = vsel %vm1525, %v10536, %v10537
    %v10555 = vsel %vm1525, %v10535, %v10536
    %v10556 = vsel %vm1525, %v10534, %v10535
    %v10557 = vsel %vm1525, %v10533, %v10534
    %v10558 = vsel %vm1525, %v10532, %v10533
    %v10559 = vsel %vm1525, %v10531, %v10532
    %v10560 = vsel %vm1525, %v10530, %v10531
    %v10561 = vsel %vm1525, %v10529, %v10530
    %v10562 = vsel %vm1525, %v10528, %v10529
    %v10563 = vsel %vm1525, %v10527, %v10528
    %v10564 = vsel %vm1525, %v10526, %v10527
    %v10565 = vsel %vm1525, %v10525, %v10526
    %v10566 = vsel %vm1525, %v10524, %v10525
    %v10567 = vsel %vm1525, %v10523, %v10524
    %v10568 = vsel %vm1525, %v10522, %v10523
    %v10569 = vsel %vm1525, %v10521, %v10522
    %v10570 = vsel %vm1525, %v10520, %v10521
    %v10571 = vsel %vm1525, %v10519, %v10520
    %v10572 = vsel %vm1525, %v10518, %v10519
    %v10573 = vsel %vm1525, %v10517, %v10518
    %v10574 = vsel %vm1525, %v10516, %v10517
    %v10575 = vsel %vm1525, %v10515, %v10516
    %v10576 = vsel %vm1525, %v10514, %v10515
    %v10577 = vsel %vm1525, %v10513, %v10514
    %v10578 = vsel %vm1525, %v10512, %v10513
    %v10579 = vsel %vm1525, %v10511, %v10512
    %v10580 = vsel %vm1525, %v10510, %v10511
    %v10581 = vsel %vm1525, %v10509, %v10510
    %v10582 = vsel %vm1525, %v10508, %v10509
    %v10583 = vsel %vm1525, %v10507, %v10508
    %v10584 = vsel %vm1525, %v10506, %v10507
    %v10585 = vsel %vm1525, %v10505, %v10506
    %v10586 = vsel %vm1525, %v10504, %v10505
    %v10587 = vsel %vm1525, %v10503, %v10504
    %v10588 = vsel %vm1525, %v10502, %v10503
    %v10589 = vsel %vm1525, %v10501, %v10502
    %v10590 = vsel %vm1525, %v10500, %v10501
    %v10591 = vsel %vm1525, %v10499, %v10500
    %v10592 = vsel %vm1525, %v10498, %v10499
    %v10593 = vsel %vm1525, %v10497, %v10498
    %v10594 = vsel %vm1525, %v10496, %v10497
    %v10595 = vsel %vm1525, %v10495, %v10496
    %v10596 = vsel %vm1525, %v10494, %v10495
    %v10597 = vsel %vm1525, %v10493, %v10494
    %v10598 = vsel %vm1525, %v10492, %v10493
    %v10599 = vsel %vm1525, %v10491, %v10492
    %v10600 = vsel %vm1525, %v10490, %v10491
    %v10601 = vsel %vm1525, %v10489, %v10490
    %v10602 = vsel %vm1525, %v10488, %v10489
    %v10603 = vsel %vm1525, %v10487, %v10488
    %v10604 = vsel %vm1525, %v10486, %v10487
    %v10605 = vsel %vm1525, %v10485, %v10486
    %v10606 = vsel %vm1525, %v10484, %v10485
    %v10607 = vsel %vm1525, %v10483, %v10484
    %v10608 = vsel %vm1525, %v10482, %v10483
    %v10609 = vsel %vm1525, %v10545, %v10482
    %v10610 = vsel %vm38, %v10608, 0.0
    %v10611 = vsel %vm39, %v10607, 0.0
    %v10612 = vsel %vm38, %v10606, 0.0
    %v10613 = vsel %vm39, %v10605, 0.0
    %v10614 = vsel %vm38, %v10604, 0.0
    %v10615 = vsel %vm39, %v10603, 0.0
    %v10616 = vsel %vm38, %v10602, 0.0
    %v10617 = vsel %vm39, %v10601, 0.0
    %v10618 = vsel %vm38, %v10600, 0.0
    %v10619 = vsel %vm39, %v10599, 0.0
    %v10620 = vsel %vm38, %v10598, 0.0
    %v10621 = vsel %vm39, %v10597, 0.0
    %v10622 = vsel %vm38, %v10596, 0.0
    %v10623 = vsel %vm39, %v10595, 0.0
    %v10624 = vsel %vm38, %v10594, 0.0
    %v10625 = vsel %vm39, %v10593, 0.0
    %v10626 = vsel %vm38, %v10592, 0.0
    %v10627 = vsel %vm39, %v10591, 0.0
    %v10628 = vsel %vm38, %v10590, 0.0
    %v10629 = vsel %vm39, %v10589, 0.0
    %v10630 = vsel %vm38, %v10588, 0.0
    %v10631 = vsel %vm39, %v10587, 0.0
    %v10632 = vsel %vm38, %v10586, 0.0
    %v10633 = vsel %vm39, %v10585, 0.0
    %v10634 = vsel %vm38, %v10584, 0.0
    %v10635 = vsel %vm39, %v10583, 0.0
    %v10636 = vsel %vm38, %v10582, 0.0
    %v10637 = vsel %vm39, %v10581, 0.0
    %v10638 = vsel %vm38, %v10580, 0.0
    %v10639 = vsel %vm39, %v10579, 0.0
    %v10640 = vsel %vm38, %v10578, 0.0
    %v10641 = vsel %vm39, %v10577, 0.0
    %v10642 = vsel %vm38, %v10576, 0.0
    %v10643 = vsel %vm39, %v10575, 0.0
    %v10644 = vsel %vm38, %v10574, 0.0
    %v10645 = vsel %vm39, %v10573, 0.0
    %v10646 = vsel %vm38, %v10572, 0.0
    %v10647 = vsel %vm39, %v10571, 0.0
    %v10648 = vsel %vm38, %v10570, 0.0
    %v10649 = vsel %vm39, %v10569, 0.0
    %v10650 = vsel %vm38, %v10568, 0.0
    %v10651 = vsel %vm39, %v10567, 0.0
    %v10652 = vsel %vm38, %v10566, 0.0
    %v10653 = vsel %vm39, %v10565, 0.0
    %v10654 = vsel %vm38, %v10564, 0.0
    %v10655 = vsel %vm39, %v10563, 0.0
    %v10656 = vsel %vm38, %v10562, 0.0
    %v10657 = vsel %vm39, %v10561, 0.0
    %v10658 = vsel %vm38, %v10560, 0.0
    %v10659 = vsel %vm39, %v10559, 0.0
    %v10660 = vsel %vm38, %v10558, 0.0
    %v10661 = vsel %vm39, %v10557, 0.0
    %v10662 = vsel %vm38, %v10556, 0.0
    %v10663 = vsel %vm39, %v10555, 0.0
    %v10664 = vsel %vm38, %v10554, 0.0
    %v10665 = vsel %vm39, %v10553, 0.0
    %v10666 = vsel %vm38, %v10552, 0.0
    %v10667 = vsel %vm39, %v10551, 0.0
    %v10668 = vsel %vm38, %v10550, 0.0
    %v10669 = vsel %vm39, %v10549, 0.0
    %v10670 = vsel %vm38, %v10548, 0.0
    %v10671 = vsel %vm39, %v10547, 0.0
    %v10672 = vsel %vm38, %v10546, 0.0
    %v10673 = vsel %vm39, %v10609, 0.0
    %v10674 = vadd.f32 %v10096, %v10610
    %v10675 = vadd.f32 %v10097, %v10611
    %v10676 = vadd.f32 %v10098, %v10612
    %v10677 = vadd.f32 %v10099, %v10613
    %v10678 = vadd.f32 %v10100, %v10614
    %v10679 = vadd.f32 %v10101, %v10615
    %v10680 = vadd.f32 %v10102, %v10616
    %v10681 = vadd.f32 %v10103, %v10617
    %v10682 = vadd.f32 %v10104, %v10618
    %v10683 = vadd.f32 %v10105, %v10619
    %v10684 = vadd.f32 %v10106, %v10620
    %v10685 = vadd.f32 %v10107, %v10621
    %v10686 = vadd.f32 %v10108, %v10622
    %v10687 = vadd.f32 %v10109, %v10623
    %v10688 = vadd.f32 %v10110, %v10624
    %v10689 = vadd.f32 %v10111, %v10625
    %v10690 = vadd.f32 %v10112, %v10626
    %v10691 = vadd.f32 %v10113, %v10627
    %v10692 = vadd.f32 %v10114, %v10628
    %v10693 = vadd.f32 %v10115, %v10629
    %v10694 = vadd.f32 %v10116, %v10630
    %v10695 = vadd.f32 %v10117, %v10631
    %v10696 = vadd.f32 %v10118, %v10632
    %v10697 = vadd.f32 %v10119, %v10633
    %v10698 = vadd.f32 %v10120, %v10634
    %v10699 = vadd.f32 %v10121, %v10635
    %v10700 = vadd.f32 %v10122, %v10636
    %v10701 = vadd.f32 %v10123, %v10637
    %v10702 = vadd.f32 %v10124, %v10638
    %v10703 = vadd.f32 %v10125, %v10639
    %v10704 = vadd.f32 %v10126, %v10640
    %v10705 = vadd.f32 %v10127, %v10641
    %v10706 = vadd.f32 %v10128, %v10642
    %v10707 = vadd.f32 %v10129, %v10643
    %v10708 = vadd.f32 %v10130, %v10644
    %v10709 = vadd.f32 %v10131, %v10645
    %v10710 = vadd.f32 %v10132, %v10646
    %v10711 = vadd.f32 %v10133, %v10647
    %v10712 = vadd.f32 %v10134, %v10648
    %v10713 = vadd.f32 %v10135, %v10649
    %v10714 = vadd.f32 %v10136, %v10650
    %v10715 = vadd.f32 %v10137, %v10651
    %v10716 = vadd.f32 %v10138, %v10652
    %v10717 = vadd.f32 %v10139, %v10653
    %v10718 = vadd.f32 %v10140, %v10654
    %v10719 = vadd.f32 %v10141, %v10655
    %v10720 = vadd.f32 %v10142, %v10656
    %v10721 = vadd.f32 %v10143, %v10657
    %v10722 = vadd.f32 %v10144, %v10658
    %v10723 = vadd.f32 %v10145, %v10659
    %v10724 = vadd.f32 %v10146, %v10660
    %v10725 = vadd.f32 %v10147, %v10661
    %v10726 = vadd.f32 %v10148, %v10662
    %v10727 = vadd.f32 %v10149, %v10663
    %v10728 = vadd.f32 %v10150, %v10664
    %v10729 = vadd.f32 %v10151, %v10665
    %v10730 = vadd.f32 %v10152, %v10666
    %v10731 = vadd.f32 %v10153, %v10667
    %v10732 = vadd.f32 %v10154, %v10668
    %v10733 = vadd.f32 %v10155, %v10669
    %v10734 = vadd.f32 %v10156, %v10670
    %v10735 = vadd.f32 %v10157, %v10671
    %v10736 = vadd.f32 %v10158, %v10672
    %v10737 = vadd.f32 %v10159, %v10673
    %v10738 = vsel %vm40, %v10674, 0.0
    %v10739 = vsel %vm40, %v10675, 0.0
    %v10740 = vadd.f32 %v10738, %v10739
    %v10741 = vsel %vm40, %v10676, 0.0
    %v10742 = vadd.f32 %v10740, %v10741
    %v10743 = vsel %vm40, %v10677, 0.0
    %v10744 = vadd.f32 %v10742, %v10743
    %v10745 = vsel %vm40, %v10678, 0.0
    %v10746 = vadd.f32 %v10744, %v10745
    %v10747 = vsel %vm40, %v10679, 0.0
    %v10748 = vadd.f32 %v10746, %v10747
    %v10749 = vsel %vm40, %v10680, 0.0
    %v10750 = vadd.f32 %v10748, %v10749
    %v10751 = vsel %vm40, %v10681, 0.0
    %v10752 = vadd.f32 %v10750, %v10751
    %v10753 = vsel %vm40, %v10682, 0.0
    %v10754 = vadd.f32 %v10752, %v10753
    %v10755 = vsel %vm40, %v10683, 0.0
    %v10756 = vadd.f32 %v10754, %v10755
    %v10757 = vsel %vm40, %v10684, 0.0
    %v10758 = vadd.f32 %v10756, %v10757
    %v10759 = vsel %vm40, %v10685, 0.0
    %v10760 = vadd.f32 %v10758, %v10759
    %v10761 = vsel %vm40, %v10686, 0.0
    %v10762 = vadd.f32 %v10760, %v10761
    %v10763 = vsel %vm40, %v10687, 0.0
    %v10764 = vadd.f32 %v10762, %v10763
    %v10765 = vsel %vm40, %v10688, 0.0
    %v10766 = vadd.f32 %v10764, %v10765
    %v10767 = vsel %vm40, %v10689, 0.0
    %v10768 = vadd.f32 %v10766, %v10767
    %v10769 = vsel %vm40, %v10690, 0.0
    %v10770 = vadd.f32 %v10768, %v10769
    %v10771 = vsel %vm40, %v10691, 0.0
    %v10772 = vadd.f32 %v10770, %v10771
    %v10773 = vsel %vm40, %v10692, 0.0
    %v10774 = vadd.f32 %v10772, %v10773
    %v10775 = vsel %vm40, %v10693, 0.0
    %v10776 = vadd.f32 %v10774, %v10775
    %v10777 = vsel %vm40, %v10694, 0.0
    %v10778 = vadd.f32 %v10776, %v10777
    %v10779 = vsel %vm40, %v10695, 0.0
    %v10780 = vadd.f32 %v10778, %v10779
    %v10781 = vsel %vm40, %v10696, 0.0
    %v10782 = vadd.f32 %v10780, %v10781
    %v10783 = vsel %vm40, %v10697, 0.0
    %v10784 = vadd.f32 %v10782, %v10783
    %v10785 = vsel %vm40, %v10698, 0.0
    %v10786 = vadd.f32 %v10784, %v10785
    %v10787 = vsel %vm40, %v10699, 0.0
    %v10788 = vadd.f32 %v10786, %v10787
    %v10789 = vsel %vm40, %v10700, 0.0
    %v10790 = vadd.f32 %v10788, %v10789
    %v10791 = vsel %vm40, %v10701, 0.0
    %v10792 = vadd.f32 %v10790, %v10791
    %v10793 = vsel %vm40, %v10702, 0.0
    %v10794 = vadd.f32 %v10792, %v10793
    %v10795 = vsel %vm40, %v10703, 0.0
    %v10796 = vadd.f32 %v10794, %v10795
    %v10797 = vsel %vm40, %v10704, 0.0
    %v10798 = vadd.f32 %v10796, %v10797
    %v10799 = vsel %vm40, %v10705, 0.0
    %v10800 = vadd.f32 %v10798, %v10799
    %v10801 = vsel %vm40, %v10706, 0.0
    %v10802 = vadd.f32 %v10800, %v10801
    %v10803 = vsel %vm40, %v10707, 0.0
    %v10804 = vadd.f32 %v10802, %v10803
    %v10805 = vsel %vm40, %v10708, 0.0
    %v10806 = vadd.f32 %v10804, %v10805
    %v10807 = vsel %vm40, %v10709, 0.0
    %v10808 = vadd.f32 %v10806, %v10807
    %v10809 = vsel %vm40, %v10710, 0.0
    %v10810 = vadd.f32 %v10808, %v10809
    %v10811 = vsel %vm40, %v10711, 0.0
    %v10812 = vadd.f32 %v10810, %v10811
    %v10813 = vsel %vm40, %v10712, 0.0
    %v10814 = vadd.f32 %v10812, %v10813
    %v10815 = vsel %vm40, %v10713, 0.0
    %v10816 = vadd.f32 %v10814, %v10815
    %v10817 = vsel %vm40, %v10714, 0.0
    %v10818 = vadd.f32 %v10816, %v10817
    %v10819 = vsel %vm40, %v10715, 0.0
    %v10820 = vadd.f32 %v10818, %v10819
    %v10821 = vsel %vm40, %v10716, 0.0
    %v10822 = vadd.f32 %v10820, %v10821
    %v10823 = vsel %vm40, %v10717, 0.0
    %v10824 = vadd.f32 %v10822, %v10823
    %v10825 = vsel %vm40, %v10718, 0.0
    %v10826 = vadd.f32 %v10824, %v10825
    %v10827 = vsel %vm40, %v10719, 0.0
    %v10828 = vadd.f32 %v10826, %v10827
    %v10829 = vsel %vm40, %v10720, 0.0
    %v10830 = vadd.f32 %v10828, %v10829
    %v10831 = vsel %vm40, %v10721, 0.0
    %v10832 = vadd.f32 %v10830, %v10831
    %v10833 = vsel %vm40, %v10722, 0.0
    %v10834 = vadd.f32 %v10832, %v10833
    %v10835 = vsel %vm40, %v10723, 0.0
    %v10836 = vadd.f32 %v10834, %v10835
    %v10837 = vsel %vm40, %v10724, 0.0
    %v10838 = vadd.f32 %v10836, %v10837
    %v10839 = vsel %vm40, %v10725, 0.0
    %v10840 = vadd.f32 %v10838, %v10839
    %v10841 = vsel %vm40, %v10726, 0.0
    %v10842 = vadd.f32 %v10840, %v10841
    %v10843 = vsel %vm40, %v10727, 0.0
    %v10844 = vadd.f32 %v10842, %v10843
    %v10845 = vsel %vm40, %v10728, 0.0
    %v10846 = vadd.f32 %v10844, %v10845
    %v10847 = vsel %vm40, %v10729, 0.0
    %v10848 = vadd.f32 %v10846, %v10847
    %v10849 = vsel %vm40, %v10730, 0.0
    %v10850 = vadd.f32 %v10848, %v10849
    %v10851 = vsel %vm40, %v10731, 0.0
    %v10852 = vadd.f32 %v10850, %v10851
    %v10853 = vsel %vm40, %v10732, 0.0
    %v10854 = vadd.f32 %v10852, %v10853
    %v10855 = vsel %vm40, %v10733, 0.0
    %v10856 = vadd.f32 %v10854, %v10855
    %v10857 = vsel %vm40, %v10734, 0.0
    %v10858 = vadd.f32 %v10856, %v10857
    %v10859 = vsel %vm40, %v10735, 0.0
    %v10860 = vadd.f32 %v10858, %v10859
    %v10861 = vsel %vm40, %v10736, 0.0
    %v10862 = vadd.f32 %v10860, %v10861
    %v10863 = vsel %vm40, %v10737, 0.0
    %v10864 = vadd.f32 %v10862, %v10863
    %v10865 = vrot.slane %v10864, 4
    %v10866 = vadd.f32 %v10864, %v10865
    %v10867 = vrot.slane %v10866, 2
    %v10868 = vadd.f32 %v10866, %v10867
    %v10869 = vrot.slane %v10868, 1
    %v10870 = vadd.f32 %v10868, %v10869
    %v10871 = vmul.f32 %v10870, 0.001953125
    %v10872 = vsub.f32 %v10674, %v10871
    %v10873 = vsub.f32 %v10675, %v10871
    %v10874 = vsub.f32 %v10676, %v10871
    %v10875 = vsub.f32 %v10677, %v10871
    %v10876 = vsub.f32 %v10678, %v10871
    %v10877 = vsub.f32 %v10679, %v10871
    %v10878 = vsub.f32 %v10680, %v10871
    %v10879 = vsub.f32 %v10681, %v10871
    %v10880 = vsub.f32 %v10682, %v10871
    %v10881 = vsub.f32 %v10683, %v10871
    %v10882 = vsub.f32 %v10684, %v10871
    %v10883 = vsub.f32 %v10685, %v10871
    %v10884 = vsub.f32 %v10686, %v10871
    %v10885 = vsub.f32 %v10687, %v10871
    %v10886 = vsub.f32 %v10688, %v10871
    %v10887 = vsub.f32 %v10689, %v10871
    %v10888 = vsub.f32 %v10690, %v10871
    %v10889 = vsub.f32 %v10691, %v10871
    %v10890 = vsub.f32 %v10692, %v10871
    %v10891 = vsub.f32 %v10693, %v10871
    %v10892 = vsub.f32 %v10694, %v10871
    %v10893 = vsub.f32 %v10695, %v10871
    %v10894 = vsub.f32 %v10696, %v10871
    %v10895 = vsub.f32 %v10697, %v10871
    %v10896 = vsub.f32 %v10698, %v10871
    %v10897 = vsub.f32 %v10699, %v10871
    %v10898 = vsub.f32 %v10700, %v10871
    %v10899 = vsub.f32 %v10701, %v10871
    %v10900 = vsub.f32 %v10702, %v10871
    %v10901 = vsub.f32 %v10703, %v10871
    %v10902 = vsub.f32 %v10704, %v10871
    %v10903 = vsub.f32 %v10705, %v10871
    %v10904 = vsub.f32 %v10706, %v10871
    %v10905 = vsub.f32 %v10707, %v10871
    %v10906 = vsub.f32 %v10708, %v10871
    %v10907 = vsub.f32 %v10709, %v10871
    %v10908 = vsub.f32 %v10710, %v10871
    %v10909 = vsub.f32 %v10711, %v10871
    %v10910 = vsub.f32 %v10712, %v10871
    %v10911 = vsub.f32 %v10713, %v10871
    %v10912 = vsub.f32 %v10714, %v10871
    %v10913 = vsub.f32 %v10715, %v10871
    %v10914 = vsub.f32 %v10716, %v10871
    %v10915 = vsub.f32 %v10717, %v10871
    %v10916 = vsub.f32 %v10718, %v10871
    %v10917 = vsub.f32 %v10719, %v10871
    %v10918 = vsub.f32 %v10720, %v10871
    %v10919 = vsub.f32 %v10721, %v10871
    %v10920 = vsub.f32 %v10722, %v10871
    %v10921 = vsub.f32 %v10723, %v10871
    %v10922 = vsub.f32 %v10724, %v10871
    %v10923 = vsub.f32 %v10725, %v10871
    %v10924 = vsub.f32 %v10726, %v10871
    %v10925 = vsub.f32 %v10727, %v10871
    %v10926 = vsub.f32 %v10728, %v10871
    %v10927 = vsub.f32 %v10729, %v10871
    %v10928 = vsub.f32 %v10730, %v10871
    %v10929 = vsub.f32 %v10731, %v10871
    %v10930 = vsub.f32 %v10732, %v10871
    %v10931 = vsub.f32 %v10733, %v10871
    %v10932 = vsub.f32 %v10734, %v10871
    %v10933 = vsub.f32 %v10735, %v10871
    %v10934 = vsub.f32 %v10736, %v10871
    %v10935 = vsub.f32 %v10737, %v10871
    %v10936 = vmul.f32 %v10872, %v10872
    %v10937 = vmul.f32 %v10873, %v10873
    %v10938 = vmul.f32 %v10874, %v10874
    %v10939 = vmul.f32 %v10875, %v10875
    %v10940 = vmul.f32 %v10876, %v10876
    %v10941 = vmul.f32 %v10877, %v10877
    %v10942 = vmul.f32 %v10878, %v10878
    %v10943 = vmul.f32 %v10879, %v10879
    %v10944 = vmul.f32 %v10880, %v10880
    %v10945 = vmul.f32 %v10881, %v10881
    %v10946 = vmul.f32 %v10882, %v10882
    %v10947 = vmul.f32 %v10883, %v10883
    %v10948 = vmul.f32 %v10884, %v10884
    %v10949 = vmul.f32 %v10885, %v10885
    %v10950 = vmul.f32 %v10886, %v10886
    %v10951 = vmul.f32 %v10887, %v10887
    %v10952 = vmul.f32 %v10888, %v10888
    %v10953 = vmul.f32 %v10889, %v10889
    %v10954 = vmul.f32 %v10890, %v10890
    %v10955 = vmul.f32 %v10891, %v10891
    %v10956 = vmul.f32 %v10892, %v10892
    %v10957 = vmul.f32 %v10893, %v10893
    %v10958 = vmul.f32 %v10894, %v10894
    %v10959 = vmul.f32 %v10895, %v10895
    %v10960 = vmul.f32 %v10896, %v10896
    %v10961 = vmul.f32 %v10897, %v10897
    %v10962 = vmul.f32 %v10898, %v10898
    %v10963 = vmul.f32 %v10899, %v10899
    %v10964 = vmul.f32 %v10900, %v10900
    %v10965 = vmul.f32 %v10901, %v10901
    %v10966 = vmul.f32 %v10902, %v10902
    %v10967 = vmul.f32 %v10903, %v10903
    %v10968 = vmul.f32 %v10904, %v10904
    %v10969 = vmul.f32 %v10905, %v10905
    %v10970 = vmul.f32 %v10906, %v10906
    %v10971 = vmul.f32 %v10907, %v10907
    %v10972 = vmul.f32 %v10908, %v10908
    %v10973 = vmul.f32 %v10909, %v10909
    %v10974 = vmul.f32 %v10910, %v10910
    %v10975 = vmul.f32 %v10911, %v10911
    %v10976 = vmul.f32 %v10912, %v10912
    %v10977 = vmul.f32 %v10913, %v10913
    %v10978 = vmul.f32 %v10914, %v10914
    %v10979 = vmul.f32 %v10915, %v10915
    %v10980 = vmul.f32 %v10916, %v10916
    %v10981 = vmul.f32 %v10917, %v10917
    %v10982 = vmul.f32 %v10918, %v10918
    %v10983 = vmul.f32 %v10919, %v10919
    %v10984 = vmul.f32 %v10920, %v10920
    %v10985 = vmul.f32 %v10921, %v10921
    %v10986 = vmul.f32 %v10922, %v10922
    %v10987 = vmul.f32 %v10923, %v10923
    %v10988 = vmul.f32 %v10924, %v10924
    %v10989 = vmul.f32 %v10925, %v10925
    %v10990 = vmul.f32 %v10926, %v10926
    %v10991 = vmul.f32 %v10927, %v10927
    %v10992 = vmul.f32 %v10928, %v10928
    %v10993 = vmul.f32 %v10929, %v10929
    %v10994 = vmul.f32 %v10930, %v10930
    %v10995 = vmul.f32 %v10931, %v10931
    %v10996 = vmul.f32 %v10932, %v10932
    %v10997 = vmul.f32 %v10933, %v10933
    %v10998 = vmul.f32 %v10934, %v10934
    %v10999 = vmul.f32 %v10935, %v10935
    %v11000 = vsel %vm40, %v10936, 0.0
    %v11001 = vsel %vm40, %v10937, 0.0
    %v11002 = vadd.f32 %v11000, %v11001
    %v11003 = vsel %vm40, %v10938, 0.0
    %v11004 = vadd.f32 %v11002, %v11003
    %v11005 = vsel %vm40, %v10939, 0.0
    %v11006 = vadd.f32 %v11004, %v11005
    %v11007 = vsel %vm40, %v10940, 0.0
    %v11008 = vadd.f32 %v11006, %v11007
    %v11009 = vsel %vm40, %v10941, 0.0
    %v11010 = vadd.f32 %v11008, %v11009
    %v11011 = vsel %vm40, %v10942, 0.0
    %v11012 = vadd.f32 %v11010, %v11011
    %v11013 = vsel %vm40, %v10943, 0.0
    %v11014 = vadd.f32 %v11012, %v11013
    %v11015 = vsel %vm40, %v10944, 0.0
    %v11016 = vadd.f32 %v11014, %v11015
    %v11017 = vsel %vm40, %v10945, 0.0
    %v11018 = vadd.f32 %v11016, %v11017
    %v11019 = vsel %vm40, %v10946, 0.0
    %v11020 = vadd.f32 %v11018, %v11019
    %v11021 = vsel %vm40, %v10947, 0.0
    %v11022 = vadd.f32 %v11020, %v11021
    %v11023 = vsel %vm40, %v10948, 0.0
    %v11024 = vadd.f32 %v11022, %v11023
    %v11025 = vsel %vm40, %v10949, 0.0
    %v11026 = vadd.f32 %v11024, %v11025
    %v11027 = vsel %vm40, %v10950, 0.0
    %v11028 = vadd.f32 %v11026, %v11027
    %v11029 = vsel %vm40, %v10951, 0.0
    %v11030 = vadd.f32 %v11028, %v11029
    %v11031 = vsel %vm40, %v10952, 0.0
    %v11032 = vadd.f32 %v11030, %v11031
    %v11033 = vsel %vm40, %v10953, 0.0
    %v11034 = vadd.f32 %v11032, %v11033
    %v11035 = vsel %vm40, %v10954, 0.0
    %v11036 = vadd.f32 %v11034, %v11035
    %v11037 = vsel %vm40, %v10955, 0.0
    %v11038 = vadd.f32 %v11036, %v11037
    %v11039 = vsel %vm40, %v10956, 0.0
    %v11040 = vadd.f32 %v11038, %v11039
    %v11041 = vsel %vm40, %v10957, 0.0
    %v11042 = vadd.f32 %v11040, %v11041
    %v11043 = vsel %vm40, %v10958, 0.0
    %v11044 = vadd.f32 %v11042, %v11043
    %v11045 = vsel %vm40, %v10959, 0.0
    %v11046 = vadd.f32 %v11044, %v11045
    %v11047 = vsel %vm40, %v10960, 0.0
    %v11048 = vadd.f32 %v11046, %v11047
    %v11049 = vsel %vm40, %v10961, 0.0
    %v11050 = vadd.f32 %v11048, %v11049
    %v11051 = vsel %vm40, %v10962, 0.0
    %v11052 = vadd.f32 %v11050, %v11051
    %v11053 = vsel %vm40, %v10963, 0.0
    %v11054 = vadd.f32 %v11052, %v11053
    %v11055 = vsel %vm40, %v10964, 0.0
    %v11056 = vadd.f32 %v11054, %v11055
    %v11057 = vsel %vm40, %v10965, 0.0
    %v11058 = vadd.f32 %v11056, %v11057
    %v11059 = vsel %vm40, %v10966, 0.0
    %v11060 = vadd.f32 %v11058, %v11059
    %v11061 = vsel %vm40, %v10967, 0.0
    %v11062 = vadd.f32 %v11060, %v11061
    %v11063 = vsel %vm40, %v10968, 0.0
    %v11064 = vadd.f32 %v11062, %v11063
    %v11065 = vsel %vm40, %v10969, 0.0
    %v11066 = vadd.f32 %v11064, %v11065
    %v11067 = vsel %vm40, %v10970, 0.0
    %v11068 = vadd.f32 %v11066, %v11067
    %v11069 = vsel %vm40, %v10971, 0.0
    %v11070 = vadd.f32 %v11068, %v11069
    %v11071 = vsel %vm40, %v10972, 0.0
    %v11072 = vadd.f32 %v11070, %v11071
    %v11073 = vsel %vm40, %v10973, 0.0
    %v11074 = vadd.f32 %v11072, %v11073
    %v11075 = vsel %vm40, %v10974, 0.0
    %v11076 = vadd.f32 %v11074, %v11075
    %v11077 = vsel %vm40, %v10975, 0.0
    %v11078 = vadd.f32 %v11076, %v11077
    %v11079 = vsel %vm40, %v10976, 0.0
    %v11080 = vadd.f32 %v11078, %v11079
    %v11081 = vsel %vm40, %v10977, 0.0
    %v11082 = vadd.f32 %v11080, %v11081
    %v11083 = vsel %vm40, %v10978, 0.0
    %v11084 = vadd.f32 %v11082, %v11083
    %v11085 = vsel %vm40, %v10979, 0.0
    %v11086 = vadd.f32 %v11084, %v11085
    %v11087 = vsel %vm40, %v10980, 0.0
    %v11088 = vadd.f32 %v11086, %v11087
    %v11089 = vsel %vm40, %v10981, 0.0
    %v11090 = vadd.f32 %v11088, %v11089
    %v11091 = vsel %vm40, %v10982, 0.0
    %v11092 = vadd.f32 %v11090, %v11091
    %v11093 = vsel %vm40, %v10983, 0.0
    %v11094 = vadd.f32 %v11092, %v11093
    %v11095 = vsel %vm40, %v10984, 0.0
    %v11096 = vadd.f32 %v11094, %v11095
    %v11097 = vsel %vm40, %v10985, 0.0
    %v11098 = vadd.f32 %v11096, %v11097
    %v11099 = vsel %vm40, %v10986, 0.0
    %v11100 = vadd.f32 %v11098, %v11099
    %v11101 = vsel %vm40, %v10987, 0.0
    %v11102 = vadd.f32 %v11100, %v11101
    %v11103 = vsel %vm40, %v10988, 0.0
    %v11104 = vadd.f32 %v11102, %v11103
    %v11105 = vsel %vm40, %v10989, 0.0
    %v11106 = vadd.f32 %v11104, %v11105
    %v11107 = vsel %vm40, %v10990, 0.0
    %v11108 = vadd.f32 %v11106, %v11107
    %v11109 = vsel %vm40, %v10991, 0.0
    %v11110 = vadd.f32 %v11108, %v11109
    %v11111 = vsel %vm40, %v10992, 0.0
    %v11112 = vadd.f32 %v11110, %v11111
    %v11113 = vsel %vm40, %v10993, 0.0
    %v11114 = vadd.f32 %v11112, %v11113
    %v11115 = vsel %vm40, %v10994, 0.0
    %v11116 = vadd.f32 %v11114, %v11115
    %v11117 = vsel %vm40, %v10995, 0.0
    %v11118 = vadd.f32 %v11116, %v11117
    %v11119 = vsel %vm40, %v10996, 0.0
    %v11120 = vadd.f32 %v11118, %v11119
    %v11121 = vsel %vm40, %v10997, 0.0
    %v11122 = vadd.f32 %v11120, %v11121
    %v11123 = vsel %vm40, %v10998, 0.0
    %v11124 = vadd.f32 %v11122, %v11123
    %v11125 = vsel %vm40, %v10999, 0.0
    %v11126 = vadd.f32 %v11124, %v11125
    %v11127 = vrot.slane %v11126, 4
    %v11128 = vadd.f32 %v11126, %v11127
    %v11129 = vrot.slane %v11128, 2
    %v11130 = vadd.f32 %v11128, %v11129
    %v11131 = vrot.slane %v11130, 1
    %v11132 = vadd.f32 %v11130, %v11131
    %v11133 = vmul.f32 %v11132, 0.001953125
    %v11134 = vld [vmem:[%s5] sm:$0x1]
    %v11135 = vadd.f32 %v11133, 1e-05
    %v11136 = vrsqrt.pop %v11135
    %v11137 = vmul.f32 %v11134, %v11136
    %v11139 = vlaneseq
    %v11140 = vshrl.u32 %v11139, 7
    %v11141 = vsub.s32 0, %v11140
    %v11142 = vrot.slane %v11137, %v11141
    %v11144 = vmul.f32 %v10872, %v11142
    %v11145 = vmul.f32 %v10873, %v11142
    %v11146 = vmul.f32 %v10874, %v11142
    %v11147 = vmul.f32 %v10875, %v11142
    %v11148 = vmul.f32 %v10876, %v11142
    %v11149 = vmul.f32 %v10877, %v11142
    %v11150 = vmul.f32 %v10878, %v11142
    %v11151 = vmul.f32 %v10879, %v11142
    %v11152 = vmul.f32 %v10880, %v11142
    %v11153 = vmul.f32 %v10881, %v11142
    %v11154 = vmul.f32 %v10882, %v11142
    %v11155 = vmul.f32 %v10883, %v11142
    %v11156 = vmul.f32 %v10884, %v11142
    %v11157 = vmul.f32 %v10885, %v11142
    %v11158 = vmul.f32 %v10886, %v11142
    %v11159 = vmul.f32 %v10887, %v11142
    %v11160 = vmul.f32 %v10888, %v11142
    %v11161 = vmul.f32 %v10889, %v11142
    %v11162 = vmul.f32 %v10890, %v11142
    %v11163 = vmul.f32 %v10891, %v11142
    %v11164 = vmul.f32 %v10892, %v11142
    %v11165 = vmul.f32 %v10893, %v11142
    %v11166 = vmul.f32 %v10894, %v11142
    %v11167 = vmul.f32 %v10895, %v11142
    %v11168 = vmul.f32 %v10896, %v11142
    %v11169 = vmul.f32 %v10897, %v11142
    %v11170 = vmul.f32 %v10898, %v11142
    %v11171 = vmul.f32 %v10899, %v11142
    %v11172 = vmul.f32 %v10900, %v11142
    %v11173 = vmul.f32 %v10901, %v11142
    %v11174 = vmul.f32 %v10902, %v11142
    %v11175 = vmul.f32 %v10903, %v11142
    %v11176 = vmul.f32 %v10904, %v11142
    %v11177 = vmul.f32 %v10905, %v11142
    %v11178 = vmul.f32 %v10906, %v11142
    %v11179 = vmul.f32 %v10907, %v11142
    %v11180 = vmul.f32 %v10908, %v11142
    %v11181 = vmul.f32 %v10909, %v11142
    %v11182 = vmul.f32 %v10910, %v11142
    %v11183 = vmul.f32 %v10911, %v11142
    %v11184 = vmul.f32 %v10912, %v11142
    %v11185 = vmul.f32 %v10913, %v11142
    %v11186 = vmul.f32 %v10914, %v11142
    %v11187 = vmul.f32 %v10915, %v11142
    %v11188 = vmul.f32 %v10916, %v11142
    %v11189 = vmul.f32 %v10917, %v11142
    %v11190 = vmul.f32 %v10918, %v11142
    %v11191 = vmul.f32 %v10919, %v11142
    %v11192 = vmul.f32 %v10920, %v11142
    %v11193 = vmul.f32 %v10921, %v11142
    %v11194 = vmul.f32 %v10922, %v11142
    %v11195 = vmul.f32 %v10923, %v11142
    %v11196 = vmul.f32 %v10924, %v11142
    %v11197 = vmul.f32 %v10925, %v11142
    %v11198 = vmul.f32 %v10926, %v11142
    %v11199 = vmul.f32 %v10927, %v11142
    %v11200 = vmul.f32 %v10928, %v11142
    %v11201 = vmul.f32 %v10929, %v11142
    %v11202 = vmul.f32 %v10930, %v11142
    %v11203 = vmul.f32 %v10931, %v11142
    %v11204 = vmul.f32 %v10932, %v11142
    %v11205 = vmul.f32 %v10933, %v11142
    %v11206 = vmul.f32 %v10934, %v11142
    %v11207 = vmul.f32 %v10935, %v11142
    %v11208 = vld [vmem:[%s6] sm:$0x1]
    %v11210 = vlaneseq
    %v11211 = vshrl.u32 %v11210, 7
    %v11212 = vsub.s32 0, %v11211
    %v11213 = vrot.slane %v11208, %v11212
    %v11215 = vadd.f32 %v11144, %v11213
    %v11216 = vadd.f32 %v11145, %v11213
    %v11217 = vadd.f32 %v11146, %v11213
    %v11218 = vadd.f32 %v11147, %v11213
    %v11219 = vadd.f32 %v11148, %v11213
    %v11220 = vadd.f32 %v11149, %v11213
    %v11221 = vadd.f32 %v11150, %v11213
    %v11222 = vadd.f32 %v11151, %v11213
    %v11223 = vadd.f32 %v11152, %v11213
    %v11224 = vadd.f32 %v11153, %v11213
    %v11225 = vadd.f32 %v11154, %v11213
    %v11226 = vadd.f32 %v11155, %v11213
    %v11227 = vadd.f32 %v11156, %v11213
    %v11228 = vadd.f32 %v11157, %v11213
    %v11229 = vadd.f32 %v11158, %v11213
    %v11230 = vadd.f32 %v11159, %v11213
    %v11231 = vadd.f32 %v11160, %v11213
    %v11232 = vadd.f32 %v11161, %v11213
    %v11233 = vadd.f32 %v11162, %v11213
    %v11234 = vadd.f32 %v11163, %v11213
    %v11235 = vadd.f32 %v11164, %v11213
    %v11236 = vadd.f32 %v11165, %v11213
    %v11237 = vadd.f32 %v11166, %v11213
    %v11238 = vadd.f32 %v11167, %v11213
    %v11239 = vadd.f32 %v11168, %v11213
    %v11240 = vadd.f32 %v11169, %v11213
    %v11241 = vadd.f32 %v11170, %v11213
    %v11242 = vadd.f32 %v11171, %v11213
    %v11243 = vadd.f32 %v11172, %v11213
    %v11244 = vadd.f32 %v11173, %v11213
    %v11245 = vadd.f32 %v11174, %v11213
    %v11246 = vadd.f32 %v11175, %v11213
    %v11247 = vadd.f32 %v11176, %v11213
    %v11248 = vadd.f32 %v11177, %v11213
    %v11249 = vadd.f32 %v11178, %v11213
    %v11250 = vadd.f32 %v11179, %v11213
    %v11251 = vadd.f32 %v11180, %v11213
    %v11252 = vadd.f32 %v11181, %v11213
    %v11253 = vadd.f32 %v11182, %v11213
    %v11254 = vadd.f32 %v11183, %v11213
    %v11255 = vadd.f32 %v11184, %v11213
    %v11256 = vadd.f32 %v11185, %v11213
    %v11257 = vadd.f32 %v11186, %v11213
    %v11258 = vadd.f32 %v11187, %v11213
    %v11259 = vadd.f32 %v11188, %v11213
    %v11260 = vadd.f32 %v11189, %v11213
    %v11261 = vadd.f32 %v11190, %v11213
    %v11262 = vadd.f32 %v11191, %v11213
    %v11263 = vadd.f32 %v11192, %v11213
    %v11264 = vadd.f32 %v11193, %v11213
    %v11265 = vadd.f32 %v11194, %v11213
    %v11266 = vadd.f32 %v11195, %v11213
    %v11267 = vadd.f32 %v11196, %v11213
    %v11268 = vadd.f32 %v11197, %v11213
    %v11269 = vadd.f32 %v11198, %v11213
    %v11270 = vadd.f32 %v11199, %v11213
    %v11271 = vadd.f32 %v11200, %v11213
    %v11272 = vadd.f32 %v11201, %v11213
    %v11273 = vadd.f32 %v11202, %v11213
    %v11274 = vadd.f32 %v11203, %v11213
    %v11275 = vadd.f32 %v11204, %v11213
    %v11276 = vadd.f32 %v11205, %v11213
    %v11277 = vadd.f32 %v11206, %v11213
    %v11278 = vadd.f32 %v11207, %v11213
    %v11279 = vld [vmem:[%s0] sm:$0xff]
    %v11280 = vld [vmem:[%s0 + $0x8] sm:$0xff]
    %v11281 = vld [vmem:[%s0 + $0x10] sm:$0xff]
    %v11282 = vld [vmem:[%s0 + $0x18] sm:$0xff]
    %v11283 = vld [vmem:[%s0 + $0x20] sm:$0xff]
    %v11284 = vld [vmem:[%s0 + $0x28] sm:$0xff]
    %v11285 = vld [vmem:[%s0 + $0x30] sm:$0xff]
    %v11286 = vld [vmem:[%s0 + $0x38] sm:$0xff]
    %v11287 = vld [vmem:[%s0 + $0x40] sm:$0xff]
    %v11288 = vld [vmem:[%s0 + $0x48] sm:$0xff]
    %v11289 = vld [vmem:[%s0 + $0x50] sm:$0xff]
    %v11290 = vld [vmem:[%s0 + $0x58] sm:$0xff]
    %v11291 = vld [vmem:[%s0 + $0x60] sm:$0xff]
    %v11292 = vld [vmem:[%s0 + $0x68] sm:$0xff]
    %v11293 = vld [vmem:[%s0 + $0x70] sm:$0xff]
    %v11294 = vld [vmem:[%s0 + $0x78] sm:$0xff]
    %v11295 = vld [vmem:[%s0 + $0x80] sm:$0xff]
    %v11296 = vld [vmem:[%s0 + $0x88] sm:$0xff]
    %v11297 = vld [vmem:[%s0 + $0x90] sm:$0xff]
    %v11298 = vld [vmem:[%s0 + $0x98] sm:$0xff]
    %v11299 = vld [vmem:[%s0 + $0xa0] sm:$0xff]
    %v11300 = vld [vmem:[%s0 + $0xa8] sm:$0xff]
    %v11301 = vld [vmem:[%s0 + $0xb0] sm:$0xff]
    %v11302 = vld [vmem:[%s0 + $0xb8] sm:$0xff]
    %v11303 = vld [vmem:[%s0 + $0xc0] sm:$0xff]
    %v11304 = vld [vmem:[%s0 + $0xc8] sm:$0xff]
    %v11305 = vld [vmem:[%s0 + $0xd0] sm:$0xff]
    %v11306 = vld [vmem:[%s0 + $0xd8] sm:$0xff]
    %v11307 = vld [vmem:[%s0 + $0xe0] sm:$0xff]
    %v11308 = vld [vmem:[%s0 + $0xe8] sm:$0xff]
    %v11309 = vld [vmem:[%s0 + $0xf0] sm:$0xff]
    %v11310 = vld [vmem:[%s0 + $0xf8] sm:$0xff]
    %v11311 = vld [vmem:[%s0 + $0x100] sm:$0xff]
    %v11312 = vld [vmem:[%s0 + $0x108] sm:$0xff]
    %v11313 = vld [vmem:[%s0 + $0x110] sm:$0xff]
    %v11314 = vld [vmem:[%s0 + $0x118] sm:$0xff]
    %v11315 = vld [vmem:[%s0 + $0x120] sm:$0xff]
    %v11316 = vld [vmem:[%s0 + $0x128] sm:$0xff]
    %v11317 = vld [vmem:[%s0 + $0x130] sm:$0xff]
    %v11318 = vld [vmem:[%s0 + $0x138] sm:$0xff]
    %v11319 = vld [vmem:[%s0 + $0x140] sm:$0xff]
    %v11320 = vld [vmem:[%s0 + $0x148] sm:$0xff]
    %v11321 = vld [vmem:[%s0 + $0x150] sm:$0xff]
    %v11322 = vld [vmem:[%s0 + $0x158] sm:$0xff]
    %v11323 = vld [vmem:[%s0 + $0x160] sm:$0xff]
    %v11324 = vld [vmem:[%s0 + $0x168] sm:$0xff]
    %v11325 = vld [vmem:[%s0 + $0x170] sm:$0xff]
    %v11326 = vld [vmem:[%s0 + $0x178] sm:$0xff]
    %v11327 = vld [vmem:[%s0 + $0x180] sm:$0xff]
    %v11328 = vld [vmem:[%s0 + $0x188] sm:$0xff]
    %v11329 = vld [vmem:[%s0 + $0x190] sm:$0xff]
    %v11330 = vld [vmem:[%s0 + $0x198] sm:$0xff]
    %v11331 = vld [vmem:[%s0 + $0x1a0] sm:$0xff]
    %v11332 = vld [vmem:[%s0 + $0x1a8] sm:$0xff]
    %v11333 = vld [vmem:[%s0 + $0x1b0] sm:$0xff]
    %v11334 = vld [vmem:[%s0 + $0x1b8] sm:$0xff]
    %v11335 = vld [vmem:[%s0 + $0x1c0] sm:$0xff]
    %v11336 = vld [vmem:[%s0 + $0x1c8] sm:$0xff]
    %v11337 = vld [vmem:[%s0 + $0x1d0] sm:$0xff]
    %v11338 = vld [vmem:[%s0 + $0x1d8] sm:$0xff]
    %v11339 = vld [vmem:[%s0 + $0x1e0] sm:$0xff]
    %v11340 = vld [vmem:[%s0 + $0x1e8] sm:$0xff]
    %v11341 = vld [vmem:[%s0 + $0x1f0] sm:$0xff]
    %v11342 = vld [vmem:[%s0 + $0x1f8] sm:$0xff]
    %v11343 = vadd.f32 %v11215, %v11279
    %v11344 = vadd.f32 %v11216, %v11280
    %v11345 = vadd.f32 %v11217, %v11281
    %v11346 = vadd.f32 %v11218, %v11282
    %v11347 = vadd.f32 %v11219, %v11283
    %v11348 = vadd.f32 %v11220, %v11284
    %v11349 = vadd.f32 %v11221, %v11285
    %v11350 = vadd.f32 %v11222, %v11286
    %v11351 = vadd.f32 %v11223, %v11287
    %v11352 = vadd.f32 %v11224, %v11288
    %v11353 = vadd.f32 %v11225, %v11289
    %v11354 = vadd.f32 %v11226, %v11290
    %v11355 = vadd.f32 %v11227, %v11291
    %v11356 = vadd.f32 %v11228, %v11292
    %v11357 = vadd.f32 %v11229, %v11293
    %v11358 = vadd.f32 %v11230, %v11294
    %v11359 = vadd.f32 %v11231, %v11295
    %v11360 = vadd.f32 %v11232, %v11296
    %v11361 = vadd.f32 %v11233, %v11297
    %v11362 = vadd.f32 %v11234, %v11298
    %v11363 = vadd.f32 %v11235, %v11299
    %v11364 = vadd.f32 %v11236, %v11300
    %v11365 = vadd.f32 %v11237, %v11301
    %v11366 = vadd.f32 %v11238, %v11302
    %v11367 = vadd.f32 %v11239, %v11303
    %v11368 = vadd.f32 %v11240, %v11304
    %v11369 = vadd.f32 %v11241, %v11305
    %v11370 = vadd.f32 %v11242, %v11306
    %v11371 = vadd.f32 %v11243, %v11307
    %v11372 = vadd.f32 %v11244, %v11308
    %v11373 = vadd.f32 %v11245, %v11309
    %v11374 = vadd.f32 %v11246, %v11310
    %v11375 = vadd.f32 %v11247, %v11311
    %v11376 = vadd.f32 %v11248, %v11312
    %v11377 = vadd.f32 %v11249, %v11313
    %v11378 = vadd.f32 %v11250, %v11314
    %v11379 = vadd.f32 %v11251, %v11315
    %v11380 = vadd.f32 %v11252, %v11316
    %v11381 = vadd.f32 %v11253, %v11317
    %v11382 = vadd.f32 %v11254, %v11318
    %v11383 = vadd.f32 %v11255, %v11319
    %v11384 = vadd.f32 %v11256, %v11320
    %v11385 = vadd.f32 %v11257, %v11321
    %v11386 = vadd.f32 %v11258, %v11322
    %v11387 = vadd.f32 %v11259, %v11323
    %v11388 = vadd.f32 %v11260, %v11324
    %v11389 = vadd.f32 %v11261, %v11325
    %v11390 = vadd.f32 %v11262, %v11326
    %v11391 = vadd.f32 %v11263, %v11327
    %v11392 = vadd.f32 %v11264, %v11328
    %v11393 = vadd.f32 %v11265, %v11329
    %v11394 = vadd.f32 %v11266, %v11330
    %v11395 = vadd.f32 %v11267, %v11331
    %v11396 = vadd.f32 %v11268, %v11332
    %v11397 = vadd.f32 %v11269, %v11333
    %v11398 = vadd.f32 %v11270, %v11334
    %v11399 = vadd.f32 %v11271, %v11335
    %v11400 = vadd.f32 %v11272, %v11336
    %v11401 = vadd.f32 %v11273, %v11337
    %v11402 = vadd.f32 %v11274, %v11338
    %v11403 = vadd.f32 %v11275, %v11339
    %v11404 = vadd.f32 %v11276, %v11340
    %v11405 = vadd.f32 %v11277, %v11341
    %v11406 = vadd.f32 %v11278, %v11342
    %11407 = vst.msk [vmem:[#allocation4] sm:$0xff] %vm40, %v11343
    %11408 = vst.msk [vmem:[#allocation4 + $0x8] sm:$0xff] %vm40, %v11344
    %11409 = vst.msk [vmem:[#allocation4 + $0x10] sm:$0xff] %vm40, %v11345
    %11410 = vst.msk [vmem:[#allocation4 + $0x18] sm:$0xff] %vm40, %v11346
    %11411 = vst.msk [vmem:[#allocation4 + $0x20] sm:$0xff] %vm40, %v11347
    %11412 = vst.msk [vmem:[#allocation4 + $0x28] sm:$0xff] %vm40, %v11348
    %11413 = vst.msk [vmem:[#allocation4 + $0x30] sm:$0xff] %vm40, %v11349
    %11414 = vst.msk [vmem:[#allocation4 + $0x38] sm:$0xff] %vm40, %v11350
    %11415 = vst.msk [vmem:[#allocation4 + $0x40] sm:$0xff] %vm40, %v11351
    %11416 = vst.msk [vmem:[#allocation4 + $0x48] sm:$0xff] %vm40, %v11352
    %11417 = vst.msk [vmem:[#allocation4 + $0x50] sm:$0xff] %vm40, %v11353
    %11418 = vst.msk [vmem:[#allocation4 + $0x58] sm:$0xff] %vm40, %v11354
    %11419 = vst.msk [vmem:[#allocation4 + $0x60] sm:$0xff] %vm40, %v11355
    %11420 = vst.msk [vmem:[#allocation4 + $0x68] sm:$0xff] %vm40, %v11356
    %11421 = vst.msk [vmem:[#allocation4 + $0x70] sm:$0xff] %vm40, %v11357
    %11422 = vst.msk [vmem:[#allocation4 + $0x78] sm:$0xff] %vm40, %v11358
    %11423 = vst.msk [vmem:[#allocation4 + $0x80] sm:$0xff] %vm40, %v11359
    %11424 = vst.msk [vmem:[#allocation4 + $0x88] sm:$0xff] %vm40, %v11360
    %11425 = vst.msk [vmem:[#allocation4 + $0x90] sm:$0xff] %vm40, %v11361
    %11426 = vst.msk [vmem:[#allocation4 + $0x98] sm:$0xff] %vm40, %v11362
    %11427 = vst.msk [vmem:[#allocation4 + $0xa0] sm:$0xff] %vm40, %v11363
    %11428 = vst.msk [vmem:[#allocation4 + $0xa8] sm:$0xff] %vm40, %v11364
    %11429 = vst.msk [vmem:[#allocation4 + $0xb0] sm:$0xff] %vm40, %v11365
    %11430 = vst.msk [vmem:[#allocation4 + $0xb8] sm:$0xff] %vm40, %v11366
    %11431 = vst.msk [vmem:[#allocation4 + $0xc0] sm:$0xff] %vm40, %v11367
    %11432 = vst.msk [vmem:[#allocation4 + $0xc8] sm:$0xff] %vm40, %v11368
    %11433 = vst.msk [vmem:[#allocation4 + $0xd0] sm:$0xff] %vm40, %v11369
    %11434 = vst.msk [vmem:[#allocation4 + $0xd8] sm:$0xff] %vm40, %v11370
    %11435 = vst.msk [vmem:[#allocation4 + $0xe0] sm:$0xff] %vm40, %v11371
    %11436 = vst.msk [vmem:[#allocation4 + $0xe8] sm:$0xff] %vm40, %v11372
    %11437 = vst.msk [vmem:[#allocation4 + $0xf0] sm:$0xff] %vm40, %v11373
    %11438 = vst.msk [vmem:[#allocation4 + $0xf8] sm:$0xff] %vm40, %v11374
    %11439 = vst.msk [vmem:[#allocation4 + $0x100] sm:$0xff] %vm40, %v11375
    %11440 = vst.msk [vmem:[#allocation4 + $0x108] sm:$0xff] %vm40, %v11376
    %11441 = vst.msk [vmem:[#allocation4 + $0x110] sm:$0xff] %vm40, %v11377
    %11442 = vst.msk [vmem:[#allocation4 + $0x118] sm:$0xff] %vm40, %v11378
    %11443 = vst.msk [vmem:[#allocation4 + $0x120] sm:$0xff] %vm40, %v11379
    %11444 = vst.msk [vmem:[#allocation4 + $0x128] sm:$0xff] %vm40, %v11380
    %11445 = vst.msk [vmem:[#allocation4 + $0x130] sm:$0xff] %vm40, %v11381
    %11446 = vst.msk [vmem:[#allocation4 + $0x138] sm:$0xff] %vm40, %v11382
    %11447 = vst.msk [vmem:[#allocation4 + $0x140] sm:$0xff] %vm40, %v11383
    %11448 = vst.msk [vmem:[#allocation4 + $0x148] sm:$0xff] %vm40, %v11384
    %11449 = vst.msk [vmem:[#allocation4 + $0x150] sm:$0xff] %vm40, %v11385
    %11450 = vst.msk [vmem:[#allocation4 + $0x158] sm:$0xff] %vm40, %v11386
    %11451 = vst.msk [vmem:[#allocation4 + $0x160] sm:$0xff] %vm40, %v11387
    %11452 = vst.msk [vmem:[#allocation4 + $0x168] sm:$0xff] %vm40, %v11388
    %11453 = vst.msk [vmem:[#allocation4 + $0x170] sm:$0xff] %vm40, %v11389
    %11454 = vst.msk [vmem:[#allocation4 + $0x178] sm:$0xff] %vm40, %v11390
    %11455 = vst.msk [vmem:[#allocation4 + $0x180] sm:$0xff] %vm40, %v11391
    %11456 = vst.msk [vmem:[#allocation4 + $0x188] sm:$0xff] %vm40, %v11392
    %11457 = vst.msk [vmem:[#allocation4 + $0x190] sm:$0xff] %vm40, %v11393
    %11458 = vst.msk [vmem:[#allocation4 + $0x198] sm:$0xff] %vm40, %v11394
    %11459 = vst.msk [vmem:[#allocation4 + $0x1a0] sm:$0xff] %vm40, %v11395
    %11460 = vst.msk [vmem:[#allocation4 + $0x1a8] sm:$0xff] %vm40, %v11396
    %11461 = vst.msk [vmem:[#allocation4 + $0x1b0] sm:$0xff] %vm40, %v11397
    %11462 = vst.msk [vmem:[#allocation4 + $0x1b8] sm:$0xff] %vm40, %v11398
    %11463 = vst.msk [vmem:[#allocation4 + $0x1c0] sm:$0xff] %vm40, %v11399
    %11464 = vst.msk [vmem:[#allocation4 + $0x1c8] sm:$0xff] %vm40, %v11400
    %11465 = vst.msk [vmem:[#allocation4 + $0x1d0] sm:$0xff] %vm40, %v11401
    %11466 = vst.msk [vmem:[#allocation4 + $0x1d8] sm:$0xff] %vm40, %v11402
    %11467 = vst.msk [vmem:[#allocation4 + $0x1e0] sm:$0xff] %vm40, %v11403
    %11468 = vst.msk [vmem:[#allocation4 + $0x1e8] sm:$0xff] %vm40, %v11404
    %11469 = vst.msk [vmem:[#allocation4 + $0x1f0] sm:$0xff] %vm40, %v11405
    %11470 = vst.msk [vmem:[#allocation4 + $0x1f8] sm:$0xff] %vm40, %v11406
    // Predicated region
    $region34: #{residual_block.1} parent=1 // pred_check
      _
    $region35: #{residual_block.1} parent=1 // pred_check_branch
      %11472 = sbr.rel (0) target = $region37
    $region36: #{residual_block.1} parent=1 // pred_region
      %s11474 = ssub.s32 8192, 8192
      %11475 = vsyncadd [#allocation5], %s11474
      %s11476 = sshll.u32 [#allocation4], 4
      %s11477 = int_to_ptr.vmem [resolvable:$true] %s11476
      %11482 = dma.vmem_to_hbm [thread:$0]  %s11477, 8192, %s8, [#allocation5], 128, 128, 8
    $region37: #{residual_block.1} parent=1 // pred_fallthru
      _
    // Predicated region
    $region38: #{residual_block.1} parent=1 // pred_check
      _
    $region39: #{residual_block.1} parent=1 // pred_check_branch
      %11484 = sbr.rel (0) target = $region41
    $region40: #{residual_block.1} parent=1 // pred_region
      %11485 = dma.done [#allocation5], 8192
    $region41: #{residual_block.1} parent=1 // pred_fallthru
      _
    %11486 = vsyncpa [#allocation5], 1

</llo_original>
